<compile_context>
chip_gen: v6e
topology: v6e:2x2x1
jax: 0.10.0
libtpu: 0.0.40
codegen_flags: <defaults>
</compile_context>

<pallas_src>
import functools
import math

import jax
import jax.numpy as jnp
from jax.experimental import pallas as pl
from jax.experimental.pallas import tpu as pltpu


# ----------------------------- Pallas kernel ------------------------------ #
def _ae_kernel(
    seed_ref,                 # scalar-prefetch (SMEM); only used when denoise=True
    x_ref,
    w_e1, b_e1, w_e2, b_e2, w_mu, b_mu,
    w_d1, b_d1, w_d2, b_d2,
    w_heads, b_heads,         # fused [mean | disp | pi] head
    z_ref, mean_ref, disp_ref, pi_ref,
    *, n_input, denoise, sigma,
):
    f32 = jnp.float32

    def linear(h, w_ref, b_ref):
        w = w_ref[...]
        # Feed the MXU in the weights' dtype (bf16-friendly); accumulate in f32.
        acc = jnp.dot(h.astype(w.dtype), w, preferred_element_type=f32)
        return acc + b_ref[...].astype(f32)

    x = x_ref[...]
    if denoise:
        # Fused denoising (x + sigma * N(0,1)) via the in-kernel TPU PRNG,
        # seeded per batch tile -> no extra HBM pass over x in the wrapper.
        pltpu.prng_seed(seed_ref[0] + pl.program_id(0))
        noise = pltpu.stateful_normal(x.shape, f32)
        x = x.astype(f32) + jnp.float32(sigma) * noise

    # ----- Encoder -----
    h = jnp.maximum(linear(x, w_e1, b_e1), 0.0)       # relu
    h = jnp.maximum(linear(h, w_e2, b_e2), 0.0)       # relu
    z = linear(h, w_mu, b_mu)

    # ----- Decoder -----
    d = jnp.maximum(linear(z, w_d1, b_d1), 0.0)
    d = jnp.maximum(linear(d, w_d2, b_d2), 0.0)

    # One wide MXU push for all three heads: [bt, 3*n_input].
    heads = linear(d, w_heads, b_heads)
    mean_lin = heads[:, :n_input]
    disp_lin = heads[:, n_input:2 * n_input]
    pi_lin = heads[:, 2 * n_input:]

    # MeanAct: clamp(exp(.), 1e-5, 1e6)
    mean = jnp.clip(jnp.exp(mean_lin), 1e-5, 1e6)
    # DispAct: clamp(softplus(.), 1e-4, 1e4)  (numerically stable softplus)
    softplus = jnp.maximum(disp_lin, 0.0) + jnp.log1p(jnp.exp(-jnp.abs(disp_lin)))
    disp = jnp.clip(softplus, 1e-4, 1e4)
    # Sigmoid via EUP exp + approx reciprocal (keeps the divide off the VALU);
    # clip keeps the nn.Sigmoid codomain exactly.
    pi = jnp.clip(pl.reciprocal(1.0 + jnp.exp(-pi_lin), approx=True), 0.0, 1.0)

    z_ref[...] = z.astype(z_ref.dtype)
    mean_ref[...] = mean.astype(mean_ref.dtype)
    disp_ref[...] = disp.astype(disp_ref.dtype)
    pi_ref[...] = pi.astype(pi_ref.dtype)


# ------------------------------ Host wrapper ------------------------------ #
def _nbytes(shape, dtype):
    return math.prod(shape) * jnp.dtype(dtype).itemsize


def _build_ae_call(*, out_dtype, param_vals, bt, num_tiles, n_input, n_z,
                   denoise, sigma, single_buffer_weights, vmem_limit_bytes):
    kernel = functools.partial(
        _ae_kernel, n_input=n_input, denoise=denoise, sigma=sigma)

    def const_spec(arr):
        # Weight block never changes across the grid -> constant index map.
        if single_buffer_weights:
            return pl.BlockSpec(arr.shape, lambda i, s: (0, 0),
                                pipeline_mode=pl.Buffered(1))
        return pl.BlockSpec(arr.shape, lambda i, s: (0, 0))

    in_specs = [pl.BlockSpec((bt, n_input), lambda i, s: (i, 0))]
    in_specs += [const_spec(p) for p in param_vals]

    out_specs = (
        pl.BlockSpec((bt, n_z), lambda i, s: (i, 0)),
        pl.BlockSpec((bt, n_input), lambda i, s: (i, 0)),
        pl.BlockSpec((bt, n_input), lambda i, s: (i, 0)),
        pl.BlockSpec((bt, n_input), lambda i, s: (i, 0)),
    )
    B_pad = bt * num_tiles
    out_shape = (
        jax.ShapeDtypeStruct((B_pad, n_z), out_dtype),
        jax.ShapeDtypeStruct((B_pad, n_input), out_dtype),
        jax.ShapeDtypeStruct((B_pad, n_input), out_dtype),
        jax.ShapeDtypeStruct((B_pad, n_input), out_dtype),
    )

    grid_spec = pltpu.PrefetchScalarGridSpec(
        num_scalar_prefetch=1,          # seed (SMEM), also fed to every index_map
        grid=(num_tiles,),
        in_specs=in_specs,
        out_specs=out_specs,
    )

    return pl.pallas_call(
        kernel,
        grid_spec=grid_spec,
        out_shape=out_shape,
        compiler_params=pltpu.CompilerParams(
            # Batch tiles are independent -> shard across TensorCores (v7x megacore).
            dimension_semantics=("parallel",),
            vmem_limit_bytes=vmem_limit_bytes,
        ),
    )


def ae_forward(x, params, *, denoise=False, sigma=0.0, seed=0, batch_tile=128,
               out_dtype=None):
    """ZINB-AE forward: returns (z, mean, disp, pi).

    `params` holds pre-transposed weights [in, out] and [1, out] biases (see
    make_params). Pass bf16 weights for 2x MXU throughput; accumulation stays f32.
    """
    B, n_input = x.shape
    n_z = params["w_mu"].shape[1]
    out_dtype = out_dtype or x.dtype

    # Fuse the three decoder heads into one wide, lane-dense matmul.
    w_heads = jnp.concatenate(
        [params["w_mean"], params["w_disp"], params["w_pi"]], axis=1)
    b_heads = jnp.concatenate(
        [params["b_mean"], params["b_disp"], params["b_pi"]], axis=1)

    param_vals = [
        params["w_e1"], params["b_e1"], params["w_e2"], params["b_e2"],
        params["w_mu"], params["b_mu"], params["w_d1"], params["b_d1"],
        params["w_d2"], params["b_d2"], w_heads, b_heads,
    ]

    # Batch tiling: large-M tiles keep the MXU busy; pad the batch if needed.
    if B <= batch_tile:
        bt = B
    else:
        assert batch_tile % 8 == 0, "batch_tile must be a multiple of 8"
        bt = batch_tile
    pad = (-B) % bt
    x_p = x if pad == 0 else jnp.concatenate(
        [x, jnp.zeros((pad, n_input), x.dtype)], axis=0)
    num_tiles = (B + pad) // bt

    seed_arr = jnp.asarray([seed], dtype=jnp.int32)

    # Explicit VMEM budget: resident weights + double-buffered IO tiles + f32
    # activations, plus headroom.  NOTE: on v7x (64 MiB VMEM) choose batch_tile so
    # this estimate stays well under ~56 MiB.
    weight_bytes = sum(_nbytes(p.shape, p.dtype) for p in param_vals)
    io_bytes = (_nbytes((bt, n_input), x.dtype)
                + _nbytes((bt, n_z), out_dtype)
                + 3 * _nbytes((bt, n_input), out_dtype))
    act_cols = sum(int(w.shape[1]) for w in param_vals[0::2])
    act_bytes = 4 * bt * act_cols
    vmem_limit = 2 * weight_bytes + 2 * io_bytes + 2 * act_bytes + (8 << 20)
    vmem_limit = int(min(max(vmem_limit, 32 << 20), 100 << 20))

    outs = None
    for single_buf in (True, False):
        try:
            call = _build_ae_call(
                out_dtype=out_dtype, param_vals=param_vals, bt=bt,
                num_tiles=num_tiles, n_input=n_input, n_z=n_z, denoise=denoise,
                sigma=float(sigma), single_buffer_weights=single_buf,
                vmem_limit_bytes=vmem_limit)
            outs = call(seed_arr, x_p, *param_vals)
            break
        except Exception:
            # Fallback: some Pallas versions reject pipeline_mode=pl.Buffered(1);
            # retry with default (double-buffered) weight specs.
            if not single_buf:
                raise

    z, mean, disp, pi = outs
    if pad:
        z, mean, disp, pi = z[:B], mean[:B], disp[:B], pi[:B]
    return z, mean, disp, pi


# --------------------------- Parameter creation ---------------------------- #
def init_linear(key, n_in, n_out, dtype=jnp.float32):
    """PyTorch-style init: U(-1/sqrt(n_in), 1/sqrt(n_in)).

    Weight returned as [n_in, n_out] (transposed vs torch's [out, in]);
    bias as [1, n_out].
    """
    kw, kb = jax.random.split(key)
    bound = 1.0 / math.sqrt(n_in)
    w = jax.random.uniform(kw, (n_in, n_out), dtype, minval=-bound, maxval=bound)
    b = jax.random.uniform(kb, (1, n_out), dtype, minval=-bound, maxval=bound)
    return w, b


def make_params(key, n_input, n_enc_1, n_enc_2, n_z, n_dec_1, n_dec_2):
    keys = jax.random.split(key, 8)
    p = {}
    p["w_e1"], p["b_e1"] = init_linear(keys[0], n_input, n_enc_1)
    p["w_e2"], p["b_e2"] = init_linear(keys[1], n_enc_1, n_enc_2)
    p["w_mu"], p["b_mu"] = init_linear(keys[2], n_enc_2, n_z)
    p["w_d1"], p["b_d1"] = init_linear(keys[3], n_z, n_dec_1)
    p["w_d2"], p["b_d2"] = init_linear(keys[4], n_dec_1, n_dec_2)
    p["w_mean"], p["b_mean"] = init_linear(keys[5], n_dec_2, n_input)
    p["w_disp"], p["b_disp"] = init_linear(keys[6], n_dec_2, n_input)
    p["w_pi"], p["b_pi"] = init_linear(keys[7], n_dec_2, n_input)
    return p


# ------------------------------ Reference ---------------------------------- #
def ae_reference(x, p):
    hp = jax.lax.Precision.HIGHEST

    def lin(h, w, b):
        return jnp.dot(h, w, precision=hp) + b

    h1 = jax.nn.relu(lin(x, p["w_e1"], p["b_e1"]))
    h2 = jax.nn.relu(lin(h1, p["w_e2"], p["b_e2"]))
    z = lin(h2, p["w_mu"], p["b_mu"])
    d1 = jax.nn.relu(lin(z, p["w_d1"], p["b_d1"]))
    d2 = jax.nn.relu(lin(d1, p["w_d2"], p["b_d2"]))
    mean = jnp.clip(jnp.exp(lin(d2, p["w_mean"], p["b_mean"])), 1e-5, 1e6)
    disp = jnp.clip(jax.nn.softplus(lin(d2, p["w_disp"], p["b_disp"])), 1e-4, 1e4)
    pi = jax.nn.sigmoid(lin(d2, p["w_pi"], p["b_pi"]))
    return z, mean, disp, pi


# --------------------------------- Main ------------------------------------ #
if __name__ == "__main__":
    # Modest shapes; the batch is tiled at 128 rows so each grid step feeds the MXU a
    # full-height tile and the 2-step grid can shard across v7x's two TensorCores.
    B = 256
    n_input, n_enc_1, n_enc_2, n_z, n_dec_1, n_dec_2 = 256, 256, 128, 32, 128, 256

    key = jax.random.PRNGKey(0)
    k_x, k_p = jax.random.split(key)
    x = jax.random.normal(k_x, (B, n_input), dtype=jnp.float32)
    params = make_params(k_p, n_input, n_enc_1, n_enc_2, n_z, n_dec_1, n_dec_2)

    # f32 run + correctness check against a pure-JAX reference.
    z, mean, disp, pi = jax.block_until_ready(
        ae_forward(x, params, denoise=False, sigma=0.0, batch_tile=128))
    z_r, mean_r, disp_r, pi_r = ae_reference(x, params)

    def rel_err(a, b):
        return float(jnp.max(jnp.abs(a - b) / (1.0 + jnp.abs(b))))

    for name, got, want in (("z", z, z_r), ("mean", mean, mean_r),
                            ("disp", disp, disp_r), ("pi", pi, pi_r)):
        assert got.shape == want.shape, name
        err = rel_err(got, want)
        assert err < 2e-2, (name, err)

    # bf16 weights path (2x MXU throughput, half the weight VMEM) — sanity run only.
    params_bf16 = jax.tree_util.tree_map(lambda a: a.astype(jnp.bfloat16), params)
    outs_bf16 = jax.block_until_ready(
        ae_forward(x, params_bf16, denoise=False, sigma=0.0, batch_tile=128))
    for o in outs_bf16:
        assert bool(jnp.all(jnp.isfinite(o.astype(jnp.float32))))

    # TODO(synk): the denoise=True path (in-kernel pltpu.stateful_normal noise) is
    # implemented but not numerically checked here since torch.randn_like has no
    # matching RNG stream.
    print("KERNEL_OK")
</pallas_src>

<mosaic_0001>
module attributes {stable_mosaic.version = 11 : i64} {
  func.func @_ae_kernel(%arg0: i32, %arg1: memref<1xi32, #tpu.memory_space<smem>>, %arg2: memref<128x256xf32, #tpu.memory_space<vmem>>, %arg3: memref<256x256xf32, #tpu.memory_space<vmem>>, %arg4: memref<1x256xf32, #tpu.memory_space<vmem>>, %arg5: memref<256x128xf32, #tpu.memory_space<vmem>>, %arg6: memref<1x128xf32, #tpu.memory_space<vmem>>, %arg7: memref<128x32xf32, #tpu.memory_space<vmem>>, %arg8: memref<1x32xf32, #tpu.memory_space<vmem>>, %arg9: memref<32x128xf32, #tpu.memory_space<vmem>>, %arg10: memref<1x128xf32, #tpu.memory_space<vmem>>, %arg11: memref<128x256xf32, #tpu.memory_space<vmem>>, %arg12: memref<1x256xf32, #tpu.memory_space<vmem>>, %arg13: memref<256x768xf32, #tpu.memory_space<vmem>>, %arg14: memref<1x768xf32, #tpu.memory_space<vmem>>, %arg15: memref<128x32xf32, #tpu.memory_space<vmem>>, %arg16: memref<128x256xf32, #tpu.memory_space<vmem>>, %arg17: memref<128x256xf32, #tpu.memory_space<vmem>>, %arg18: memref<128x256xf32, #tpu.memory_space<vmem>>) attributes {dimension_semantics = [#tpu.dimension_semantics<parallel>], iteration_bounds = array<i64: 2>, scalar_prefetch = 1 : i64, scratch_operands = 0 : i64, tpu.core_type = #tpu.core_type<tc>, window_params = [{transform_indices = @transform_0, window_bounds = array<i64: 128, 256>}, {pipeline_mode = #tpu.pipeline_mode<synchronous>, transform_indices = @transform_1, window_bounds = array<i64: 256, 256>}, {pipeline_mode = #tpu.pipeline_mode<synchronous>, transform_indices = @transform_2, window_bounds = array<i64: 1, 256>}, {pipeline_mode = #tpu.pipeline_mode<synchronous>, transform_indices = @transform_3, window_bounds = array<i64: 256, 128>}, {pipeline_mode = #tpu.pipeline_mode<synchronous>, transform_indices = @transform_4, window_bounds = array<i64: 1, 128>}, {pipeline_mode = #tpu.pipeline_mode<synchronous>, transform_indices = @transform_5, window_bounds = array<i64: 128, 32>}, {pipeline_mode = #tpu.pipeline_mode<synchronous>, transform_indices = @transform_6, window_bounds = array<i64: 1, 32>}, {pipeline_mode = #tpu.pipeline_mode<synchronous>, transform_indices = @transform_7, window_bounds = array<i64: 32, 128>}, {pipeline_mode = #tpu.pipeline_mode<synchronous>, transform_indices = @transform_8, window_bounds = array<i64: 1, 128>}, {pipeline_mode = #tpu.pipeline_mode<synchronous>, transform_indices = @transform_9, window_bounds = array<i64: 128, 256>}, {pipeline_mode = #tpu.pipeline_mode<synchronous>, transform_indices = @transform_10, window_bounds = array<i64: 1, 256>}, {pipeline_mode = #tpu.pipeline_mode<synchronous>, transform_indices = @transform_11, window_bounds = array<i64: 256, 768>}, {pipeline_mode = #tpu.pipeline_mode<synchronous>, transform_indices = @transform_12, window_bounds = array<i64: 1, 768>}, {transform_indices = @transform_13, window_bounds = array<i64: 128, 32>}, {transform_indices = @transform_14, window_bounds = array<i64: 128, 256>}, {transform_indices = @transform_15, window_bounds = array<i64: 128, 256>}, {transform_indices = @transform_16, window_bounds = array<i64: 128, 256>}]} {
    %c0 = arith.constant 0 : index
    %c0_0 = arith.constant 0 : index
    %0 = vector.load %arg2[%c0, %c0_0] : memref<128x256xf32, #tpu.memory_space<vmem>>, vector<128x256xf32>
    %c0_1 = arith.constant 0 : index
    %c0_2 = arith.constant 0 : index
    %1 = vector.load %arg3[%c0_1, %c0_2] : memref<256x256xf32, #tpu.memory_space<vmem>>, vector<256x256xf32>
    %cst = arith.constant dense<0.000000e+00> : vector<128x256xf32>
    %2 = tpu.matmul %0, %1, %cst {dimension_numbers = #tpu.dot_dimension_numbers<[1], [0], [0], [1], [0, 0, 1, 1], [], []>} : vector<128x256xf32>, vector<256x256xf32>, vector<128x256xf32> -> vector<128x256xf32>
    %c0_3 = arith.constant 0 : index
    %c0_4 = arith.constant 0 : index
    %3 = vector.load %arg4[%c0_3, %c0_4] : memref<1x256xf32, #tpu.memory_space<vmem>>, vector<1x256xf32>
    %4 = vector.broadcast %3 : vector<1x256xf32> to vector<128x256xf32>
    %5 = arith.addf %2, %4 : vector<128x256xf32>
    %cst_5 = arith.constant 0.000000e+00 : f32
    %6 = vector.broadcast %cst_5 : f32 to vector<128x256xf32>
    %7 = arith.maximumf %5, %6 : vector<128x256xf32>
    %c0_6 = arith.constant 0 : index
    %c0_7 = arith.constant 0 : index
    %8 = vector.load %arg5[%c0_6, %c0_7] : memref<256x128xf32, #tpu.memory_space<vmem>>, vector<256x128xf32>
    %cst_8 = arith.constant dense<0.000000e+00> : vector<128x128xf32>
    %9 = tpu.matmul %7, %8, %cst_8 {dimension_numbers = #tpu.dot_dimension_numbers<[1], [0], [0], [1], [0, 0, 1, 1], [], []>} : vector<128x256xf32>, vector<256x128xf32>, vector<128x128xf32> -> vector<128x128xf32>
    %c0_9 = arith.constant 0 : index
    %c0_10 = arith.constant 0 : index
    %10 = vector.load %arg6[%c0_9, %c0_10] : memref<1x128xf32, #tpu.memory_space<vmem>>, vector<1x128xf32>
    %11 = vector.broadcast %10 : vector<1x128xf32> to vector<128x128xf32>
    %12 = arith.addf %9, %11 : vector<128x128xf32>
    %cst_11 = arith.constant 0.000000e+00 : f32
    %13 = vector.broadcast %cst_11 : f32 to vector<128x128xf32>
    %14 = arith.maximumf %12, %13 : vector<128x128xf32>
    %c0_12 = arith.constant 0 : index
    %c0_13 = arith.constant 0 : index
    %15 = vector.load %arg7[%c0_12, %c0_13] : memref<128x32xf32, #tpu.memory_space<vmem>>, vector<128x32xf32>
    %cst_14 = arith.constant dense<0.000000e+00> : vector<128x32xf32>
    %16 = tpu.matmul %14, %15, %cst_14 {dimension_numbers = #tpu.dot_dimension_numbers<[1], [0], [0], [1], [0, 0, 1, 1], [], []>} : vector<128x128xf32>, vector<128x32xf32>, vector<128x32xf32> -> vector<128x32xf32>
    %c0_15 = arith.constant 0 : index
    %c0_16 = arith.constant 0 : index
    %17 = vector.load %arg8[%c0_15, %c0_16] : memref<1x32xf32, #tpu.memory_space<vmem>>, vector<1x32xf32>
    %18 = vector.broadcast %17 : vector<1x32xf32> to vector<128x32xf32>
    %19 = arith.addf %16, %18 : vector<128x32xf32>
    %c0_17 = arith.constant 0 : index
    %c0_18 = arith.constant 0 : index
    %20 = vector.load %arg9[%c0_17, %c0_18] : memref<32x128xf32, #tpu.memory_space<vmem>>, vector<32x128xf32>
    %cst_19 = arith.constant dense<0.000000e+00> : vector<128x128xf32>
    %21 = tpu.matmul %19, %20, %cst_19 {dimension_numbers = #tpu.dot_dimension_numbers<[1], [0], [0], [1], [0, 0, 1, 1], [], []>} : vector<128x32xf32>, vector<32x128xf32>, vector<128x128xf32> -> vector<128x128xf32>
    %c0_20 = arith.constant 0 : index
    %c0_21 = arith.constant 0 : index
    %22 = vector.load %arg10[%c0_20, %c0_21] : memref<1x128xf32, #tpu.memory_space<vmem>>, vector<1x128xf32>
    %23 = vector.broadcast %22 : vector<1x128xf32> to vector<128x128xf32>
    %24 = arith.addf %21, %23 : vector<128x128xf32>
    %cst_22 = arith.constant 0.000000e+00 : f32
    %25 = vector.broadcast %cst_22 : f32 to vector<128x128xf32>
    %26 = arith.maximumf %24, %25 : vector<128x128xf32>
    %c0_23 = arith.constant 0 : index
    %c0_24 = arith.constant 0 : index
    %27 = vector.load %arg11[%c0_23, %c0_24] : memref<128x256xf32, #tpu.memory_space<vmem>>, vector<128x256xf32>
    %cst_25 = arith.constant dense<0.000000e+00> : vector<128x256xf32>
    %28 = tpu.matmul %26, %27, %cst_25 {dimension_numbers = #tpu.dot_dimension_numbers<[1], [0], [0], [1], [0, 0, 1, 1], [], []>} : vector<128x128xf32>, vector<128x256xf32>, vector<128x256xf32> -> vector<128x256xf32>
    %c0_26 = arith.constant 0 : index
    %c0_27 = arith.constant 0 : index
    %29 = vector.load %arg12[%c0_26, %c0_27] : memref<1x256xf32, #tpu.memory_space<vmem>>, vector<1x256xf32>
    %30 = vector.broadcast %29 : vector<1x256xf32> to vector<128x256xf32>
    %31 = arith.addf %28, %30 : vector<128x256xf32>
    %cst_28 = arith.constant 0.000000e+00 : f32
    %32 = vector.broadcast %cst_28 : f32 to vector<128x256xf32>
    %33 = arith.maximumf %31, %32 : vector<128x256xf32>
    %c0_29 = arith.constant 0 : index
    %c0_30 = arith.constant 0 : index
    %34 = vector.load %arg13[%c0_29, %c0_30] : memref<256x768xf32, #tpu.memory_space<vmem>>, vector<256x768xf32>
    %cst_31 = arith.constant dense<0.000000e+00> : vector<128x768xf32>
    %35 = tpu.matmul %33, %34, %cst_31 {dimension_numbers = #tpu.dot_dimension_numbers<[1], [0], [0], [1], [0, 0, 1, 1], [], []>} : vector<128x256xf32>, vector<256x768xf32>, vector<128x768xf32> -> vector<128x768xf32>
    %c0_32 = arith.constant 0 : index
    %c0_33 = arith.constant 0 : index
    %36 = vector.load %arg14[%c0_32, %c0_33] : memref<1x768xf32, #tpu.memory_space<vmem>>, vector<1x768xf32>
    %37 = vector.broadcast %36 : vector<1x768xf32> to vector<128x768xf32>
    %38 = arith.addf %35, %37 : vector<128x768xf32>
    %39 = vector.extract_strided_slice %38 {offsets = [0, 0], sizes = [128, 256], strides = [1, 1]} : vector<128x768xf32> to vector<128x256xf32>
    %40 = vector.extract_strided_slice %38 {offsets = [0, 256], sizes = [128, 256], strides = [1, 1]} : vector<128x768xf32> to vector<128x256xf32>
    %41 = vector.extract_strided_slice %38 {offsets = [0, 512], sizes = [128, 256], strides = [1, 1]} : vector<128x768xf32> to vector<128x256xf32>
    %42 = math.exp %39 : vector<128x256xf32>
    %cst_34 = arith.constant 9.99999974E-6 : f32
    %cst_35 = arith.constant 1.000000e+06 : f32
    %43 = vector.broadcast %cst_34 : f32 to vector<128x256xf32>
    %44 = arith.maximumf %43, %42 : vector<128x256xf32>
    %45 = vector.broadcast %cst_35 : f32 to vector<128x256xf32>
    %46 = arith.minimumf %45, %44 : vector<128x256xf32>
    %cst_36 = arith.constant 0.000000e+00 : f32
    %47 = vector.broadcast %cst_36 : f32 to vector<128x256xf32>
    %48 = arith.maximumf %40, %47 : vector<128x256xf32>
    %49 = math.absf %40 : vector<128x256xf32>
    %cst_37 = arith.constant 0.000000e+00 : f32
    %50 = vector.broadcast %cst_37 : f32 to vector<128x256xf32>
    %51 = arith.subf %50, %49 : vector<128x256xf32>
    %52 = math.exp %51 : vector<128x256xf32>
    %53 = math.log1p %52 : vector<128x256xf32>
    %54 = arith.addf %48, %53 : vector<128x256xf32>
    %cst_38 = arith.constant 9.99999974E-5 : f32
    %cst_39 = arith.constant 1.000000e+04 : f32
    %55 = vector.broadcast %cst_38 : f32 to vector<128x256xf32>
    %56 = arith.maximumf %55, %54 : vector<128x256xf32>
    %57 = vector.broadcast %cst_39 : f32 to vector<128x256xf32>
    %58 = arith.minimumf %57, %56 : vector<128x256xf32>
    %cst_40 = arith.constant 0.000000e+00 : f32
    %59 = vector.broadcast %cst_40 : f32 to vector<128x256xf32>
    %60 = arith.subf %59, %41 : vector<128x256xf32>
    %61 = math.exp %60 : vector<128x256xf32>
    %cst_41 = arith.constant 1.000000e+00 : f32
    %62 = vector.broadcast %cst_41 : f32 to vector<128x256xf32>
    %63 = arith.addf %62, %61 : vector<128x256xf32>
    %64 = tpu.reciprocal %63 {approx = true} : vector<128x256xf32> -> vector<128x256xf32>
    %cst_42 = arith.constant 0.000000e+00 : f32
    %cst_43 = arith.constant 1.000000e+00 : f32
    %65 = vector.broadcast %cst_42 : f32 to vector<128x256xf32>
    %66 = arith.maximumf %65, %64 : vector<128x256xf32>
    %67 = vector.broadcast %cst_43 : f32 to vector<128x256xf32>
    %68 = arith.minimumf %67, %66 : vector<128x256xf32>
    %c0_44 = arith.constant 0 : index
    %c0_45 = arith.constant 0 : index
    %69 = vector.load %arg15[%c0_44, %c0_45] : memref<128x32xf32, #tpu.memory_space<vmem>>, vector<128x32xf32>
    tpu.vector_store %arg15[%c0_44, %c0_45], %19 {strides = array<i32>} : memref<128x32xf32, #tpu.memory_space<vmem>>, vector<128x32xf32>,
    %c0_46 = arith.constant 0 : index
    %c0_47 = arith.constant 0 : index
    %70 = vector.load %arg16[%c0_46, %c0_47] : memref<128x256xf32, #tpu.memory_space<vmem>>, vector<128x256xf32>
    tpu.vector_store %arg16[%c0_46, %c0_47], %46 {strides = array<i32>} : memref<128x256xf32, #tpu.memory_space<vmem>>, vector<128x256xf32>,
    %c0_48 = arith.constant 0 : index
    %c0_49 = arith.constant 0 : index
    %71 = vector.load %arg17[%c0_48, %c0_49] : memref<128x256xf32, #tpu.memory_space<vmem>>, vector<128x256xf32>
    tpu.vector_store %arg17[%c0_48, %c0_49], %58 {strides = array<i32>} : memref<128x256xf32, #tpu.memory_space<vmem>>, vector<128x256xf32>,
    %c0_50 = arith.constant 0 : index
    %c0_51 = arith.constant 0 : index
    %72 = vector.load %arg18[%c0_50, %c0_51] : memref<128x256xf32, #tpu.memory_space<vmem>>, vector<128x256xf32>
    tpu.vector_store %arg18[%c0_50, %c0_51], %68 {strides = array<i32>} : memref<128x256xf32, #tpu.memory_space<vmem>>, vector<128x256xf32>,
    return
  }
  func.func @transform_0(%arg0: i32, %arg1: memref<1xi32, #tpu.memory_space<smem>>) -> (i32, i32) {
    %c0_i32 = arith.constant 0 : i32
    %c0_i32_0 = arith.constant 0 : i32
    return %arg0, %c0_i32 : i32, i32
  }
  func.func @transform_1(%arg0: i32, %arg1: memref<1xi32, #tpu.memory_space<smem>>) -> (i32, i32) {
    %c0_i32 = arith.constant 0 : i32
    %c0_i32_0 = arith.constant 0 : i32
    %c0_i32_1 = arith.constant 0 : i32
    return %c0_i32, %c0_i32_0 : i32, i32
  }
  func.func @transform_2(%arg0: i32, %arg1: memref<1xi32, #tpu.memory_space<smem>>) -> (i32, i32) {
    %c0_i32 = arith.constant 0 : i32
    %c0_i32_0 = arith.constant 0 : i32
    %c0_i32_1 = arith.constant 0 : i32
    return %c0_i32, %c0_i32_0 : i32, i32
  }
  func.func @transform_3(%arg0: i32, %arg1: memref<1xi32, #tpu.memory_space<smem>>) -> (i32, i32) {
    %c0_i32 = arith.constant 0 : i32
    %c0_i32_0 = arith.constant 0 : i32
    %c0_i32_1 = arith.constant 0 : i32
    return %c0_i32, %c0_i32_0 : i32, i32
  }
  func.func @transform_4(%arg0: i32, %arg1: memref<1xi32, #tpu.memory_space<smem>>) -> (i32, i32) {
    %c0_i32 = arith.constant 0 : i32
    %c0_i32_0 = arith.constant 0 : i32
    %c0_i32_1 = arith.constant 0 : i32
    return %c0_i32, %c0_i32_0 : i32, i32
  }
  func.func @transform_5(%arg0: i32, %arg1: memref<1xi32, #tpu.memory_space<smem>>) -> (i32, i32) {
    %c0_i32 = arith.constant 0 : i32
    %c0_i32_0 = arith.constant 0 : i32
    %c0_i32_1 = arith.constant 0 : i32
    return %c0_i32, %c0_i32_0 : i32, i32
  }
  func.func @transform_6(%arg0: i32, %arg1: memref<1xi32, #tpu.memory_space<smem>>) -> (i32, i32) {
    %c0_i32 = arith.constant 0 : i32
    %c0_i32_0 = arith.constant 0 : i32
    %c0_i32_1 = arith.constant 0 : i32
    return %c0_i32, %c0_i32_0 : i32, i32
  }
  func.func @transform_7(%arg0: i32, %arg1: memref<1xi32, #tpu.memory_space<smem>>) -> (i32, i32) {
    %c0_i32 = arith.constant 0 : i32
    %c0_i32_0 = arith.constant 0 : i32
    %c0_i32_1 = arith.constant 0 : i32
    return %c0_i32, %c0_i32_0 : i32, i32
  }
  func.func @transform_8(%arg0: i32, %arg1: memref<1xi32, #tpu.memory_space<smem>>) -> (i32, i32) {
    %c0_i32 = arith.constant 0 : i32
    %c0_i32_0 = arith.constant 0 : i32
    %c0_i32_1 = arith.constant 0 : i32
    return %c0_i32, %c0_i32_0 : i32, i32
  }
  func.func @transform_9(%arg0: i32, %arg1: memref<1xi32, #tpu.memory_space<smem>>) -> (i32, i32) {
    %c0_i32 = arith.constant 0 : i32
    %c0_i32_0 = arith.constant 0 : i32
    %c0_i32_1 = arith.constant 0 : i32
    return %c0_i32, %c0_i32_0 : i32, i32
  }
  func.func @transform_10(%arg0: i32, %arg1: memref<1xi32, #tpu.memory_space<smem>>) -> (i32, i32) {
    %c0_i32 = arith.constant 0 : i32
    %c0_i32_0 = arith.constant 0 : i32
    %c0_i32_1 = arith.constant 0 : i32
    return %c0_i32, %c0_i32_0 : i32, i32
  }
  func.func @transform_11(%arg0: i32, %arg1: memref<1xi32, #tpu.memory_space<smem>>) -> (i32, i32) {
    %c0_i32 = arith.constant 0 : i32
    %c0_i32_0 = arith.constant 0 : i32
    %c0_i32_1 = arith.constant 0 : i32
    return %c0_i32, %c0_i32_0 : i32, i32
  }
  func.func @transform_12(%arg0: i32, %arg1: memref<1xi32, #tpu.memory_space<smem>>) -> (i32, i32) {
    %c0_i32 = arith.constant 0 : i32
    %c0_i32_0 = arith.constant 0 : i32
    %c0_i32_1 = arith.constant 0 : i32
    return %c0_i32, %c0_i32_0 : i32, i32
  }
  func.func @transform_13(%arg0: i32, %arg1: memref<1xi32, #tpu.memory_space<smem>>) -> (i32, i32) {
    %c0_i32 = arith.constant 0 : i32
    %c0_i32_0 = arith.constant 0 : i32
    return %arg0, %c0_i32 : i32, i32
  }
  func.func @transform_14(%arg0: i32, %arg1: memref<1xi32, #tpu.memory_space<smem>>) -> (i32, i32) {
    %c0_i32 = arith.constant 0 : i32
    %c0_i32_0 = arith.constant 0 : i32
    return %arg0, %c0_i32 : i32, i32
  }
  func.func @transform_15(%arg0: i32, %arg1: memref<1xi32, #tpu.memory_space<smem>>) -> (i32, i32) {
    %c0_i32 = arith.constant 0 : i32
    %c0_i32_0 = arith.constant 0 : i32
    return %arg0, %c0_i32 : i32, i32
  }
  func.func @transform_16(%arg0: i32, %arg1: memref<1xi32, #tpu.memory_space<smem>>) -> (i32, i32) {
    %c0_i32 = arith.constant 0 : i32
    %c0_i32_0 = arith.constant 0 : i32
    return %arg0, %c0_i32 : i32, i32
  }
}

module attributes {stable_mosaic.version = 11 : i64} {
  func.func @_ae_kernel(%arg0: i32, %arg1: memref<1xi32, #tpu.memory_space<smem>>, %arg2: memref<128x256xf32, #tpu.memory_space<vmem>>, %arg3: memref<256x256xf32, #tpu.memory_space<vmem>>, %arg4: memref<1x256xf32, #tpu.memory_space<vmem>>, %arg5: memref<256x128xf32, #tpu.memory_space<vmem>>, %arg6: memref<1x128xf32, #tpu.memory_space<vmem>>, %arg7: memref<128x32xf32, #tpu.memory_space<vmem>>, %arg8: memref<1x32xf32, #tpu.memory_space<vmem>>, %arg9: memref<32x128xf32, #tpu.memory_space<vmem>>, %arg10: memref<1x128xf32, #tpu.memory_space<vmem>>, %arg11: memref<128x256xf32, #tpu.memory_space<vmem>>, %arg12: memref<1x256xf32, #tpu.memory_space<vmem>>, %arg13: memref<256x768xf32, #tpu.memory_space<vmem>>, %arg14: memref<1x768xf32, #tpu.memory_space<vmem>>, %arg15: memref<128x32xf32, #tpu.memory_space<vmem>>, %arg16: memref<128x256xf32, #tpu.memory_space<vmem>>, %arg17: memref<128x256xf32, #tpu.memory_space<vmem>>, %arg18: memref<128x256xf32, #tpu.memory_space<vmem>>) attributes {dimension_semantics = [#tpu.dimension_semantics<parallel>], iteration_bounds = array<i64: 2>, scalar_prefetch = 1 : i64, scratch_operands = 0 : i64, tpu.core_type = #tpu.core_type<tc>, window_params = [{transform_indices = @transform_0, window_bounds = array<i64: 128, 256>}, {pipeline_mode = #tpu.pipeline_mode<synchronous>, transform_indices = @transform_1, window_bounds = array<i64: 256, 256>}, {pipeline_mode = #tpu.pipeline_mode<synchronous>, transform_indices = @transform_2, window_bounds = array<i64: 1, 256>}, {pipeline_mode = #tpu.pipeline_mode<synchronous>, transform_indices = @transform_3, window_bounds = array<i64: 256, 128>}, {pipeline_mode = #tpu.pipeline_mode<synchronous>, transform_indices = @transform_4, window_bounds = array<i64: 1, 128>}, {pipeline_mode = #tpu.pipeline_mode<synchronous>, transform_indices = @transform_5, window_bounds = array<i64: 128, 32>}, {pipeline_mode = #tpu.pipeline_mode<synchronous>, transform_indices = @transform_6, window_bounds = array<i64: 1, 32>}, {pipeline_mode = #tpu.pipeline_mode<synchronous>, transform_indices = @transform_7, window_bounds = array<i64: 32, 128>}, {pipeline_mode = #tpu.pipeline_mode<synchronous>, transform_indices = @transform_8, window_bounds = array<i64: 1, 128>}, {pipeline_mode = #tpu.pipeline_mode<synchronous>, transform_indices = @transform_9, window_bounds = array<i64: 128, 256>}, {pipeline_mode = #tpu.pipeline_mode<synchronous>, transform_indices = @transform_10, window_bounds = array<i64: 1, 256>}, {pipeline_mode = #tpu.pipeline_mode<synchronous>, transform_indices = @transform_11, window_bounds = array<i64: 256, 768>}, {pipeline_mode = #tpu.pipeline_mode<synchronous>, transform_indices = @transform_12, window_bounds = array<i64: 1, 768>}, {transform_indices = @transform_13, window_bounds = array<i64: 128, 32>}, {transform_indices = @transform_14, window_bounds = array<i64: 128, 256>}, {transform_indices = @transform_15, window_bounds = array<i64: 128, 256>}, {transform_indices = @transform_16, window_bounds = array<i64: 128, 256>}]} {
    %c0 = arith.constant 0 : index
    %c0_0 = arith.constant 0 : index
    %0 = vector.load %arg2[%c0, %c0_0] : memref<128x256xf32, #tpu.memory_space<vmem>>, vector<128x256xf32>
    %c0_1 = arith.constant 0 : index
    %c0_2 = arith.constant 0 : index
    %1 = vector.load %arg3[%c0_1, %c0_2] : memref<256x256xf32, #tpu.memory_space<vmem>>, vector<256x256xf32>
    %cst = arith.constant dense<0.000000e+00> : vector<128x256xf32>
    %2 = tpu.matmul %0, %1, %cst {dimension_numbers = #tpu.dot_dimension_numbers<[1], [0], [0], [1], [0, 0, 1, 1], [], []>} : vector<128x256xf32>, vector<256x256xf32>, vector<128x256xf32> -> vector<128x256xf32>
    %c0_3 = arith.constant 0 : index
    %c0_4 = arith.constant 0 : index
    %3 = vector.load %arg4[%c0_3, %c0_4] : memref<1x256xf32, #tpu.memory_space<vmem>>, vector<1x256xf32>
    %4 = vector.broadcast %3 : vector<1x256xf32> to vector<128x256xf32>
    %5 = arith.addf %2, %4 : vector<128x256xf32>
    %cst_5 = arith.constant 0.000000e+00 : f32
    %6 = vector.broadcast %cst_5 : f32 to vector<128x256xf32>
    %7 = arith.maximumf %5, %6 : vector<128x256xf32>
    %c0_6 = arith.constant 0 : index
    %c0_7 = arith.constant 0 : index
    %8 = vector.load %arg5[%c0_6, %c0_7] : memref<256x128xf32, #tpu.memory_space<vmem>>, vector<256x128xf32>
    %cst_8 = arith.constant dense<0.000000e+00> : vector<128x128xf32>
    %9 = tpu.matmul %7, %8, %cst_8 {dimension_numbers = #tpu.dot_dimension_numbers<[1], [0], [0], [1], [0, 0, 1, 1], [], []>} : vector<128x256xf32>, vector<256x128xf32>, vector<128x128xf32> -> vector<128x128xf32>
    %c0_9 = arith.constant 0 : index
    %c0_10 = arith.constant 0 : index
    %10 = vector.load %arg6[%c0_9, %c0_10] : memref<1x128xf32, #tpu.memory_space<vmem>>, vector<1x128xf32>
    %11 = vector.broadcast %10 : vector<1x128xf32> to vector<128x128xf32>
    %12 = arith.addf %9, %11 : vector<128x128xf32>
    %cst_11 = arith.constant 0.000000e+00 : f32
    %13 = vector.broadcast %cst_11 : f32 to vector<128x128xf32>
    %14 = arith.maximumf %12, %13 : vector<128x128xf32>
    %c0_12 = arith.constant 0 : index
    %c0_13 = arith.constant 0 : index
    %15 = vector.load %arg7[%c0_12, %c0_13] : memref<128x32xf32, #tpu.memory_space<vmem>>, vector<128x32xf32>
    %cst_14 = arith.constant dense<0.000000e+00> : vector<128x32xf32>
    %16 = tpu.matmul %14, %15, %cst_14 {dimension_numbers = #tpu.dot_dimension_numbers<[1], [0], [0], [1], [0, 0, 1, 1], [], []>} : vector<128x128xf32>, vector<128x32xf32>, vector<128x32xf32> -> vector<128x32xf32>
    %c0_15 = arith.constant 0 : index
    %c0_16 = arith.constant 0 : index
    %17 = vector.load %arg8[%c0_15, %c0_16] : memref<1x32xf32, #tpu.memory_space<vmem>>, vector<1x32xf32>
    %18 = vector.broadcast %17 : vector<1x32xf32> to vector<128x32xf32>
    %19 = arith.addf %16, %18 : vector<128x32xf32>
    %c0_17 = arith.constant 0 : index
    %c0_18 = arith.constant 0 : index
    %20 = vector.load %arg9[%c0_17, %c0_18] : memref<32x128xf32, #tpu.memory_space<vmem>>, vector<32x128xf32>
    %cst_19 = arith.constant dense<0.000000e+00> : vector<128x128xf32>
    %21 = tpu.matmul %19, %20, %cst_19 {dimension_numbers = #tpu.dot_dimension_numbers<[1], [0], [0], [1], [0, 0, 1, 1], [], []>} : vector<128x32xf32>, vector<32x128xf32>, vector<128x128xf32> -> vector<128x128xf32>
    %c0_20 = arith.constant 0 : index
    %c0_21 = arith.constant 0 : index
    %22 = vector.load %arg10[%c0_20, %c0_21] : memref<1x128xf32, #tpu.memory_space<vmem>>, vector<1x128xf32>
    %23 = vector.broadcast %22 : vector<1x128xf32> to vector<128x128xf32>
    %24 = arith.addf %21, %23 : vector<128x128xf32>
    %cst_22 = arith.constant 0.000000e+00 : f32
    %25 = vector.broadcast %cst_22 : f32 to vector<128x128xf32>
    %26 = arith.maximumf %24, %25 : vector<128x128xf32>
    %c0_23 = arith.constant 0 : index
    %c0_24 = arith.constant 0 : index
    %27 = vector.load %arg11[%c0_23, %c0_24] : memref<128x256xf32, #tpu.memory_space<vmem>>, vector<128x256xf32>
    %cst_25 = arith.constant dense<0.000000e+00> : vector<128x256xf32>
    %28 = tpu.matmul %26, %27, %cst_25 {dimension_numbers = #tpu.dot_dimension_numbers<[1], [0], [0], [1], [0, 0, 1, 1], [], []>} : vector<128x128xf32>, vector<128x256xf32>, vector<128x256xf32> -> vector<128x256xf32>
    %c0_26 = arith.constant 0 : index
    %c0_27 = arith.constant 0 : index
    %29 = vector.load %arg12[%c0_26, %c0_27] : memref<1x256xf32, #tpu.memory_space<vmem>>, vector<1x256xf32>
    %30 = vector.broadcast %29 : vector<1x256xf32> to vector<128x256xf32>
    %31 = arith.addf %28, %30 : vector<128x256xf32>
    %cst_28 = arith.constant 0.000000e+00 : f32
    %32 = vector.broadcast %cst_28 : f32 to vector<128x256xf32>
    %33 = arith.maximumf %31, %32 : vector<128x256xf32>
    %c0_29 = arith.constant 0 : index
    %c0_30 = arith.constant 0 : index
    %34 = vector.load %arg13[%c0_29, %c0_30] : memref<256x768xf32, #tpu.memory_space<vmem>>, vector<256x768xf32>
    %cst_31 = arith.constant dense<0.000000e+00> : vector<128x768xf32>
    %35 = tpu.matmul %33, %34, %cst_31 {dimension_numbers = #tpu.dot_dimension_numbers<[1], [0], [0], [1], [0, 0, 1, 1], [], []>} : vector<128x256xf32>, vector<256x768xf32>, vector<128x768xf32> -> vector<128x768xf32>
    %c0_32 = arith.constant 0 : index
    %c0_33 = arith.constant 0 : index
    %36 = vector.load %arg14[%c0_32, %c0_33] : memref<1x768xf32, #tpu.memory_space<vmem>>, vector<1x768xf32>
    %37 = vector.broadcast %36 : vector<1x768xf32> to vector<128x768xf32>
    %38 = arith.addf %35, %37 : vector<128x768xf32>
    %39 = vector.extract_strided_slice %38 {offsets = [0, 0], sizes = [128, 256], strides = [1, 1]} : vector<128x768xf32> to vector<128x256xf32>
    %40 = vector.extract_strided_slice %38 {offsets = [0, 256], sizes = [128, 256], strides = [1, 1]} : vector<128x768xf32> to vector<128x256xf32>
    %41 = vector.extract_strided_slice %38 {offsets = [0, 512], sizes = [128, 256], strides = [1, 1]} : vector<128x768xf32> to vector<128x256xf32>
    %42 = math.exp %39 : vector<128x256xf32>
    %cst_34 = arith.constant 9.99999974E-6 : f32
    %cst_35 = arith.constant 1.000000e+06 : f32
    %43 = vector.broadcast %cst_34 : f32 to vector<128x256xf32>
    %44 = arith.maximumf %43, %42 : vector<128x256xf32>
    %45 = vector.broadcast %cst_35 : f32 to vector<128x256xf32>
    %46 = arith.minimumf %45, %44 : vector<128x256xf32>
    %cst_36 = arith.constant 0.000000e+00 : f32
    %47 = vector.broadcast %cst_36 : f32 to vector<128x256xf32>
    %48 = arith.maximumf %40, %47 : vector<128x256xf32>
    %49 = math.absf %40 : vector<128x256xf32>
    %cst_37 = arith.constant 0.000000e+00 : f32
    %50 = vector.broadcast %cst_37 : f32 to vector<128x256xf32>
    %51 = arith.subf %50, %49 : vector<128x256xf32>
    %52 = math.exp %51 : vector<128x256xf32>
    %53 = math.log1p %52 : vector<128x256xf32>
    %54 = arith.addf %48, %53 : vector<128x256xf32>
    %cst_38 = arith.constant 9.99999974E-5 : f32
    %cst_39 = arith.constant 1.000000e+04 : f32
    %55 = vector.broadcast %cst_38 : f32 to vector<128x256xf32>
    %56 = arith.maximumf %55, %54 : vector<128x256xf32>
    %57 = vector.broadcast %cst_39 : f32 to vector<128x256xf32>
    %58 = arith.minimumf %57, %56 : vector<128x256xf32>
    %cst_40 = arith.constant 0.000000e+00 : f32
    %59 = vector.broadcast %cst_40 : f32 to vector<128x256xf32>
    %60 = arith.subf %59, %41 : vector<128x256xf32>
    %61 = math.exp %60 : vector<128x256xf32>
    %cst_41 = arith.constant 1.000000e+00 : f32
    %62 = vector.broadcast %cst_41 : f32 to vector<128x256xf32>
    %63 = arith.addf %62, %61 : vector<128x256xf32>
    %64 = tpu.reciprocal %63 {approx = true} : vector<128x256xf32> -> vector<128x256xf32>
    %cst_42 = arith.constant 0.000000e+00 : f32
    %cst_43 = arith.constant 1.000000e+00 : f32
    %65 = vector.broadcast %cst_42 : f32 to vector<128x256xf32>
    %66 = arith.maximumf %65, %64 : vector<128x256xf32>
    %67 = vector.broadcast %cst_43 : f32 to vector<128x256xf32>
    %68 = arith.minimumf %67, %66 : vector<128x256xf32>
    %c0_44 = arith.constant 0 : index
    %c0_45 = arith.constant 0 : index
    %69 = vector.load %arg15[%c0_44, %c0_45] : memref<128x32xf32, #tpu.memory_space<vmem>>, vector<128x32xf32>
    tpu.vector_store %arg15[%c0_44, %c0_45], %19 {strides = array<i32>} : memref<128x32xf32, #tpu.memory_space<vmem>>, vector<128x32xf32>,
    %c0_46 = arith.constant 0 : index
    %c0_47 = arith.constant 0 : index
    %70 = vector.load %arg16[%c0_46, %c0_47] : memref<128x256xf32, #tpu.memory_space<vmem>>, vector<128x256xf32>
    tpu.vector_store %arg16[%c0_46, %c0_47], %46 {strides = array<i32>} : memref<128x256xf32, #tpu.memory_space<vmem>>, vector<128x256xf32>,
    %c0_48 = arith.constant 0 : index
    %c0_49 = arith.constant 0 : index
    %71 = vector.load %arg17[%c0_48, %c0_49] : memref<128x256xf32, #tpu.memory_space<vmem>>, vector<128x256xf32>
    tpu.vector_store %arg17[%c0_48, %c0_49], %58 {strides = array<i32>} : memref<128x256xf32, #tpu.memory_space<vmem>>, vector<128x256xf32>,
    %c0_50 = arith.constant 0 : index
    %c0_51 = arith.constant 0 : index
    %72 = vector.load %arg18[%c0_50, %c0_51] : memref<128x256xf32, #tpu.memory_space<vmem>>, vector<128x256xf32>
    tpu.vector_store %arg18[%c0_50, %c0_51], %68 {strides = array<i32>} : memref<128x256xf32, #tpu.memory_space<vmem>>, vector<128x256xf32>,
    return
  }
  func.func @transform_0(%arg0: i32, %arg1: memref<1xi32, #tpu.memory_space<smem>>) -> (i32, i32) {
    %c0_i32 = arith.constant 0 : i32
    %c0_i32_0 = arith.constant 0 : i32
    return %arg0, %c0_i32 : i32, i32
  }
  func.func @transform_1(%arg0: i32, %arg1: memref<1xi32, #tpu.memory_space<smem>>) -> (i32, i32) {
    %c0_i32 = arith.constant 0 : i32
    %c0_i32_0 = arith.constant 0 : i32
    %c0_i32_1 = arith.constant 0 : i32
    return %c0_i32, %c0_i32_0 : i32, i32
  }
  func.func @transform_2(%arg0: i32, %arg1: memref<1xi32, #tpu.memory_space<smem>>) -> (i32, i32) {
    %c0_i32 = arith.constant 0 : i32
    %c0_i32_0 = arith.constant 0 : i32
    %c0_i32_1 = arith.constant 0 : i32
    return %c0_i32, %c0_i32_0 : i32, i32
  }
  func.func @transform_3(%arg0: i32, %arg1: memref<1xi32, #tpu.memory_space<smem>>) -> (i32, i32) {
    %c0_i32 = arith.constant 0 : i32
    %c0_i32_0 = arith.constant 0 : i32
    %c0_i32_1 = arith.constant 0 : i32
    return %c0_i32, %c0_i32_0 : i32, i32
  }
  func.func @transform_4(%arg0: i32, %arg1: memref<1xi32, #tpu.memory_space<smem>>) -> (i32, i32) {
    %c0_i32 = arith.constant 0 : i32
    %c0_i32_0 = arith.constant 0 : i32
    %c0_i32_1 = arith.constant 0 : i32
    return %c0_i32, %c0_i32_0 : i32, i32
  }
  func.func @transform_5(%arg0: i32, %arg1: memref<1xi32, #tpu.memory_space<smem>>) -> (i32, i32) {
    %c0_i32 = arith.constant 0 : i32
    %c0_i32_0 = arith.constant 0 : i32
    %c0_i32_1 = arith.constant 0 : i32
    return %c0_i32, %c0_i32_0 : i32, i32
  }
  func.func @transform_6(%arg0: i32, %arg1: memref<1xi32, #tpu.memory_space<smem>>) -> (i32, i32) {
    %c0_i32 = arith.constant 0 : i32
    %c0_i32_0 = arith.constant 0 : i32
    %c0_i32_1 = arith.constant 0 : i32
    return %c0_i32, %c0_i32_0 : i32, i32
  }
  func.func @transform_7(%arg0: i32, %arg1: memref<1xi32, #tpu.memory_space<smem>>) -> (i32, i32) {
    %c0_i32 = arith.constant 0 : i32
    %c0_i32_0 = arith.constant 0 : i32
    %c0_i32_1 = arith.constant 0 : i32
    return %c0_i32, %c0_i32_0 : i32, i32
  }
  func.func @transform_8(%arg0: i32, %arg1: memref<1xi32, #tpu.memory_space<smem>>) -> (i32, i32) {
    %c0_i32 = arith.constant 0 : i32
    %c0_i32_0 = arith.constant 0 : i32
    %c0_i32_1 = arith.constant 0 : i32
    return %c0_i32, %c0_i32_0 : i32, i32
  }
  func.func @transform_9(%arg0: i32, %arg1: memref<1xi32, #tpu.memory_space<smem>>) -> (i32, i32) {
    %c0_i32 = arith.constant 0 : i32
    %c0_i32_0 = arith.constant 0 : i32
    %c0_i32_1 = arith.constant 0 : i32
    return %c0_i32, %c0_i32_0 : i32, i32
  }
  func.func @transform_10(%arg0: i32, %arg1: memref<1xi32, #tpu.memory_space<smem>>) -> (i32, i32) {
    %c0_i32 = arith.constant 0 : i32
    %c0_i32_0 = arith.constant 0 : i32
    %c0_i32_1 = arith.constant 0 : i32
    return %c0_i32, %c0_i32_0 : i32, i32
  }
  func.func @transform_11(%arg0: i32, %arg1: memref<1xi32, #tpu.memory_space<smem>>) -> (i32, i32) {
    %c0_i32 = arith.constant 0 : i32
    %c0_i32_0 = arith.constant 0 : i32
    %c0_i32_1 = arith.constant 0 : i32
    return %c0_i32, %c0_i32_0 : i32, i32
  }
  func.func @transform_12(%arg0: i32, %arg1: memref<1xi32, #tpu.memory_space<smem>>) -> (i32, i32) {
    %c0_i32 = arith.constant 0 : i32
    %c0_i32_0 = arith.constant 0 : i32
    %c0_i32_1 = arith.constant 0 : i32
    return %c0_i32, %c0_i32_0 : i32, i32
  }
  func.func @transform_13(%arg0: i32, %arg1: memref<1xi32, #tpu.memory_space<smem>>) -> (i32, i32) {
    %c0_i32 = arith.constant 0 : i32
    %c0_i32_0 = arith.constant 0 : i32
    return %arg0, %c0_i32 : i32, i32
  }
  func.func @transform_14(%arg0: i32, %arg1: memref<1xi32, #tpu.memory_space<smem>>) -> (i32, i32) {
    %c0_i32 = arith.constant 0 : i32
    %c0_i32_0 = arith.constant 0 : i32
    return %arg0, %c0_i32 : i32, i32
  }
  func.func @transform_15(%arg0: i32, %arg1: memref<1xi32, #tpu.memory_space<smem>>) -> (i32, i32) {
    %c0_i32 = arith.constant 0 : i32
    %c0_i32_0 = arith.constant 0 : i32
    return %arg0, %c0_i32 : i32, i32
  }
  func.func @transform_16(%arg0: i32, %arg1: memref<1xi32, #tpu.memory_space<smem>>) -> (i32, i32) {
    %c0_i32 = arith.constant 0 : i32
    %c0_i32_0 = arith.constant 0 : i32
    return %arg0, %c0_i32 : i32, i32
  }
}

</mosaic_0001>

<llo_original>
// kernel: tpu_custom_call.1
$region0: #{tpu_custom_call.1}
  #allocation0 [shape = 'u32[]', space=smem, size = 0x4, offset = 0x4, fixed_abs, tag = 'smem constant byte address 0x4 - core index']
  #allocation1 [shape = 'u32[144,128]{1,0:T(1,128)}', space=vmem, size = 0x12000, scoped, tag = 'internal scratch']
  #allocation2 [shape = 's32[1]{0}', space=sflag, size = 0x4, scoped, tag = 'scoped memory for tpu_custom_call.1']
  #allocation3 [shape = 's32[1]{0:T(128)S(6)}', space=smem, size = 0x200, scoped, tag = 'prefetched SMEM operand 0']
  %s0 = inlined_call_operand.<no memory space> [shape: s32[1], index: 0, kind: input, shape index: {}]
  %s1 = inlined_call_operand.hbm [shape: f32[256,256], index: 1, kind: input, shape index: {}]
  %s2 = inlined_call_operand.hbm [shape: f32[256,256], index: 2, kind: input, shape index: {}]
  %s3 = inlined_call_operand.vmem [shape: f32[1,256], index: 3, kind: input, shape index: {}]
  %s4 = inlined_call_operand.hbm [shape: f32[256,128], index: 4, kind: input, shape index: {}]
  %s5 = inlined_call_operand.vmem [shape: f32[1,128], index: 5, kind: input, shape index: {}]
  %s6 = inlined_call_operand.vmem [shape: f32[128,32], index: 6, kind: input, shape index: {}]
  %s7 = inlined_call_operand.vmem [shape: f32[1,32], index: 7, kind: input, shape index: {}]
  %s8 = inlined_call_operand.vmem [shape: f32[32,128], index: 8, kind: input, shape index: {}]
  %s9 = inlined_call_operand.vmem [shape: f32[1,128], index: 9, kind: input, shape index: {}]
  %s10 = inlined_call_operand.hbm [shape: f32[128,256], index: 10, kind: input, shape index: {}]
  %s11 = inlined_call_operand.vmem [shape: f32[1,256], index: 11, kind: input, shape index: {}]
  %s12 = inlined_call_operand.hbm [shape: f32[256,768], index: 12, kind: input, shape index: {}]
  %s13 = inlined_call_operand.vmem [shape: f32[1,768], index: 13, kind: input, shape index: {}]
  %s14 = inlined_call_operand.vmem [shape: f32[256,32], index: 14, kind: output, shape index: {0}]
  %s15 = inlined_call_operand.hbm [shape: f32[256,256], index: 15, kind: output, shape index: {1}]
  %s16 = inlined_call_operand.hbm [shape: f32[256,256], index: 16, kind: output, shape index: {2}]
  %s17 = inlined_call_operand.hbm [shape: f32[256,256], index: 17, kind: output, shape index: {3}]
  %18 = xla_tuple %s14, %s15, %s16, %s17
  %s19 = sld [smem:[#allocation0]]
  $region129: #{tpu_custom_call.1} parent=0
    _
  %s21 = ssub.s32 1, %s19
  %s22 = scalar_select 0, %s21, %s19
  %23 = sst [smem:[#allocation3]] %s0
  $region1: #{tpu_custom_call.1} parent=0
    #allocation4 [shape = 'u8[262144]{0}', space=vmem, size = 0x40000, scoped, tag = 'input window, operand 1']
    #allocation5 [shape = 's32[2]{0}', space=sflag, size = 0x8, scoped, tag = 'scoped memory for tpu_custom_call.1']
    #allocation6 [shape = 's32[2]{0}', space=sflag, size = 0x8, scoped, tag = 'scoped memory for tpu_custom_call.1']
    #allocation7 [shape = 'u8[262144]{0}', space=vmem, size = 0x40000, scoped, tag = 'input window, operand 2, single buffered']
    #allocation8 [shape = 's32[1]{0}', space=sflag, size = 0x4, scoped, tag = 'scoped memory for tpu_custom_call.1']
    #allocation9 [shape = 'u8[131072]{0}', space=vmem, size = 0x20000, scoped, tag = 'input window, operand 4, single buffered']
    #allocation10 [shape = 'u8[131072]{0}', space=vmem, size = 0x20000, scoped, tag = 'input window, operand 10, single buffered']
    #allocation11 [shape = 's32[1]{0}', space=sflag, size = 0x4, scoped, tag = 'scoped memory for tpu_custom_call.1']
    #allocation12 [shape = 'u8[786432]{0}', space=vmem, size = 0xc0000, scoped, tag = 'input window, operand 12, single buffered']
    #allocation13 [shape = 'u8[262144]{0}', space=vmem, size = 0x40000, scoped, tag = 'output window, operand 1']
    #allocation14 [shape = 'u8[262144]{0}', space=vmem, size = 0x40000, scoped, tag = 'output window, operand 2']
    #allocation15 [shape = 's32[2]{0}', space=sflag, size = 0x8, scoped, tag = 'scoped memory for tpu_custom_call.1']
    #allocation16 [shape = 'u8[262144]{0}', space=vmem, size = 0x40000, scoped, tag = 'output window, operand 3']
    %24 = vsyncpa [#allocation5], 0
    %s25 = scalar_lea.sflag [#allocation5], 1
    %26 = vsyncpa %s25, 0
    %27 = vsyncpa [#allocation8], 0
    %28 = vsyncpa [#allocation11], 0
    %29 = vsyncpa [#allocation6], 0
    %s30 = scalar_lea.sflag [#allocation6], 1
    %31 = vsyncpa %s30, 0
    %32 = vsyncpa [#allocation15], 0
    %s33 = scalar_lea.sflag [#allocation15], 1
    %34 = vsyncpa %s33, 0
    loop: start=0, step=1, limit=4
    $region2: #{tpu_custom_call.1} parent=1 // loop_pre_header
      _
    $region3: #{tpu_custom_call.1} parent=1 // loop_header
      %s36 = sphi 0, %s40
      %p37 = scmp.ge.s32.totalorder %s36, 4
      %s46 = sphi 0, %s48
      %s49 = sphi 0, %s46
      %s50 = sphi 0, %s49
      %s66 = sphi 0, %s50
      %s70 = sphi 0, %s70
      %s72 = sphi 0, %s70
      %s73 = sphi 0, %s72
      %s87 = sphi 0, %s73
      %s91 = sphi 0, %s91
      %s93 = sphi 0, %s91
      %s94 = sphi 0, %s93
      %s108 = sphi 0, %s94
      %s112 = sphi 0, %s112
      %s114 = sphi 0, %s112
      %s115 = sphi 0, %s114
      %s129 = sphi 0, %s115
      %s133 = sphi 0, %s133
      %s135 = sphi 0, %s133
      %s136 = sphi 0, %s135
      %s150 = sphi 0, %s136
      %s154 = sphi 0, %s154
      %s156 = sphi 0, %s154
      %s157 = sphi 0, %s156
      %s171 = sphi 0, %s157
      %s175 = sphi 0, %s175
      %s177 = sphi 0, %s175
      %s178 = sphi 0, %s177
      %s192 = sphi 0, %s178
      %s196 = sphi 0, %s196
      %s198 = sphi 0, %s196
      %s199 = sphi 0, %s198
      %s213 = sphi 0, %s199
      %s217 = sphi 0, %s217
      %s219 = sphi 0, %s217
      %s220 = sphi 0, %s219
      %s234 = sphi 0, %s220
      %s238 = sphi 0, %s238
      %s240 = sphi 0, %s238
      %s241 = sphi 0, %s240
      %s255 = sphi 0, %s241
      %s259 = sphi 0, %s259
      %s261 = sphi 0, %s259
      %s262 = sphi 0, %s261
      %s276 = sphi 0, %s262
      %s280 = sphi 0, %s280
      %s282 = sphi 0, %s280
      %s283 = sphi 0, %s282
      %s297 = sphi 0, %s283
      %s301 = sphi 0, %s301
      %s303 = sphi 0, %s301
      %s304 = sphi 0, %s303
      %s318 = sphi 0, %s304
      %s324 = sphi 0, %s326
      %s327 = sphi 0, %s324
      %s328 = sphi 0, %s327
      %s344 = sphi 0, %s328
      %s350 = sphi 0, %s352
      %s353 = sphi 0, %s350
      %s354 = sphi 0, %s353
      %s370 = sphi 0, %s354
      %s376 = sphi 0, %s378
      %s379 = sphi 0, %s376
      %s380 = sphi 0, %s379
      %s396 = sphi 0, %s380
      %s402 = sphi 0, %s404
      %s405 = sphi 0, %s402
      %s406 = sphi 0, %s405
      %s422 = sphi 0, %s406
    $region4: #{tpu_custom_call.1} parent=1 // loop_header_branch
      %39 = sbr.rel (%p37) target = $region8
    $region5: #{tpu_custom_call.1} parent=1 // loop_body
      %s41 = ssub.s32 %s36, 1
      %s42 = ssub.s32 %s36, 2
      %s43 = sadd.s32 %s36, 1
      %s44 = ssub.s32 %s36, %s43
      %p45 = scmp.eq.s32.totalorder %s44, 0
      %s47 = sadd.s32 %s46, 1
      %s48 = scalar_select %p45, %s46, %s47
      %p51 = pneg %p45
      %p52 = scmp.eq.s32.totalorder %s36, 1
      %p53 = por %p51, %p52
      %p54 = scmp.ne.s32.totalorder %s46, %s49
      %p55 = scmp.eq.s32.totalorder %s36, 0
      %p56 = por %p54, %p55
      %p57 = scmp.ne.s32.totalorder %s46, %s49
      %p58 = scmp.eq.s32.totalorder %s41, 1
      %p59 = por %p57, %p58
      %p60 = scmp.ne.s32.totalorder %s49, %s50
      %p61 = scmp.eq.s32.totalorder %s41, 0
      %p62 = por %p60, %p61
      %p63 = scmp.ne.s32.totalorder %s49, %s50
      %p64 = scmp.eq.s32.totalorder %s42, 1
      %p65 = por %p63, %p64
      %p67 = scmp.ne.s32.totalorder %s50, %s66
      %p68 = scmp.eq.s32.totalorder %s42, 0
      %p69 = por %p67, %p68
      %s71 = sadd.s32 %s70, 1
      %p74 = scmp.eq.s32.totalorder %s36, 1
      %p75 = scmp.ne.s32.totalorder %s70, %s72
      %p76 = scmp.eq.s32.totalorder %s36, 0
      %p77 = por %p75, %p76
      %p78 = scmp.ne.s32.totalorder %s70, %s72
      %p79 = scmp.eq.s32.totalorder %s41, 1
      %p80 = por %p78, %p79
      %p81 = scmp.ne.s32.totalorder %s72, %s73
      %p82 = scmp.eq.s32.totalorder %s41, 0
      %p83 = por %p81, %p82
      %p84 = scmp.ne.s32.totalorder %s72, %s73
      %p85 = scmp.eq.s32.totalorder %s42, 1
      %p86 = por %p84, %p85
      %p88 = scmp.ne.s32.totalorder %s73, %s87
      %p89 = scmp.eq.s32.totalorder %s42, 0
      %p90 = por %p88, %p89
      %s92 = sadd.s32 %s91, 1
      %p95 = scmp.eq.s32.totalorder %s36, 1
      %p96 = scmp.ne.s32.totalorder %s91, %s93
      %p97 = scmp.eq.s32.totalorder %s36, 0
      %p98 = por %p96, %p97
      %p99 = scmp.ne.s32.totalorder %s91, %s93
      %p100 = scmp.eq.s32.totalorder %s41, 1
      %p101 = por %p99, %p100
      %p102 = scmp.ne.s32.totalorder %s93, %s94
      %p103 = scmp.eq.s32.totalorder %s41, 0
      %p104 = por %p102, %p103
      %p105 = scmp.ne.s32.totalorder %s93, %s94
      %p106 = scmp.eq.s32.totalorder %s42, 1
      %p107 = por %p105, %p106
      %p109 = scmp.ne.s32.totalorder %s94, %s108
      %p110 = scmp.eq.s32.totalorder %s42, 0
      %p111 = por %p109, %p110
      %s113 = sadd.s32 %s112, 1
      %p116 = scmp.eq.s32.totalorder %s36, 1
      %p117 = scmp.ne.s32.totalorder %s112, %s114
      %p118 = scmp.eq.s32.totalorder %s36, 0
      %p119 = por %p117, %p118
      %p120 = scmp.ne.s32.totalorder %s112, %s114
      %p121 = scmp.eq.s32.totalorder %s41, 1
      %p122 = por %p120, %p121
      %p123 = scmp.ne.s32.totalorder %s114, %s115
      %p124 = scmp.eq.s32.totalorder %s41, 0
      %p125 = por %p123, %p124
      %p126 = scmp.ne.s32.totalorder %s114, %s115
      %p127 = scmp.eq.s32.totalorder %s42, 1
      %p128 = por %p126, %p127
      %p130 = scmp.ne.s32.totalorder %s115, %s129
      %p131 = scmp.eq.s32.totalorder %s42, 0
      %p132 = por %p130, %p131
      %s134 = sadd.s32 %s133, 1
      %p137 = scmp.eq.s32.totalorder %s36, 1
      %p138 = scmp.ne.s32.totalorder %s133, %s135
      %p139 = scmp.eq.s32.totalorder %s36, 0
      %p140 = por %p138, %p139
      %p141 = scmp.ne.s32.totalorder %s133, %s135
      %p142 = scmp.eq.s32.totalorder %s41, 1
      %p143 = por %p141, %p142
      %p144 = scmp.ne.s32.totalorder %s135, %s136
      %p145 = scmp.eq.s32.totalorder %s41, 0
      %p146 = por %p144, %p145
      %p147 = scmp.ne.s32.totalorder %s135, %s136
      %p148 = scmp.eq.s32.totalorder %s42, 1
      %p149 = por %p147, %p148
      %p151 = scmp.ne.s32.totalorder %s136, %s150
      %p152 = scmp.eq.s32.totalorder %s42, 0
      %p153 = por %p151, %p152
      %s155 = sadd.s32 %s154, 1
      %p158 = scmp.eq.s32.totalorder %s36, 1
      %p159 = scmp.ne.s32.totalorder %s154, %s156
      %p160 = scmp.eq.s32.totalorder %s36, 0
      %p161 = por %p159, %p160
      %p162 = scmp.ne.s32.totalorder %s154, %s156
      %p163 = scmp.eq.s32.totalorder %s41, 1
      %p164 = por %p162, %p163
      %p165 = scmp.ne.s32.totalorder %s156, %s157
      %p166 = scmp.eq.s32.totalorder %s41, 0
      %p167 = por %p165, %p166
      %p168 = scmp.ne.s32.totalorder %s156, %s157
      %p169 = scmp.eq.s32.totalorder %s42, 1
      %p170 = por %p168, %p169
      %p172 = scmp.ne.s32.totalorder %s157, %s171
      %p173 = scmp.eq.s32.totalorder %s42, 0
      %p174 = por %p172, %p173
      %s176 = sadd.s32 %s175, 1
      %p179 = scmp.eq.s32.totalorder %s36, 1
      %p180 = scmp.ne.s32.totalorder %s175, %s177
      %p181 = scmp.eq.s32.totalorder %s36, 0
      %p182 = por %p180, %p181
      %p183 = scmp.ne.s32.totalorder %s175, %s177
      %p184 = scmp.eq.s32.totalorder %s41, 1
      %p185 = por %p183, %p184
      %p186 = scmp.ne.s32.totalorder %s177, %s178
      %p187 = scmp.eq.s32.totalorder %s41, 0
      %p188 = por %p186, %p187
      %p189 = scmp.ne.s32.totalorder %s177, %s178
      %p190 = scmp.eq.s32.totalorder %s42, 1
      %p191 = por %p189, %p190
      %p193 = scmp.ne.s32.totalorder %s178, %s192
      %p194 = scmp.eq.s32.totalorder %s42, 0
      %p195 = por %p193, %p194
      %s197 = sadd.s32 %s196, 1
      %p200 = scmp.eq.s32.totalorder %s36, 1
      %p201 = scmp.ne.s32.totalorder %s196, %s198
      %p202 = scmp.eq.s32.totalorder %s36, 0
      %p203 = por %p201, %p202
      %p204 = scmp.ne.s32.totalorder %s196, %s198
      %p205 = scmp.eq.s32.totalorder %s41, 1
      %p206 = por %p204, %p205
      %p207 = scmp.ne.s32.totalorder %s198, %s199
      %p208 = scmp.eq.s32.totalorder %s41, 0
      %p209 = por %p207, %p208
      %p210 = scmp.ne.s32.totalorder %s198, %s199
      %p211 = scmp.eq.s32.totalorder %s42, 1
      %p212 = por %p210, %p211
      %p214 = scmp.ne.s32.totalorder %s199, %s213
      %p215 = scmp.eq.s32.totalorder %s42, 0
      %p216 = por %p214, %p215
      %s218 = sadd.s32 %s217, 1
      %p221 = scmp.eq.s32.totalorder %s36, 1
      %p222 = scmp.ne.s32.totalorder %s217, %s219
      %p223 = scmp.eq.s32.totalorder %s36, 0
      %p224 = por %p222, %p223
      %p225 = scmp.ne.s32.totalorder %s217, %s219
      %p226 = scmp.eq.s32.totalorder %s41, 1
      %p227 = por %p225, %p226
      %p228 = scmp.ne.s32.totalorder %s219, %s220
      %p229 = scmp.eq.s32.totalorder %s41, 0
      %p230 = por %p228, %p229
      %p231 = scmp.ne.s32.totalorder %s219, %s220
      %p232 = scmp.eq.s32.totalorder %s42, 1
      %p233 = por %p231, %p232
      %p235 = scmp.ne.s32.totalorder %s220, %s234
      %p236 = scmp.eq.s32.totalorder %s42, 0
      %p237 = por %p235, %p236
      %s239 = sadd.s32 %s238, 1
      %p242 = scmp.eq.s32.totalorder %s36, 1
      %p243 = scmp.ne.s32.totalorder %s238, %s240
      %p244 = scmp.eq.s32.totalorder %s36, 0
      %p245 = por %p243, %p244
      %p246 = scmp.ne.s32.totalorder %s238, %s240
      %p247 = scmp.eq.s32.totalorder %s41, 1
      %p248 = por %p246, %p247
      %p249 = scmp.ne.s32.totalorder %s240, %s241
      %p250 = scmp.eq.s32.totalorder %s41, 0
      %p251 = por %p249, %p250
      %p252 = scmp.ne.s32.totalorder %s240, %s241
      %p253 = scmp.eq.s32.totalorder %s42, 1
      %p254 = por %p252, %p253
      %p256 = scmp.ne.s32.totalorder %s241, %s255
      %p257 = scmp.eq.s32.totalorder %s42, 0
      %p258 = por %p256, %p257
      %s260 = sadd.s32 %s259, 1
      %p263 = scmp.eq.s32.totalorder %s36, 1
      %p264 = scmp.ne.s32.totalorder %s259, %s261
      %p265 = scmp.eq.s32.totalorder %s36, 0
      %p266 = por %p264, %p265
      %p267 = scmp.ne.s32.totalorder %s259, %s261
      %p268 = scmp.eq.s32.totalorder %s41, 1
      %p269 = por %p267, %p268
      %p270 = scmp.ne.s32.totalorder %s261, %s262
      %p271 = scmp.eq.s32.totalorder %s41, 0
      %p272 = por %p270, %p271
      %p273 = scmp.ne.s32.totalorder %s261, %s262
      %p274 = scmp.eq.s32.totalorder %s42, 1
      %p275 = por %p273, %p274
      %p277 = scmp.ne.s32.totalorder %s262, %s276
      %p278 = scmp.eq.s32.totalorder %s42, 0
      %p279 = por %p277, %p278
      %s281 = sadd.s32 %s280, 1
      %p284 = scmp.eq.s32.totalorder %s36, 1
      %p285 = scmp.ne.s32.totalorder %s280, %s282
      %p286 = scmp.eq.s32.totalorder %s36, 0
      %p287 = por %p285, %p286
      %p288 = scmp.ne.s32.totalorder %s280, %s282
      %p289 = scmp.eq.s32.totalorder %s41, 1
      %p290 = por %p288, %p289
      %p291 = scmp.ne.s32.totalorder %s282, %s283
      %p292 = scmp.eq.s32.totalorder %s41, 0
      %p293 = por %p291, %p292
      %p294 = scmp.ne.s32.totalorder %s282, %s283
      %p295 = scmp.eq.s32.totalorder %s42, 1
      %p296 = por %p294, %p295
      %p298 = scmp.ne.s32.totalorder %s283, %s297
      %p299 = scmp.eq.s32.totalorder %s42, 0
      %p300 = por %p298, %p299
      %s302 = sadd.s32 %s301, 1
      %p305 = scmp.eq.s32.totalorder %s36, 1
      %p306 = scmp.ne.s32.totalorder %s301, %s303
      %p307 = scmp.eq.s32.totalorder %s36, 0
      %p308 = por %p306, %p307
      %p309 = scmp.ne.s32.totalorder %s301, %s303
      %p310 = scmp.eq.s32.totalorder %s41, 1
      %p311 = por %p309, %p310
      %p312 = scmp.ne.s32.totalorder %s303, %s304
      %p313 = scmp.eq.s32.totalorder %s41, 0
      %p314 = por %p312, %p313
      %p315 = scmp.ne.s32.totalorder %s303, %s304
      %p316 = scmp.eq.s32.totalorder %s42, 1
      %p317 = por %p315, %p316
      %p319 = scmp.ne.s32.totalorder %s304, %s318
      %p320 = scmp.eq.s32.totalorder %s42, 0
      %p321 = por %p319, %p320
      %s322 = ssub.s32 %s36, %s43
      %p323 = scmp.eq.s32.totalorder %s322, 0
      %s325 = sadd.s32 %s324, 1
      %s326 = scalar_select %p323, %s324, %s325
      %p329 = pneg %p323
      %p330 = scmp.eq.s32.totalorder %s36, 1
      %p331 = por %p329, %p330
      %p332 = scmp.ne.s32.totalorder %s324, %s327
      %p333 = scmp.eq.s32.totalorder %s36, 0
      %p334 = por %p332, %p333
      %p335 = scmp.ne.s32.totalorder %s324, %s327
      %p336 = scmp.eq.s32.totalorder %s41, 1
      %p337 = por %p335, %p336
      %p338 = scmp.ne.s32.totalorder %s327, %s328
      %p339 = scmp.eq.s32.totalorder %s41, 0
      %p340 = por %p338, %p339
      %p341 = scmp.ne.s32.totalorder %s327, %s328
      %p342 = scmp.eq.s32.totalorder %s42, 1
      %p343 = por %p341, %p342
      %p345 = scmp.ne.s32.totalorder %s328, %s344
      %p346 = scmp.eq.s32.totalorder %s42, 0
      %p347 = por %p345, %p346
      %s348 = ssub.s32 %s36, %s43
      %p349 = scmp.eq.s32.totalorder %s348, 0
      %s351 = sadd.s32 %s350, 1
      %s352 = scalar_select %p349, %s350, %s351
      %p355 = pneg %p349
      %p356 = scmp.eq.s32.totalorder %s36, 1
      %p357 = por %p355, %p356
      %p358 = scmp.ne.s32.totalorder %s350, %s353
      %p359 = scmp.eq.s32.totalorder %s36, 0
      %p360 = por %p358, %p359
      %p361 = scmp.ne.s32.totalorder %s350, %s353
      %p362 = scmp.eq.s32.totalorder %s41, 1
      %p363 = por %p361, %p362
      %p364 = scmp.ne.s32.totalorder %s353, %s354
      %p365 = scmp.eq.s32.totalorder %s41, 0
      %p366 = por %p364, %p365
      %p367 = scmp.ne.s32.totalorder %s353, %s354
      %p368 = scmp.eq.s32.totalorder %s42, 1
      %p369 = por %p367, %p368
      %p371 = scmp.ne.s32.totalorder %s354, %s370
      %p372 = scmp.eq.s32.totalorder %s42, 0
      %p373 = por %p371, %p372
      %s374 = ssub.s32 %s36, %s43
      %p375 = scmp.eq.s32.totalorder %s374, 0
      %s377 = sadd.s32 %s376, 1
      %s378 = scalar_select %p375, %s376, %s377
      %p381 = pneg %p375
      %p382 = scmp.eq.s32.totalorder %s36, 1
      %p383 = por %p381, %p382
      %p384 = scmp.ne.s32.totalorder %s376, %s379
      %p385 = scmp.eq.s32.totalorder %s36, 0
      %p386 = por %p384, %p385
      %p387 = scmp.ne.s32.totalorder %s376, %s379
      %p388 = scmp.eq.s32.totalorder %s41, 1
      %p389 = por %p387, %p388
      %p390 = scmp.ne.s32.totalorder %s379, %s380
      %p391 = scmp.eq.s32.totalorder %s41, 0
      %p392 = por %p390, %p391
      %p393 = scmp.ne.s32.totalorder %s379, %s380
      %p394 = scmp.eq.s32.totalorder %s42, 1
      %p395 = por %p393, %p394
      %p397 = scmp.ne.s32.totalorder %s380, %s396
      %p398 = scmp.eq.s32.totalorder %s42, 0
      %p399 = por %p397, %p398
      %s400 = ssub.s32 %s36, %s43
      %p401 = scmp.eq.s32.totalorder %s400, 0
      %s403 = sadd.s32 %s402, 1
      %s404 = scalar_select %p401, %s402, %s403
      %p407 = pneg %p401
      %p408 = scmp.eq.s32.totalorder %s36, 1
      %p409 = por %p407, %p408
      %p410 = scmp.ne.s32.totalorder %s402, %s405
      %p411 = scmp.eq.s32.totalorder %s36, 0
      %p412 = por %p410, %p411
      %p413 = scmp.ne.s32.totalorder %s402, %s405
      %p414 = scmp.eq.s32.totalorder %s41, 1
      %p415 = por %p413, %p414
      %p416 = scmp.ne.s32.totalorder %s405, %s406
      %p417 = scmp.eq.s32.totalorder %s41, 0
      %p418 = por %p416, %p417
      %p419 = scmp.ne.s32.totalorder %s405, %s406
      %p420 = scmp.eq.s32.totalorder %s42, 1
      %p421 = por %p419, %p420
      %p423 = scmp.ne.s32.totalorder %s406, %s422
      %p424 = scmp.eq.s32.totalorder %s42, 0
      %p425 = por %p423, %p424
      %p426 = scmp.le.s32.totalorder 1, %s36
      %p427 = scmp.lt.s32.totalorder %s36, 3
      %p428 = pnand %p426, %p427
      %p429 = pneg %p428
      // Predicated region
      $region9: #{tpu_custom_call.1} parent=5 // pred_check
        _
      $region10: #{tpu_custom_call.1} parent=5 // pred_check_branch
        %431 = sbr.rel (%p428) target = $region12
      $region11: #{tpu_custom_call.1} parent=5 // pred_region
        %s432 = ssub.s32 %s36, 1
        // Predicated region
        $region13: #{tpu_custom_call.1} parent=11 // pred_check
          %p433 = pneg %p83
        $region14: #{tpu_custom_call.1} parent=11 // pred_check_branch
          %435 = sbr.rel (%p433) target = $region16
        $region15: #{tpu_custom_call.1} parent=11 // pred_region
          %s437 = ssub.s32 8192, 8192
          %438 = vsyncadd [#allocation8], %s437
          %s439 = sshll.u32 [#allocation7], 4
          %s440 = int_to_ptr.vmem [resolvable:$true] %s439
          %445 = dma.hbm_to_vmem [thread:$0]  %s2, 8192, %s440, [#allocation8], 256, 256, 16
        $region16: #{tpu_custom_call.1} parent=11 // pred_fallthru
          _
        // Predicated region
        $region17: #{tpu_custom_call.1} parent=11 // pred_check
          %p446 = pneg %p104
        $region18: #{tpu_custom_call.1} parent=11 // pred_check_branch
          %448 = sbr.rel (%p446) target = $region20
        $region19: #{tpu_custom_call.1} parent=11 // pred_region
          _
        $region20: #{tpu_custom_call.1} parent=11 // pred_fallthru
          _
        // Predicated region
        $region21: #{tpu_custom_call.1} parent=11 // pred_check
          %p449 = pneg %p125
        $region22: #{tpu_custom_call.1} parent=11 // pred_check_branch
          %451 = sbr.rel (%p449) target = $region24
        $region23: #{tpu_custom_call.1} parent=11 // pred_region
          %s453 = ssub.s32 4096, 4096
          %454 = vsyncadd [#allocation8], %s453
          %s455 = sshll.u32 [#allocation9], 4
          %s456 = int_to_ptr.vmem [resolvable:$true] %s455
          %461 = dma.hbm_to_vmem [thread:$0]  %s4, 4096, %s456, [#allocation8], 128, 128, 8
        $region24: #{tpu_custom_call.1} parent=11 // pred_fallthru
          _
        // Predicated region
        $region25: #{tpu_custom_call.1} parent=11 // pred_check
          %p462 = pneg %p146
        $region26: #{tpu_custom_call.1} parent=11 // pred_check_branch
          %464 = sbr.rel (%p462) target = $region28
        $region27: #{tpu_custom_call.1} parent=11 // pred_region
          _
        $region28: #{tpu_custom_call.1} parent=11 // pred_fallthru
          _
        // Predicated region
        $region29: #{tpu_custom_call.1} parent=11 // pred_check
          %p465 = pneg %p167
        $region30: #{tpu_custom_call.1} parent=11 // pred_check_branch
          %467 = sbr.rel (%p465) target = $region32
        $region31: #{tpu_custom_call.1} parent=11 // pred_region
          _
        $region32: #{tpu_custom_call.1} parent=11 // pred_fallthru
          _
        // Predicated region
        $region33: #{tpu_custom_call.1} parent=11 // pred_check
          %p468 = pneg %p188
        $region34: #{tpu_custom_call.1} parent=11 // pred_check_branch
          %470 = sbr.rel (%p468) target = $region36
        $region35: #{tpu_custom_call.1} parent=11 // pred_region
          _
        $region36: #{tpu_custom_call.1} parent=11 // pred_fallthru
          _
        // Predicated region
        $region37: #{tpu_custom_call.1} parent=11 // pred_check
          %p471 = pneg %p209
        $region38: #{tpu_custom_call.1} parent=11 // pred_check_branch
          %473 = sbr.rel (%p471) target = $region40
        $region39: #{tpu_custom_call.1} parent=11 // pred_region
          _
        $region40: #{tpu_custom_call.1} parent=11 // pred_fallthru
          _
        // Predicated region
        $region41: #{tpu_custom_call.1} parent=11 // pred_check
          %p474 = pneg %p230
        $region42: #{tpu_custom_call.1} parent=11 // pred_check_branch
          %476 = sbr.rel (%p474) target = $region44
        $region43: #{tpu_custom_call.1} parent=11 // pred_region
          _
        $region44: #{tpu_custom_call.1} parent=11 // pred_fallthru
          _
        // Predicated region
        $region45: #{tpu_custom_call.1} parent=11 // pred_check
          %p477 = pneg %p251
        $region46: #{tpu_custom_call.1} parent=11 // pred_check_branch
          %479 = sbr.rel (%p477) target = $region48
        $region47: #{tpu_custom_call.1} parent=11 // pred_region
          %s481 = ssub.s32 4096, 4096
          %482 = vsyncadd [#allocation11], %s481
          %s483 = sshll.u32 [#allocation10], 4
          %s484 = int_to_ptr.vmem [resolvable:$true] %s483
          %489 = dma.hbm_to_vmem [thread:$0]  %s10, 4096, %s484, [#allocation11], 256, 256, 16
        $region48: #{tpu_custom_call.1} parent=11 // pred_fallthru
          _
        // Predicated region
        $region49: #{tpu_custom_call.1} parent=11 // pred_check
          %p490 = pneg %p272
        $region50: #{tpu_custom_call.1} parent=11 // pred_check_branch
          %492 = sbr.rel (%p490) target = $region52
        $region51: #{tpu_custom_call.1} parent=11 // pred_region
          _
        $region52: #{tpu_custom_call.1} parent=11 // pred_fallthru
          _
        // Predicated region
        $region53: #{tpu_custom_call.1} parent=11 // pred_check
          %p493 = pneg %p293
        $region54: #{tpu_custom_call.1} parent=11 // pred_check_branch
          %495 = sbr.rel (%p493) target = $region56
        $region55: #{tpu_custom_call.1} parent=11 // pred_region
          %s497 = ssub.s32 24576, 24576
          %498 = vsyncadd [#allocation11], %s497
          %s499 = sshll.u32 [#allocation12], 4
          %s500 = int_to_ptr.vmem [resolvable:$true] %s499
          %505 = dma.hbm_to_vmem [thread:$0]  %s12, 24576, %s500, [#allocation11], 768, 768, 48
        $region56: #{tpu_custom_call.1} parent=11 // pred_fallthru
          _
        // Predicated region
        $region57: #{tpu_custom_call.1} parent=11 // pred_check
          %p506 = pneg %p314
        $region58: #{tpu_custom_call.1} parent=11 // pred_check_branch
          %508 = sbr.rel (%p506) target = $region60
        $region59: #{tpu_custom_call.1} parent=11 // pred_region
          _
        $region60: #{tpu_custom_call.1} parent=11 // pred_fallthru
          _
      $region12: #{tpu_custom_call.1} parent=5 // pred_fallthru
        _
      %p509 = scmp.lt.s32.totalorder %s36, 2
      // Predicated region
      $region61: #{tpu_custom_call.1} parent=5 // pred_check
        %p510 = pneg %p509
      $region62: #{tpu_custom_call.1} parent=5 // pred_check_branch
        %512 = sbr.rel (%p510) target = $region64
      $region63: #{tpu_custom_call.1} parent=5 // pred_region
        // Predicated region
        $region65: #{tpu_custom_call.1} parent=63 // pred_check
          %p513 = pneg %p56
        $region66: #{tpu_custom_call.1} parent=63 // pred_check_branch
          %515 = sbr.rel (%p513) target = $region68
        $region67: #{tpu_custom_call.1} parent=63 // pred_region
          %s516 = sand.u32 %s46, 1
          %s517 = scalar_lea.sflag [#allocation5], %s516
          %s518 = sand.u32 %s46, 1
          %s519 = smul.addr %s518, 256
          %s520 = scalar_lea.vmem [#allocation4], %s519
          %s521 = smul.u32 16, %s36
          %s523 = ssub.s32 4096, 4096
          %524 = vsyncadd %s517, %s523
          %s525 = smul.addr %s521, 2
          %s526 = smul.addr %s525, 128
          %s527 = scalar_lea.hbm %s1, %s526
          %s528 = sshll.u32 %s520, 4
          %s529 = int_to_ptr.vmem [resolvable:$true] %s528
          %534 = dma.hbm_to_vmem [thread:$0]  %s527, 4096, %s529, %s517, 256, 256, 16
        $region68: #{tpu_custom_call.1} parent=63 // pred_fallthru
          _
      $region64: #{tpu_custom_call.1} parent=5 // pred_fallthru
        _
      %p535 = scmp.le.s32.totalorder 1, %s36
      %p536 = scmp.lt.s32.totalorder %s36, 3
      %p537 = pnand %p535, %p536
      %p538 = pneg %p537
      // Predicated region
      $region69: #{tpu_custom_call.1} parent=5 // pred_check
        _
      $region70: #{tpu_custom_call.1} parent=5 // pred_check_branch
        %540 = sbr.rel (%p537) target = $region72
      $region71: #{tpu_custom_call.1} parent=5 // pred_region
        %s541 = ssub.s32 %s36, 1
        %s542 = sand.u32 %s49, 1
        %s543 = scalar_lea.sflag [#allocation5], %s542
        %s544 = sand.u32 %s49, 1
        %s545 = smul.addr %s544, 256
        %s546 = scalar_lea.vmem [#allocation4], %s545
        // Predicated region
        $region73: #{tpu_custom_call.1} parent=71 // pred_check
          %p547 = pneg %p62
        $region74: #{tpu_custom_call.1} parent=71 // pred_check_branch
          %549 = sbr.rel (%p547) target = $region76
        $region75: #{tpu_custom_call.1} parent=71 // pred_region
          %550 = dma.done %s543, 4096
        $region76: #{tpu_custom_call.1} parent=71 // pred_fallthru
          _
        // Predicated region
        $region77: #{tpu_custom_call.1} parent=71 // pred_check
          %p551 = pneg %p83
        $region78: #{tpu_custom_call.1} parent=71 // pred_check_branch
          %553 = sbr.rel (%p551) target = $region80
        $region79: #{tpu_custom_call.1} parent=71 // pred_region
          %554 = dma.done [#allocation8], 8192
        $region80: #{tpu_custom_call.1} parent=71 // pred_fallthru
          _
        // Predicated region
        $region81: #{tpu_custom_call.1} parent=71 // pred_check
          %p555 = pneg %p125
        $region82: #{tpu_custom_call.1} parent=71 // pred_check_branch
          %557 = sbr.rel (%p555) target = $region84
        $region83: #{tpu_custom_call.1} parent=71 // pred_region
          %558 = dma.done [#allocation8], 4096
        $region84: #{tpu_custom_call.1} parent=71 // pred_fallthru
          _
        // Predicated region
        $region85: #{tpu_custom_call.1} parent=71 // pred_check
          %p559 = pneg %p251
        $region86: #{tpu_custom_call.1} parent=71 // pred_check_branch
          %561 = sbr.rel (%p559) target = $region88
        $region87: #{tpu_custom_call.1} parent=71 // pred_region
          %562 = dma.done [#allocation11], 4096
        $region88: #{tpu_custom_call.1} parent=71 // pred_fallthru
          _
        // Predicated region
        $region89: #{tpu_custom_call.1} parent=71 // pred_check
          %p563 = pneg %p293
        $region90: #{tpu_custom_call.1} parent=71 // pred_check_branch
          %565 = sbr.rel (%p563) target = $region92
        $region91: #{tpu_custom_call.1} parent=71 // pred_region
          %566 = dma.done [#allocation11], 24576
        $region92: #{tpu_custom_call.1} parent=71 // pred_fallthru
          _
        %s567 = sand.u32 %s49, 1
        %s568 = scalar_lea.sflag [#allocation5], %s567
        %s569 = sand.u32 %s49, 1
        %s570 = smul.addr %s569, 256
        %s571 = scalar_lea.vmem [#allocation4], %s570
        %p572 = pneg %p62
        %p573 = pneg %p59
        %p574 = pneg %p83
        %p575 = pneg %p80
        %p576 = pneg %p104
        %p577 = pneg %p101
        %p578 = pneg %p125
        %p579 = pneg %p122
        %p580 = pneg %p146
        %p581 = pneg %p143
        %p582 = pneg %p167
        %p583 = pneg %p164
        %p584 = pneg %p188
        %p585 = pneg %p185
        %p586 = pneg %p209
        %p587 = pneg %p206
        %p588 = pneg %p230
        %p589 = pneg %p227
        %p590 = pneg %p251
        %p591 = pneg %p248
        %p592 = pneg %p272
        %p593 = pneg %p269
        %p594 = pneg %p293
        %p595 = pneg %p290
        %p596 = pneg %p314
        %p597 = pneg %p311
        %p598 = pneg %p340
        %p599 = pneg %p337
        %s600 = smul.u32 16, %s41
        %p601 = scmp.lt.s32.totalorder %s600, 31
        %s602 = scalar_select %p601, %s600, 31
        %s603 = smul.addr %s602, 8
        %s604 = scalar_lea.vmem %s14, %s603
        %p605 = pneg %p366
        %p606 = pneg %p363
        %s607 = sand.u32 %s353, 1
        %s608 = scalar_lea.sflag [#allocation6], %s607
        %s609 = sand.u32 %s353, 1
        %s610 = smul.addr %s609, 256
        %s611 = scalar_lea.vmem [#allocation13], %s610
        %p612 = pneg %p392
        %p613 = pneg %p389
        %s614 = sand.u32 %s41, 1
        %s615 = scalar_lea.sflag [#allocation15], %s614
        %s616 = sand.u32 %s379, 1
        %s617 = smul.addr %s616, 256
        %s618 = scalar_lea.vmem [#allocation14], %s617
        %p619 = pneg %p418
        %p620 = pneg %p415
        %s621 = sand.u32 %s41, 1
        %s622 = scalar_lea.sflag [#allocation15], %s621
        %s623 = sand.u32 %s405, 1
        %s624 = smul.addr %s623, 256
        %s625 = scalar_lea.vmem [#allocation16], %s624
        %s626 = smul.u32 16, %s41
        %s627 = smul.u32 16, %s41
        %p628 = scmp.lt.s32.totalorder %s627, 31
        %s629 = scalar_select %p628, %s627, 31
        %s630 = smul.addr %s629, 8
        %s631 = scalar_lea.vmem %s14, %s630
        %s632 = smul.u32 16, %s41
        %s633 = smul.u32 16, %s41
        %s634 = smul.u32 16, %s41
        %s635 = smul.u32 16, %s41
        %v636 = vld [vmem:[%s546] sm:$0xff]
        %v637 = vld [vmem:[%s546 + $0x8] sm:$0xff]
        %v638 = vld [vmem:[%s546 + $0x10] sm:$0xff]
        %v639 = vld [vmem:[%s546 + $0x18] sm:$0xff]
        %v640 = vld [vmem:[%s546 + $0x20] sm:$0xff]
        %v641 = vld [vmem:[%s546 + $0x28] sm:$0xff]
        %v642 = vld [vmem:[%s546 + $0x30] sm:$0xff]
        %v643 = vld [vmem:[%s546 + $0x38] sm:$0xff]
        %v644 = vld [vmem:[%s546 + $0x40] sm:$0xff]
        %v645 = vld [vmem:[%s546 + $0x48] sm:$0xff]
        %v646 = vld [vmem:[%s546 + $0x50] sm:$0xff]
        %v647 = vld [vmem:[%s546 + $0x58] sm:$0xff]
        %v648 = vld [vmem:[%s546 + $0x60] sm:$0xff]
        %v649 = vld [vmem:[%s546 + $0x68] sm:$0xff]
        %v650 = vld [vmem:[%s546 + $0x70] sm:$0xff]
        %v651 = vld [vmem:[%s546 + $0x78] sm:$0xff]
        %v652 = vld [vmem:[%s546 + $0x80] sm:$0xff]
        %v653 = vld [vmem:[%s546 + $0x88] sm:$0xff]
        %v654 = vld [vmem:[%s546 + $0x90] sm:$0xff]
        %v655 = vld [vmem:[%s546 + $0x98] sm:$0xff]
        %v656 = vld [vmem:[%s546 + $0xa0] sm:$0xff]
        %v657 = vld [vmem:[%s546 + $0xa8] sm:$0xff]
        %v658 = vld [vmem:[%s546 + $0xb0] sm:$0xff]
        %v659 = vld [vmem:[%s546 + $0xb8] sm:$0xff]
        %v660 = vld [vmem:[%s546 + $0xc0] sm:$0xff]
        %v661 = vld [vmem:[%s546 + $0xc8] sm:$0xff]
        %v662 = vld [vmem:[%s546 + $0xd0] sm:$0xff]
        %v663 = vld [vmem:[%s546 + $0xd8] sm:$0xff]
        %v664 = vld [vmem:[%s546 + $0xe0] sm:$0xff]
        %v665 = vld [vmem:[%s546 + $0xe8] sm:$0xff]
        %v666 = vld [vmem:[%s546 + $0xf0] sm:$0xff]
        %v667 = vld [vmem:[%s546 + $0xf8] sm:$0xff]
        %v668 = vld [vmem:[#allocation7] sm:$0xff]
        %v669 = vld [vmem:[#allocation7 + $0x8] sm:$0xff]
        %v670 = vld [vmem:[#allocation7 + $0x10] sm:$0xff]
        %v671 = vld [vmem:[#allocation7 + $0x18] sm:$0xff]
        %v672 = vld [vmem:[#allocation7 + $0x20] sm:$0xff]
        %v673 = vld [vmem:[#allocation7 + $0x28] sm:$0xff]
        %v674 = vld [vmem:[#allocation7 + $0x30] sm:$0xff]
        %v675 = vld [vmem:[#allocation7 + $0x38] sm:$0xff]
        %v676 = vld [vmem:[#allocation7 + $0x40] sm:$0xff]
        %v677 = vld [vmem:[#allocation7 + $0x48] sm:$0xff]
        %v678 = vld [vmem:[#allocation7 + $0x50] sm:$0xff]
        %v679 = vld [vmem:[#allocation7 + $0x58] sm:$0xff]
        %v680 = vld [vmem:[#allocation7 + $0x60] sm:$0xff]
        %v681 = vld [vmem:[#allocation7 + $0x68] sm:$0xff]
        %v682 = vld [vmem:[#allocation7 + $0x70] sm:$0xff]
        %v683 = vld [vmem:[#allocation7 + $0x78] sm:$0xff]
        %v684 = vld [vmem:[#allocation7 + $0x80] sm:$0xff]
        %v685 = vld [vmem:[#allocation7 + $0x88] sm:$0xff]
        %v686 = vld [vmem:[#allocation7 + $0x90] sm:$0xff]
        %v687 = vld [vmem:[#allocation7 + $0x98] sm:$0xff]
        %v688 = vld [vmem:[#allocation7 + $0xa0] sm:$0xff]
        %v689 = vld [vmem:[#allocation7 + $0xa8] sm:$0xff]
        %v690 = vld [vmem:[#allocation7 + $0xb0] sm:$0xff]
        %v691 = vld [vmem:[#allocation7 + $0xb8] sm:$0xff]
        %v692 = vld [vmem:[#allocation7 + $0xc0] sm:$0xff]
        %v693 = vld [vmem:[#allocation7 + $0xc8] sm:$0xff]
        %v694 = vld [vmem:[#allocation7 + $0xd0] sm:$0xff]
        %v695 = vld [vmem:[#allocation7 + $0xd8] sm:$0xff]
        %v696 = vld [vmem:[#allocation7 + $0xe0] sm:$0xff]
        %v697 = vld [vmem:[#allocation7 + $0xe8] sm:$0xff]
        %v698 = vld [vmem:[#allocation7 + $0xf0] sm:$0xff]
        %v699 = vld [vmem:[#allocation7 + $0xf8] sm:$0xff]
        %v700 = vld [vmem:[#allocation7 + $0x100] sm:$0xff]
        %v701 = vld [vmem:[#allocation7 + $0x108] sm:$0xff]
        %v702 = vld [vmem:[#allocation7 + $0x110] sm:$0xff]
        %v703 = vld [vmem:[#allocation7 + $0x118] sm:$0xff]
        %v704 = vld [vmem:[#allocation7 + $0x120] sm:$0xff]
        %v705 = vld [vmem:[#allocation7 + $0x128] sm:$0xff]
        %v706 = vld [vmem:[#allocation7 + $0x130] sm:$0xff]
        %v707 = vld [vmem:[#allocation7 + $0x138] sm:$0xff]
        %v708 = vld [vmem:[#allocation7 + $0x140] sm:$0xff]
        %v709 = vld [vmem:[#allocation7 + $0x148] sm:$0xff]
        %v710 = vld [vmem:[#allocation7 + $0x150] sm:$0xff]
        %v711 = vld [vmem:[#allocation7 + $0x158] sm:$0xff]
        %v712 = vld [vmem:[#allocation7 + $0x160] sm:$0xff]
        %v713 = vld [vmem:[#allocation7 + $0x168] sm:$0xff]
        %v714 = vld [vmem:[#allocation7 + $0x170] sm:$0xff]
        %v715 = vld [vmem:[#allocation7 + $0x178] sm:$0xff]
        %v716 = vld [vmem:[#allocation7 + $0x180] sm:$0xff]
        %v717 = vld [vmem:[#allocation7 + $0x188] sm:$0xff]
        %v718 = vld [vmem:[#allocation7 + $0x190] sm:$0xff]
        %v719 = vld [vmem:[#allocation7 + $0x198] sm:$0xff]
        %v720 = vld [vmem:[#allocation7 + $0x1a0] sm:$0xff]
        %v721 = vld [vmem:[#allocation7 + $0x1a8] sm:$0xff]
        %v722 = vld [vmem:[#allocation7 + $0x1b0] sm:$0xff]
        %v723 = vld [vmem:[#allocation7 + $0x1b8] sm:$0xff]
        %v724 = vld [vmem:[#allocation7 + $0x1c0] sm:$0xff]
        %v725 = vld [vmem:[#allocation7 + $0x1c8] sm:$0xff]
        %v726 = vld [vmem:[#allocation7 + $0x1d0] sm:$0xff]
        %v727 = vld [vmem:[#allocation7 + $0x1d8] sm:$0xff]
        %v728 = vld [vmem:[#allocation7 + $0x1e0] sm:$0xff]
        %v729 = vld [vmem:[#allocation7 + $0x1e8] sm:$0xff]
        %v730 = vld [vmem:[#allocation7 + $0x1f0] sm:$0xff]
        %v731 = vld [vmem:[#allocation7 + $0x1f8] sm:$0xff]
        %v732 = vld [vmem:[%s3] sm:$0x3]
        %v734 = vlaneseq
        %v735 = vshrl.u32 %v734, 7
        %v736 = vsub.s32 0, %v735
        %v737 = vrot.slane %v732, %v736
        %v738 = vlaneseq
        %v739 = vshrl.u32 %v738, 7
        %v740 = vsub.s32 1, %v739
        %v741 = vrot.slane %v732, %v740
        %744 = vmatprep.subr.mxu0 %v699
        %745 = vmatpush1.msra.mxu0 %v698
        %746 = vmatprep.subr.mxu0 %v697
        %747 = vmatpush1.msra.mxu0 %v696
        %748 = vmatprep.subr.mxu0 %v695
        %749 = vmatpush1.msra.mxu0 %v694
        %750 = vmatprep.subr.mxu0 %v693
        %751 = vmatpush1.msra.mxu0 %v692
        %752 = vmatprep.subr.mxu0 %v691
        %753 = vmatpush1.msra.mxu0 %v690
        %754 = vmatprep.subr.mxu0 %v689
        %755 = vmatpush1.msra.mxu0 %v688
        %756 = vmatprep.subr.mxu0 %v687
        %757 = vmatpush1.msra.mxu0 %v686
        %758 = vmatprep.subr.mxu0 %v685
        %759 = vmatpush1.msra.mxu0 %v684
        %760 = vmatprep.subr.mxu0 %v683
        %761 = vmatpush1.msra.mxu0 %v682
        %762 = vmatprep.subr.mxu0 %v681
        %763 = vmatpush1.msra.mxu0 %v680
        %764 = vmatprep.subr.mxu0 %v679
        %765 = vmatpush1.msra.mxu0 %v678
        %766 = vmatprep.subr.mxu0 %v677
        %767 = vmatpush1.msra.mxu0 %v676
        %768 = vmatprep.subr.mxu0 %v675
        %769 = vmatpush1.msra.mxu0 %v674
        %770 = vmatprep.subr.mxu0 %v673
        %771 = vmatpush1.msra.mxu0 %v672
        %772 = vmatprep.subr.mxu0 %v671
        %773 = vmatpush1.msra.mxu0 %v670
        %774 = vmatprep.subr.mxu0 %v669
        %775 = vmatpush1.msra.mxu0 %v668
        %776 = vmatprep.subr.mxu0 %v731
        %777 = vmatpush2.msra.mxu0 %v730
        %778 = vmatprep.subr.mxu0 %v729
        %779 = vmatpush2.msra.mxu0 %v728
        %780 = vmatprep.subr.mxu0 %v727
        %781 = vmatpush2.msra.mxu0 %v726
        %782 = vmatprep.subr.mxu0 %v725
        %783 = vmatpush2.msra.mxu0 %v724
        %784 = vmatprep.subr.mxu0 %v723
        %785 = vmatpush2.msra.mxu0 %v722
        %786 = vmatprep.subr.mxu0 %v721
        %787 = vmatpush2.msra.mxu0 %v720
        %788 = vmatprep.subr.mxu0 %v719
        %789 = vmatpush2.msra.mxu0 %v718
        %790 = vmatprep.subr.mxu0 %v717
        %791 = vmatpush2.msra.mxu0 %v716
        %792 = vmatprep.subr.mxu0 %v715
        %793 = vmatpush2.msra.mxu0 %v714
        %794 = vmatprep.subr.mxu0 %v713
        %795 = vmatpush2.msra.mxu0 %v712
        %796 = vmatprep.subr.mxu0 %v711
        %797 = vmatpush2.msra.mxu0 %v710
        %798 = vmatprep.subr.mxu0 %v709
        %799 = vmatpush2.msra.mxu0 %v708
        %800 = vmatprep.subr.mxu0 %v707
        %801 = vmatpush2.msra.mxu0 %v706
        %802 = vmatprep.subr.mxu0 %v705
        %803 = vmatpush2.msra.mxu0 %v704
        %804 = vmatprep.subr.mxu0 %v703
        %805 = vmatpush2.msra.mxu0 %v702
        %806 = vmatprep.subr.mxu0 %v701
        %807 = vmatpush2.msra.mxu0 %v700
        %808 = vmatprep.mubr.f32.mxu0 %v637
        %809 = vmatmul.mubr.f32.gmra.mxu0 %v636
        %v810 = vpop.f32.mrf.mxu0
        %v811 = vadd.f32 %v737, %v810
        %v812 = vpop.f32.mrf.mxu0
        %v813 = vadd.f32 %v741, %v812
        %814 = vmatprep.mubr.f32.mxu0 %v639
        %815 = vmatmul.mubr.f32.gmra.mxu0 %v638
        %v816 = vpop.f32.mrf.mxu0
        %v817 = vadd.f32 %v737, %v816
        %v818 = vpop.f32.mrf.mxu0
        %v819 = vadd.f32 %v741, %v818
        %820 = vmatprep.mubr.f32.mxu0 %v641
        %821 = vmatmul.mubr.f32.gmra.mxu0 %v640
        %v822 = vpop.f32.mrf.mxu0
        %v823 = vadd.f32 %v737, %v822
        %v824 = vpop.f32.mrf.mxu0
        %v825 = vadd.f32 %v741, %v824
        %826 = vmatprep.mubr.f32.mxu0 %v643
        %827 = vmatmul.mubr.f32.gmra.mxu0 %v642
        %v828 = vpop.f32.mrf.mxu0
        %v829 = vadd.f32 %v737, %v828
        %v830 = vpop.f32.mrf.mxu0
        %v831 = vadd.f32 %v741, %v830
        %832 = vmatprep.mubr.f32.mxu0 %v645
        %833 = vmatmul.mubr.f32.gmra.mxu0 %v644
        %v834 = vpop.f32.mrf.mxu0
        %v835 = vadd.f32 %v737, %v834
        %v836 = vpop.f32.mrf.mxu0
        %v837 = vadd.f32 %v741, %v836
        %838 = vmatprep.mubr.f32.mxu0 %v647
        %839 = vmatmul.mubr.f32.gmra.mxu0 %v646
        %v840 = vpop.f32.mrf.mxu0
        %v841 = vadd.f32 %v737, %v840
        %v842 = vpop.f32.mrf.mxu0
        %v843 = vadd.f32 %v741, %v842
        %844 = vmatprep.mubr.f32.mxu0 %v649
        %845 = vmatmul.mubr.f32.gmra.mxu0 %v648
        %v846 = vpop.f32.mrf.mxu0
        %v847 = vadd.f32 %v737, %v846
        %v848 = vpop.f32.mrf.mxu0
        %v849 = vadd.f32 %v741, %v848
        %850 = vmatprep.mubr.f32.mxu0 %v651
        %851 = vmatmul.mubr.f32.gmra.mxu0 %v650
        %v852 = vpop.f32.mrf.mxu0
        %v853 = vadd.f32 %v737, %v852
        %v854 = vpop.f32.mrf.mxu0
        %v855 = vadd.f32 %v741, %v854
        %856 = vmatprep.mubr.f32.mxu0 %v653
        %857 = vmatmul.mubr.f32.gmra.mxu0 %v652
        %v858 = vpop.f32.mrf.mxu0
        %v859 = vadd.f32 %v737, %v858
        %v860 = vpop.f32.mrf.mxu0
        %v861 = vadd.f32 %v741, %v860
        %862 = vmatprep.mubr.f32.mxu0 %v655
        %863 = vmatmul.mubr.f32.gmra.mxu0 %v654
        %v864 = vpop.f32.mrf.mxu0
        %v865 = vadd.f32 %v737, %v864
        %v866 = vpop.f32.mrf.mxu0
        %v867 = vadd.f32 %v741, %v866
        %868 = vmatprep.mubr.f32.mxu0 %v657
        %869 = vmatmul.mubr.f32.gmra.mxu0 %v656
        %v870 = vpop.f32.mrf.mxu0
        %v871 = vadd.f32 %v737, %v870
        %v872 = vpop.f32.mrf.mxu0
        %v873 = vadd.f32 %v741, %v872
        %874 = vmatprep.mubr.f32.mxu0 %v659
        %875 = vmatmul.mubr.f32.gmra.mxu0 %v658
        %v876 = vpop.f32.mrf.mxu0
        %v877 = vadd.f32 %v737, %v876
        %v878 = vpop.f32.mrf.mxu0
        %v879 = vadd.f32 %v741, %v878
        %880 = vmatprep.mubr.f32.mxu0 %v661
        %881 = vmatmul.mubr.f32.gmra.mxu0 %v660
        %v882 = vpop.f32.mrf.mxu0
        %v883 = vadd.f32 %v737, %v882
        %v884 = vpop.f32.mrf.mxu0
        %v885 = vadd.f32 %v741, %v884
        %886 = vmatprep.mubr.f32.mxu0 %v663
        %887 = vmatmul.mubr.f32.gmra.mxu0 %v662
        %v888 = vpop.f32.mrf.mxu0
        %v889 = vadd.f32 %v737, %v888
        %v890 = vpop.f32.mrf.mxu0
        %v891 = vadd.f32 %v741, %v890
        %892 = vmatprep.mubr.f32.mxu0 %v665
        %893 = vmatmul.mubr.f32.gmra.mxu0 %v664
        %v894 = vpop.f32.mrf.mxu0
        %v895 = vadd.f32 %v737, %v894
        %v896 = vpop.f32.mrf.mxu0
        %v897 = vadd.f32 %v741, %v896
        %898 = vmatprep.mubr.f32.mxu0 %v667
        %899 = vmatmul.mubr.f32.gmra.mxu0 %v666
        %v900 = vpop.f32.mrf.mxu0
        %v901 = vadd.f32 %v737, %v900
        %v902 = vpop.f32.mrf.mxu0
        %v903 = vadd.f32 %v741, %v902
        %904 = vdwg.mxu0
        %v905 = vmax.f32 %v811, 0.0
        %v906 = vmax.f32 %v813, 0.0
        %v907 = vmax.f32 %v817, 0.0
        %v908 = vmax.f32 %v819, 0.0
        %v909 = vmax.f32 %v823, 0.0
        %v910 = vmax.f32 %v825, 0.0
        %v911 = vmax.f32 %v829, 0.0
        %v912 = vmax.f32 %v831, 0.0
        %v913 = vmax.f32 %v835, 0.0
        %v914 = vmax.f32 %v837, 0.0
        %v915 = vmax.f32 %v841, 0.0
        %v916 = vmax.f32 %v843, 0.0
        %v917 = vmax.f32 %v847, 0.0
        %v918 = vmax.f32 %v849, 0.0
        %v919 = vmax.f32 %v853, 0.0
        %v920 = vmax.f32 %v855, 0.0
        %v921 = vmax.f32 %v859, 0.0
        %v922 = vmax.f32 %v861, 0.0
        %v923 = vmax.f32 %v865, 0.0
        %v924 = vmax.f32 %v867, 0.0
        %v925 = vmax.f32 %v871, 0.0
        %v926 = vmax.f32 %v873, 0.0
        %v927 = vmax.f32 %v877, 0.0
        %v928 = vmax.f32 %v879, 0.0
        %v929 = vmax.f32 %v883, 0.0
        %v930 = vmax.f32 %v885, 0.0
        %v931 = vmax.f32 %v889, 0.0
        %v932 = vmax.f32 %v891, 0.0
        %v933 = vmax.f32 %v895, 0.0
        %v934 = vmax.f32 %v897, 0.0
        %v935 = vmax.f32 %v901, 0.0
        %v936 = vmax.f32 %v903, 0.0
        %v937 = vld [vmem:[#allocation9] sm:$0xff]
        %v938 = vld [vmem:[#allocation9 + $0x8] sm:$0xff]
        %v939 = vld [vmem:[#allocation9 + $0x10] sm:$0xff]
        %v940 = vld [vmem:[#allocation9 + $0x18] sm:$0xff]
        %v941 = vld [vmem:[#allocation9 + $0x20] sm:$0xff]
        %v942 = vld [vmem:[#allocation9 + $0x28] sm:$0xff]
        %v943 = vld [vmem:[#allocation9 + $0x30] sm:$0xff]
        %v944 = vld [vmem:[#allocation9 + $0x38] sm:$0xff]
        %v945 = vld [vmem:[#allocation9 + $0x40] sm:$0xff]
        %v946 = vld [vmem:[#allocation9 + $0x48] sm:$0xff]
        %v947 = vld [vmem:[#allocation9 + $0x50] sm:$0xff]
        %v948 = vld [vmem:[#allocation9 + $0x58] sm:$0xff]
        %v949 = vld [vmem:[#allocation9 + $0x60] sm:$0xff]
        %v950 = vld [vmem:[#allocation9 + $0x68] sm:$0xff]
        %v951 = vld [vmem:[#allocation9 + $0x70] sm:$0xff]
        %v952 = vld [vmem:[#allocation9 + $0x78] sm:$0xff]
        %v953 = vld [vmem:[#allocation9 + $0x80] sm:$0xff]
        %v954 = vld [vmem:[#allocation9 + $0x88] sm:$0xff]
        %v955 = vld [vmem:[#allocation9 + $0x90] sm:$0xff]
        %v956 = vld [vmem:[#allocation9 + $0x98] sm:$0xff]
        %v957 = vld [vmem:[#allocation9 + $0xa0] sm:$0xff]
        %v958 = vld [vmem:[#allocation9 + $0xa8] sm:$0xff]
        %v959 = vld [vmem:[#allocation9 + $0xb0] sm:$0xff]
        %v960 = vld [vmem:[#allocation9 + $0xb8] sm:$0xff]
        %v961 = vld [vmem:[#allocation9 + $0xc0] sm:$0xff]
        %v962 = vld [vmem:[#allocation9 + $0xc8] sm:$0xff]
        %v963 = vld [vmem:[#allocation9 + $0xd0] sm:$0xff]
        %v964 = vld [vmem:[#allocation9 + $0xd8] sm:$0xff]
        %v965 = vld [vmem:[#allocation9 + $0xe0] sm:$0xff]
        %v966 = vld [vmem:[#allocation9 + $0xe8] sm:$0xff]
        %v967 = vld [vmem:[#allocation9 + $0xf0] sm:$0xff]
        %v968 = vld [vmem:[#allocation9 + $0xf8] sm:$0xff]
        %v969 = vld [vmem:[%s5] sm:$0x1]
        %v971 = vlaneseq
        %v972 = vshrl.u32 %v971, 7
        %v973 = vsub.s32 0, %v972
        %v974 = vrot.slane %v969, %v973
        %976 = vmatprep.subr.mxu0 0.0
        %977 = vmatpush1.msra.mxu0 %v952
        %978 = vmatprep.subr.mxu0 0.0
        %979 = vmatpush1.msra.mxu0 %v951
        %980 = vmatprep.subr.mxu0 0.0
        %981 = vmatpush1.msra.mxu0 %v950
        %982 = vmatprep.subr.mxu0 0.0
        %983 = vmatpush1.msra.mxu0 %v949
        %984 = vmatprep.subr.mxu0 0.0
        %985 = vmatpush1.msra.mxu0 %v948
        %986 = vmatprep.subr.mxu0 0.0
        %987 = vmatpush1.msra.mxu0 %v947
        %988 = vmatprep.subr.mxu0 0.0
        %989 = vmatpush1.msra.mxu0 %v946
        %990 = vmatprep.subr.mxu0 0.0
        %991 = vmatpush1.msra.mxu0 %v945
        %992 = vmatprep.subr.mxu0 0.0
        %993 = vmatpush1.msra.mxu0 %v944
        %994 = vmatprep.subr.mxu0 0.0
        %995 = vmatpush1.msra.mxu0 %v943
        %996 = vmatprep.subr.mxu0 0.0
        %997 = vmatpush1.msra.mxu0 %v942
        %998 = vmatprep.subr.mxu0 0.0
        %999 = vmatpush1.msra.mxu0 %v941
        %1000 = vmatprep.subr.mxu0 0.0
        %1001 = vmatpush1.msra.mxu0 %v940
        %1002 = vmatprep.subr.mxu0 0.0
        %1003 = vmatpush1.msra.mxu0 %v939
        %1004 = vmatprep.subr.mxu0 0.0
        %1005 = vmatpush1.msra.mxu0 %v938
        %1006 = vmatprep.subr.mxu0 0.0
        %1007 = vmatpush1.msra.mxu0 %v937
        %1008 = vmatprep.subr.mxu0 0.0
        %1009 = vmatpush2.msra.mxu0 %v968
        %1010 = vmatprep.subr.mxu0 0.0
        %1011 = vmatpush2.msra.mxu0 %v967
        %1012 = vmatprep.subr.mxu0 0.0
        %1013 = vmatpush2.msra.mxu0 %v966
        %1014 = vmatprep.subr.mxu0 0.0
        %1015 = vmatpush2.msra.mxu0 %v965
        %1016 = vmatprep.subr.mxu0 0.0
        %1017 = vmatpush2.msra.mxu0 %v964
        %1018 = vmatprep.subr.mxu0 0.0
        %1019 = vmatpush2.msra.mxu0 %v963
        %1020 = vmatprep.subr.mxu0 0.0
        %1021 = vmatpush2.msra.mxu0 %v962
        %1022 = vmatprep.subr.mxu0 0.0
        %1023 = vmatpush2.msra.mxu0 %v961
        %1024 = vmatprep.subr.mxu0 0.0
        %1025 = vmatpush2.msra.mxu0 %v960
        %1026 = vmatprep.subr.mxu0 0.0
        %1027 = vmatpush2.msra.mxu0 %v959
        %1028 = vmatprep.subr.mxu0 0.0
        %1029 = vmatpush2.msra.mxu0 %v958
        %1030 = vmatprep.subr.mxu0 0.0
        %1031 = vmatpush2.msra.mxu0 %v957
        %1032 = vmatprep.subr.mxu0 0.0
        %1033 = vmatpush2.msra.mxu0 %v956
        %1034 = vmatprep.subr.mxu0 0.0
        %1035 = vmatpush2.msra.mxu0 %v955
        %1036 = vmatprep.subr.mxu0 0.0
        %1037 = vmatpush2.msra.mxu0 %v954
        %1038 = vmatprep.subr.mxu0 0.0
        %1039 = vmatpush2.msra.mxu0 %v953
        %1040 = vmatprep.mubr.f32.mxu0 %v906
        %1041 = vmatmul.mubr.f32.gmra.mxu0 %v905
        %v1042 = vpop.f32.mrf.mxu0
        %v1043 = vadd.f32 %v974, %v1042
        %v1044 = vpop.f32.mrf.mxu0
        %1045 = vmatprep.mubr.f32.mxu0 %v908
        %1046 = vmatmul.mubr.f32.gmra.mxu0 %v907
        %v1047 = vpop.f32.mrf.mxu0
        %v1048 = vadd.f32 %v974, %v1047
        %v1049 = vpop.f32.mrf.mxu0
        %1050 = vmatprep.mubr.f32.mxu0 %v910
        %1051 = vmatmul.mubr.f32.gmra.mxu0 %v909
        %v1052 = vpop.f32.mrf.mxu0
        %v1053 = vadd.f32 %v974, %v1052
        %v1054 = vpop.f32.mrf.mxu0
        %1055 = vmatprep.mubr.f32.mxu0 %v912
        %1056 = vmatmul.mubr.f32.gmra.mxu0 %v911
        %v1057 = vpop.f32.mrf.mxu0
        %v1058 = vadd.f32 %v974, %v1057
        %v1059 = vpop.f32.mrf.mxu0
        %1060 = vmatprep.mubr.f32.mxu0 %v914
        %1061 = vmatmul.mubr.f32.gmra.mxu0 %v913
        %v1062 = vpop.f32.mrf.mxu0
        %v1063 = vadd.f32 %v974, %v1062
        %v1064 = vpop.f32.mrf.mxu0
        %1065 = vmatprep.mubr.f32.mxu0 %v916
        %1066 = vmatmul.mubr.f32.gmra.mxu0 %v915
        %v1067 = vpop.f32.mrf.mxu0
        %v1068 = vadd.f32 %v974, %v1067
        %v1069 = vpop.f32.mrf.mxu0
        %1070 = vmatprep.mubr.f32.mxu0 %v918
        %1071 = vmatmul.mubr.f32.gmra.mxu0 %v917
        %v1072 = vpop.f32.mrf.mxu0
        %v1073 = vadd.f32 %v974, %v1072
        %v1074 = vpop.f32.mrf.mxu0
        %1075 = vmatprep.mubr.f32.mxu0 %v920
        %1076 = vmatmul.mubr.f32.gmra.mxu0 %v919
        %v1077 = vpop.f32.mrf.mxu0
        %v1078 = vadd.f32 %v974, %v1077
        %v1079 = vpop.f32.mrf.mxu0
        %1080 = vmatprep.mubr.f32.mxu0 %v922
        %1081 = vmatmul.mubr.f32.gmra.mxu0 %v921
        %v1082 = vpop.f32.mrf.mxu0
        %v1083 = vadd.f32 %v974, %v1082
        %v1084 = vpop.f32.mrf.mxu0
        %1085 = vmatprep.mubr.f32.mxu0 %v924
        %1086 = vmatmul.mubr.f32.gmra.mxu0 %v923
        %v1087 = vpop.f32.mrf.mxu0
        %v1088 = vadd.f32 %v974, %v1087
        %v1089 = vpop.f32.mrf.mxu0
        %1090 = vmatprep.mubr.f32.mxu0 %v926
        %1091 = vmatmul.mubr.f32.gmra.mxu0 %v925
        %v1092 = vpop.f32.mrf.mxu0
        %v1093 = vadd.f32 %v974, %v1092
        %v1094 = vpop.f32.mrf.mxu0
        %1095 = vmatprep.mubr.f32.mxu0 %v928
        %1096 = vmatmul.mubr.f32.gmra.mxu0 %v927
        %v1097 = vpop.f32.mrf.mxu0
        %v1098 = vadd.f32 %v974, %v1097
        %v1099 = vpop.f32.mrf.mxu0
        %1100 = vmatprep.mubr.f32.mxu0 %v930
        %1101 = vmatmul.mubr.f32.gmra.mxu0 %v929
        %v1102 = vpop.f32.mrf.mxu0
        %v1103 = vadd.f32 %v974, %v1102
        %v1104 = vpop.f32.mrf.mxu0
        %1105 = vmatprep.mubr.f32.mxu0 %v932
        %1106 = vmatmul.mubr.f32.gmra.mxu0 %v931
        %v1107 = vpop.f32.mrf.mxu0
        %v1108 = vadd.f32 %v974, %v1107
        %v1109 = vpop.f32.mrf.mxu0
        %1110 = vmatprep.mubr.f32.mxu0 %v934
        %1111 = vmatmul.mubr.f32.gmra.mxu0 %v933
        %v1112 = vpop.f32.mrf.mxu0
        %v1113 = vadd.f32 %v974, %v1112
        %v1114 = vpop.f32.mrf.mxu0
        %1115 = vmatprep.mubr.f32.mxu0 %v936
        %1116 = vmatmul.mubr.f32.gmra.mxu0 %v935
        %v1117 = vpop.f32.mrf.mxu0
        %v1118 = vadd.f32 %v974, %v1117
        %v1119 = vpop.f32.mrf.mxu0
        %1120 = vdwg.mxu0
        %v1121 = vmax.f32 %v1043, 0.0
        %v1122 = vmax.f32 %v1048, 0.0
        %v1123 = vmax.f32 %v1053, 0.0
        %v1124 = vmax.f32 %v1058, 0.0
        %v1125 = vmax.f32 %v1063, 0.0
        %v1126 = vmax.f32 %v1068, 0.0
        %v1127 = vmax.f32 %v1073, 0.0
        %v1128 = vmax.f32 %v1078, 0.0
        %v1129 = vmax.f32 %v1083, 0.0
        %v1130 = vmax.f32 %v1088, 0.0
        %v1131 = vmax.f32 %v1093, 0.0
        %v1132 = vmax.f32 %v1098, 0.0
        %v1133 = vmax.f32 %v1103, 0.0
        %v1134 = vmax.f32 %v1108, 0.0
        %v1135 = vmax.f32 %v1113, 0.0
        %v1136 = vmax.f32 %v1118, 0.0
        %v1137 = vld [vmem:[%s6] sm:$0xff]
        %v1138 = vld [vmem:[%s6 + $0x8] sm:$0xff]
        %v1139 = vld [vmem:[%s6 + $0x10] sm:$0xff]
        %v1140 = vld [vmem:[%s6 + $0x18] sm:$0xff]
        %v1141 = vld [vmem:[%s6 + $0x20] sm:$0xff]
        %v1142 = vld [vmem:[%s6 + $0x28] sm:$0xff]
        %v1143 = vld [vmem:[%s6 + $0x30] sm:$0xff]
        %v1144 = vld [vmem:[%s6 + $0x38] sm:$0xff]
        %v1145 = vld [vmem:[%s6 + $0x40] sm:$0xff]
        %v1146 = vld [vmem:[%s6 + $0x48] sm:$0xff]
        %v1147 = vld [vmem:[%s6 + $0x50] sm:$0xff]
        %v1148 = vld [vmem:[%s6 + $0x58] sm:$0xff]
        %v1149 = vld [vmem:[%s6 + $0x60] sm:$0xff]
        %v1150 = vld [vmem:[%s6 + $0x68] sm:$0xff]
        %v1151 = vld [vmem:[%s6 + $0x70] sm:$0xff]
        %v1152 = vld [vmem:[%s6 + $0x78] sm:$0xff]
        %v1153 = vld [vmem:[%s7] sm:$0x1]
        %v1155 = vlaneseq
        %v1156 = vshrl.u32 %v1155, 7
        %v1157 = vsub.s32 0, %v1156
        %v1158 = vrot.slane %v1153, %v1157
        %1160 = vmatprep.subr.mxu0 0.0
        %1161 = vmatpush1.msra.mxu0 %v1152
        %1162 = vmatprep.subr.mxu0 0.0
        %1163 = vmatpush1.msra.mxu0 %v1151
        %1164 = vmatprep.subr.mxu0 0.0
        %1165 = vmatpush1.msra.mxu0 %v1150
        %1166 = vmatprep.subr.mxu0 0.0
        %1167 = vmatpush1.msra.mxu0 %v1149
        %1168 = vmatprep.subr.mxu0 0.0
        %1169 = vmatpush1.msra.mxu0 %v1148
        %1170 = vmatprep.subr.mxu0 0.0
        %1171 = vmatpush1.msra.mxu0 %v1147
        %1172 = vmatprep.subr.mxu0 0.0
        %1173 = vmatpush1.msra.mxu0 %v1146
        %1174 = vmatprep.subr.mxu0 0.0
        %1175 = vmatpush1.msra.mxu0 %v1145
        %1176 = vmatprep.subr.mxu0 0.0
        %1177 = vmatpush1.msra.mxu0 %v1144
        %1178 = vmatprep.subr.mxu0 0.0
        %1179 = vmatpush1.msra.mxu0 %v1143
        %1180 = vmatprep.subr.mxu0 0.0
        %1181 = vmatpush1.msra.mxu0 %v1142
        %1182 = vmatprep.subr.mxu0 0.0
        %1183 = vmatpush1.msra.mxu0 %v1141
        %1184 = vmatprep.subr.mxu0 0.0
        %1185 = vmatpush1.msra.mxu0 %v1140
        %1186 = vmatprep.subr.mxu0 0.0
        %1187 = vmatpush1.msra.mxu0 %v1139
        %1188 = vmatprep.subr.mxu0 0.0
        %1189 = vmatpush1.msra.mxu0 %v1138
        %1190 = vmatprep.subr.mxu0 0.0
        %1191 = vmatpush1.msra.mxu0 %v1137
        %1192 = vmatprep.subr.mxu0 0.0
        %1193 = vmatpush2.msra.mxu0 0.0
        %1194 = vmatprep.subr.mxu0 0.0
        %1195 = vmatpush2.msra.mxu0 0.0
        %1196 = vmatprep.subr.mxu0 0.0
        %1197 = vmatpush2.msra.mxu0 0.0
        %1198 = vmatprep.subr.mxu0 0.0
        %1199 = vmatpush2.msra.mxu0 0.0
        %1200 = vmatprep.subr.mxu0 0.0
        %1201 = vmatpush2.msra.mxu0 0.0
        %1202 = vmatprep.subr.mxu0 0.0
        %1203 = vmatpush2.msra.mxu0 0.0
        %1204 = vmatprep.subr.mxu0 0.0
        %1205 = vmatpush2.msra.mxu0 0.0
        %1206 = vmatprep.subr.mxu0 0.0
        %1207 = vmatpush2.msra.mxu0 0.0
        %1208 = vmatprep.subr.mxu0 0.0
        %1209 = vmatpush2.msra.mxu0 0.0
        %1210 = vmatprep.subr.mxu0 0.0
        %1211 = vmatpush2.msra.mxu0 0.0
        %1212 = vmatprep.subr.mxu0 0.0
        %1213 = vmatpush2.msra.mxu0 0.0
        %1214 = vmatprep.subr.mxu0 0.0
        %1215 = vmatpush2.msra.mxu0 0.0
        %1216 = vmatprep.subr.mxu0 0.0
        %1217 = vmatpush2.msra.mxu0 0.0
        %1218 = vmatprep.subr.mxu0 0.0
        %1219 = vmatpush2.msra.mxu0 0.0
        %1220 = vmatprep.subr.mxu0 0.0
        %1221 = vmatpush2.msra.mxu0 0.0
        %1222 = vmatprep.subr.mxu0 0.0
        %1223 = vmatpush2.msra.mxu0 0.0
        %1224 = vmatprep.mubr.f32.mxu0 0.0
        %1225 = vmatmul.mubr.f32.gmra.mxu0 %v1121
        %v1226 = vpop.f32.mrf.mxu0
        %v1227 = vadd.f32 %v1158, %v1226
        %v1228 = vpop.f32.mrf.mxu0
        %1229 = vmatprep.mubr.f32.mxu0 0.0
        %1230 = vmatmul.mubr.f32.gmra.mxu0 %v1122
        %v1231 = vpop.f32.mrf.mxu0
        %v1232 = vadd.f32 %v1158, %v1231
        %v1233 = vpop.f32.mrf.mxu0
        %1234 = vmatprep.mubr.f32.mxu0 0.0
        %1235 = vmatmul.mubr.f32.gmra.mxu0 %v1123
        %v1236 = vpop.f32.mrf.mxu0
        %v1237 = vadd.f32 %v1158, %v1236
        %v1238 = vpop.f32.mrf.mxu0
        %1239 = vmatprep.mubr.f32.mxu0 0.0
        %1240 = vmatmul.mubr.f32.gmra.mxu0 %v1124
        %v1241 = vpop.f32.mrf.mxu0
        %v1242 = vadd.f32 %v1158, %v1241
        %v1243 = vpop.f32.mrf.mxu0
        %1244 = vmatprep.mubr.f32.mxu0 0.0
        %1245 = vmatmul.mubr.f32.gmra.mxu0 %v1125
        %v1246 = vpop.f32.mrf.mxu0
        %v1247 = vadd.f32 %v1158, %v1246
        %v1248 = vpop.f32.mrf.mxu0
        %1249 = vmatprep.mubr.f32.mxu0 0.0
        %1250 = vmatmul.mubr.f32.gmra.mxu0 %v1126
        %v1251 = vpop.f32.mrf.mxu0
        %v1252 = vadd.f32 %v1158, %v1251
        %v1253 = vpop.f32.mrf.mxu0
        %1254 = vmatprep.mubr.f32.mxu0 0.0
        %1255 = vmatmul.mubr.f32.gmra.mxu0 %v1127
        %v1256 = vpop.f32.mrf.mxu0
        %v1257 = vadd.f32 %v1158, %v1256
        %v1258 = vpop.f32.mrf.mxu0
        %1259 = vmatprep.mubr.f32.mxu0 0.0
        %1260 = vmatmul.mubr.f32.gmra.mxu0 %v1128
        %v1261 = vpop.f32.mrf.mxu0
        %v1262 = vadd.f32 %v1158, %v1261
        %v1263 = vpop.f32.mrf.mxu0
        %1264 = vmatprep.mubr.f32.mxu0 0.0
        %1265 = vmatmul.mubr.f32.gmra.mxu0 %v1129
        %v1266 = vpop.f32.mrf.mxu0
        %v1267 = vadd.f32 %v1158, %v1266
        %v1268 = vpop.f32.mrf.mxu0
        %1269 = vmatprep.mubr.f32.mxu0 0.0
        %1270 = vmatmul.mubr.f32.gmra.mxu0 %v1130
        %v1271 = vpop.f32.mrf.mxu0
        %v1272 = vadd.f32 %v1158, %v1271
        %v1273 = vpop.f32.mrf.mxu0
        %1274 = vmatprep.mubr.f32.mxu0 0.0
        %1275 = vmatmul.mubr.f32.gmra.mxu0 %v1131
        %v1276 = vpop.f32.mrf.mxu0
        %v1277 = vadd.f32 %v1158, %v1276
        %v1278 = vpop.f32.mrf.mxu0
        %1279 = vmatprep.mubr.f32.mxu0 0.0
        %1280 = vmatmul.mubr.f32.gmra.mxu0 %v1132
        %v1281 = vpop.f32.mrf.mxu0
        %v1282 = vadd.f32 %v1158, %v1281
        %v1283 = vpop.f32.mrf.mxu0
        %1284 = vmatprep.mubr.f32.mxu0 0.0
        %1285 = vmatmul.mubr.f32.gmra.mxu0 %v1133
        %v1286 = vpop.f32.mrf.mxu0
        %v1287 = vadd.f32 %v1158, %v1286
        %v1288 = vpop.f32.mrf.mxu0
        %1289 = vmatprep.mubr.f32.mxu0 0.0
        %1290 = vmatmul.mubr.f32.gmra.mxu0 %v1134
        %v1291 = vpop.f32.mrf.mxu0
        %v1292 = vadd.f32 %v1158, %v1291
        %v1293 = vpop.f32.mrf.mxu0
        %1294 = vmatprep.mubr.f32.mxu0 0.0
        %1295 = vmatmul.mubr.f32.gmra.mxu0 %v1135
        %v1296 = vpop.f32.mrf.mxu0
        %v1297 = vadd.f32 %v1158, %v1296
        %v1298 = vpop.f32.mrf.mxu0
        %1299 = vmatprep.mubr.f32.mxu0 0.0
        %1300 = vmatmul.mubr.f32.gmra.mxu0 %v1136
        %v1301 = vpop.f32.mrf.mxu0
        %v1302 = vadd.f32 %v1158, %v1301
        %v1303 = vpop.f32.mrf.mxu0
        %1304 = vdwg.mxu0
        %v1305 = vld [vmem:[%s8] sm:$0xff]
        %v1306 = vld [vmem:[%s8 + $0x8] sm:$0xff]
        %v1307 = vld [vmem:[%s8 + $0x10] sm:$0xff]
        %v1308 = vld [vmem:[%s8 + $0x18] sm:$0xff]
        %v1309 = vld [vmem:[%s9] sm:$0x1]
        %v1311 = vlaneseq
        %v1312 = vshrl.u32 %v1311, 7
        %v1313 = vsub.s32 0, %v1312
        %v1314 = vrot.slane %v1309, %v1313
        %vm1316 = vcmask 261120
        %v1318 = vsel %vm1316, %v1227, 0
        %v1321 = vsel %vm1316, %v1232, 0
        %v1324 = vsel %vm1316, %v1237, 0
        %v1327 = vsel %vm1316, %v1242, 0
        %v1330 = vsel %vm1316, %v1247, 0
        %v1333 = vsel %vm1316, %v1252, 0
        %v1336 = vsel %vm1316, %v1257, 0
        %v1339 = vsel %vm1316, %v1262, 0
        %v1342 = vsel %vm1316, %v1267, 0
        %v1345 = vsel %vm1316, %v1272, 0
        %v1348 = vsel %vm1316, %v1277, 0
        %v1351 = vsel %vm1316, %v1282, 0
        %v1354 = vsel %vm1316, %v1287, 0
        %v1357 = vsel %vm1316, %v1292, 0
        %v1360 = vsel %vm1316, %v1297, 0
        %v1363 = vsel %vm1316, %v1302, 0
        %1365 = vmatprep.subr.mxu0 0.0
        %1366 = vmatpush1.msra.mxu0 0.0
        %1367 = vmatprep.subr.mxu0 0.0
        %1368 = vmatpush1.msra.mxu0 0.0
        %1369 = vmatprep.subr.mxu0 0.0
        %1370 = vmatpush1.msra.mxu0 0.0
        %1371 = vmatprep.subr.mxu0 0.0
        %1372 = vmatpush1.msra.mxu0 0.0
        %1373 = vmatprep.subr.mxu0 0.0
        %1374 = vmatpush1.msra.mxu0 0.0
        %1375 = vmatprep.subr.mxu0 0.0
        %1376 = vmatpush1.msra.mxu0 0.0
        %1377 = vmatprep.subr.mxu0 0.0
        %1378 = vmatpush1.msra.mxu0 0.0
        %1379 = vmatprep.subr.mxu0 0.0
        %1380 = vmatpush1.msra.mxu0 0.0
        %1381 = vmatprep.subr.mxu0 0.0
        %1382 = vmatpush1.msra.mxu0 0.0
        %1383 = vmatprep.subr.mxu0 0.0
        %1384 = vmatpush1.msra.mxu0 0.0
        %1385 = vmatprep.subr.mxu0 0.0
        %1386 = vmatpush1.msra.mxu0 0.0
        %1387 = vmatprep.subr.mxu0 0.0
        %1388 = vmatpush1.msra.mxu0 0.0
        %1389 = vmatprep.subr.mxu0 0.0
        %1390 = vmatpush1.msra.mxu0 %v1308
        %1391 = vmatprep.subr.mxu0 0.0
        %1392 = vmatpush1.msra.mxu0 %v1307
        %1393 = vmatprep.subr.mxu0 0.0
        %1394 = vmatpush1.msra.mxu0 %v1306
        %1395 = vmatprep.subr.mxu0 0.0
        %1396 = vmatpush1.msra.mxu0 %v1305
        %1397 = vmatprep.subr.mxu0 0.0
        %1398 = vmatpush2.msra.mxu0 0.0
        %1399 = vmatprep.subr.mxu0 0.0
        %1400 = vmatpush2.msra.mxu0 0.0
        %1401 = vmatprep.subr.mxu0 0.0
        %1402 = vmatpush2.msra.mxu0 0.0
        %1403 = vmatprep.subr.mxu0 0.0
        %1404 = vmatpush2.msra.mxu0 0.0
        %1405 = vmatprep.subr.mxu0 0.0
        %1406 = vmatpush2.msra.mxu0 0.0
        %1407 = vmatprep.subr.mxu0 0.0
        %1408 = vmatpush2.msra.mxu0 0.0
        %1409 = vmatprep.subr.mxu0 0.0
        %1410 = vmatpush2.msra.mxu0 0.0
        %1411 = vmatprep.subr.mxu0 0.0
        %1412 = vmatpush2.msra.mxu0 0.0
        %1413 = vmatprep.subr.mxu0 0.0
        %1414 = vmatpush2.msra.mxu0 0.0
        %1415 = vmatprep.subr.mxu0 0.0
        %1416 = vmatpush2.msra.mxu0 0.0
        %1417 = vmatprep.subr.mxu0 0.0
        %1418 = vmatpush2.msra.mxu0 0.0
        %1419 = vmatprep.subr.mxu0 0.0
        %1420 = vmatpush2.msra.mxu0 0.0
        %1421 = vmatprep.subr.mxu0 0.0
        %1422 = vmatpush2.msra.mxu0 0.0
        %1423 = vmatprep.subr.mxu0 0.0
        %1424 = vmatpush2.msra.mxu0 0.0
        %1425 = vmatprep.subr.mxu0 0.0
        %1426 = vmatpush2.msra.mxu0 0.0
        %1427 = vmatprep.subr.mxu0 0.0
        %1428 = vmatpush2.msra.mxu0 0.0
        %1429 = vmatprep.mubr.f32.mxu0 0.0
        %1430 = vmatmul.mubr.f32.gmra.mxu0 %v1318
        %v1431 = vpop.f32.mrf.mxu0
        %v1432 = vadd.f32 %v1314, %v1431
        %v1433 = vpop.f32.mrf.mxu0
        %1434 = vmatprep.mubr.f32.mxu0 0.0
        %1435 = vmatmul.mubr.f32.gmra.mxu0 %v1321
        %v1436 = vpop.f32.mrf.mxu0
        %v1437 = vadd.f32 %v1314, %v1436
        %v1438 = vpop.f32.mrf.mxu0
        %1439 = vmatprep.mubr.f32.mxu0 0.0
        %1440 = vmatmul.mubr.f32.gmra.mxu0 %v1324
        %v1441 = vpop.f32.mrf.mxu0
        %v1442 = vadd.f32 %v1314, %v1441
        %v1443 = vpop.f32.mrf.mxu0
        %1444 = vmatprep.mubr.f32.mxu0 0.0
        %1445 = vmatmul.mubr.f32.gmra.mxu0 %v1327
        %v1446 = vpop.f32.mrf.mxu0
        %v1447 = vadd.f32 %v1314, %v1446
        %v1448 = vpop.f32.mrf.mxu0
        %1449 = vmatprep.mubr.f32.mxu0 0.0
        %1450 = vmatmul.mubr.f32.gmra.mxu0 %v1330
        %v1451 = vpop.f32.mrf.mxu0
        %v1452 = vadd.f32 %v1314, %v1451
        %v1453 = vpop.f32.mrf.mxu0
        %1454 = vmatprep.mubr.f32.mxu0 0.0
        %1455 = vmatmul.mubr.f32.gmra.mxu0 %v1333
        %v1456 = vpop.f32.mrf.mxu0
        %v1457 = vadd.f32 %v1314, %v1456
        %v1458 = vpop.f32.mrf.mxu0
        %1459 = vmatprep.mubr.f32.mxu0 0.0
        %1460 = vmatmul.mubr.f32.gmra.mxu0 %v1336
        %v1461 = vpop.f32.mrf.mxu0
        %v1462 = vadd.f32 %v1314, %v1461
        %v1463 = vpop.f32.mrf.mxu0
        %1464 = vmatprep.mubr.f32.mxu0 0.0
        %1465 = vmatmul.mubr.f32.gmra.mxu0 %v1339
        %v1466 = vpop.f32.mrf.mxu0
        %v1467 = vadd.f32 %v1314, %v1466
        %v1468 = vpop.f32.mrf.mxu0
        %1469 = vmatprep.mubr.f32.mxu0 0.0
        %1470 = vmatmul.mubr.f32.gmra.mxu0 %v1342
        %v1471 = vpop.f32.mrf.mxu0
        %v1472 = vadd.f32 %v1314, %v1471
        %v1473 = vpop.f32.mrf.mxu0
        %1474 = vmatprep.mubr.f32.mxu0 0.0
        %1475 = vmatmul.mubr.f32.gmra.mxu0 %v1345
        %v1476 = vpop.f32.mrf.mxu0
        %v1477 = vadd.f32 %v1314, %v1476
        %v1478 = vpop.f32.mrf.mxu0
        %1479 = vmatprep.mubr.f32.mxu0 0.0
        %1480 = vmatmul.mubr.f32.gmra.mxu0 %v1348
        %v1481 = vpop.f32.mrf.mxu0
        %v1482 = vadd.f32 %v1314, %v1481
        %v1483 = vpop.f32.mrf.mxu0
        %1484 = vmatprep.mubr.f32.mxu0 0.0
        %1485 = vmatmul.mubr.f32.gmra.mxu0 %v1351
        %v1486 = vpop.f32.mrf.mxu0
        %v1487 = vadd.f32 %v1314, %v1486
        %v1488 = vpop.f32.mrf.mxu0
        %1489 = vmatprep.mubr.f32.mxu0 0.0
        %1490 = vmatmul.mubr.f32.gmra.mxu0 %v1354
        %v1491 = vpop.f32.mrf.mxu0
        %v1492 = vadd.f32 %v1314, %v1491
        %v1493 = vpop.f32.mrf.mxu0
        %1494 = vmatprep.mubr.f32.mxu0 0.0
        %1495 = vmatmul.mubr.f32.gmra.mxu0 %v1357
        %v1496 = vpop.f32.mrf.mxu0
        %v1497 = vadd.f32 %v1314, %v1496
        %v1498 = vpop.f32.mrf.mxu0
        %1499 = vmatprep.mubr.f32.mxu0 0.0
        %1500 = vmatmul.mubr.f32.gmra.mxu0 %v1360
        %v1501 = vpop.f32.mrf.mxu0
        %v1502 = vadd.f32 %v1314, %v1501
        %v1503 = vpop.f32.mrf.mxu0
        %1504 = vmatprep.mubr.f32.mxu0 0.0
        %1505 = vmatmul.mubr.f32.gmra.mxu0 %v1363
        %v1506 = vpop.f32.mrf.mxu0
        %v1507 = vadd.f32 %v1314, %v1506
        %v1508 = vpop.f32.mrf.mxu0
        %1509 = vdwg.mxu0
        %v1510 = vmax.f32 %v1432, 0.0
        %v1511 = vmax.f32 %v1437, 0.0
        %v1512 = vmax.f32 %v1442, 0.0
        %v1513 = vmax.f32 %v1447, 0.0
        %v1514 = vmax.f32 %v1452, 0.0
        %v1515 = vmax.f32 %v1457, 0.0
        %v1516 = vmax.f32 %v1462, 0.0
        %v1517 = vmax.f32 %v1467, 0.0
        %v1518 = vmax.f32 %v1472, 0.0
        %v1519 = vmax.f32 %v1477, 0.0
        %v1520 = vmax.f32 %v1482, 0.0
        %v1521 = vmax.f32 %v1487, 0.0
        %v1522 = vmax.f32 %v1492, 0.0
        %v1523 = vmax.f32 %v1497, 0.0
        %v1524 = vmax.f32 %v1502, 0.0
        %v1525 = vmax.f32 %v1507, 0.0
        %v1526 = vld [vmem:[#allocation10] sm:$0xff]
        %v1527 = vld [vmem:[#allocation10 + $0x8] sm:$0xff]
        %v1528 = vld [vmem:[#allocation10 + $0x10] sm:$0xff]
        %v1529 = vld [vmem:[#allocation10 + $0x18] sm:$0xff]
        %v1530 = vld [vmem:[#allocation10 + $0x20] sm:$0xff]
        %v1531 = vld [vmem:[#allocation10 + $0x28] sm:$0xff]
        %v1532 = vld [vmem:[#allocation10 + $0x30] sm:$0xff]
        %v1533 = vld [vmem:[#allocation10 + $0x38] sm:$0xff]
        %v1534 = vld [vmem:[#allocation10 + $0x40] sm:$0xff]
        %v1535 = vld [vmem:[#allocation10 + $0x48] sm:$0xff]
        %v1536 = vld [vmem:[#allocation10 + $0x50] sm:$0xff]
        %v1537 = vld [vmem:[#allocation10 + $0x58] sm:$0xff]
        %v1538 = vld [vmem:[#allocation10 + $0x60] sm:$0xff]
        %v1539 = vld [vmem:[#allocation10 + $0x68] sm:$0xff]
        %v1540 = vld [vmem:[#allocation10 + $0x70] sm:$0xff]
        %v1541 = vld [vmem:[#allocation10 + $0x78] sm:$0xff]
        %v1542 = vld [vmem:[#allocation10 + $0x80] sm:$0xff]
        %v1543 = vld [vmem:[#allocation10 + $0x88] sm:$0xff]
        %v1544 = vld [vmem:[#allocation10 + $0x90] sm:$0xff]
        %v1545 = vld [vmem:[#allocation10 + $0x98] sm:$0xff]
        %v1546 = vld [vmem:[#allocation10 + $0xa0] sm:$0xff]
        %v1547 = vld [vmem:[#allocation10 + $0xa8] sm:$0xff]
        %v1548 = vld [vmem:[#allocation10 + $0xb0] sm:$0xff]
        %v1549 = vld [vmem:[#allocation10 + $0xb8] sm:$0xff]
        %v1550 = vld [vmem:[#allocation10 + $0xc0] sm:$0xff]
        %v1551 = vld [vmem:[#allocation10 + $0xc8] sm:$0xff]
        %v1552 = vld [vmem:[#allocation10 + $0xd0] sm:$0xff]
        %v1553 = vld [vmem:[#allocation10 + $0xd8] sm:$0xff]
        %v1554 = vld [vmem:[#allocation10 + $0xe0] sm:$0xff]
        %v1555 = vld [vmem:[#allocation10 + $0xe8] sm:$0xff]
        %v1556 = vld [vmem:[#allocation10 + $0xf0] sm:$0xff]
        %v1557 = vld [vmem:[#allocation10 + $0xf8] sm:$0xff]
        %v1558 = vld [vmem:[%s11] sm:$0x3]
        %v1560 = vlaneseq
        %v1561 = vshrl.u32 %v1560, 7
        %v1562 = vsub.s32 0, %v1561
        %v1563 = vrot.slane %v1558, %v1562
        %v1564 = vlaneseq
        %v1565 = vshrl.u32 %v1564, 7
        %v1566 = vsub.s32 1, %v1565
        %v1567 = vrot.slane %v1558, %v1566
        %1570 = vmatprep.subr.mxu0 %v1557
        %1571 = vmatpush1.msra.mxu0 %v1556
        %1572 = vmatprep.subr.mxu0 %v1555
        %1573 = vmatpush1.msra.mxu0 %v1554
        %1574 = vmatprep.subr.mxu0 %v1553
        %1575 = vmatpush1.msra.mxu0 %v1552
        %1576 = vmatprep.subr.mxu0 %v1551
        %1577 = vmatpush1.msra.mxu0 %v1550
        %1578 = vmatprep.subr.mxu0 %v1549
        %1579 = vmatpush1.msra.mxu0 %v1548
        %1580 = vmatprep.subr.mxu0 %v1547
        %1581 = vmatpush1.msra.mxu0 %v1546
        %1582 = vmatprep.subr.mxu0 %v1545
        %1583 = vmatpush1.msra.mxu0 %v1544
        %1584 = vmatprep.subr.mxu0 %v1543
        %1585 = vmatpush1.msra.mxu0 %v1542
        %1586 = vmatprep.subr.mxu0 %v1541
        %1587 = vmatpush1.msra.mxu0 %v1540
        %1588 = vmatprep.subr.mxu0 %v1539
        %1589 = vmatpush1.msra.mxu0 %v1538
        %1590 = vmatprep.subr.mxu0 %v1537
        %1591 = vmatpush1.msra.mxu0 %v1536
        %1592 = vmatprep.subr.mxu0 %v1535
        %1593 = vmatpush1.msra.mxu0 %v1534
        %1594 = vmatprep.subr.mxu0 %v1533
        %1595 = vmatpush1.msra.mxu0 %v1532
        %1596 = vmatprep.subr.mxu0 %v1531
        %1597 = vmatpush1.msra.mxu0 %v1530
        %1598 = vmatprep.subr.mxu0 %v1529
        %1599 = vmatpush1.msra.mxu0 %v1528
        %1600 = vmatprep.subr.mxu0 %v1527
        %1601 = vmatpush1.msra.mxu0 %v1526
        %1602 = vmatprep.subr.mxu0 0.0
        %1603 = vmatpush2.msra.mxu0 0.0
        %1604 = vmatprep.subr.mxu0 0.0
        %1605 = vmatpush2.msra.mxu0 0.0
        %1606 = vmatprep.subr.mxu0 0.0
        %1607 = vmatpush2.msra.mxu0 0.0
        %1608 = vmatprep.subr.mxu0 0.0
        %1609 = vmatpush2.msra.mxu0 0.0
        %1610 = vmatprep.subr.mxu0 0.0
        %1611 = vmatpush2.msra.mxu0 0.0
        %1612 = vmatprep.subr.mxu0 0.0
        %1613 = vmatpush2.msra.mxu0 0.0
        %1614 = vmatprep.subr.mxu0 0.0
        %1615 = vmatpush2.msra.mxu0 0.0
        %1616 = vmatprep.subr.mxu0 0.0
        %1617 = vmatpush2.msra.mxu0 0.0
        %1618 = vmatprep.subr.mxu0 0.0
        %1619 = vmatpush2.msra.mxu0 0.0
        %1620 = vmatprep.subr.mxu0 0.0
        %1621 = vmatpush2.msra.mxu0 0.0
        %1622 = vmatprep.subr.mxu0 0.0
        %1623 = vmatpush2.msra.mxu0 0.0
        %1624 = vmatprep.subr.mxu0 0.0
        %1625 = vmatpush2.msra.mxu0 0.0
        %1626 = vmatprep.subr.mxu0 0.0
        %1627 = vmatpush2.msra.mxu0 0.0
        %1628 = vmatprep.subr.mxu0 0.0
        %1629 = vmatpush2.msra.mxu0 0.0
        %1630 = vmatprep.subr.mxu0 0.0
        %1631 = vmatpush2.msra.mxu0 0.0
        %1632 = vmatprep.subr.mxu0 0.0
        %1633 = vmatpush2.msra.mxu0 0.0
        %1634 = vmatprep.mubr.f32.mxu0 0.0
        %1635 = vmatmul.mubr.f32.gmra.mxu0 %v1510
        %v1636 = vpop.f32.mrf.mxu0
        %v1637 = vadd.f32 %v1563, %v1636
        %v1638 = vpop.f32.mrf.mxu0
        %v1639 = vadd.f32 %v1567, %v1638
        %1640 = vmatprep.mubr.f32.mxu0 0.0
        %1641 = vmatmul.mubr.f32.gmra.mxu0 %v1511
        %v1642 = vpop.f32.mrf.mxu0
        %v1643 = vadd.f32 %v1563, %v1642
        %v1644 = vpop.f32.mrf.mxu0
        %v1645 = vadd.f32 %v1567, %v1644
        %1646 = vmatprep.mubr.f32.mxu0 0.0
        %1647 = vmatmul.mubr.f32.gmra.mxu0 %v1512
        %v1648 = vpop.f32.mrf.mxu0
        %v1649 = vadd.f32 %v1563, %v1648
        %v1650 = vpop.f32.mrf.mxu0
        %v1651 = vadd.f32 %v1567, %v1650
        %1652 = vmatprep.mubr.f32.mxu0 0.0
        %1653 = vmatmul.mubr.f32.gmra.mxu0 %v1513
        %v1654 = vpop.f32.mrf.mxu0
        %v1655 = vadd.f32 %v1563, %v1654
        %v1656 = vpop.f32.mrf.mxu0
        %v1657 = vadd.f32 %v1567, %v1656
        %1658 = vmatprep.mubr.f32.mxu0 0.0
        %1659 = vmatmul.mubr.f32.gmra.mxu0 %v1514
        %v1660 = vpop.f32.mrf.mxu0
        %v1661 = vadd.f32 %v1563, %v1660
        %v1662 = vpop.f32.mrf.mxu0
        %v1663 = vadd.f32 %v1567, %v1662
        %1664 = vmatprep.mubr.f32.mxu0 0.0
        %1665 = vmatmul.mubr.f32.gmra.mxu0 %v1515
        %v1666 = vpop.f32.mrf.mxu0
        %v1667 = vadd.f32 %v1563, %v1666
        %v1668 = vpop.f32.mrf.mxu0
        %v1669 = vadd.f32 %v1567, %v1668
        %1670 = vmatprep.mubr.f32.mxu0 0.0
        %1671 = vmatmul.mubr.f32.gmra.mxu0 %v1516
        %v1672 = vpop.f32.mrf.mxu0
        %v1673 = vadd.f32 %v1563, %v1672
        %v1674 = vpop.f32.mrf.mxu0
        %v1675 = vadd.f32 %v1567, %v1674
        %1676 = vmatprep.mubr.f32.mxu0 0.0
        %1677 = vmatmul.mubr.f32.gmra.mxu0 %v1517
        %v1678 = vpop.f32.mrf.mxu0
        %v1679 = vadd.f32 %v1563, %v1678
        %v1680 = vpop.f32.mrf.mxu0
        %v1681 = vadd.f32 %v1567, %v1680
        %1682 = vmatprep.mubr.f32.mxu0 0.0
        %1683 = vmatmul.mubr.f32.gmra.mxu0 %v1518
        %v1684 = vpop.f32.mrf.mxu0
        %v1685 = vadd.f32 %v1563, %v1684
        %v1686 = vpop.f32.mrf.mxu0
        %v1687 = vadd.f32 %v1567, %v1686
        %1688 = vmatprep.mubr.f32.mxu0 0.0
        %1689 = vmatmul.mubr.f32.gmra.mxu0 %v1519
        %v1690 = vpop.f32.mrf.mxu0
        %v1691 = vadd.f32 %v1563, %v1690
        %v1692 = vpop.f32.mrf.mxu0
        %v1693 = vadd.f32 %v1567, %v1692
        %1694 = vmatprep.mubr.f32.mxu0 0.0
        %1695 = vmatmul.mubr.f32.gmra.mxu0 %v1520
        %v1696 = vpop.f32.mrf.mxu0
        %v1697 = vadd.f32 %v1563, %v1696
        %v1698 = vpop.f32.mrf.mxu0
        %v1699 = vadd.f32 %v1567, %v1698
        %1700 = vmatprep.mubr.f32.mxu0 0.0
        %1701 = vmatmul.mubr.f32.gmra.mxu0 %v1521
        %v1702 = vpop.f32.mrf.mxu0
        %v1703 = vadd.f32 %v1563, %v1702
        %v1704 = vpop.f32.mrf.mxu0
        %v1705 = vadd.f32 %v1567, %v1704
        %1706 = vmatprep.mubr.f32.mxu0 0.0
        %1707 = vmatmul.mubr.f32.gmra.mxu0 %v1522
        %v1708 = vpop.f32.mrf.mxu0
        %v1709 = vadd.f32 %v1563, %v1708
        %v1710 = vpop.f32.mrf.mxu0
        %v1711 = vadd.f32 %v1567, %v1710
        %1712 = vmatprep.mubr.f32.mxu0 0.0
        %1713 = vmatmul.mubr.f32.gmra.mxu0 %v1523
        %v1714 = vpop.f32.mrf.mxu0
        %v1715 = vadd.f32 %v1563, %v1714
        %v1716 = vpop.f32.mrf.mxu0
        %v1717 = vadd.f32 %v1567, %v1716
        %1718 = vmatprep.mubr.f32.mxu0 0.0
        %1719 = vmatmul.mubr.f32.gmra.mxu0 %v1524
        %v1720 = vpop.f32.mrf.mxu0
        %v1721 = vadd.f32 %v1563, %v1720
        %v1722 = vpop.f32.mrf.mxu0
        %v1723 = vadd.f32 %v1567, %v1722
        %1724 = vmatprep.mubr.f32.mxu0 0.0
        %1725 = vmatmul.mubr.f32.gmra.mxu0 %v1525
        %v1726 = vpop.f32.mrf.mxu0
        %v1727 = vadd.f32 %v1563, %v1726
        %v1728 = vpop.f32.mrf.mxu0
        %v1729 = vadd.f32 %v1567, %v1728
        %1730 = vdwg.mxu0
        %v1731 = vmax.f32 %v1637, 0.0
        %v1732 = vmax.f32 %v1639, 0.0
        %v1733 = vmax.f32 %v1643, 0.0
        %v1734 = vmax.f32 %v1645, 0.0
        %v1735 = vmax.f32 %v1649, 0.0
        %v1736 = vmax.f32 %v1651, 0.0
        %v1737 = vmax.f32 %v1655, 0.0
        %v1738 = vmax.f32 %v1657, 0.0
        %v1739 = vmax.f32 %v1661, 0.0
        %v1740 = vmax.f32 %v1663, 0.0
        %v1741 = vmax.f32 %v1667, 0.0
        %v1742 = vmax.f32 %v1669, 0.0
        %v1743 = vmax.f32 %v1673, 0.0
        %v1744 = vmax.f32 %v1675, 0.0
        %v1745 = vmax.f32 %v1679, 0.0
        %v1746 = vmax.f32 %v1681, 0.0
        %v1747 = vmax.f32 %v1685, 0.0
        %v1748 = vmax.f32 %v1687, 0.0
        %v1749 = vmax.f32 %v1691, 0.0
        %v1750 = vmax.f32 %v1693, 0.0
        %v1751 = vmax.f32 %v1697, 0.0
        %v1752 = vmax.f32 %v1699, 0.0
        %v1753 = vmax.f32 %v1703, 0.0
        %v1754 = vmax.f32 %v1705, 0.0
        %v1755 = vmax.f32 %v1709, 0.0
        %v1756 = vmax.f32 %v1711, 0.0
        %v1757 = vmax.f32 %v1715, 0.0
        %v1758 = vmax.f32 %v1717, 0.0
        %v1759 = vmax.f32 %v1721, 0.0
        %v1760 = vmax.f32 %v1723, 0.0
        %v1761 = vmax.f32 %v1727, 0.0
        %v1762 = vmax.f32 %v1729, 0.0
        %v1763 = vld [vmem:[#allocation12] sm:$0xff]
        %v1764 = vld [vmem:[#allocation12 + $0x8] sm:$0xff]
        %v1765 = vld [vmem:[#allocation12 + $0x10] sm:$0xff]
        %v1766 = vld [vmem:[#allocation12 + $0x18] sm:$0xff]
        %v1767 = vld [vmem:[#allocation12 + $0x20] sm:$0xff]
        %v1768 = vld [vmem:[#allocation12 + $0x28] sm:$0xff]
        %v1769 = vld [vmem:[#allocation12 + $0x30] sm:$0xff]
        %v1770 = vld [vmem:[#allocation12 + $0x38] sm:$0xff]
        %v1771 = vld [vmem:[#allocation12 + $0x40] sm:$0xff]
        %v1772 = vld [vmem:[#allocation12 + $0x48] sm:$0xff]
        %v1773 = vld [vmem:[#allocation12 + $0x50] sm:$0xff]
        %v1774 = vld [vmem:[#allocation12 + $0x58] sm:$0xff]
        %v1775 = vld [vmem:[#allocation12 + $0x60] sm:$0xff]
        %v1776 = vld [vmem:[#allocation12 + $0x68] sm:$0xff]
        %v1777 = vld [vmem:[#allocation12 + $0x70] sm:$0xff]
        %v1778 = vld [vmem:[#allocation12 + $0x78] sm:$0xff]
        %v1779 = vld [vmem:[#allocation12 + $0x80] sm:$0xff]
        %v1780 = vld [vmem:[#allocation12 + $0x88] sm:$0xff]
        %v1781 = vld [vmem:[#allocation12 + $0x90] sm:$0xff]
        %v1782 = vld [vmem:[#allocation12 + $0x98] sm:$0xff]
        %v1783 = vld [vmem:[#allocation12 + $0xa0] sm:$0xff]
        %v1784 = vld [vmem:[#allocation12 + $0xa8] sm:$0xff]
        %v1785 = vld [vmem:[#allocation12 + $0xb0] sm:$0xff]
        %v1786 = vld [vmem:[#allocation12 + $0xb8] sm:$0xff]
        %v1787 = vld [vmem:[#allocation12 + $0xc0] sm:$0xff]
        %v1788 = vld [vmem:[#allocation12 + $0xc8] sm:$0xff]
        %v1789 = vld [vmem:[#allocation12 + $0xd0] sm:$0xff]
        %v1790 = vld [vmem:[#allocation12 + $0xd8] sm:$0xff]
        %v1791 = vld [vmem:[#allocation12 + $0xe0] sm:$0xff]
        %v1792 = vld [vmem:[#allocation12 + $0xe8] sm:$0xff]
        %v1793 = vld [vmem:[#allocation12 + $0xf0] sm:$0xff]
        %v1794 = vld [vmem:[#allocation12 + $0xf8] sm:$0xff]
        %v1795 = vld [vmem:[#allocation12 + $0x100] sm:$0xff]
        %v1796 = vld [vmem:[#allocation12 + $0x108] sm:$0xff]
        %v1797 = vld [vmem:[#allocation12 + $0x110] sm:$0xff]
        %v1798 = vld [vmem:[#allocation12 + $0x118] sm:$0xff]
        %v1799 = vld [vmem:[#allocation12 + $0x120] sm:$0xff]
        %v1800 = vld [vmem:[#allocation12 + $0x128] sm:$0xff]
        %v1801 = vld [vmem:[#allocation12 + $0x130] sm:$0xff]
        %v1802 = vld [vmem:[#allocation12 + $0x138] sm:$0xff]
        %v1803 = vld [vmem:[#allocation12 + $0x140] sm:$0xff]
        %v1804 = vld [vmem:[#allocation12 + $0x148] sm:$0xff]
        %v1805 = vld [vmem:[#allocation12 + $0x150] sm:$0xff]
        %v1806 = vld [vmem:[#allocation12 + $0x158] sm:$0xff]
        %v1807 = vld [vmem:[#allocation12 + $0x160] sm:$0xff]
        %v1808 = vld [vmem:[#allocation12 + $0x168] sm:$0xff]
        %v1809 = vld [vmem:[#allocation12 + $0x170] sm:$0xff]
        %v1810 = vld [vmem:[#allocation12 + $0x178] sm:$0xff]
        %v1811 = vld [vmem:[#allocation12 + $0x180] sm:$0xff]
        %v1812 = vld [vmem:[#allocation12 + $0x188] sm:$0xff]
        %v1813 = vld [vmem:[#allocation12 + $0x190] sm:$0xff]
        %v1814 = vld [vmem:[#allocation12 + $0x198] sm:$0xff]
        %v1815 = vld [vmem:[#allocation12 + $0x1a0] sm:$0xff]
        %v1816 = vld [vmem:[#allocation12 + $0x1a8] sm:$0xff]
        %v1817 = vld [vmem:[#allocation12 + $0x1b0] sm:$0xff]
        %v1818 = vld [vmem:[#allocation12 + $0x1b8] sm:$0xff]
        %v1819 = vld [vmem:[#allocation12 + $0x1c0] sm:$0xff]
        %v1820 = vld [vmem:[#allocation12 + $0x1c8] sm:$0xff]
        %v1821 = vld [vmem:[#allocation12 + $0x1d0] sm:$0xff]
        %v1822 = vld [vmem:[#allocation12 + $0x1d8] sm:$0xff]
        %v1823 = vld [vmem:[#allocation12 + $0x1e0] sm:$0xff]
        %v1824 = vld [vmem:[#allocation12 + $0x1e8] sm:$0xff]
        %v1825 = vld [vmem:[#allocation12 + $0x1f0] sm:$0xff]
        %v1826 = vld [vmem:[#allocation12 + $0x1f8] sm:$0xff]
        %v1827 = vld [vmem:[#allocation12 + $0x200] sm:$0xff]
        %v1828 = vld [vmem:[#allocation12 + $0x208] sm:$0xff]
        %v1829 = vld [vmem:[#allocation12 + $0x210] sm:$0xff]
        %v1830 = vld [vmem:[#allocation12 + $0x218] sm:$0xff]
        %v1831 = vld [vmem:[#allocation12 + $0x220] sm:$0xff]
        %v1832 = vld [vmem:[#allocation12 + $0x228] sm:$0xff]
        %v1833 = vld [vmem:[#allocation12 + $0x230] sm:$0xff]
        %v1834 = vld [vmem:[#allocation12 + $0x238] sm:$0xff]
        %v1835 = vld [vmem:[#allocation12 + $0x240] sm:$0xff]
        %v1836 = vld [vmem:[#allocation12 + $0x248] sm:$0xff]
        %v1837 = vld [vmem:[#allocation12 + $0x250] sm:$0xff]
        %v1838 = vld [vmem:[#allocation12 + $0x258] sm:$0xff]
        %v1839 = vld [vmem:[#allocation12 + $0x260] sm:$0xff]
        %v1840 = vld [vmem:[#allocation12 + $0x268] sm:$0xff]
        %v1841 = vld [vmem:[#allocation12 + $0x270] sm:$0xff]
        %v1842 = vld [vmem:[#allocation12 + $0x278] sm:$0xff]
        %v1843 = vld [vmem:[#allocation12 + $0x280] sm:$0xff]
        %v1844 = vld [vmem:[#allocation12 + $0x288] sm:$0xff]
        %v1845 = vld [vmem:[#allocation12 + $0x290] sm:$0xff]
        %v1846 = vld [vmem:[#allocation12 + $0x298] sm:$0xff]
        %v1847 = vld [vmem:[#allocation12 + $0x2a0] sm:$0xff]
        %v1848 = vld [vmem:[#allocation12 + $0x2a8] sm:$0xff]
        %v1849 = vld [vmem:[#allocation12 + $0x2b0] sm:$0xff]
        %v1850 = vld [vmem:[#allocation12 + $0x2b8] sm:$0xff]
        %v1851 = vld [vmem:[#allocation12 + $0x2c0] sm:$0xff]
        %v1852 = vld [vmem:[#allocation12 + $0x2c8] sm:$0xff]
        %v1853 = vld [vmem:[#allocation12 + $0x2d0] sm:$0xff]
        %v1854 = vld [vmem:[#allocation12 + $0x2d8] sm:$0xff]
        %v1855 = vld [vmem:[#allocation12 + $0x2e0] sm:$0xff]
        %v1856 = vld [vmem:[#allocation12 + $0x2e8] sm:$0xff]
        %v1857 = vld [vmem:[#allocation12 + $0x2f0] sm:$0xff]
        %v1858 = vld [vmem:[#allocation12 + $0x2f8] sm:$0xff]
        %v1859 = vld [vmem:[#allocation12 + $0x300] sm:$0xff]
        %v1860 = vld [vmem:[#allocation12 + $0x308] sm:$0xff]
        %v1861 = vld [vmem:[#allocation12 + $0x310] sm:$0xff]
        %v1862 = vld [vmem:[#allocation12 + $0x318] sm:$0xff]
        %v1863 = vld [vmem:[#allocation12 + $0x320] sm:$0xff]
        %v1864 = vld [vmem:[#allocation12 + $0x328] sm:$0xff]
        %v1865 = vld [vmem:[#allocation12 + $0x330] sm:$0xff]
        %v1866 = vld [vmem:[#allocation12 + $0x338] sm:$0xff]
        %v1867 = vld [vmem:[#allocation12 + $0x340] sm:$0xff]
        %v1868 = vld [vmem:[#allocation12 + $0x348] sm:$0xff]
        %v1869 = vld [vmem:[#allocation12 + $0x350] sm:$0xff]
        %v1870 = vld [vmem:[#allocation12 + $0x358] sm:$0xff]
        %v1871 = vld [vmem:[#allocation12 + $0x360] sm:$0xff]
        %v1872 = vld [vmem:[#allocation12 + $0x368] sm:$0xff]
        %v1873 = vld [vmem:[#allocation12 + $0x370] sm:$0xff]
        %v1874 = vld [vmem:[#allocation12 + $0x378] sm:$0xff]
        %v1875 = vld [vmem:[#allocation12 + $0x380] sm:$0xff]
        %v1876 = vld [vmem:[#allocation12 + $0x388] sm:$0xff]
        %v1877 = vld [vmem:[#allocation12 + $0x390] sm:$0xff]
        %v1878 = vld [vmem:[#allocation12 + $0x398] sm:$0xff]
        %v1879 = vld [vmem:[#allocation12 + $0x3a0] sm:$0xff]
        %v1880 = vld [vmem:[#allocation12 + $0x3a8] sm:$0xff]
        %v1881 = vld [vmem:[#allocation12 + $0x3b0] sm:$0xff]
        %v1882 = vld [vmem:[#allocation12 + $0x3b8] sm:$0xff]
        %v1883 = vld [vmem:[#allocation12 + $0x3c0] sm:$0xff]
        %v1884 = vld [vmem:[#allocation12 + $0x3c8] sm:$0xff]
        %v1885 = vld [vmem:[#allocation12 + $0x3d0] sm:$0xff]
        %v1886 = vld [vmem:[#allocation12 + $0x3d8] sm:$0xff]
        %v1887 = vld [vmem:[#allocation12 + $0x3e0] sm:$0xff]
        %v1888 = vld [vmem:[#allocation12 + $0x3e8] sm:$0xff]
        %v1889 = vld [vmem:[#allocation12 + $0x3f0] sm:$0xff]
        %v1890 = vld [vmem:[#allocation12 + $0x3f8] sm:$0xff]
        %v1891 = vld [vmem:[#allocation12 + $0x400] sm:$0xff]
        %v1892 = vld [vmem:[#allocation12 + $0x408] sm:$0xff]
        %v1893 = vld [vmem:[#allocation12 + $0x410] sm:$0xff]
        %v1894 = vld [vmem:[#allocation12 + $0x418] sm:$0xff]
        %v1895 = vld [vmem:[#allocation12 + $0x420] sm:$0xff]
        %v1896 = vld [vmem:[#allocation12 + $0x428] sm:$0xff]
        %v1897 = vld [vmem:[#allocation12 + $0x430] sm:$0xff]
        %v1898 = vld [vmem:[#allocation12 + $0x438] sm:$0xff]
        %v1899 = vld [vmem:[#allocation12 + $0x440] sm:$0xff]
        %v1900 = vld [vmem:[#allocation12 + $0x448] sm:$0xff]
        %v1901 = vld [vmem:[#allocation12 + $0x450] sm:$0xff]
        %v1902 = vld [vmem:[#allocation12 + $0x458] sm:$0xff]
        %v1903 = vld [vmem:[#allocation12 + $0x460] sm:$0xff]
        %v1904 = vld [vmem:[#allocation12 + $0x468] sm:$0xff]
        %v1905 = vld [vmem:[#allocation12 + $0x470] sm:$0xff]
        %v1906 = vld [vmem:[#allocation12 + $0x478] sm:$0xff]
        %v1907 = vld [vmem:[#allocation12 + $0x480] sm:$0xff]
        %v1908 = vld [vmem:[#allocation12 + $0x488] sm:$0xff]
        %v1909 = vld [vmem:[#allocation12 + $0x490] sm:$0xff]
        %v1910 = vld [vmem:[#allocation12 + $0x498] sm:$0xff]
        %v1911 = vld [vmem:[#allocation12 + $0x4a0] sm:$0xff]
        %v1912 = vld [vmem:[#allocation12 + $0x4a8] sm:$0xff]
        %v1913 = vld [vmem:[#allocation12 + $0x4b0] sm:$0xff]
        %v1914 = vld [vmem:[#allocation12 + $0x4b8] sm:$0xff]
        %v1915 = vld [vmem:[#allocation12 + $0x4c0] sm:$0xff]
        %v1916 = vld [vmem:[#allocation12 + $0x4c8] sm:$0xff]
        %v1917 = vld [vmem:[#allocation12 + $0x4d0] sm:$0xff]
        %v1918 = vld [vmem:[#allocation12 + $0x4d8] sm:$0xff]
        %v1919 = vld [vmem:[#allocation12 + $0x4e0] sm:$0xff]
        %v1920 = vld [vmem:[#allocation12 + $0x4e8] sm:$0xff]
        %v1921 = vld [vmem:[#allocation12 + $0x4f0] sm:$0xff]
        %v1922 = vld [vmem:[#allocation12 + $0x4f8] sm:$0xff]
        %v1923 = vld [vmem:[#allocation12 + $0x500] sm:$0xff]
        %v1924 = vld [vmem:[#allocation12 + $0x508] sm:$0xff]
        %v1925 = vld [vmem:[#allocation12 + $0x510] sm:$0xff]
        %v1926 = vld [vmem:[#allocation12 + $0x518] sm:$0xff]
        %v1927 = vld [vmem:[#allocation12 + $0x520] sm:$0xff]
        %v1928 = vld [vmem:[#allocation12 + $0x528] sm:$0xff]
        %v1929 = vld [vmem:[#allocation12 + $0x530] sm:$0xff]
        %v1930 = vld [vmem:[#allocation12 + $0x538] sm:$0xff]
        %v1931 = vld [vmem:[#allocation12 + $0x540] sm:$0xff]
        %v1932 = vld [vmem:[#allocation12 + $0x548] sm:$0xff]
        %v1933 = vld [vmem:[#allocation12 + $0x550] sm:$0xff]
        %v1934 = vld [vmem:[#allocation12 + $0x558] sm:$0xff]
        %v1935 = vld [vmem:[#allocation12 + $0x560] sm:$0xff]
        %v1936 = vld [vmem:[#allocation12 + $0x568] sm:$0xff]
        %v1937 = vld [vmem:[#allocation12 + $0x570] sm:$0xff]
        %v1938 = vld [vmem:[#allocation12 + $0x578] sm:$0xff]
        %v1939 = vld [vmem:[#allocation12 + $0x580] sm:$0xff]
        %v1940 = vld [vmem:[#allocation12 + $0x588] sm:$0xff]
        %v1941 = vld [vmem:[#allocation12 + $0x590] sm:$0xff]
        %v1942 = vld [vmem:[#allocation12 + $0x598] sm:$0xff]
        %v1943 = vld [vmem:[#allocation12 + $0x5a0] sm:$0xff]
        %v1944 = vld [vmem:[#allocation12 + $0x5a8] sm:$0xff]
        %v1945 = vld [vmem:[#allocation12 + $0x5b0] sm:$0xff]
        %v1946 = vld [vmem:[#allocation12 + $0x5b8] sm:$0xff]
        %v1947 = vld [vmem:[#allocation12 + $0x5c0] sm:$0xff]
        %v1948 = vld [vmem:[#allocation12 + $0x5c8] sm:$0xff]
        %v1949 = vld [vmem:[#allocation12 + $0x5d0] sm:$0xff]
        %v1950 = vld [vmem:[#allocation12 + $0x5d8] sm:$0xff]
        %v1951 = vld [vmem:[#allocation12 + $0x5e0] sm:$0xff]
        %v1952 = vld [vmem:[#allocation12 + $0x5e8] sm:$0xff]
        %v1953 = vld [vmem:[#allocation12 + $0x5f0] sm:$0xff]
        %v1954 = vld [vmem:[#allocation12 + $0x5f8] sm:$0xff]
        %v1955 = vld [vmem:[%s13] sm:$0x3f]
        %v1957 = vlaneseq
        %v1958 = vshrl.u32 %v1957, 7
        %v1959 = vsub.s32 0, %v1958
        %v1960 = vrot.slane %v1955, %v1959
        %v1961 = vlaneseq
        %v1962 = vshrl.u32 %v1961, 7
        %v1963 = vsub.s32 1, %v1962
        %v1964 = vrot.slane %v1955, %v1963
        %v1965 = vlaneseq
        %v1966 = vshrl.u32 %v1965, 7
        %v1967 = vsub.s32 2, %v1966
        %v1968 = vrot.slane %v1955, %v1967
        %v1969 = vlaneseq
        %v1970 = vshrl.u32 %v1969, 7
        %v1971 = vsub.s32 3, %v1970
        %v1972 = vrot.slane %v1955, %v1971
        %v1973 = vlaneseq
        %v1974 = vshrl.u32 %v1973, 7
        %v1975 = vsub.s32 4, %v1974
        %v1976 = vrot.slane %v1955, %v1975
        %v1977 = vlaneseq
        %v1978 = vshrl.u32 %v1977, 7
        %v1979 = vsub.s32 5, %v1978
        %v1980 = vrot.slane %v1955, %v1979
        %1987 = vmatprep.subr.mxu0 %v1854
        %1988 = vmatpush1.msra.mxu0 %v1853
        %1989 = vmatprep.subr.mxu0 %v1848
        %1990 = vmatpush1.msra.mxu0 %v1847
        %1991 = vmatprep.subr.mxu0 %v1842
        %1992 = vmatpush1.msra.mxu0 %v1841
        %1993 = vmatprep.subr.mxu0 %v1836
        %1994 = vmatpush1.msra.mxu0 %v1835
        %1995 = vmatprep.subr.mxu0 %v1830
        %1996 = vmatpush1.msra.mxu0 %v1829
        %1997 = vmatprep.subr.mxu0 %v1824
        %1998 = vmatpush1.msra.mxu0 %v1823
        %1999 = vmatprep.subr.mxu0 %v1818
        %2000 = vmatpush1.msra.mxu0 %v1817
        %2001 = vmatprep.subr.mxu0 %v1812
        %2002 = vmatpush1.msra.mxu0 %v1811
        %2003 = vmatprep.subr.mxu0 %v1806
        %2004 = vmatpush1.msra.mxu0 %v1805
        %2005 = vmatprep.subr.mxu0 %v1800
        %2006 = vmatpush1.msra.mxu0 %v1799
        %2007 = vmatprep.subr.mxu0 %v1794
        %2008 = vmatpush1.msra.mxu0 %v1793
        %2009 = vmatprep.subr.mxu0 %v1788
        %2010 = vmatpush1.msra.mxu0 %v1787
        %2011 = vmatprep.subr.mxu0 %v1782
        %2012 = vmatpush1.msra.mxu0 %v1781
        %2013 = vmatprep.subr.mxu0 %v1776
        %2014 = vmatpush1.msra.mxu0 %v1775
        %2015 = vmatprep.subr.mxu0 %v1770
        %2016 = vmatpush1.msra.mxu0 %v1769
        %2017 = vmatprep.subr.mxu0 %v1764
        %2018 = vmatpush1.msra.mxu0 %v1763
        %2019 = vmatprep.subr.mxu0 %v1950
        %2020 = vmatpush2.msra.mxu0 %v1949
        %2021 = vmatprep.subr.mxu0 %v1944
        %2022 = vmatpush2.msra.mxu0 %v1943
        %2023 = vmatprep.subr.mxu0 %v1938
        %2024 = vmatpush2.msra.mxu0 %v1937
        %2025 = vmatprep.subr.mxu0 %v1932
        %2026 = vmatpush2.msra.mxu0 %v1931
        %2027 = vmatprep.subr.mxu0 %v1926
        %2028 = vmatpush2.msra.mxu0 %v1925
        %2029 = vmatprep.subr.mxu0 %v1920
        %2030 = vmatpush2.msra.mxu0 %v1919
        %2031 = vmatprep.subr.mxu0 %v1914
        %2032 = vmatpush2.msra.mxu0 %v1913
        %2033 = vmatprep.subr.mxu0 %v1908
        %2034 = vmatpush2.msra.mxu0 %v1907
        %2035 = vmatprep.subr.mxu0 %v1902
        %2036 = vmatpush2.msra.mxu0 %v1901
        %2037 = vmatprep.subr.mxu0 %v1896
        %2038 = vmatpush2.msra.mxu0 %v1895
        %2039 = vmatprep.subr.mxu0 %v1890
        %2040 = vmatpush2.msra.mxu0 %v1889
        %2041 = vmatprep.subr.mxu0 %v1884
        %2042 = vmatpush2.msra.mxu0 %v1883
        %2043 = vmatprep.subr.mxu0 %v1878
        %2044 = vmatpush2.msra.mxu0 %v1877
        %2045 = vmatprep.subr.mxu0 %v1872
        %2046 = vmatpush2.msra.mxu0 %v1871
        %2047 = vmatprep.subr.mxu0 %v1866
        %2048 = vmatpush2.msra.mxu0 %v1865
        %2049 = vmatprep.subr.mxu0 %v1860
        %2050 = vmatpush2.msra.mxu0 %v1859
        %2051 = vmatprep.mubr.f32.mxu0 %v1732
        %2052 = vmatmul.mubr.f32.gmra.mxu0 %v1731
        %v2053 = vpop.f32.mrf.mxu0
        %v2054 = vadd.f32 %v1960, %v2053
        %v2055 = vpop.f32.mrf.mxu0
        %v2056 = vadd.f32 %v1964, %v2055
        %2057 = vmatprep.mubr.f32.mxu0 %v1734
        %2058 = vmatmul.mubr.f32.gmra.mxu0 %v1733
        %v2059 = vpop.f32.mrf.mxu0
        %v2060 = vadd.f32 %v1960, %v2059
        %v2061 = vpop.f32.mrf.mxu0
        %v2062 = vadd.f32 %v1964, %v2061
        %2063 = vmatprep.mubr.f32.mxu0 %v1736
        %2064 = vmatmul.mubr.f32.gmra.mxu0 %v1735
        %v2065 = vpop.f32.mrf.mxu0
        %v2066 = vadd.f32 %v1960, %v2065
        %v2067 = vpop.f32.mrf.mxu0
        %v2068 = vadd.f32 %v1964, %v2067
        %2069 = vmatprep.mubr.f32.mxu0 %v1738
        %2070 = vmatmul.mubr.f32.gmra.mxu0 %v1737
        %v2071 = vpop.f32.mrf.mxu0
        %v2072 = vadd.f32 %v1960, %v2071
        %v2073 = vpop.f32.mrf.mxu0
        %v2074 = vadd.f32 %v1964, %v2073
        %2075 = vmatprep.mubr.f32.mxu0 %v1740
        %2076 = vmatmul.mubr.f32.gmra.mxu0 %v1739
        %v2077 = vpop.f32.mrf.mxu0
        %v2078 = vadd.f32 %v1960, %v2077
        %v2079 = vpop.f32.mrf.mxu0
        %v2080 = vadd.f32 %v1964, %v2079
        %2081 = vmatprep.mubr.f32.mxu0 %v1742
        %2082 = vmatmul.mubr.f32.gmra.mxu0 %v1741
        %v2083 = vpop.f32.mrf.mxu0
        %v2084 = vadd.f32 %v1960, %v2083
        %v2085 = vpop.f32.mrf.mxu0
        %v2086 = vadd.f32 %v1964, %v2085
        %2087 = vmatprep.mubr.f32.mxu0 %v1744
        %2088 = vmatmul.mubr.f32.gmra.mxu0 %v1743
        %v2089 = vpop.f32.mrf.mxu0
        %v2090 = vadd.f32 %v1960, %v2089
        %v2091 = vpop.f32.mrf.mxu0
        %v2092 = vadd.f32 %v1964, %v2091
        %2093 = vmatprep.mubr.f32.mxu0 %v1746
        %2094 = vmatmul.mubr.f32.gmra.mxu0 %v1745
        %v2095 = vpop.f32.mrf.mxu0
        %v2096 = vadd.f32 %v1960, %v2095
        %v2097 = vpop.f32.mrf.mxu0
        %v2098 = vadd.f32 %v1964, %v2097
        %2099 = vmatprep.mubr.f32.mxu0 %v1748
        %2100 = vmatmul.mubr.f32.gmra.mxu0 %v1747
        %v2101 = vpop.f32.mrf.mxu0
        %v2102 = vadd.f32 %v1960, %v2101
        %v2103 = vpop.f32.mrf.mxu0
        %v2104 = vadd.f32 %v1964, %v2103
        %2105 = vmatprep.mubr.f32.mxu0 %v1750
        %2106 = vmatmul.mubr.f32.gmra.mxu0 %v1749
        %v2107 = vpop.f32.mrf.mxu0
        %v2108 = vadd.f32 %v1960, %v2107
        %v2109 = vpop.f32.mrf.mxu0
        %v2110 = vadd.f32 %v1964, %v2109
        %2111 = vmatprep.mubr.f32.mxu0 %v1752
        %2112 = vmatmul.mubr.f32.gmra.mxu0 %v1751
        %v2113 = vpop.f32.mrf.mxu0
        %v2114 = vadd.f32 %v1960, %v2113
        %v2115 = vpop.f32.mrf.mxu0
        %v2116 = vadd.f32 %v1964, %v2115
        %2117 = vmatprep.mubr.f32.mxu0 %v1754
        %2118 = vmatmul.mubr.f32.gmra.mxu0 %v1753
        %v2119 = vpop.f32.mrf.mxu0
        %v2120 = vadd.f32 %v1960, %v2119
        %v2121 = vpop.f32.mrf.mxu0
        %v2122 = vadd.f32 %v1964, %v2121
        %2123 = vmatprep.mubr.f32.mxu0 %v1756
        %2124 = vmatmul.mubr.f32.gmra.mxu0 %v1755
        %v2125 = vpop.f32.mrf.mxu0
        %v2126 = vadd.f32 %v1960, %v2125
        %v2127 = vpop.f32.mrf.mxu0
        %v2128 = vadd.f32 %v1964, %v2127
        %2129 = vmatprep.mubr.f32.mxu0 %v1758
        %2130 = vmatmul.mubr.f32.gmra.mxu0 %v1757
        %v2131 = vpop.f32.mrf.mxu0
        %v2132 = vadd.f32 %v1960, %v2131
        %v2133 = vpop.f32.mrf.mxu0
        %v2134 = vadd.f32 %v1964, %v2133
        %2135 = vmatprep.mubr.f32.mxu0 %v1760
        %2136 = vmatmul.mubr.f32.gmra.mxu0 %v1759
        %v2137 = vpop.f32.mrf.mxu0
        %v2138 = vadd.f32 %v1960, %v2137
        %v2139 = vpop.f32.mrf.mxu0
        %v2140 = vadd.f32 %v1964, %v2139
        %2141 = vmatprep.mubr.f32.mxu0 %v1762
        %2142 = vmatmul.mubr.f32.gmra.mxu0 %v1761
        %v2143 = vpop.f32.mrf.mxu0
        %v2144 = vadd.f32 %v1960, %v2143
        %v2145 = vpop.f32.mrf.mxu0
        %v2146 = vadd.f32 %v1964, %v2145
        %2147 = vdwg.mxu0
        %2148 = vmatprep.subr.mxu0 %v1856
        %2149 = vmatpush1.msra.mxu0 %v1855
        %2150 = vmatprep.subr.mxu0 %v1850
        %2151 = vmatpush1.msra.mxu0 %v1849
        %2152 = vmatprep.subr.mxu0 %v1844
        %2153 = vmatpush1.msra.mxu0 %v1843
        %2154 = vmatprep.subr.mxu0 %v1838
        %2155 = vmatpush1.msra.mxu0 %v1837
        %2156 = vmatprep.subr.mxu0 %v1832
        %2157 = vmatpush1.msra.mxu0 %v1831
        %2158 = vmatprep.subr.mxu0 %v1826
        %2159 = vmatpush1.msra.mxu0 %v1825
        %2160 = vmatprep.subr.mxu0 %v1820
        %2161 = vmatpush1.msra.mxu0 %v1819
        %2162 = vmatprep.subr.mxu0 %v1814
        %2163 = vmatpush1.msra.mxu0 %v1813
        %2164 = vmatprep.subr.mxu0 %v1808
        %2165 = vmatpush1.msra.mxu0 %v1807
        %2166 = vmatprep.subr.mxu0 %v1802
        %2167 = vmatpush1.msra.mxu0 %v1801
        %2168 = vmatprep.subr.mxu0 %v1796
        %2169 = vmatpush1.msra.mxu0 %v1795
        %2170 = vmatprep.subr.mxu0 %v1790
        %2171 = vmatpush1.msra.mxu0 %v1789
        %2172 = vmatprep.subr.mxu0 %v1784
        %2173 = vmatpush1.msra.mxu0 %v1783
        %2174 = vmatprep.subr.mxu0 %v1778
        %2175 = vmatpush1.msra.mxu0 %v1777
        %2176 = vmatprep.subr.mxu0 %v1772
        %2177 = vmatpush1.msra.mxu0 %v1771
        %2178 = vmatprep.subr.mxu0 %v1766
        %2179 = vmatpush1.msra.mxu0 %v1765
        %2180 = vmatprep.subr.mxu0 %v1952
        %2181 = vmatpush2.msra.mxu0 %v1951
        %2182 = vmatprep.subr.mxu0 %v1946
        %2183 = vmatpush2.msra.mxu0 %v1945
        %2184 = vmatprep.subr.mxu0 %v1940
        %2185 = vmatpush2.msra.mxu0 %v1939
        %2186 = vmatprep.subr.mxu0 %v1934
        %2187 = vmatpush2.msra.mxu0 %v1933
        %2188 = vmatprep.subr.mxu0 %v1928
        %2189 = vmatpush2.msra.mxu0 %v1927
        %2190 = vmatprep.subr.mxu0 %v1922
        %2191 = vmatpush2.msra.mxu0 %v1921
        %2192 = vmatprep.subr.mxu0 %v1916
        %2193 = vmatpush2.msra.mxu0 %v1915
        %2194 = vmatprep.subr.mxu0 %v1910
        %2195 = vmatpush2.msra.mxu0 %v1909
        %2196 = vmatprep.subr.mxu0 %v1904
        %2197 = vmatpush2.msra.mxu0 %v1903
        %2198 = vmatprep.subr.mxu0 %v1898
        %2199 = vmatpush2.msra.mxu0 %v1897
        %2200 = vmatprep.subr.mxu0 %v1892
        %2201 = vmatpush2.msra.mxu0 %v1891
        %2202 = vmatprep.subr.mxu0 %v1886
        %2203 = vmatpush2.msra.mxu0 %v1885
        %2204 = vmatprep.subr.mxu0 %v1880
        %2205 = vmatpush2.msra.mxu0 %v1879
        %2206 = vmatprep.subr.mxu0 %v1874
        %2207 = vmatpush2.msra.mxu0 %v1873
        %2208 = vmatprep.subr.mxu0 %v1868
        %2209 = vmatpush2.msra.mxu0 %v1867
        %2210 = vmatprep.subr.mxu0 %v1862
        %2211 = vmatpush2.msra.mxu0 %v1861
        %2212 = vmatprep.mubr.f32.mxu0 %v1732
        %2213 = vmatmul.mubr.f32.gmra.mxu0 %v1731
        %v2214 = vpop.f32.mrf.mxu0
        %v2215 = vadd.f32 %v1968, %v2214
        %v2216 = vpop.f32.mrf.mxu0
        %v2217 = vadd.f32 %v1972, %v2216
        %2218 = vmatprep.mubr.f32.mxu0 %v1734
        %2219 = vmatmul.mubr.f32.gmra.mxu0 %v1733
        %v2220 = vpop.f32.mrf.mxu0
        %v2221 = vadd.f32 %v1968, %v2220
        %v2222 = vpop.f32.mrf.mxu0
        %v2223 = vadd.f32 %v1972, %v2222
        %2224 = vmatprep.mubr.f32.mxu0 %v1736
        %2225 = vmatmul.mubr.f32.gmra.mxu0 %v1735
        %v2226 = vpop.f32.mrf.mxu0
        %v2227 = vadd.f32 %v1968, %v2226
        %v2228 = vpop.f32.mrf.mxu0
        %v2229 = vadd.f32 %v1972, %v2228
        %2230 = vmatprep.mubr.f32.mxu0 %v1738
        %2231 = vmatmul.mubr.f32.gmra.mxu0 %v1737
        %v2232 = vpop.f32.mrf.mxu0
        %v2233 = vadd.f32 %v1968, %v2232
        %v2234 = vpop.f32.mrf.mxu0
        %v2235 = vadd.f32 %v1972, %v2234
        %2236 = vmatprep.mubr.f32.mxu0 %v1740
        %2237 = vmatmul.mubr.f32.gmra.mxu0 %v1739
        %v2238 = vpop.f32.mrf.mxu0
        %v2239 = vadd.f32 %v1968, %v2238
        %v2240 = vpop.f32.mrf.mxu0
        %v2241 = vadd.f32 %v1972, %v2240
        %2242 = vmatprep.mubr.f32.mxu0 %v1742
        %2243 = vmatmul.mubr.f32.gmra.mxu0 %v1741
        %v2244 = vpop.f32.mrf.mxu0
        %v2245 = vadd.f32 %v1968, %v2244
        %v2246 = vpop.f32.mrf.mxu0
        %v2247 = vadd.f32 %v1972, %v2246
        %2248 = vmatprep.mubr.f32.mxu0 %v1744
        %2249 = vmatmul.mubr.f32.gmra.mxu0 %v1743
        %v2250 = vpop.f32.mrf.mxu0
        %v2251 = vadd.f32 %v1968, %v2250
        %v2252 = vpop.f32.mrf.mxu0
        %v2253 = vadd.f32 %v1972, %v2252
        %2254 = vmatprep.mubr.f32.mxu0 %v1746
        %2255 = vmatmul.mubr.f32.gmra.mxu0 %v1745
        %v2256 = vpop.f32.mrf.mxu0
        %v2257 = vadd.f32 %v1968, %v2256
        %v2258 = vpop.f32.mrf.mxu0
        %v2259 = vadd.f32 %v1972, %v2258
        %2260 = vmatprep.mubr.f32.mxu0 %v1748
        %2261 = vmatmul.mubr.f32.gmra.mxu0 %v1747
        %v2262 = vpop.f32.mrf.mxu0
        %v2263 = vadd.f32 %v1968, %v2262
        %v2264 = vpop.f32.mrf.mxu0
        %v2265 = vadd.f32 %v1972, %v2264
        %2266 = vmatprep.mubr.f32.mxu0 %v1750
        %2267 = vmatmul.mubr.f32.gmra.mxu0 %v1749
        %v2268 = vpop.f32.mrf.mxu0
        %v2269 = vadd.f32 %v1968, %v2268
        %v2270 = vpop.f32.mrf.mxu0
        %v2271 = vadd.f32 %v1972, %v2270
        %2272 = vmatprep.mubr.f32.mxu0 %v1752
        %2273 = vmatmul.mubr.f32.gmra.mxu0 %v1751
        %v2274 = vpop.f32.mrf.mxu0
        %v2275 = vadd.f32 %v1968, %v2274
        %v2276 = vpop.f32.mrf.mxu0
        %v2277 = vadd.f32 %v1972, %v2276
        %2278 = vmatprep.mubr.f32.mxu0 %v1754
        %2279 = vmatmul.mubr.f32.gmra.mxu0 %v1753
        %v2280 = vpop.f32.mrf.mxu0
        %v2281 = vadd.f32 %v1968, %v2280
        %v2282 = vpop.f32.mrf.mxu0
        %v2283 = vadd.f32 %v1972, %v2282
        %2284 = vmatprep.mubr.f32.mxu0 %v1756
        %2285 = vmatmul.mubr.f32.gmra.mxu0 %v1755
        %v2286 = vpop.f32.mrf.mxu0
        %v2287 = vadd.f32 %v1968, %v2286
        %v2288 = vpop.f32.mrf.mxu0
        %v2289 = vadd.f32 %v1972, %v2288
        %2290 = vmatprep.mubr.f32.mxu0 %v1758
        %2291 = vmatmul.mubr.f32.gmra.mxu0 %v1757
        %v2292 = vpop.f32.mrf.mxu0
        %v2293 = vadd.f32 %v1968, %v2292
        %v2294 = vpop.f32.mrf.mxu0
        %v2295 = vadd.f32 %v1972, %v2294
        %2296 = vmatprep.mubr.f32.mxu0 %v1760
        %2297 = vmatmul.mubr.f32.gmra.mxu0 %v1759
        %v2298 = vpop.f32.mrf.mxu0
        %v2299 = vadd.f32 %v1968, %v2298
        %v2300 = vpop.f32.mrf.mxu0
        %v2301 = vadd.f32 %v1972, %v2300
        %2302 = vmatprep.mubr.f32.mxu0 %v1762
        %2303 = vmatmul.mubr.f32.gmra.mxu0 %v1761
        %v2304 = vpop.f32.mrf.mxu0
        %v2305 = vadd.f32 %v1968, %v2304
        %v2306 = vpop.f32.mrf.mxu0
        %v2307 = vadd.f32 %v1972, %v2306
        %2308 = vdwg.mxu0
        %2309 = vmatprep.subr.mxu0 %v1858
        %2310 = vmatpush1.msra.mxu0 %v1857
        %2311 = vmatprep.subr.mxu0 %v1852
        %2312 = vmatpush1.msra.mxu0 %v1851
        %2313 = vmatprep.subr.mxu0 %v1846
        %2314 = vmatpush1.msra.mxu0 %v1845
        %2315 = vmatprep.subr.mxu0 %v1840
        %2316 = vmatpush1.msra.mxu0 %v1839
        %2317 = vmatprep.subr.mxu0 %v1834
        %2318 = vmatpush1.msra.mxu0 %v1833
        %2319 = vmatprep.subr.mxu0 %v1828
        %2320 = vmatpush1.msra.mxu0 %v1827
        %2321 = vmatprep.subr.mxu0 %v1822
        %2322 = vmatpush1.msra.mxu0 %v1821
        %2323 = vmatprep.subr.mxu0 %v1816
        %2324 = vmatpush1.msra.mxu0 %v1815
        %2325 = vmatprep.subr.mxu0 %v1810
        %2326 = vmatpush1.msra.mxu0 %v1809
        %2327 = vmatprep.subr.mxu0 %v1804
        %2328 = vmatpush1.msra.mxu0 %v1803
        %2329 = vmatprep.subr.mxu0 %v1798
        %2330 = vmatpush1.msra.mxu0 %v1797
        %2331 = vmatprep.subr.mxu0 %v1792
        %2332 = vmatpush1.msra.mxu0 %v1791
        %2333 = vmatprep.subr.mxu0 %v1786
        %2334 = vmatpush1.msra.mxu0 %v1785
        %2335 = vmatprep.subr.mxu0 %v1780
        %2336 = vmatpush1.msra.mxu0 %v1779
        %2337 = vmatprep.subr.mxu0 %v1774
        %2338 = vmatpush1.msra.mxu0 %v1773
        %2339 = vmatprep.subr.mxu0 %v1768
        %2340 = vmatpush1.msra.mxu0 %v1767
        %2341 = vmatprep.subr.mxu0 %v1954
        %2342 = vmatpush2.msra.mxu0 %v1953
        %2343 = vmatprep.subr.mxu0 %v1948
        %2344 = vmatpush2.msra.mxu0 %v1947
        %2345 = vmatprep.subr.mxu0 %v1942
        %2346 = vmatpush2.msra.mxu0 %v1941
        %2347 = vmatprep.subr.mxu0 %v1936
        %2348 = vmatpush2.msra.mxu0 %v1935
        %2349 = vmatprep.subr.mxu0 %v1930
        %2350 = vmatpush2.msra.mxu0 %v1929
        %2351 = vmatprep.subr.mxu0 %v1924
        %2352 = vmatpush2.msra.mxu0 %v1923
        %2353 = vmatprep.subr.mxu0 %v1918
        %2354 = vmatpush2.msra.mxu0 %v1917
        %2355 = vmatprep.subr.mxu0 %v1912
        %2356 = vmatpush2.msra.mxu0 %v1911
        %2357 = vmatprep.subr.mxu0 %v1906
        %2358 = vmatpush2.msra.mxu0 %v1905
        %2359 = vmatprep.subr.mxu0 %v1900
        %2360 = vmatpush2.msra.mxu0 %v1899
        %2361 = vmatprep.subr.mxu0 %v1894
        %2362 = vmatpush2.msra.mxu0 %v1893
        %2363 = vmatprep.subr.mxu0 %v1888
        %2364 = vmatpush2.msra.mxu0 %v1887
        %2365 = vmatprep.subr.mxu0 %v1882
        %2366 = vmatpush2.msra.mxu0 %v1881
        %2367 = vmatprep.subr.mxu0 %v1876
        %2368 = vmatpush2.msra.mxu0 %v1875
        %2369 = vmatprep.subr.mxu0 %v1870
        %2370 = vmatpush2.msra.mxu0 %v1869
        %2371 = vmatprep.subr.mxu0 %v1864
        %2372 = vmatpush2.msra.mxu0 %v1863
        %2373 = vmatprep.mubr.f32.mxu0 %v1732
        %2374 = vmatmul.mubr.f32.gmra.mxu0 %v1731
        %v2375 = vpop.f32.mrf.mxu0
        %v2376 = vadd.f32 %v1976, %v2375
        %v2377 = vpop.f32.mrf.mxu0
        %v2378 = vadd.f32 %v1980, %v2377
        %2379 = vmatprep.mubr.f32.mxu0 %v1734
        %2380 = vmatmul.mubr.f32.gmra.mxu0 %v1733
        %v2381 = vpop.f32.mrf.mxu0
        %v2382 = vadd.f32 %v1976, %v2381
        %v2383 = vpop.f32.mrf.mxu0
        %v2384 = vadd.f32 %v1980, %v2383
        %2385 = vmatprep.mubr.f32.mxu0 %v1736
        %2386 = vmatmul.mubr.f32.gmra.mxu0 %v1735
        %v2387 = vpop.f32.mrf.mxu0
        %v2388 = vadd.f32 %v1976, %v2387
        %v2389 = vpop.f32.mrf.mxu0
        %v2390 = vadd.f32 %v1980, %v2389
        %2391 = vmatprep.mubr.f32.mxu0 %v1738
        %2392 = vmatmul.mubr.f32.gmra.mxu0 %v1737
        %v2393 = vpop.f32.mrf.mxu0
        %v2394 = vadd.f32 %v1976, %v2393
        %v2395 = vpop.f32.mrf.mxu0
        %v2396 = vadd.f32 %v1980, %v2395
        %2397 = vmatprep.mubr.f32.mxu0 %v1740
        %2398 = vmatmul.mubr.f32.gmra.mxu0 %v1739
        %v2399 = vpop.f32.mrf.mxu0
        %v2400 = vadd.f32 %v1976, %v2399
        %v2401 = vpop.f32.mrf.mxu0
        %v2402 = vadd.f32 %v1980, %v2401
        %2403 = vmatprep.mubr.f32.mxu0 %v1742
        %2404 = vmatmul.mubr.f32.gmra.mxu0 %v1741
        %v2405 = vpop.f32.mrf.mxu0
        %v2406 = vadd.f32 %v1976, %v2405
        %v2407 = vpop.f32.mrf.mxu0
        %v2408 = vadd.f32 %v1980, %v2407
        %2409 = vmatprep.mubr.f32.mxu0 %v1744
        %2410 = vmatmul.mubr.f32.gmra.mxu0 %v1743
        %v2411 = vpop.f32.mrf.mxu0
        %v2412 = vadd.f32 %v1976, %v2411
        %v2413 = vpop.f32.mrf.mxu0
        %v2414 = vadd.f32 %v1980, %v2413
        %2415 = vmatprep.mubr.f32.mxu0 %v1746
        %2416 = vmatmul.mubr.f32.gmra.mxu0 %v1745
        %v2417 = vpop.f32.mrf.mxu0
        %v2418 = vadd.f32 %v1976, %v2417
        %v2419 = vpop.f32.mrf.mxu0
        %v2420 = vadd.f32 %v1980, %v2419
        %2421 = vmatprep.mubr.f32.mxu0 %v1748
        %2422 = vmatmul.mubr.f32.gmra.mxu0 %v1747
        %v2423 = vpop.f32.mrf.mxu0
        %v2424 = vadd.f32 %v1976, %v2423
        %v2425 = vpop.f32.mrf.mxu0
        %v2426 = vadd.f32 %v1980, %v2425
        %2427 = vmatprep.mubr.f32.mxu0 %v1750
        %2428 = vmatmul.mubr.f32.gmra.mxu0 %v1749
        %v2429 = vpop.f32.mrf.mxu0
        %v2430 = vadd.f32 %v1976, %v2429
        %v2431 = vpop.f32.mrf.mxu0
        %v2432 = vadd.f32 %v1980, %v2431
        %2433 = vmatprep.mubr.f32.mxu0 %v1752
        %2434 = vmatmul.mubr.f32.gmra.mxu0 %v1751
        %v2435 = vpop.f32.mrf.mxu0
        %v2436 = vadd.f32 %v1976, %v2435
        %v2437 = vpop.f32.mrf.mxu0
        %v2438 = vadd.f32 %v1980, %v2437
        %2439 = vmatprep.mubr.f32.mxu0 %v1754
        %2440 = vmatmul.mubr.f32.gmra.mxu0 %v1753
        %v2441 = vpop.f32.mrf.mxu0
        %v2442 = vadd.f32 %v1976, %v2441
        %v2443 = vpop.f32.mrf.mxu0
        %v2444 = vadd.f32 %v1980, %v2443
        %2445 = vmatprep.mubr.f32.mxu0 %v1756
        %2446 = vmatmul.mubr.f32.gmra.mxu0 %v1755
        %v2447 = vpop.f32.mrf.mxu0
        %v2448 = vadd.f32 %v1976, %v2447
        %v2449 = vpop.f32.mrf.mxu0
        %v2450 = vadd.f32 %v1980, %v2449
        %2451 = vmatprep.mubr.f32.mxu0 %v1758
        %2452 = vmatmul.mubr.f32.gmra.mxu0 %v1757
        %v2453 = vpop.f32.mrf.mxu0
        %v2454 = vadd.f32 %v1976, %v2453
        %v2455 = vpop.f32.mrf.mxu0
        %v2456 = vadd.f32 %v1980, %v2455
        %2457 = vmatprep.mubr.f32.mxu0 %v1760
        %2458 = vmatmul.mubr.f32.gmra.mxu0 %v1759
        %v2459 = vpop.f32.mrf.mxu0
        %v2460 = vadd.f32 %v1976, %v2459
        %v2461 = vpop.f32.mrf.mxu0
        %v2462 = vadd.f32 %v1980, %v2461
        %2463 = vmatprep.mubr.f32.mxu0 %v1762
        %2464 = vmatmul.mubr.f32.gmra.mxu0 %v1761
        %v2465 = vpop.f32.mrf.mxu0
        %v2466 = vadd.f32 %v1976, %v2465
        %v2467 = vpop.f32.mrf.mxu0
        %v2468 = vadd.f32 %v1980, %v2467
        %2469 = vdwg.mxu0
        %v2470 = vmul.f32 %v2054, 1.442695
        %v2471 = vpow.pop %v2470
        %v2472 = vmul.f32 %v2056, 1.442695
        %v2473 = vpow.pop %v2472
        %v2474 = vmul.f32 %v2060, 1.442695
        %v2475 = vpow.pop %v2474
        %v2476 = vmul.f32 %v2062, 1.442695
        %v2477 = vpow.pop %v2476
        %v2478 = vmul.f32 %v2066, 1.442695
        %v2479 = vpow.pop %v2478
        %v2480 = vmul.f32 %v2068, 1.442695
        %v2481 = vpow.pop %v2480
        %v2482 = vmul.f32 %v2072, 1.442695
        %v2483 = vpow.pop %v2482
        %v2484 = vmul.f32 %v2074, 1.442695
        %v2485 = vpow.pop %v2484
        %v2486 = vmul.f32 %v2078, 1.442695
        %v2487 = vpow.pop %v2486
        %v2488 = vmul.f32 %v2080, 1.442695
        %v2489 = vpow.pop %v2488
        %v2490 = vmul.f32 %v2084, 1.442695
        %v2491 = vpow.pop %v2490
        %v2492 = vmul.f32 %v2086, 1.442695
        %v2493 = vpow.pop %v2492
        %v2494 = vmul.f32 %v2090, 1.442695
        %v2495 = vpow.pop %v2494
        %v2496 = vmul.f32 %v2092, 1.442695
        %v2497 = vpow.pop %v2496
        %v2498 = vmul.f32 %v2096, 1.442695
        %v2499 = vpow.pop %v2498
        %v2500 = vmul.f32 %v2098, 1.442695
        %v2501 = vpow.pop %v2500
        %v2502 = vmul.f32 %v2102, 1.442695
        %v2503 = vpow.pop %v2502
        %v2504 = vmul.f32 %v2104, 1.442695
        %v2505 = vpow.pop %v2504
        %v2506 = vmul.f32 %v2108, 1.442695
        %v2507 = vpow.pop %v2506
        %v2508 = vmul.f32 %v2110, 1.442695
        %v2509 = vpow.pop %v2508
        %v2510 = vmul.f32 %v2114, 1.442695
        %v2511 = vpow.pop %v2510
        %v2512 = vmul.f32 %v2116, 1.442695
        %v2513 = vpow.pop %v2512
        %v2514 = vmul.f32 %v2120, 1.442695
        %v2515 = vpow.pop %v2514
        %v2516 = vmul.f32 %v2122, 1.442695
        %v2517 = vpow.pop %v2516
        %v2518 = vmul.f32 %v2126, 1.442695
        %v2519 = vpow.pop %v2518
        %v2520 = vmul.f32 %v2128, 1.442695
        %v2521 = vpow.pop %v2520
        %v2522 = vmul.f32 %v2132, 1.442695
        %v2523 = vpow.pop %v2522
        %v2524 = vmul.f32 %v2134, 1.442695
        %v2525 = vpow.pop %v2524
        %v2526 = vmul.f32 %v2138, 1.442695
        %v2527 = vpow.pop %v2526
        %v2528 = vmul.f32 %v2140, 1.442695
        %v2529 = vpow.pop %v2528
        %v2530 = vmul.f32 %v2144, 1.442695
        %v2531 = vpow.pop %v2530
        %v2532 = vmul.f32 %v2146, 1.442695
        %v2533 = vpow.pop %v2532
        %v2534 = vmax.f32 %v2471, 1e-05
        %v2535 = vmax.f32 %v2473, 1e-05
        %v2536 = vmax.f32 %v2475, 1e-05
        %v2537 = vmax.f32 %v2477, 1e-05
        %v2538 = vmax.f32 %v2479, 1e-05
        %v2539 = vmax.f32 %v2481, 1e-05
        %v2540 = vmax.f32 %v2483, 1e-05
        %v2541 = vmax.f32 %v2485, 1e-05
        %v2542 = vmax.f32 %v2487, 1e-05
        %v2543 = vmax.f32 %v2489, 1e-05
        %v2544 = vmax.f32 %v2491, 1e-05
        %v2545 = vmax.f32 %v2493, 1e-05
        %v2546 = vmax.f32 %v2495, 1e-05
        %v2547 = vmax.f32 %v2497, 1e-05
        %v2548 = vmax.f32 %v2499, 1e-05
        %v2549 = vmax.f32 %v2501, 1e-05
        %v2550 = vmax.f32 %v2503, 1e-05
        %v2551 = vmax.f32 %v2505, 1e-05
        %v2552 = vmax.f32 %v2507, 1e-05
        %v2553 = vmax.f32 %v2509, 1e-05
        %v2554 = vmax.f32 %v2511, 1e-05
        %v2555 = vmax.f32 %v2513, 1e-05
        %v2556 = vmax.f32 %v2515, 1e-05
        %v2557 = vmax.f32 %v2517, 1e-05
        %v2558 = vmax.f32 %v2519, 1e-05
        %v2559 = vmax.f32 %v2521, 1e-05
        %v2560 = vmax.f32 %v2523, 1e-05
        %v2561 = vmax.f32 %v2525, 1e-05
        %v2562 = vmax.f32 %v2527, 1e-05
        %v2563 = vmax.f32 %v2529, 1e-05
        %v2564 = vmax.f32 %v2531, 1e-05
        %v2565 = vmax.f32 %v2533, 1e-05
        %v2566 = vmin.f32 %v2534, 1000000.0
        %v2567 = vmin.f32 %v2535, 1000000.0
        %v2568 = vmin.f32 %v2536, 1000000.0
        %v2569 = vmin.f32 %v2537, 1000000.0
        %v2570 = vmin.f32 %v2538, 1000000.0
        %v2571 = vmin.f32 %v2539, 1000000.0
        %v2572 = vmin.f32 %v2540, 1000000.0
        %v2573 = vmin.f32 %v2541, 1000000.0
        %v2574 = vmin.f32 %v2542, 1000000.0
        %v2575 = vmin.f32 %v2543, 1000000.0
        %v2576 = vmin.f32 %v2544, 1000000.0
        %v2577 = vmin.f32 %v2545, 1000000.0
        %v2578 = vmin.f32 %v2546, 1000000.0
        %v2579 = vmin.f32 %v2547, 1000000.0
        %v2580 = vmin.f32 %v2548, 1000000.0
        %v2581 = vmin.f32 %v2549, 1000000.0
        %v2582 = vmin.f32 %v2550, 1000000.0
        %v2583 = vmin.f32 %v2551, 1000000.0
        %v2584 = vmin.f32 %v2552, 1000000.0
        %v2585 = vmin.f32 %v2553, 1000000.0
        %v2586 = vmin.f32 %v2554, 1000000.0
        %v2587 = vmin.f32 %v2555, 1000000.0
        %v2588 = vmin.f32 %v2556, 1000000.0
        %v2589 = vmin.f32 %v2557, 1000000.0
        %v2590 = vmin.f32 %v2558, 1000000.0
        %v2591 = vmin.f32 %v2559, 1000000.0
        %v2592 = vmin.f32 %v2560, 1000000.0
        %v2593 = vmin.f32 %v2561, 1000000.0
        %v2594 = vmin.f32 %v2562, 1000000.0
        %v2595 = vmin.f32 %v2563, 1000000.0
        %v2596 = vmin.f32 %v2564, 1000000.0
        %v2597 = vmin.f32 %v2565, 1000000.0
        %v2598 = vmax.f32 %v2215, 0.0
        %v2599 = vmax.f32 %v2217, 0.0
        %v2600 = vmax.f32 %v2221, 0.0
        %v2601 = vmax.f32 %v2223, 0.0
        %v2602 = vmax.f32 %v2227, 0.0
        %v2603 = vmax.f32 %v2229, 0.0
        %v2604 = vmax.f32 %v2233, 0.0
        %v2605 = vmax.f32 %v2235, 0.0
        %v2606 = vmax.f32 %v2239, 0.0
        %v2607 = vmax.f32 %v2241, 0.0
        %v2608 = vmax.f32 %v2245, 0.0
        %v2609 = vmax.f32 %v2247, 0.0
        %v2610 = vmax.f32 %v2251, 0.0
        %v2611 = vmax.f32 %v2253, 0.0
        %v2612 = vmax.f32 %v2257, 0.0
        %v2613 = vmax.f32 %v2259, 0.0
        %v2614 = vmax.f32 %v2263, 0.0
        %v2615 = vmax.f32 %v2265, 0.0
        %v2616 = vmax.f32 %v2269, 0.0
        %v2617 = vmax.f32 %v2271, 0.0
        %v2618 = vmax.f32 %v2275, 0.0
        %v2619 = vmax.f32 %v2277, 0.0
        %v2620 = vmax.f32 %v2281, 0.0
        %v2621 = vmax.f32 %v2283, 0.0
        %v2622 = vmax.f32 %v2287, 0.0
        %v2623 = vmax.f32 %v2289, 0.0
        %v2624 = vmax.f32 %v2293, 0.0
        %v2625 = vmax.f32 %v2295, 0.0
        %v2626 = vmax.f32 %v2299, 0.0
        %v2627 = vmax.f32 %v2301, 0.0
        %v2628 = vmax.f32 %v2305, 0.0
        %v2629 = vmax.f32 %v2307, 0.0
        %v2630 = vand.u32 2147483647, %v2215
        %v2631 = vand.u32 2147483647, %v2217
        %v2632 = vand.u32 2147483647, %v2221
        %v2633 = vand.u32 2147483647, %v2223
        %v2634 = vand.u32 2147483647, %v2227
        %v2635 = vand.u32 2147483647, %v2229
        %v2636 = vand.u32 2147483647, %v2233
        %v2637 = vand.u32 2147483647, %v2235
        %v2638 = vand.u32 2147483647, %v2239
        %v2639 = vand.u32 2147483647, %v2241
        %v2640 = vand.u32 2147483647, %v2245
        %v2641 = vand.u32 2147483647, %v2247
        %v2642 = vand.u32 2147483647, %v2251
        %v2643 = vand.u32 2147483647, %v2253
        %v2644 = vand.u32 2147483647, %v2257
        %v2645 = vand.u32 2147483647, %v2259
        %v2646 = vand.u32 2147483647, %v2263
        %v2647 = vand.u32 2147483647, %v2265
        %v2648 = vand.u32 2147483647, %v2269
        %v2649 = vand.u32 2147483647, %v2271
        %v2650 = vand.u32 2147483647, %v2275
        %v2651 = vand.u32 2147483647, %v2277
        %v2652 = vand.u32 2147483647, %v2281
        %v2653 = vand.u32 2147483647, %v2283
        %v2654 = vand.u32 2147483647, %v2287
        %v2655 = vand.u32 2147483647, %v2289
        %v2656 = vand.u32 2147483647, %v2293
        %v2657 = vand.u32 2147483647, %v2295
        %v2658 = vand.u32 2147483647, %v2299
        %v2659 = vand.u32 2147483647, %v2301
        %v2660 = vand.u32 2147483647, %v2305
        %v2661 = vand.u32 2147483647, %v2307
        %v2662 = vsub.f32 0.0, %v2630
        %v2663 = vsub.f32 0.0, %v2631
        %v2664 = vsub.f32 0.0, %v2632
        %v2665 = vsub.f32 0.0, %v2633
        %v2666 = vsub.f32 0.0, %v2634
        %v2667 = vsub.f32 0.0, %v2635
        %v2668 = vsub.f32 0.0, %v2636
        %v2669 = vsub.f32 0.0, %v2637
        %v2670 = vsub.f32 0.0, %v2638
        %v2671 = vsub.f32 0.0, %v2639
        %v2672 = vsub.f32 0.0, %v2640
        %v2673 = vsub.f32 0.0, %v2641
        %v2674 = vsub.f32 0.0, %v2642
        %v2675 = vsub.f32 0.0, %v2643
        %v2676 = vsub.f32 0.0, %v2644
        %v2677 = vsub.f32 0.0, %v2645
        %v2678 = vsub.f32 0.0, %v2646
        %v2679 = vsub.f32 0.0, %v2647
        %v2680 = vsub.f32 0.0, %v2648
        %v2681 = vsub.f32 0.0, %v2649
        %v2682 = vsub.f32 0.0, %v2650
        %v2683 = vsub.f32 0.0, %v2651
        %v2684 = vsub.f32 0.0, %v2652
        %v2685 = vsub.f32 0.0, %v2653
        %v2686 = vsub.f32 0.0, %v2654
        %v2687 = vsub.f32 0.0, %v2655
        %v2688 = vsub.f32 0.0, %v2656
        %v2689 = vsub.f32 0.0, %v2657
        %v2690 = vsub.f32 0.0, %v2658
        %v2691 = vsub.f32 0.0, %v2659
        %v2692 = vsub.f32 0.0, %v2660
        %v2693 = vsub.f32 0.0, %v2661
        %v2694 = vmul.f32 %v2662, 1.442695
        %v2695 = vpow.pop %v2694
        %v2696 = vmul.f32 %v2663, 1.442695
        %v2697 = vpow.pop %v2696
        %v2698 = vmul.f32 %v2664, 1.442695
        %v2699 = vpow.pop %v2698
        %v2700 = vmul.f32 %v2665, 1.442695
        %v2701 = vpow.pop %v2700
        %v2702 = vmul.f32 %v2666, 1.442695
        %v2703 = vpow.pop %v2702
        %v2704 = vmul.f32 %v2667, 1.442695
        %v2705 = vpow.pop %v2704
        %v2706 = vmul.f32 %v2668, 1.442695
        %v2707 = vpow.pop %v2706
        %v2708 = vmul.f32 %v2669, 1.442695
        %v2709 = vpow.pop %v2708
        %v2710 = vmul.f32 %v2670, 1.442695
        %v2711 = vpow.pop %v2710
        %v2712 = vmul.f32 %v2671, 1.442695
        %v2713 = vpow.pop %v2712
        %v2714 = vmul.f32 %v2672, 1.442695
        %v2715 = vpow.pop %v2714
        %v2716 = vmul.f32 %v2673, 1.442695
        %v2717 = vpow.pop %v2716
        %v2718 = vmul.f32 %v2674, 1.442695
        %v2719 = vpow.pop %v2718
        %v2720 = vmul.f32 %v2675, 1.442695
        %v2721 = vpow.pop %v2720
        %v2722 = vmul.f32 %v2676, 1.442695
        %v2723 = vpow.pop %v2722
        %v2724 = vmul.f32 %v2677, 1.442695
        %v2725 = vpow.pop %v2724
        %v2726 = vmul.f32 %v2678, 1.442695
        %v2727 = vpow.pop %v2726
        %v2728 = vmul.f32 %v2679, 1.442695
        %v2729 = vpow.pop %v2728
        %v2730 = vmul.f32 %v2680, 1.442695
        %v2731 = vpow.pop %v2730
        %v2732 = vmul.f32 %v2681, 1.442695
        %v2733 = vpow.pop %v2732
        %v2734 = vmul.f32 %v2682, 1.442695
        %v2735 = vpow.pop %v2734
        %v2736 = vmul.f32 %v2683, 1.442695
        %v2737 = vpow.pop %v2736
        %v2738 = vmul.f32 %v2684, 1.442695
        %v2739 = vpow.pop %v2738
        %v2740 = vmul.f32 %v2685, 1.442695
        %v2741 = vpow.pop %v2740
        %v2742 = vmul.f32 %v2686, 1.442695
        %v2743 = vpow.pop %v2742
        %v2744 = vmul.f32 %v2687, 1.442695
        %v2745 = vpow.pop %v2744
        %v2746 = vmul.f32 %v2688, 1.442695
        %v2747 = vpow.pop %v2746
        %v2748 = vmul.f32 %v2689, 1.442695
        %v2749 = vpow.pop %v2748
        %v2750 = vmul.f32 %v2690, 1.442695
        %v2751 = vpow.pop %v2750
        %v2752 = vmul.f32 %v2691, 1.442695
        %v2753 = vpow.pop %v2752
        %v2754 = vmul.f32 %v2692, 1.442695
        %v2755 = vpow.pop %v2754
        %v2756 = vmul.f32 %v2693, 1.442695
        %v2757 = vpow.pop %v2756
        %v2758 = vadd.f32 %v2695, 1.0
        %v2759 = vlog2.pop %v2758
        %v2760 = vmul.f32 %v2759, 0.6931472
        %v2761 = vmul.f32 -0.5, %v2695
        %v2762 = vadd.f32 %v2761, 1.0
        %v2763 = vmul.f32 %v2762, %v2695
        %v2764 = vand.u32 2147483647, %v2695
        %vm2765 = vcmp.lt.f32.partialorder %v2764, 0.0004427343
        %v2766 = vsel %vm2765, %v2763, %v2760
        %v2767 = vadd.f32 %v2697, 1.0
        %v2768 = vlog2.pop %v2767
        %v2769 = vmul.f32 %v2768, 0.6931472
        %v2770 = vmul.f32 -0.5, %v2697
        %v2771 = vadd.f32 %v2770, 1.0
        %v2772 = vmul.f32 %v2771, %v2697
        %v2773 = vand.u32 2147483647, %v2697
        %vm2774 = vcmp.lt.f32.partialorder %v2773, 0.0004427343
        %v2775 = vsel %vm2774, %v2772, %v2769
        %v2776 = vadd.f32 %v2699, 1.0
        %v2777 = vlog2.pop %v2776
        %v2778 = vmul.f32 %v2777, 0.6931472
        %v2779 = vmul.f32 -0.5, %v2699
        %v2780 = vadd.f32 %v2779, 1.0
        %v2781 = vmul.f32 %v2780, %v2699
        %v2782 = vand.u32 2147483647, %v2699
        %vm2783 = vcmp.lt.f32.partialorder %v2782, 0.0004427343
        %v2784 = vsel %vm2783, %v2781, %v2778
        %v2785 = vadd.f32 %v2701, 1.0
        %v2786 = vlog2.pop %v2785
        %v2787 = vmul.f32 %v2786, 0.6931472
        %v2788 = vmul.f32 -0.5, %v2701
        %v2789 = vadd.f32 %v2788, 1.0
        %v2790 = vmul.f32 %v2789, %v2701
        %v2791 = vand.u32 2147483647, %v2701
        %vm2792 = vcmp.lt.f32.partialorder %v2791, 0.0004427343
        %v2793 = vsel %vm2792, %v2790, %v2787
        %v2794 = vadd.f32 %v2703, 1.0
        %v2795 = vlog2.pop %v2794
        %v2796 = vmul.f32 %v2795, 0.6931472
        %v2797 = vmul.f32 -0.5, %v2703
        %v2798 = vadd.f32 %v2797, 1.0
        %v2799 = vmul.f32 %v2798, %v2703
        %v2800 = vand.u32 2147483647, %v2703
        %vm2801 = vcmp.lt.f32.partialorder %v2800, 0.0004427343
        %v2802 = vsel %vm2801, %v2799, %v2796
        %v2803 = vadd.f32 %v2705, 1.0
        %v2804 = vlog2.pop %v2803
        %v2805 = vmul.f32 %v2804, 0.6931472
        %v2806 = vmul.f32 -0.5, %v2705
        %v2807 = vadd.f32 %v2806, 1.0
        %v2808 = vmul.f32 %v2807, %v2705
        %v2809 = vand.u32 2147483647, %v2705
        %vm2810 = vcmp.lt.f32.partialorder %v2809, 0.0004427343
        %v2811 = vsel %vm2810, %v2808, %v2805
        %v2812 = vadd.f32 %v2707, 1.0
        %v2813 = vlog2.pop %v2812
        %v2814 = vmul.f32 %v2813, 0.6931472
        %v2815 = vmul.f32 -0.5, %v2707
        %v2816 = vadd.f32 %v2815, 1.0
        %v2817 = vmul.f32 %v2816, %v2707
        %v2818 = vand.u32 2147483647, %v2707
        %vm2819 = vcmp.lt.f32.partialorder %v2818, 0.0004427343
        %v2820 = vsel %vm2819, %v2817, %v2814
        %v2821 = vadd.f32 %v2709, 1.0
        %v2822 = vlog2.pop %v2821
        %v2823 = vmul.f32 %v2822, 0.6931472
        %v2824 = vmul.f32 -0.5, %v2709
        %v2825 = vadd.f32 %v2824, 1.0
        %v2826 = vmul.f32 %v2825, %v2709
        %v2827 = vand.u32 2147483647, %v2709
        %vm2828 = vcmp.lt.f32.partialorder %v2827, 0.0004427343
        %v2829 = vsel %vm2828, %v2826, %v2823
        %v2830 = vadd.f32 %v2711, 1.0
        %v2831 = vlog2.pop %v2830
        %v2832 = vmul.f32 %v2831, 0.6931472
        %v2833 = vmul.f32 -0.5, %v2711
        %v2834 = vadd.f32 %v2833, 1.0
        %v2835 = vmul.f32 %v2834, %v2711
        %v2836 = vand.u32 2147483647, %v2711
        %vm2837 = vcmp.lt.f32.partialorder %v2836, 0.0004427343
        %v2838 = vsel %vm2837, %v2835, %v2832
        %v2839 = vadd.f32 %v2713, 1.0
        %v2840 = vlog2.pop %v2839
        %v2841 = vmul.f32 %v2840, 0.6931472
        %v2842 = vmul.f32 -0.5, %v2713
        %v2843 = vadd.f32 %v2842, 1.0
        %v2844 = vmul.f32 %v2843, %v2713
        %v2845 = vand.u32 2147483647, %v2713
        %vm2846 = vcmp.lt.f32.partialorder %v2845, 0.0004427343
        %v2847 = vsel %vm2846, %v2844, %v2841
        %v2848 = vadd.f32 %v2715, 1.0
        %v2849 = vlog2.pop %v2848
        %v2850 = vmul.f32 %v2849, 0.6931472
        %v2851 = vmul.f32 -0.5, %v2715
        %v2852 = vadd.f32 %v2851, 1.0
        %v2853 = vmul.f32 %v2852, %v2715
        %v2854 = vand.u32 2147483647, %v2715
        %vm2855 = vcmp.lt.f32.partialorder %v2854, 0.0004427343
        %v2856 = vsel %vm2855, %v2853, %v2850
        %v2857 = vadd.f32 %v2717, 1.0
        %v2858 = vlog2.pop %v2857
        %v2859 = vmul.f32 %v2858, 0.6931472
        %v2860 = vmul.f32 -0.5, %v2717
        %v2861 = vadd.f32 %v2860, 1.0
        %v2862 = vmul.f32 %v2861, %v2717
        %v2863 = vand.u32 2147483647, %v2717
        %vm2864 = vcmp.lt.f32.partialorder %v2863, 0.0004427343
        %v2865 = vsel %vm2864, %v2862, %v2859
        %v2866 = vadd.f32 %v2719, 1.0
        %v2867 = vlog2.pop %v2866
        %v2868 = vmul.f32 %v2867, 0.6931472
        %v2869 = vmul.f32 -0.5, %v2719
        %v2870 = vadd.f32 %v2869, 1.0
        %v2871 = vmul.f32 %v2870, %v2719
        %v2872 = vand.u32 2147483647, %v2719
        %vm2873 = vcmp.lt.f32.partialorder %v2872, 0.0004427343
        %v2874 = vsel %vm2873, %v2871, %v2868
        %v2875 = vadd.f32 %v2721, 1.0
        %v2876 = vlog2.pop %v2875
        %v2877 = vmul.f32 %v2876, 0.6931472
        %v2878 = vmul.f32 -0.5, %v2721
        %v2879 = vadd.f32 %v2878, 1.0
        %v2880 = vmul.f32 %v2879, %v2721
        %v2881 = vand.u32 2147483647, %v2721
        %vm2882 = vcmp.lt.f32.partialorder %v2881, 0.0004427343
        %v2883 = vsel %vm2882, %v2880, %v2877
        %v2884 = vadd.f32 %v2723, 1.0
        %v2885 = vlog2.pop %v2884
        %v2886 = vmul.f32 %v2885, 0.6931472
        %v2887 = vmul.f32 -0.5, %v2723
        %v2888 = vadd.f32 %v2887, 1.0
        %v2889 = vmul.f32 %v2888, %v2723
        %v2890 = vand.u32 2147483647, %v2723
        %vm2891 = vcmp.lt.f32.partialorder %v2890, 0.0004427343
        %v2892 = vsel %vm2891, %v2889, %v2886
        %v2893 = vadd.f32 %v2725, 1.0
        %v2894 = vlog2.pop %v2893
        %v2895 = vmul.f32 %v2894, 0.6931472
        %v2896 = vmul.f32 -0.5, %v2725
        %v2897 = vadd.f32 %v2896, 1.0
        %v2898 = vmul.f32 %v2897, %v2725
        %v2899 = vand.u32 2147483647, %v2725
        %vm2900 = vcmp.lt.f32.partialorder %v2899, 0.0004427343
        %v2901 = vsel %vm2900, %v2898, %v2895
        %v2902 = vadd.f32 %v2727, 1.0
        %v2903 = vlog2.pop %v2902
        %v2904 = vmul.f32 %v2903, 0.6931472
        %v2905 = vmul.f32 -0.5, %v2727
        %v2906 = vadd.f32 %v2905, 1.0
        %v2907 = vmul.f32 %v2906, %v2727
        %v2908 = vand.u32 2147483647, %v2727
        %vm2909 = vcmp.lt.f32.partialorder %v2908, 0.0004427343
        %v2910 = vsel %vm2909, %v2907, %v2904
        %v2911 = vadd.f32 %v2729, 1.0
        %v2912 = vlog2.pop %v2911
        %v2913 = vmul.f32 %v2912, 0.6931472
        %v2914 = vmul.f32 -0.5, %v2729
        %v2915 = vadd.f32 %v2914, 1.0
        %v2916 = vmul.f32 %v2915, %v2729
        %v2917 = vand.u32 2147483647, %v2729
        %vm2918 = vcmp.lt.f32.partialorder %v2917, 0.0004427343
        %v2919 = vsel %vm2918, %v2916, %v2913
        %v2920 = vadd.f32 %v2731, 1.0
        %v2921 = vlog2.pop %v2920
        %v2922 = vmul.f32 %v2921, 0.6931472
        %v2923 = vmul.f32 -0.5, %v2731
        %v2924 = vadd.f32 %v2923, 1.0
        %v2925 = vmul.f32 %v2924, %v2731
        %v2926 = vand.u32 2147483647, %v2731
        %vm2927 = vcmp.lt.f32.partialorder %v2926, 0.0004427343
        %v2928 = vsel %vm2927, %v2925, %v2922
        %v2929 = vadd.f32 %v2733, 1.0
        %v2930 = vlog2.pop %v2929
        %v2931 = vmul.f32 %v2930, 0.6931472
        %v2932 = vmul.f32 -0.5, %v2733
        %v2933 = vadd.f32 %v2932, 1.0
        %v2934 = vmul.f32 %v2933, %v2733
        %v2935 = vand.u32 2147483647, %v2733
        %vm2936 = vcmp.lt.f32.partialorder %v2935, 0.0004427343
        %v2937 = vsel %vm2936, %v2934, %v2931
        %v2938 = vadd.f32 %v2735, 1.0
        %v2939 = vlog2.pop %v2938
        %v2940 = vmul.f32 %v2939, 0.6931472
        %v2941 = vmul.f32 -0.5, %v2735
        %v2942 = vadd.f32 %v2941, 1.0
        %v2943 = vmul.f32 %v2942, %v2735
        %v2944 = vand.u32 2147483647, %v2735
        %vm2945 = vcmp.lt.f32.partialorder %v2944, 0.0004427343
        %v2946 = vsel %vm2945, %v2943, %v2940
        %v2947 = vadd.f32 %v2737, 1.0
        %v2948 = vlog2.pop %v2947
        %v2949 = vmul.f32 %v2948, 0.6931472
        %v2950 = vmul.f32 -0.5, %v2737
        %v2951 = vadd.f32 %v2950, 1.0
        %v2952 = vmul.f32 %v2951, %v2737
        %v2953 = vand.u32 2147483647, %v2737
        %vm2954 = vcmp.lt.f32.partialorder %v2953, 0.0004427343
        %v2955 = vsel %vm2954, %v2952, %v2949
        %v2956 = vadd.f32 %v2739, 1.0
        %v2957 = vlog2.pop %v2956
        %v2958 = vmul.f32 %v2957, 0.6931472
        %v2959 = vmul.f32 -0.5, %v2739
        %v2960 = vadd.f32 %v2959, 1.0
        %v2961 = vmul.f32 %v2960, %v2739
        %v2962 = vand.u32 2147483647, %v2739
        %vm2963 = vcmp.lt.f32.partialorder %v2962, 0.0004427343
        %v2964 = vsel %vm2963, %v2961, %v2958
        %v2965 = vadd.f32 %v2741, 1.0
        %v2966 = vlog2.pop %v2965
        %v2967 = vmul.f32 %v2966, 0.6931472
        %v2968 = vmul.f32 -0.5, %v2741
        %v2969 = vadd.f32 %v2968, 1.0
        %v2970 = vmul.f32 %v2969, %v2741
        %v2971 = vand.u32 2147483647, %v2741
        %vm2972 = vcmp.lt.f32.partialorder %v2971, 0.0004427343
        %v2973 = vsel %vm2972, %v2970, %v2967
        %v2974 = vadd.f32 %v2743, 1.0
        %v2975 = vlog2.pop %v2974
        %v2976 = vmul.f32 %v2975, 0.6931472
        %v2977 = vmul.f32 -0.5, %v2743
        %v2978 = vadd.f32 %v2977, 1.0
        %v2979 = vmul.f32 %v2978, %v2743
        %v2980 = vand.u32 2147483647, %v2743
        %vm2981 = vcmp.lt.f32.partialorder %v2980, 0.0004427343
        %v2982 = vsel %vm2981, %v2979, %v2976
        %v2983 = vadd.f32 %v2745, 1.0
        %v2984 = vlog2.pop %v2983
        %v2985 = vmul.f32 %v2984, 0.6931472
        %v2986 = vmul.f32 -0.5, %v2745
        %v2987 = vadd.f32 %v2986, 1.0
        %v2988 = vmul.f32 %v2987, %v2745
        %v2989 = vand.u32 2147483647, %v2745
        %vm2990 = vcmp.lt.f32.partialorder %v2989, 0.0004427343
        %v2991 = vsel %vm2990, %v2988, %v2985
        %v2992 = vadd.f32 %v2747, 1.0
        %v2993 = vlog2.pop %v2992
        %v2994 = vmul.f32 %v2993, 0.6931472
        %v2995 = vmul.f32 -0.5, %v2747
        %v2996 = vadd.f32 %v2995, 1.0
        %v2997 = vmul.f32 %v2996, %v2747
        %v2998 = vand.u32 2147483647, %v2747
        %vm2999 = vcmp.lt.f32.partialorder %v2998, 0.0004427343
        %v3000 = vsel %vm2999, %v2997, %v2994
        %v3001 = vadd.f32 %v2749, 1.0
        %v3002 = vlog2.pop %v3001
        %v3003 = vmul.f32 %v3002, 0.6931472
        %v3004 = vmul.f32 -0.5, %v2749
        %v3005 = vadd.f32 %v3004, 1.0
        %v3006 = vmul.f32 %v3005, %v2749
        %v3007 = vand.u32 2147483647, %v2749
        %vm3008 = vcmp.lt.f32.partialorder %v3007, 0.0004427343
        %v3009 = vsel %vm3008, %v3006, %v3003
        %v3010 = vadd.f32 %v2751, 1.0
        %v3011 = vlog2.pop %v3010
        %v3012 = vmul.f32 %v3011, 0.6931472
        %v3013 = vmul.f32 -0.5, %v2751
        %v3014 = vadd.f32 %v3013, 1.0
        %v3015 = vmul.f32 %v3014, %v2751
        %v3016 = vand.u32 2147483647, %v2751
        %vm3017 = vcmp.lt.f32.partialorder %v3016, 0.0004427343
        %v3018 = vsel %vm3017, %v3015, %v3012
        %v3019 = vadd.f32 %v2753, 1.0
        %v3020 = vlog2.pop %v3019
        %v3021 = vmul.f32 %v3020, 0.6931472
        %v3022 = vmul.f32 -0.5, %v2753
        %v3023 = vadd.f32 %v3022, 1.0
        %v3024 = vmul.f32 %v3023, %v2753
        %v3025 = vand.u32 2147483647, %v2753
        %vm3026 = vcmp.lt.f32.partialorder %v3025, 0.0004427343
        %v3027 = vsel %vm3026, %v3024, %v3021
        %v3028 = vadd.f32 %v2755, 1.0
        %v3029 = vlog2.pop %v3028
        %v3030 = vmul.f32 %v3029, 0.6931472
        %v3031 = vmul.f32 -0.5, %v2755
        %v3032 = vadd.f32 %v3031, 1.0
        %v3033 = vmul.f32 %v3032, %v2755
        %v3034 = vand.u32 2147483647, %v2755
        %vm3035 = vcmp.lt.f32.partialorder %v3034, 0.0004427343
        %v3036 = vsel %vm3035, %v3033, %v3030
        %v3037 = vadd.f32 %v2757, 1.0
        %v3038 = vlog2.pop %v3037
        %v3039 = vmul.f32 %v3038, 0.6931472
        %v3040 = vmul.f32 -0.5, %v2757
        %v3041 = vadd.f32 %v3040, 1.0
        %v3042 = vmul.f32 %v3041, %v2757
        %v3043 = vand.u32 2147483647, %v2757
        %vm3044 = vcmp.lt.f32.partialorder %v3043, 0.0004427343
        %v3045 = vsel %vm3044, %v3042, %v3039
        %v3046 = vadd.f32 %v2598, %v2766
        %v3047 = vadd.f32 %v2599, %v2775
        %v3048 = vadd.f32 %v2600, %v2784
        %v3049 = vadd.f32 %v2601, %v2793
        %v3050 = vadd.f32 %v2602, %v2802
        %v3051 = vadd.f32 %v2603, %v2811
        %v3052 = vadd.f32 %v2604, %v2820
        %v3053 = vadd.f32 %v2605, %v2829
        %v3054 = vadd.f32 %v2606, %v2838
        %v3055 = vadd.f32 %v2607, %v2847
        %v3056 = vadd.f32 %v2608, %v2856
        %v3057 = vadd.f32 %v2609, %v2865
        %v3058 = vadd.f32 %v2610, %v2874
        %v3059 = vadd.f32 %v2611, %v2883
        %v3060 = vadd.f32 %v2612, %v2892
        %v3061 = vadd.f32 %v2613, %v2901
        %v3062 = vadd.f32 %v2614, %v2910
        %v3063 = vadd.f32 %v2615, %v2919
        %v3064 = vadd.f32 %v2616, %v2928
        %v3065 = vadd.f32 %v2617, %v2937
        %v3066 = vadd.f32 %v2618, %v2946
        %v3067 = vadd.f32 %v2619, %v2955
        %v3068 = vadd.f32 %v2620, %v2964
        %v3069 = vadd.f32 %v2621, %v2973
        %v3070 = vadd.f32 %v2622, %v2982
        %v3071 = vadd.f32 %v2623, %v2991
        %v3072 = vadd.f32 %v2624, %v3000
        %v3073 = vadd.f32 %v2625, %v3009
        %v3074 = vadd.f32 %v2626, %v3018
        %v3075 = vadd.f32 %v2627, %v3027
        %v3076 = vadd.f32 %v2628, %v3036
        %v3077 = vadd.f32 %v2629, %v3045
        %v3078 = vmax.f32 %v3046, 0.0001
        %v3079 = vmax.f32 %v3047, 0.0001
        %v3080 = vmax.f32 %v3048, 0.0001
        %v3081 = vmax.f32 %v3049, 0.0001
        %v3082 = vmax.f32 %v3050, 0.0001
        %v3083 = vmax.f32 %v3051, 0.0001
        %v3084 = vmax.f32 %v3052, 0.0001
        %v3085 = vmax.f32 %v3053, 0.0001
        %v3086 = vmax.f32 %v3054, 0.0001
        %v3087 = vmax.f32 %v3055, 0.0001
        %v3088 = vmax.f32 %v3056, 0.0001
        %v3089 = vmax.f32 %v3057, 0.0001
        %v3090 = vmax.f32 %v3058, 0.0001
        %v3091 = vmax.f32 %v3059, 0.0001
        %v3092 = vmax.f32 %v3060, 0.0001
        %v3093 = vmax.f32 %v3061, 0.0001
        %v3094 = vmax.f32 %v3062, 0.0001
        %v3095 = vmax.f32 %v3063, 0.0001
        %v3096 = vmax.f32 %v3064, 0.0001
        %v3097 = vmax.f32 %v3065, 0.0001
        %v3098 = vmax.f32 %v3066, 0.0001
        %v3099 = vmax.f32 %v3067, 0.0001
        %v3100 = vmax.f32 %v3068, 0.0001
        %v3101 = vmax.f32 %v3069, 0.0001
        %v3102 = vmax.f32 %v3070, 0.0001
        %v3103 = vmax.f32 %v3071, 0.0001
        %v3104 = vmax.f32 %v3072, 0.0001
        %v3105 = vmax.f32 %v3073, 0.0001
        %v3106 = vmax.f32 %v3074, 0.0001
        %v3107 = vmax.f32 %v3075, 0.0001
        %v3108 = vmax.f32 %v3076, 0.0001
        %v3109 = vmax.f32 %v3077, 0.0001
        %v3110 = vmin.f32 %v3078, 10000.0
        %v3111 = vmin.f32 %v3079, 10000.0
        %v3112 = vmin.f32 %v3080, 10000.0
        %v3113 = vmin.f32 %v3081, 10000.0
        %v3114 = vmin.f32 %v3082, 10000.0
        %v3115 = vmin.f32 %v3083, 10000.0
        %v3116 = vmin.f32 %v3084, 10000.0
        %v3117 = vmin.f32 %v3085, 10000.0
        %v3118 = vmin.f32 %v3086, 10000.0
        %v3119 = vmin.f32 %v3087, 10000.0
        %v3120 = vmin.f32 %v3088, 10000.0
        %v3121 = vmin.f32 %v3089, 10000.0
        %v3122 = vmin.f32 %v3090, 10000.0
        %v3123 = vmin.f32 %v3091, 10000.0
        %v3124 = vmin.f32 %v3092, 10000.0
        %v3125 = vmin.f32 %v3093, 10000.0
        %v3126 = vmin.f32 %v3094, 10000.0
        %v3127 = vmin.f32 %v3095, 10000.0
        %v3128 = vmin.f32 %v3096, 10000.0
        %v3129 = vmin.f32 %v3097, 10000.0
        %v3130 = vmin.f32 %v3098, 10000.0
        %v3131 = vmin.f32 %v3099, 10000.0
        %v3132 = vmin.f32 %v3100, 10000.0
        %v3133 = vmin.f32 %v3101, 10000.0
        %v3134 = vmin.f32 %v3102, 10000.0
        %v3135 = vmin.f32 %v3103, 10000.0
        %v3136 = vmin.f32 %v3104, 10000.0
        %v3137 = vmin.f32 %v3105, 10000.0
        %v3138 = vmin.f32 %v3106, 10000.0
        %v3139 = vmin.f32 %v3107, 10000.0
        %v3140 = vmin.f32 %v3108, 10000.0
        %v3141 = vmin.f32 %v3109, 10000.0
        %v3142 = vsub.f32 0.0, %v2376
        %v3143 = vsub.f32 0.0, %v2378
        %v3144 = vsub.f32 0.0, %v2382
        %v3145 = vsub.f32 0.0, %v2384
        %v3146 = vsub.f32 0.0, %v2388
        %v3147 = vsub.f32 0.0, %v2390
        %v3148 = vsub.f32 0.0, %v2394
        %v3149 = vsub.f32 0.0, %v2396
        %v3150 = vsub.f32 0.0, %v2400
        %v3151 = vsub.f32 0.0, %v2402
        %v3152 = vsub.f32 0.0, %v2406
        %v3153 = vsub.f32 0.0, %v2408
        %v3154 = vsub.f32 0.0, %v2412
        %v3155 = vsub.f32 0.0, %v2414
        %v3156 = vsub.f32 0.0, %v2418
        %v3157 = vsub.f32 0.0, %v2420
        %v3158 = vsub.f32 0.0, %v2424
        %v3159 = vsub.f32 0.0, %v2426
        %v3160 = vsub.f32 0.0, %v2430
        %v3161 = vsub.f32 0.0, %v2432
        %v3162 = vsub.f32 0.0, %v2436
        %v3163 = vsub.f32 0.0, %v2438
        %v3164 = vsub.f32 0.0, %v2442
        %v3165 = vsub.f32 0.0, %v2444
        %v3166 = vsub.f32 0.0, %v2448
        %v3167 = vsub.f32 0.0, %v2450
        %v3168 = vsub.f32 0.0, %v2454
        %v3169 = vsub.f32 0.0, %v2456
        %v3170 = vsub.f32 0.0, %v2460
        %v3171 = vsub.f32 0.0, %v2462
        %v3172 = vsub.f32 0.0, %v2466
        %v3173 = vsub.f32 0.0, %v2468
        %v3174 = vmul.f32 %v3142, 1.442695
        %v3175 = vpow.pop %v3174
        %v3176 = vmul.f32 %v3143, 1.442695
        %v3177 = vpow.pop %v3176
        %v3178 = vmul.f32 %v3144, 1.442695
        %v3179 = vpow.pop %v3178
        %v3180 = vmul.f32 %v3145, 1.442695
        %v3181 = vpow.pop %v3180
        %v3182 = vmul.f32 %v3146, 1.442695
        %v3183 = vpow.pop %v3182
        %v3184 = vmul.f32 %v3147, 1.442695
        %v3185 = vpow.pop %v3184
        %v3186 = vmul.f32 %v3148, 1.442695
        %v3187 = vpow.pop %v3186
        %v3188 = vmul.f32 %v3149, 1.442695
        %v3189 = vpow.pop %v3188
        %v3190 = vmul.f32 %v3150, 1.442695
        %v3191 = vpow.pop %v3190
        %v3192 = vmul.f32 %v3151, 1.442695
        %v3193 = vpow.pop %v3192
        %v3194 = vmul.f32 %v3152, 1.442695
        %v3195 = vpow.pop %v3194
        %v3196 = vmul.f32 %v3153, 1.442695
        %v3197 = vpow.pop %v3196
        %v3198 = vmul.f32 %v3154, 1.442695
        %v3199 = vpow.pop %v3198
        %v3200 = vmul.f32 %v3155, 1.442695
        %v3201 = vpow.pop %v3200
        %v3202 = vmul.f32 %v3156, 1.442695
        %v3203 = vpow.pop %v3202
        %v3204 = vmul.f32 %v3157, 1.442695
        %v3205 = vpow.pop %v3204
        %v3206 = vmul.f32 %v3158, 1.442695
        %v3207 = vpow.pop %v3206
        %v3208 = vmul.f32 %v3159, 1.442695
        %v3209 = vpow.pop %v3208
        %v3210 = vmul.f32 %v3160, 1.442695
        %v3211 = vpow.pop %v3210
        %v3212 = vmul.f32 %v3161, 1.442695
        %v3213 = vpow.pop %v3212
        %v3214 = vmul.f32 %v3162, 1.442695
        %v3215 = vpow.pop %v3214
        %v3216 = vmul.f32 %v3163, 1.442695
        %v3217 = vpow.pop %v3216
        %v3218 = vmul.f32 %v3164, 1.442695
        %v3219 = vpow.pop %v3218
        %v3220 = vmul.f32 %v3165, 1.442695
        %v3221 = vpow.pop %v3220
        %v3222 = vmul.f32 %v3166, 1.442695
        %v3223 = vpow.pop %v3222
        %v3224 = vmul.f32 %v3167, 1.442695
        %v3225 = vpow.pop %v3224
        %v3226 = vmul.f32 %v3168, 1.442695
        %v3227 = vpow.pop %v3226
        %v3228 = vmul.f32 %v3169, 1.442695
        %v3229 = vpow.pop %v3228
        %v3230 = vmul.f32 %v3170, 1.442695
        %v3231 = vpow.pop %v3230
        %v3232 = vmul.f32 %v3171, 1.442695
        %v3233 = vpow.pop %v3232
        %v3234 = vmul.f32 %v3172, 1.442695
        %v3235 = vpow.pop %v3234
        %v3236 = vmul.f32 %v3173, 1.442695
        %v3237 = vpow.pop %v3236
        %v3238 = vadd.f32 %v3175, 1.0
        %v3239 = vadd.f32 %v3177, 1.0
        %v3240 = vadd.f32 %v3179, 1.0
        %v3241 = vadd.f32 %v3181, 1.0
        %v3242 = vadd.f32 %v3183, 1.0
        %v3243 = vadd.f32 %v3185, 1.0
        %v3244 = vadd.f32 %v3187, 1.0
        %v3245 = vadd.f32 %v3189, 1.0
        %v3246 = vadd.f32 %v3191, 1.0
        %v3247 = vadd.f32 %v3193, 1.0
        %v3248 = vadd.f32 %v3195, 1.0
        %v3249 = vadd.f32 %v3197, 1.0
        %v3250 = vadd.f32 %v3199, 1.0
        %v3251 = vadd.f32 %v3201, 1.0
        %v3252 = vadd.f32 %v3203, 1.0
        %v3253 = vadd.f32 %v3205, 1.0
        %v3254 = vadd.f32 %v3207, 1.0
        %v3255 = vadd.f32 %v3209, 1.0
        %v3256 = vadd.f32 %v3211, 1.0
        %v3257 = vadd.f32 %v3213, 1.0
        %v3258 = vadd.f32 %v3215, 1.0
        %v3259 = vadd.f32 %v3217, 1.0
        %v3260 = vadd.f32 %v3219, 1.0
        %v3261 = vadd.f32 %v3221, 1.0
        %v3262 = vadd.f32 %v3223, 1.0
        %v3263 = vadd.f32 %v3225, 1.0
        %v3264 = vadd.f32 %v3227, 1.0
        %v3265 = vadd.f32 %v3229, 1.0
        %v3266 = vadd.f32 %v3231, 1.0
        %v3267 = vadd.f32 %v3233, 1.0
        %v3268 = vadd.f32 %v3235, 1.0
        %v3269 = vadd.f32 %v3237, 1.0
        %v3270 = vrcp.pop %v3238
        %v3271 = vrcp.pop %v3239
        %v3272 = vrcp.pop %v3240
        %v3273 = vrcp.pop %v3241
        %v3274 = vrcp.pop %v3242
        %v3275 = vrcp.pop %v3243
        %v3276 = vrcp.pop %v3244
        %v3277 = vrcp.pop %v3245
        %v3278 = vrcp.pop %v3246
        %v3279 = vrcp.pop %v3247
        %v3280 = vrcp.pop %v3248
        %v3281 = vrcp.pop %v3249
        %v3282 = vrcp.pop %v3250
        %v3283 = vrcp.pop %v3251
        %v3284 = vrcp.pop %v3252
        %v3285 = vrcp.pop %v3253
        %v3286 = vrcp.pop %v3254
        %v3287 = vrcp.pop %v3255
        %v3288 = vrcp.pop %v3256
        %v3289 = vrcp.pop %v3257
        %v3290 = vrcp.pop %v3258
        %v3291 = vrcp.pop %v3259
        %v3292 = vrcp.pop %v3260
        %v3293 = vrcp.pop %v3261
        %v3294 = vrcp.pop %v3262
        %v3295 = vrcp.pop %v3263
        %v3296 = vrcp.pop %v3264
        %v3297 = vrcp.pop %v3265
        %v3298 = vrcp.pop %v3266
        %v3299 = vrcp.pop %v3267
        %v3300 = vrcp.pop %v3268
        %v3301 = vrcp.pop %v3269
        %v3302 = vmax.f32 %v3270, 0.0
        %v3303 = vmax.f32 %v3271, 0.0
        %v3304 = vmax.f32 %v3272, 0.0
        %v3305 = vmax.f32 %v3273, 0.0
        %v3306 = vmax.f32 %v3274, 0.0
        %v3307 = vmax.f32 %v3275, 0.0
        %v3308 = vmax.f32 %v3276, 0.0
        %v3309 = vmax.f32 %v3277, 0.0
        %v3310 = vmax.f32 %v3278, 0.0
        %v3311 = vmax.f32 %v3279, 0.0
        %v3312 = vmax.f32 %v3280, 0.0
        %v3313 = vmax.f32 %v3281, 0.0
        %v3314 = vmax.f32 %v3282, 0.0
        %v3315 = vmax.f32 %v3283, 0.0
        %v3316 = vmax.f32 %v3284, 0.0
        %v3317 = vmax.f32 %v3285, 0.0
        %v3318 = vmax.f32 %v3286, 0.0
        %v3319 = vmax.f32 %v3287, 0.0
        %v3320 = vmax.f32 %v3288, 0.0
        %v3321 = vmax.f32 %v3289, 0.0
        %v3322 = vmax.f32 %v3290, 0.0
        %v3323 = vmax.f32 %v3291, 0.0
        %v3324 = vmax.f32 %v3292, 0.0
        %v3325 = vmax.f32 %v3293, 0.0
        %v3326 = vmax.f32 %v3294, 0.0
        %v3327 = vmax.f32 %v3295, 0.0
        %v3328 = vmax.f32 %v3296, 0.0
        %v3329 = vmax.f32 %v3297, 0.0
        %v3330 = vmax.f32 %v3298, 0.0
        %v3331 = vmax.f32 %v3299, 0.0
        %v3332 = vmax.f32 %v3300, 0.0
        %v3333 = vmax.f32 %v3301, 0.0
        %v3334 = vmin.f32 %v3302, 1.0
        %v3335 = vmin.f32 %v3303, 1.0
        %v3336 = vmin.f32 %v3304, 1.0
        %v3337 = vmin.f32 %v3305, 1.0
        %v3338 = vmin.f32 %v3306, 1.0
        %v3339 = vmin.f32 %v3307, 1.0
        %v3340 = vmin.f32 %v3308, 1.0
        %v3341 = vmin.f32 %v3309, 1.0
        %v3342 = vmin.f32 %v3310, 1.0
        %v3343 = vmin.f32 %v3311, 1.0
        %v3344 = vmin.f32 %v3312, 1.0
        %v3345 = vmin.f32 %v3313, 1.0
        %v3346 = vmin.f32 %v3314, 1.0
        %v3347 = vmin.f32 %v3315, 1.0
        %v3348 = vmin.f32 %v3316, 1.0
        %v3349 = vmin.f32 %v3317, 1.0
        %v3350 = vmin.f32 %v3318, 1.0
        %v3351 = vmin.f32 %v3319, 1.0
        %v3352 = vmin.f32 %v3320, 1.0
        %v3353 = vmin.f32 %v3321, 1.0
        %v3354 = vmin.f32 %v3322, 1.0
        %v3355 = vmin.f32 %v3323, 1.0
        %v3356 = vmin.f32 %v3324, 1.0
        %v3357 = vmin.f32 %v3325, 1.0
        %v3358 = vmin.f32 %v3326, 1.0
        %v3359 = vmin.f32 %v3327, 1.0
        %v3360 = vmin.f32 %v3328, 1.0
        %v3361 = vmin.f32 %v3329, 1.0
        %v3362 = vmin.f32 %v3330, 1.0
        %v3363 = vmin.f32 %v3331, 1.0
        %v3364 = vmin.f32 %v3332, 1.0
        %v3365 = vmin.f32 %v3333, 1.0
        %3366 = vst.msk [vmem:[%s631] sm:$0xff] %vm1316, %v1227
        %3367 = vst.msk [vmem:[%s631 + $0x8] sm:$0xff] %vm1316, %v1232
        %3368 = vst.msk [vmem:[%s631 + $0x10] sm:$0xff] %vm1316, %v1237
        %3369 = vst.msk [vmem:[%s631 + $0x18] sm:$0xff] %vm1316, %v1242
        %3370 = vst.msk [vmem:[%s631 + $0x20] sm:$0xff] %vm1316, %v1247
        %3371 = vst.msk [vmem:[%s631 + $0x28] sm:$0xff] %vm1316, %v1252
        %3372 = vst.msk [vmem:[%s631 + $0x30] sm:$0xff] %vm1316, %v1257
        %3373 = vst.msk [vmem:[%s631 + $0x38] sm:$0xff] %vm1316, %v1262
        %3374 = vst.msk [vmem:[%s631 + $0x40] sm:$0xff] %vm1316, %v1267
        %3375 = vst.msk [vmem:[%s631 + $0x48] sm:$0xff] %vm1316, %v1272
        %3376 = vst.msk [vmem:[%s631 + $0x50] sm:$0xff] %vm1316, %v1277
        %3377 = vst.msk [vmem:[%s631 + $0x58] sm:$0xff] %vm1316, %v1282
        %3378 = vst.msk [vmem:[%s631 + $0x60] sm:$0xff] %vm1316, %v1287
        %3379 = vst.msk [vmem:[%s631 + $0x68] sm:$0xff] %vm1316, %v1292
        %3380 = vst.msk [vmem:[%s631 + $0x70] sm:$0xff] %vm1316, %v1297
        %3381 = vst.msk [vmem:[%s631 + $0x78] sm:$0xff] %vm1316, %v1302
        %3382 = vst [vmem:[%s611] sm:$0xff] %v2566
        %3383 = vst [vmem:[%s611 + $0x8] sm:$0xff] %v2567
        %3384 = vst [vmem:[%s611 + $0x10] sm:$0xff] %v2568
        %3385 = vst [vmem:[%s611 + $0x18] sm:$0xff] %v2569
        %3386 = vst [vmem:[%s611 + $0x20] sm:$0xff] %v2570
        %3387 = vst [vmem:[%s611 + $0x28] sm:$0xff] %v2571
        %3388 = vst [vmem:[%s611 + $0x30] sm:$0xff] %v2572
        %3389 = vst [vmem:[%s611 + $0x38] sm:$0xff] %v2573
        %3390 = vst [vmem:[%s611 + $0x40] sm:$0xff] %v2574
        %3391 = vst [vmem:[%s611 + $0x48] sm:$0xff] %v2575
        %3392 = vst [vmem:[%s611 + $0x50] sm:$0xff] %v2576
        %3393 = vst [vmem:[%s611 + $0x58] sm:$0xff] %v2577
        %3394 = vst [vmem:[%s611 + $0x60] sm:$0xff] %v2578
        %3395 = vst [vmem:[%s611 + $0x68] sm:$0xff] %v2579
        %3396 = vst [vmem:[%s611 + $0x70] sm:$0xff] %v2580
        %3397 = vst [vmem:[%s611 + $0x78] sm:$0xff] %v2581
        %3398 = vst [vmem:[%s611 + $0x80] sm:$0xff] %v2582
        %3399 = vst [vmem:[%s611 + $0x88] sm:$0xff] %v2583
        %3400 = vst [vmem:[%s611 + $0x90] sm:$0xff] %v2584
        %3401 = vst [vmem:[%s611 + $0x98] sm:$0xff] %v2585
        %3402 = vst [vmem:[%s611 + $0xa0] sm:$0xff] %v2586
        %3403 = vst [vmem:[%s611 + $0xa8] sm:$0xff] %v2587
        %3404 = vst [vmem:[%s611 + $0xb0] sm:$0xff] %v2588
        %3405 = vst [vmem:[%s611 + $0xb8] sm:$0xff] %v2589
        %3406 = vst [vmem:[%s611 + $0xc0] sm:$0xff] %v2590
        %3407 = vst [vmem:[%s611 + $0xc8] sm:$0xff] %v2591
        %3408 = vst [vmem:[%s611 + $0xd0] sm:$0xff] %v2592
        %3409 = vst [vmem:[%s611 + $0xd8] sm:$0xff] %v2593
        %3410 = vst [vmem:[%s611 + $0xe0] sm:$0xff] %v2594
        %3411 = vst [vmem:[%s611 + $0xe8] sm:$0xff] %v2595
        %3412 = vst [vmem:[%s611 + $0xf0] sm:$0xff] %v2596
        %3413 = vst [vmem:[%s611 + $0xf8] sm:$0xff] %v2597
        %3414 = vst [vmem:[%s618] sm:$0xff] %v3110
        %3415 = vst [vmem:[%s618 + $0x8] sm:$0xff] %v3111
        %3416 = vst [vmem:[%s618 + $0x10] sm:$0xff] %v3112
        %3417 = vst [vmem:[%s618 + $0x18] sm:$0xff] %v3113
        %3418 = vst [vmem:[%s618 + $0x20] sm:$0xff] %v3114
        %3419 = vst [vmem:[%s618 + $0x28] sm:$0xff] %v3115
        %3420 = vst [vmem:[%s618 + $0x30] sm:$0xff] %v3116
        %3421 = vst [vmem:[%s618 + $0x38] sm:$0xff] %v3117
        %3422 = vst [vmem:[%s618 + $0x40] sm:$0xff] %v3118
        %3423 = vst [vmem:[%s618 + $0x48] sm:$0xff] %v3119
        %3424 = vst [vmem:[%s618 + $0x50] sm:$0xff] %v3120
        %3425 = vst [vmem:[%s618 + $0x58] sm:$0xff] %v3121
        %3426 = vst [vmem:[%s618 + $0x60] sm:$0xff] %v3122
        %3427 = vst [vmem:[%s618 + $0x68] sm:$0xff] %v3123
        %3428 = vst [vmem:[%s618 + $0x70] sm:$0xff] %v3124
        %3429 = vst [vmem:[%s618 + $0x78] sm:$0xff] %v3125
        %3430 = vst [vmem:[%s618 + $0x80] sm:$0xff] %v3126
        %3431 = vst [vmem:[%s618 + $0x88] sm:$0xff] %v3127
        %3432 = vst [vmem:[%s618 + $0x90] sm:$0xff] %v3128
        %3433 = vst [vmem:[%s618 + $0x98] sm:$0xff] %v3129
        %3434 = vst [vmem:[%s618 + $0xa0] sm:$0xff] %v3130
        %3435 = vst [vmem:[%s618 + $0xa8] sm:$0xff] %v3131
        %3436 = vst [vmem:[%s618 + $0xb0] sm:$0xff] %v3132
        %3437 = vst [vmem:[%s618 + $0xb8] sm:$0xff] %v3133
        %3438 = vst [vmem:[%s618 + $0xc0] sm:$0xff] %v3134
        %3439 = vst [vmem:[%s618 + $0xc8] sm:$0xff] %v3135
        %3440 = vst [vmem:[%s618 + $0xd0] sm:$0xff] %v3136
        %3441 = vst [vmem:[%s618 + $0xd8] sm:$0xff] %v3137
        %3442 = vst [vmem:[%s618 + $0xe0] sm:$0xff] %v3138
        %3443 = vst [vmem:[%s618 + $0xe8] sm:$0xff] %v3139
        %3444 = vst [vmem:[%s618 + $0xf0] sm:$0xff] %v3140
        %3445 = vst [vmem:[%s618 + $0xf8] sm:$0xff] %v3141
        %3446 = vst [vmem:[%s625] sm:$0xff] %v3334
        %3447 = vst [vmem:[%s625 + $0x8] sm:$0xff] %v3335
        %3448 = vst [vmem:[%s625 + $0x10] sm:$0xff] %v3336
        %3449 = vst [vmem:[%s625 + $0x18] sm:$0xff] %v3337
        %3450 = vst [vmem:[%s625 + $0x20] sm:$0xff] %v3338
        %3451 = vst [vmem:[%s625 + $0x28] sm:$0xff] %v3339
        %3452 = vst [vmem:[%s625 + $0x30] sm:$0xff] %v3340
        %3453 = vst [vmem:[%s625 + $0x38] sm:$0xff] %v3341
        %3454 = vst [vmem:[%s625 + $0x40] sm:$0xff] %v3342
        %3455 = vst [vmem:[%s625 + $0x48] sm:$0xff] %v3343
        %3456 = vst [vmem:[%s625 + $0x50] sm:$0xff] %v3344
        %3457 = vst [vmem:[%s625 + $0x58] sm:$0xff] %v3345
        %3458 = vst [vmem:[%s625 + $0x60] sm:$0xff] %v3346
        %3459 = vst [vmem:[%s625 + $0x68] sm:$0xff] %v3347
        %3460 = vst [vmem:[%s625 + $0x70] sm:$0xff] %v3348
        %3461 = vst [vmem:[%s625 + $0x78] sm:$0xff] %v3349
        %3462 = vst [vmem:[%s625 + $0x80] sm:$0xff] %v3350
        %3463 = vst [vmem:[%s625 + $0x88] sm:$0xff] %v3351
        %3464 = vst [vmem:[%s625 + $0x90] sm:$0xff] %v3352
        %3465 = vst [vmem:[%s625 + $0x98] sm:$0xff] %v3353
        %3466 = vst [vmem:[%s625 + $0xa0] sm:$0xff] %v3354
        %3467 = vst [vmem:[%s625 + $0xa8] sm:$0xff] %v3355
        %3468 = vst [vmem:[%s625 + $0xb0] sm:$0xff] %v3356
        %3469 = vst [vmem:[%s625 + $0xb8] sm:$0xff] %v3357
        %3470 = vst [vmem:[%s625 + $0xc0] sm:$0xff] %v3358
        %3471 = vst [vmem:[%s625 + $0xc8] sm:$0xff] %v3359
        %3472 = vst [vmem:[%s625 + $0xd0] sm:$0xff] %v3360
        %3473 = vst [vmem:[%s625 + $0xd8] sm:$0xff] %v3361
        %3474 = vst [vmem:[%s625 + $0xe0] sm:$0xff] %v3362
        %3475 = vst [vmem:[%s625 + $0xe8] sm:$0xff] %v3363
        %3476 = vst [vmem:[%s625 + $0xf0] sm:$0xff] %v3364
        %3477 = vst [vmem:[%s625 + $0xf8] sm:$0xff] %v3365
        %s3478 = smul.u32 16, %s41
        %p3479 = scmp.lt.s32.totalorder %s3478, 31
        %s3480 = scalar_select %p3479, %s3478, 31
        %s3481 = smul.addr %s3480, 8
        %s3482 = scalar_lea.vmem %s14, %s3481
        %s3483 = sand.u32 %s353, 1
        %s3484 = scalar_lea.sflag [#allocation6], %s3483
        %s3485 = sand.u32 %s353, 1
        %s3486 = smul.addr %s3485, 256
        %s3487 = scalar_lea.vmem [#allocation13], %s3486
        %s3488 = sand.u32 %s41, 1
        %s3489 = scalar_lea.sflag [#allocation15], %s3488
        %s3490 = sand.u32 %s379, 1
        %s3491 = smul.addr %s3490, 256
        %s3492 = scalar_lea.vmem [#allocation14], %s3491
        %s3493 = sand.u32 %s41, 1
        %s3494 = scalar_lea.sflag [#allocation15], %s3493
        %s3495 = sand.u32 %s405, 1
        %s3496 = smul.addr %s3495, 256
        %s3497 = scalar_lea.vmem [#allocation16], %s3496
        // Predicated region
        $region93: #{tpu_custom_call.1} parent=71 // pred_check
          %p3498 = pneg %p337
        $region94: #{tpu_custom_call.1} parent=71 // pred_check_branch
          %3500 = sbr.rel (%p3498) target = $region96
        $region95: #{tpu_custom_call.1} parent=71 // pred_region
          %s3501 = smul.u32 16, %s41
        $region96: #{tpu_custom_call.1} parent=71 // pred_fallthru
          _
        // Predicated region
        $region97: #{tpu_custom_call.1} parent=71 // pred_check
          %p3502 = pneg %p363
        $region98: #{tpu_custom_call.1} parent=71 // pred_check_branch
          %3504 = sbr.rel (%p3502) target = $region100
        $region99: #{tpu_custom_call.1} parent=71 // pred_region
          %s3505 = smul.u32 16, %s41
          %s3507 = ssub.s32 4096, 4096
          %3508 = vsyncadd %s3484, %s3507
          %s3509 = smul.addr %s3505, 2
          %s3510 = smul.addr %s3509, 128
          %s3511 = scalar_lea.hbm %s15, %s3510
          %s3512 = sshll.u32 %s3487, 4
          %s3513 = int_to_ptr.vmem [resolvable:$true] %s3512
          %3518 = dma.vmem_to_hbm [thread:$0]  %s3513, 4096, %s3511, %s3484, 256, 256, 16
        $region100: #{tpu_custom_call.1} parent=71 // pred_fallthru
          _
        // Predicated region
        $region101: #{tpu_custom_call.1} parent=71 // pred_check
          %p3519 = pneg %p389
        $region102: #{tpu_custom_call.1} parent=71 // pred_check_branch
          %3521 = sbr.rel (%p3519) target = $region104
        $region103: #{tpu_custom_call.1} parent=71 // pred_region
          %s3522 = smul.u32 16, %s41
          %s3524 = ssub.s32 4096, 4096
          %3525 = vsyncadd %s3489, %s3524
          %s3526 = smul.addr %s3522, 2
          %s3527 = smul.addr %s3526, 128
          %s3528 = scalar_lea.hbm %s16, %s3527
          %s3529 = sshll.u32 %s3492, 4
          %s3530 = int_to_ptr.vmem [resolvable:$true] %s3529
          %3535 = dma.vmem_to_hbm [thread:$0]  %s3530, 4096, %s3528, %s3489, 256, 256, 16
        $region104: #{tpu_custom_call.1} parent=71 // pred_fallthru
          _
        // Predicated region
        $region105: #{tpu_custom_call.1} parent=71 // pred_check
          %p3536 = pneg %p415
        $region106: #{tpu_custom_call.1} parent=71 // pred_check_branch
          %3538 = sbr.rel (%p3536) target = $region108
        $region107: #{tpu_custom_call.1} parent=71 // pred_region
          %s3539 = smul.u32 16, %s41
          %s3541 = ssub.s32 4096, 4096
          %3542 = vsyncadd %s3494, %s3541
          %s3543 = smul.addr %s3539, 2
          %s3544 = smul.addr %s3543, 128
          %s3545 = scalar_lea.hbm %s17, %s3544
          %s3546 = sshll.u32 %s3497, 4
          %s3547 = int_to_ptr.vmem [resolvable:$true] %s3546
          %3552 = dma.vmem_to_hbm [thread:$0]  %s3547, 4096, %s3545, %s3494, 256, 256, 16
        $region108: #{tpu_custom_call.1} parent=71 // pred_fallthru
          _
      $region72: #{tpu_custom_call.1} parent=5 // pred_fallthru
        _
      %p3553 = scmp.le.s32.totalorder 2, %s36
      // Predicated region
      $region109: #{tpu_custom_call.1} parent=5 // pred_check
        %p3554 = pneg %p3553
      $region110: #{tpu_custom_call.1} parent=5 // pred_check_branch
        %3556 = sbr.rel (%p3554) target = $region112
      $region111: #{tpu_custom_call.1} parent=5 // pred_region
        %s3557 = ssub.s32 %s36, 2
        // Predicated region
        $region113: #{tpu_custom_call.1} parent=111 // pred_check
          %p3558 = pneg %p343
        $region114: #{tpu_custom_call.1} parent=111 // pred_check_branch
          %3560 = sbr.rel (%p3558) target = $region116
        $region115: #{tpu_custom_call.1} parent=111 // pred_region
          %s3561 = smul.u32 16, %s42
          %p3562 = scmp.lt.s32.totalorder %s3561, 31
          %s3563 = scalar_select %p3562, %s3561, 31
          %s3564 = smul.addr %s3563, 8
          %s3565 = scalar_lea.vmem %s14, %s3564
        $region116: #{tpu_custom_call.1} parent=111 // pred_fallthru
          _
        // Predicated region
        $region117: #{tpu_custom_call.1} parent=111 // pred_check
          %p3566 = pneg %p369
        $region118: #{tpu_custom_call.1} parent=111 // pred_check_branch
          %3568 = sbr.rel (%p3566) target = $region120
        $region119: #{tpu_custom_call.1} parent=111 // pred_region
          %s3569 = sand.u32 %s354, 1
          %s3570 = scalar_lea.sflag [#allocation6], %s3569
          %s3571 = sand.u32 %s354, 1
          %s3572 = smul.addr %s3571, 256
          %s3573 = scalar_lea.vmem [#allocation13], %s3572
          %3574 = dma.done %s3570, 4096
        $region120: #{tpu_custom_call.1} parent=111 // pred_fallthru
          _
        // Predicated region
        $region121: #{tpu_custom_call.1} parent=111 // pred_check
          %p3575 = pneg %p395
        $region122: #{tpu_custom_call.1} parent=111 // pred_check_branch
          %3577 = sbr.rel (%p3575) target = $region124
        $region123: #{tpu_custom_call.1} parent=111 // pred_region
          %s3578 = sand.u32 %s42, 1
          %s3579 = scalar_lea.sflag [#allocation15], %s3578
          %s3580 = sand.u32 %s380, 1
          %s3581 = smul.addr %s3580, 256
          %s3582 = scalar_lea.vmem [#allocation14], %s3581
          %3583 = dma.done %s3579, 4096
        $region124: #{tpu_custom_call.1} parent=111 // pred_fallthru
          _
        // Predicated region
        $region125: #{tpu_custom_call.1} parent=111 // pred_check
          %p3584 = pneg %p421
        $region126: #{tpu_custom_call.1} parent=111 // pred_check_branch
          %3586 = sbr.rel (%p3584) target = $region128
        $region127: #{tpu_custom_call.1} parent=111 // pred_region
          %s3587 = sand.u32 %s42, 1
          %s3588 = scalar_lea.sflag [#allocation15], %s3587
          %s3589 = sand.u32 %s406, 1
          %s3590 = smul.addr %s3589, 256
          %s3591 = scalar_lea.vmem [#allocation16], %s3590
          %3592 = dma.done %s3588, 4096
        $region128: #{tpu_custom_call.1} parent=111 // pred_fallthru
          _
      $region112: #{tpu_custom_call.1} parent=5 // pred_fallthru
        _
    $region6: #{tpu_custom_call.1} parent=1 // loop_footer
      %s40 = sadd.s32 1, %s36
    $region7: #{tpu_custom_call.1} parent=1 // loop_footer_branch
      %35 = sbr.rel target = $region3
    $region8: #{tpu_custom_call.1} parent=1 // loop_exit
      _
    %3593 = vsyncpa [#allocation5], 1
    %s3594 = scalar_lea.sflag [#allocation5], 1
    %3595 = vsyncpa %s3594, 1
    %3596 = vsyncpa [#allocation8], 1
    %3597 = vsyncpa [#allocation11], 1
    %3598 = vsyncpa [#allocation6], 1
    %s3599 = scalar_lea.sflag [#allocation6], 1
    %3600 = vsyncpa %s3599, 1
    %3601 = vsyncpa [#allocation15], 1
    %s3602 = scalar_lea.sflag [#allocation15], 1
    %3603 = vsyncpa %s3602, 1

// kernel: tpu_custom_call.1
$region0: #{tpu_custom_call.1}
  #allocation0 [shape = 'u32[]', space=smem, size = 0x4, offset = 0x4, fixed_abs, tag = 'smem constant byte address 0x4 - core index']
  #allocation1 [shape = 'u32[144,128]{1,0:T(1,128)}', space=vmem, size = 0x12000, scoped, tag = 'internal scratch']
  #allocation2 [shape = 's32[1]{0}', space=sflag, size = 0x4, scoped, tag = 'scoped memory for tpu_custom_call.1']
  #allocation3 [shape = 's32[1]{0:T(128)S(6)}', space=smem, size = 0x200, scoped, tag = 'prefetched SMEM operand 0']
  %s0 = inlined_call_operand.<no memory space> [shape: s32[1], index: 0, kind: input, shape index: {}]
  %s1 = inlined_call_operand.hbm [shape: f32[256,256], index: 1, kind: input, shape index: {}]
  %s2 = inlined_call_operand.hbm [shape: f32[256,256], index: 2, kind: input, shape index: {}]
  %s3 = inlined_call_operand.vmem [shape: f32[1,256], index: 3, kind: input, shape index: {}]
  %s4 = inlined_call_operand.hbm [shape: f32[256,128], index: 4, kind: input, shape index: {}]
  %s5 = inlined_call_operand.vmem [shape: f32[1,128], index: 5, kind: input, shape index: {}]
  %s6 = inlined_call_operand.vmem [shape: f32[128,32], index: 6, kind: input, shape index: {}]
  %s7 = inlined_call_operand.vmem [shape: f32[1,32], index: 7, kind: input, shape index: {}]
  %s8 = inlined_call_operand.vmem [shape: f32[32,128], index: 8, kind: input, shape index: {}]
  %s9 = inlined_call_operand.vmem [shape: f32[1,128], index: 9, kind: input, shape index: {}]
  %s10 = inlined_call_operand.hbm [shape: f32[128,256], index: 10, kind: input, shape index: {}]
  %s11 = inlined_call_operand.vmem [shape: f32[1,256], index: 11, kind: input, shape index: {}]
  %s12 = inlined_call_operand.hbm [shape: f32[256,768], index: 12, kind: input, shape index: {}]
  %s13 = inlined_call_operand.vmem [shape: f32[1,768], index: 13, kind: input, shape index: {}]
  %s14 = inlined_call_operand.vmem [shape: f32[256,32], index: 14, kind: output, shape index: {0}]
  %s15 = inlined_call_operand.hbm [shape: f32[256,256], index: 15, kind: output, shape index: {1}]
  %s16 = inlined_call_operand.hbm [shape: f32[256,256], index: 16, kind: output, shape index: {2}]
  %s17 = inlined_call_operand.hbm [shape: f32[256,256], index: 17, kind: output, shape index: {3}]
  %18 = xla_tuple %s14, %s15, %s16, %s17
  %s19 = sld [smem:[#allocation0]]
  $region129: #{tpu_custom_call.1} parent=0
    _
  %s21 = ssub.s32 1, %s19
  %s22 = scalar_select 0, %s21, %s19
  %23 = sst [smem:[#allocation3]] %s0
  $region1: #{tpu_custom_call.1} parent=0
    #allocation4 [shape = 'u8[262144]{0}', space=vmem, size = 0x40000, scoped, tag = 'input window, operand 1']
    #allocation5 [shape = 's32[2]{0}', space=sflag, size = 0x8, scoped, tag = 'scoped memory for tpu_custom_call.1']
    #allocation6 [shape = 's32[2]{0}', space=sflag, size = 0x8, scoped, tag = 'scoped memory for tpu_custom_call.1']
    #allocation7 [shape = 'u8[262144]{0}', space=vmem, size = 0x40000, scoped, tag = 'input window, operand 2, single buffered']
    #allocation8 [shape = 's32[1]{0}', space=sflag, size = 0x4, scoped, tag = 'scoped memory for tpu_custom_call.1']
    #allocation9 [shape = 'u8[131072]{0}', space=vmem, size = 0x20000, scoped, tag = 'input window, operand 4, single buffered']
    #allocation10 [shape = 'u8[131072]{0}', space=vmem, size = 0x20000, scoped, tag = 'input window, operand 10, single buffered']
    #allocation11 [shape = 's32[1]{0}', space=sflag, size = 0x4, scoped, tag = 'scoped memory for tpu_custom_call.1']
    #allocation12 [shape = 'u8[786432]{0}', space=vmem, size = 0xc0000, scoped, tag = 'input window, operand 12, single buffered']
    #allocation13 [shape = 'u8[262144]{0}', space=vmem, size = 0x40000, scoped, tag = 'output window, operand 1']
    #allocation14 [shape = 'u8[262144]{0}', space=vmem, size = 0x40000, scoped, tag = 'output window, operand 2']
    #allocation15 [shape = 's32[2]{0}', space=sflag, size = 0x8, scoped, tag = 'scoped memory for tpu_custom_call.1']
    #allocation16 [shape = 'u8[262144]{0}', space=vmem, size = 0x40000, scoped, tag = 'output window, operand 3']
    %24 = vsyncpa [#allocation5], 0
    %s25 = scalar_lea.sflag [#allocation5], 1
    %26 = vsyncpa %s25, 0
    %27 = vsyncpa [#allocation8], 0
    %28 = vsyncpa [#allocation11], 0
    %29 = vsyncpa [#allocation6], 0
    %s30 = scalar_lea.sflag [#allocation6], 1
    %31 = vsyncpa %s30, 0
    %32 = vsyncpa [#allocation15], 0
    %s33 = scalar_lea.sflag [#allocation15], 1
    %34 = vsyncpa %s33, 0
    loop: start=0, step=1, limit=4
    $region2: #{tpu_custom_call.1} parent=1 // loop_pre_header
      _
    $region3: #{tpu_custom_call.1} parent=1 // loop_header
      %s36 = sphi 0, %s40
      %p37 = scmp.ge.s32.totalorder %s36, 4
      %s46 = sphi 0, %s48
      %s49 = sphi 0, %s46
      %s50 = sphi 0, %s49
      %s66 = sphi 0, %s50
      %s70 = sphi 0, %s70
      %s72 = sphi 0, %s70
      %s73 = sphi 0, %s72
      %s87 = sphi 0, %s73
      %s91 = sphi 0, %s91
      %s93 = sphi 0, %s91
      %s94 = sphi 0, %s93
      %s108 = sphi 0, %s94
      %s112 = sphi 0, %s112
      %s114 = sphi 0, %s112
      %s115 = sphi 0, %s114
      %s129 = sphi 0, %s115
      %s133 = sphi 0, %s133
      %s135 = sphi 0, %s133
      %s136 = sphi 0, %s135
      %s150 = sphi 0, %s136
      %s154 = sphi 0, %s154
      %s156 = sphi 0, %s154
      %s157 = sphi 0, %s156
      %s171 = sphi 0, %s157
      %s175 = sphi 0, %s175
      %s177 = sphi 0, %s175
      %s178 = sphi 0, %s177
      %s192 = sphi 0, %s178
      %s196 = sphi 0, %s196
      %s198 = sphi 0, %s196
      %s199 = sphi 0, %s198
      %s213 = sphi 0, %s199
      %s217 = sphi 0, %s217
      %s219 = sphi 0, %s217
      %s220 = sphi 0, %s219
      %s234 = sphi 0, %s220
      %s238 = sphi 0, %s238
      %s240 = sphi 0, %s238
      %s241 = sphi 0, %s240
      %s255 = sphi 0, %s241
      %s259 = sphi 0, %s259
      %s261 = sphi 0, %s259
      %s262 = sphi 0, %s261
      %s276 = sphi 0, %s262
      %s280 = sphi 0, %s280
      %s282 = sphi 0, %s280
      %s283 = sphi 0, %s282
      %s297 = sphi 0, %s283
      %s301 = sphi 0, %s301
      %s303 = sphi 0, %s301
      %s304 = sphi 0, %s303
      %s318 = sphi 0, %s304
      %s324 = sphi 0, %s326
      %s327 = sphi 0, %s324
      %s328 = sphi 0, %s327
      %s344 = sphi 0, %s328
      %s350 = sphi 0, %s352
      %s353 = sphi 0, %s350
      %s354 = sphi 0, %s353
      %s370 = sphi 0, %s354
      %s376 = sphi 0, %s378
      %s379 = sphi 0, %s376
      %s380 = sphi 0, %s379
      %s396 = sphi 0, %s380
      %s402 = sphi 0, %s404
      %s405 = sphi 0, %s402
      %s406 = sphi 0, %s405
      %s422 = sphi 0, %s406
    $region4: #{tpu_custom_call.1} parent=1 // loop_header_branch
      %39 = sbr.rel (%p37) target = $region8
    $region5: #{tpu_custom_call.1} parent=1 // loop_body
      %s41 = ssub.s32 %s36, 1
      %s42 = ssub.s32 %s36, 2
      %s43 = sadd.s32 %s36, 1
      %s44 = ssub.s32 %s36, %s43
      %p45 = scmp.eq.s32.totalorder %s44, 0
      %s47 = sadd.s32 %s46, 1
      %s48 = scalar_select %p45, %s46, %s47
      %p51 = pneg %p45
      %p52 = scmp.eq.s32.totalorder %s36, 1
      %p53 = por %p51, %p52
      %p54 = scmp.ne.s32.totalorder %s46, %s49
      %p55 = scmp.eq.s32.totalorder %s36, 0
      %p56 = por %p54, %p55
      %p57 = scmp.ne.s32.totalorder %s46, %s49
      %p58 = scmp.eq.s32.totalorder %s41, 1
      %p59 = por %p57, %p58
      %p60 = scmp.ne.s32.totalorder %s49, %s50
      %p61 = scmp.eq.s32.totalorder %s41, 0
      %p62 = por %p60, %p61
      %p63 = scmp.ne.s32.totalorder %s49, %s50
      %p64 = scmp.eq.s32.totalorder %s42, 1
      %p65 = por %p63, %p64
      %p67 = scmp.ne.s32.totalorder %s50, %s66
      %p68 = scmp.eq.s32.totalorder %s42, 0
      %p69 = por %p67, %p68
      %s71 = sadd.s32 %s70, 1
      %p74 = scmp.eq.s32.totalorder %s36, 1
      %p75 = scmp.ne.s32.totalorder %s70, %s72
      %p76 = scmp.eq.s32.totalorder %s36, 0
      %p77 = por %p75, %p76
      %p78 = scmp.ne.s32.totalorder %s70, %s72
      %p79 = scmp.eq.s32.totalorder %s41, 1
      %p80 = por %p78, %p79
      %p81 = scmp.ne.s32.totalorder %s72, %s73
      %p82 = scmp.eq.s32.totalorder %s41, 0
      %p83 = por %p81, %p82
      %p84 = scmp.ne.s32.totalorder %s72, %s73
      %p85 = scmp.eq.s32.totalorder %s42, 1
      %p86 = por %p84, %p85
      %p88 = scmp.ne.s32.totalorder %s73, %s87
      %p89 = scmp.eq.s32.totalorder %s42, 0
      %p90 = por %p88, %p89
      %s92 = sadd.s32 %s91, 1
      %p95 = scmp.eq.s32.totalorder %s36, 1
      %p96 = scmp.ne.s32.totalorder %s91, %s93
      %p97 = scmp.eq.s32.totalorder %s36, 0
      %p98 = por %p96, %p97
      %p99 = scmp.ne.s32.totalorder %s91, %s93
      %p100 = scmp.eq.s32.totalorder %s41, 1
      %p101 = por %p99, %p100
      %p102 = scmp.ne.s32.totalorder %s93, %s94
      %p103 = scmp.eq.s32.totalorder %s41, 0
      %p104 = por %p102, %p103
      %p105 = scmp.ne.s32.totalorder %s93, %s94
      %p106 = scmp.eq.s32.totalorder %s42, 1
      %p107 = por %p105, %p106
      %p109 = scmp.ne.s32.totalorder %s94, %s108
      %p110 = scmp.eq.s32.totalorder %s42, 0
      %p111 = por %p109, %p110
      %s113 = sadd.s32 %s112, 1
      %p116 = scmp.eq.s32.totalorder %s36, 1
      %p117 = scmp.ne.s32.totalorder %s112, %s114
      %p118 = scmp.eq.s32.totalorder %s36, 0
      %p119 = por %p117, %p118
      %p120 = scmp.ne.s32.totalorder %s112, %s114
      %p121 = scmp.eq.s32.totalorder %s41, 1
      %p122 = por %p120, %p121
      %p123 = scmp.ne.s32.totalorder %s114, %s115
      %p124 = scmp.eq.s32.totalorder %s41, 0
      %p125 = por %p123, %p124
      %p126 = scmp.ne.s32.totalorder %s114, %s115
      %p127 = scmp.eq.s32.totalorder %s42, 1
      %p128 = por %p126, %p127
      %p130 = scmp.ne.s32.totalorder %s115, %s129
      %p131 = scmp.eq.s32.totalorder %s42, 0
      %p132 = por %p130, %p131
      %s134 = sadd.s32 %s133, 1
      %p137 = scmp.eq.s32.totalorder %s36, 1
      %p138 = scmp.ne.s32.totalorder %s133, %s135
      %p139 = scmp.eq.s32.totalorder %s36, 0
      %p140 = por %p138, %p139
      %p141 = scmp.ne.s32.totalorder %s133, %s135
      %p142 = scmp.eq.s32.totalorder %s41, 1
      %p143 = por %p141, %p142
      %p144 = scmp.ne.s32.totalorder %s135, %s136
      %p145 = scmp.eq.s32.totalorder %s41, 0
      %p146 = por %p144, %p145
      %p147 = scmp.ne.s32.totalorder %s135, %s136
      %p148 = scmp.eq.s32.totalorder %s42, 1
      %p149 = por %p147, %p148
      %p151 = scmp.ne.s32.totalorder %s136, %s150
      %p152 = scmp.eq.s32.totalorder %s42, 0
      %p153 = por %p151, %p152
      %s155 = sadd.s32 %s154, 1
      %p158 = scmp.eq.s32.totalorder %s36, 1
      %p159 = scmp.ne.s32.totalorder %s154, %s156
      %p160 = scmp.eq.s32.totalorder %s36, 0
      %p161 = por %p159, %p160
      %p162 = scmp.ne.s32.totalorder %s154, %s156
      %p163 = scmp.eq.s32.totalorder %s41, 1
      %p164 = por %p162, %p163
      %p165 = scmp.ne.s32.totalorder %s156, %s157
      %p166 = scmp.eq.s32.totalorder %s41, 0
      %p167 = por %p165, %p166
      %p168 = scmp.ne.s32.totalorder %s156, %s157
      %p169 = scmp.eq.s32.totalorder %s42, 1
      %p170 = por %p168, %p169
      %p172 = scmp.ne.s32.totalorder %s157, %s171
      %p173 = scmp.eq.s32.totalorder %s42, 0
      %p174 = por %p172, %p173
      %s176 = sadd.s32 %s175, 1
      %p179 = scmp.eq.s32.totalorder %s36, 1
      %p180 = scmp.ne.s32.totalorder %s175, %s177
      %p181 = scmp.eq.s32.totalorder %s36, 0
      %p182 = por %p180, %p181
      %p183 = scmp.ne.s32.totalorder %s175, %s177
      %p184 = scmp.eq.s32.totalorder %s41, 1
      %p185 = por %p183, %p184
      %p186 = scmp.ne.s32.totalorder %s177, %s178
      %p187 = scmp.eq.s32.totalorder %s41, 0
      %p188 = por %p186, %p187
      %p189 = scmp.ne.s32.totalorder %s177, %s178
      %p190 = scmp.eq.s32.totalorder %s42, 1
      %p191 = por %p189, %p190
      %p193 = scmp.ne.s32.totalorder %s178, %s192
      %p194 = scmp.eq.s32.totalorder %s42, 0
      %p195 = por %p193, %p194
      %s197 = sadd.s32 %s196, 1
      %p200 = scmp.eq.s32.totalorder %s36, 1
      %p201 = scmp.ne.s32.totalorder %s196, %s198
      %p202 = scmp.eq.s32.totalorder %s36, 0
      %p203 = por %p201, %p202
      %p204 = scmp.ne.s32.totalorder %s196, %s198
      %p205 = scmp.eq.s32.totalorder %s41, 1
      %p206 = por %p204, %p205
      %p207 = scmp.ne.s32.totalorder %s198, %s199
      %p208 = scmp.eq.s32.totalorder %s41, 0
      %p209 = por %p207, %p208
      %p210 = scmp.ne.s32.totalorder %s198, %s199
      %p211 = scmp.eq.s32.totalorder %s42, 1
      %p212 = por %p210, %p211
      %p214 = scmp.ne.s32.totalorder %s199, %s213
      %p215 = scmp.eq.s32.totalorder %s42, 0
      %p216 = por %p214, %p215
      %s218 = sadd.s32 %s217, 1
      %p221 = scmp.eq.s32.totalorder %s36, 1
      %p222 = scmp.ne.s32.totalorder %s217, %s219
      %p223 = scmp.eq.s32.totalorder %s36, 0
      %p224 = por %p222, %p223
      %p225 = scmp.ne.s32.totalorder %s217, %s219
      %p226 = scmp.eq.s32.totalorder %s41, 1
      %p227 = por %p225, %p226
      %p228 = scmp.ne.s32.totalorder %s219, %s220
      %p229 = scmp.eq.s32.totalorder %s41, 0
      %p230 = por %p228, %p229
      %p231 = scmp.ne.s32.totalorder %s219, %s220
      %p232 = scmp.eq.s32.totalorder %s42, 1
      %p233 = por %p231, %p232
      %p235 = scmp.ne.s32.totalorder %s220, %s234
      %p236 = scmp.eq.s32.totalorder %s42, 0
      %p237 = por %p235, %p236
      %s239 = sadd.s32 %s238, 1
      %p242 = scmp.eq.s32.totalorder %s36, 1
      %p243 = scmp.ne.s32.totalorder %s238, %s240
      %p244 = scmp.eq.s32.totalorder %s36, 0
      %p245 = por %p243, %p244
      %p246 = scmp.ne.s32.totalorder %s238, %s240
      %p247 = scmp.eq.s32.totalorder %s41, 1
      %p248 = por %p246, %p247
      %p249 = scmp.ne.s32.totalorder %s240, %s241
      %p250 = scmp.eq.s32.totalorder %s41, 0
      %p251 = por %p249, %p250
      %p252 = scmp.ne.s32.totalorder %s240, %s241
      %p253 = scmp.eq.s32.totalorder %s42, 1
      %p254 = por %p252, %p253
      %p256 = scmp.ne.s32.totalorder %s241, %s255
      %p257 = scmp.eq.s32.totalorder %s42, 0
      %p258 = por %p256, %p257
      %s260 = sadd.s32 %s259, 1
      %p263 = scmp.eq.s32.totalorder %s36, 1
      %p264 = scmp.ne.s32.totalorder %s259, %s261
      %p265 = scmp.eq.s32.totalorder %s36, 0
      %p266 = por %p264, %p265
      %p267 = scmp.ne.s32.totalorder %s259, %s261
      %p268 = scmp.eq.s32.totalorder %s41, 1
      %p269 = por %p267, %p268
      %p270 = scmp.ne.s32.totalorder %s261, %s262
      %p271 = scmp.eq.s32.totalorder %s41, 0
      %p272 = por %p270, %p271
      %p273 = scmp.ne.s32.totalorder %s261, %s262
      %p274 = scmp.eq.s32.totalorder %s42, 1
      %p275 = por %p273, %p274
      %p277 = scmp.ne.s32.totalorder %s262, %s276
      %p278 = scmp.eq.s32.totalorder %s42, 0
      %p279 = por %p277, %p278
      %s281 = sadd.s32 %s280, 1
      %p284 = scmp.eq.s32.totalorder %s36, 1
      %p285 = scmp.ne.s32.totalorder %s280, %s282
      %p286 = scmp.eq.s32.totalorder %s36, 0
      %p287 = por %p285, %p286
      %p288 = scmp.ne.s32.totalorder %s280, %s282
      %p289 = scmp.eq.s32.totalorder %s41, 1
      %p290 = por %p288, %p289
      %p291 = scmp.ne.s32.totalorder %s282, %s283
      %p292 = scmp.eq.s32.totalorder %s41, 0
      %p293 = por %p291, %p292
      %p294 = scmp.ne.s32.totalorder %s282, %s283
      %p295 = scmp.eq.s32.totalorder %s42, 1
      %p296 = por %p294, %p295
      %p298 = scmp.ne.s32.totalorder %s283, %s297
      %p299 = scmp.eq.s32.totalorder %s42, 0
      %p300 = por %p298, %p299
      %s302 = sadd.s32 %s301, 1
      %p305 = scmp.eq.s32.totalorder %s36, 1
      %p306 = scmp.ne.s32.totalorder %s301, %s303
      %p307 = scmp.eq.s32.totalorder %s36, 0
      %p308 = por %p306, %p307
      %p309 = scmp.ne.s32.totalorder %s301, %s303
      %p310 = scmp.eq.s32.totalorder %s41, 1
      %p311 = por %p309, %p310
      %p312 = scmp.ne.s32.totalorder %s303, %s304
      %p313 = scmp.eq.s32.totalorder %s41, 0
      %p314 = por %p312, %p313
      %p315 = scmp.ne.s32.totalorder %s303, %s304
      %p316 = scmp.eq.s32.totalorder %s42, 1
      %p317 = por %p315, %p316
      %p319 = scmp.ne.s32.totalorder %s304, %s318
      %p320 = scmp.eq.s32.totalorder %s42, 0
      %p321 = por %p319, %p320
      %s322 = ssub.s32 %s36, %s43
      %p323 = scmp.eq.s32.totalorder %s322, 0
      %s325 = sadd.s32 %s324, 1
      %s326 = scalar_select %p323, %s324, %s325
      %p329 = pneg %p323
      %p330 = scmp.eq.s32.totalorder %s36, 1
      %p331 = por %p329, %p330
      %p332 = scmp.ne.s32.totalorder %s324, %s327
      %p333 = scmp.eq.s32.totalorder %s36, 0
      %p334 = por %p332, %p333
      %p335 = scmp.ne.s32.totalorder %s324, %s327
      %p336 = scmp.eq.s32.totalorder %s41, 1
      %p337 = por %p335, %p336
      %p338 = scmp.ne.s32.totalorder %s327, %s328
      %p339 = scmp.eq.s32.totalorder %s41, 0
      %p340 = por %p338, %p339
      %p341 = scmp.ne.s32.totalorder %s327, %s328
      %p342 = scmp.eq.s32.totalorder %s42, 1
      %p343 = por %p341, %p342
      %p345 = scmp.ne.s32.totalorder %s328, %s344
      %p346 = scmp.eq.s32.totalorder %s42, 0
      %p347 = por %p345, %p346
      %s348 = ssub.s32 %s36, %s43
      %p349 = scmp.eq.s32.totalorder %s348, 0
      %s351 = sadd.s32 %s350, 1
      %s352 = scalar_select %p349, %s350, %s351
      %p355 = pneg %p349
      %p356 = scmp.eq.s32.totalorder %s36, 1
      %p357 = por %p355, %p356
      %p358 = scmp.ne.s32.totalorder %s350, %s353
      %p359 = scmp.eq.s32.totalorder %s36, 0
      %p360 = por %p358, %p359
      %p361 = scmp.ne.s32.totalorder %s350, %s353
      %p362 = scmp.eq.s32.totalorder %s41, 1
      %p363 = por %p361, %p362
      %p364 = scmp.ne.s32.totalorder %s353, %s354
      %p365 = scmp.eq.s32.totalorder %s41, 0
      %p366 = por %p364, %p365
      %p367 = scmp.ne.s32.totalorder %s353, %s354
      %p368 = scmp.eq.s32.totalorder %s42, 1
      %p369 = por %p367, %p368
      %p371 = scmp.ne.s32.totalorder %s354, %s370
      %p372 = scmp.eq.s32.totalorder %s42, 0
      %p373 = por %p371, %p372
      %s374 = ssub.s32 %s36, %s43
      %p375 = scmp.eq.s32.totalorder %s374, 0
      %s377 = sadd.s32 %s376, 1
      %s378 = scalar_select %p375, %s376, %s377
      %p381 = pneg %p375
      %p382 = scmp.eq.s32.totalorder %s36, 1
      %p383 = por %p381, %p382
      %p384 = scmp.ne.s32.totalorder %s376, %s379
      %p385 = scmp.eq.s32.totalorder %s36, 0
      %p386 = por %p384, %p385
      %p387 = scmp.ne.s32.totalorder %s376, %s379
      %p388 = scmp.eq.s32.totalorder %s41, 1
      %p389 = por %p387, %p388
      %p390 = scmp.ne.s32.totalorder %s379, %s380
      %p391 = scmp.eq.s32.totalorder %s41, 0
      %p392 = por %p390, %p391
      %p393 = scmp.ne.s32.totalorder %s379, %s380
      %p394 = scmp.eq.s32.totalorder %s42, 1
      %p395 = por %p393, %p394
      %p397 = scmp.ne.s32.totalorder %s380, %s396
      %p398 = scmp.eq.s32.totalorder %s42, 0
      %p399 = por %p397, %p398
      %s400 = ssub.s32 %s36, %s43
      %p401 = scmp.eq.s32.totalorder %s400, 0
      %s403 = sadd.s32 %s402, 1
      %s404 = scalar_select %p401, %s402, %s403
      %p407 = pneg %p401
      %p408 = scmp.eq.s32.totalorder %s36, 1
      %p409 = por %p407, %p408
      %p410 = scmp.ne.s32.totalorder %s402, %s405
      %p411 = scmp.eq.s32.totalorder %s36, 0
      %p412 = por %p410, %p411
      %p413 = scmp.ne.s32.totalorder %s402, %s405
      %p414 = scmp.eq.s32.totalorder %s41, 1
      %p415 = por %p413, %p414
      %p416 = scmp.ne.s32.totalorder %s405, %s406
      %p417 = scmp.eq.s32.totalorder %s41, 0
      %p418 = por %p416, %p417
      %p419 = scmp.ne.s32.totalorder %s405, %s406
      %p420 = scmp.eq.s32.totalorder %s42, 1
      %p421 = por %p419, %p420
      %p423 = scmp.ne.s32.totalorder %s406, %s422
      %p424 = scmp.eq.s32.totalorder %s42, 0
      %p425 = por %p423, %p424
      %p426 = scmp.le.s32.totalorder 1, %s36
      %p427 = scmp.lt.s32.totalorder %s36, 3
      %p428 = pnand %p426, %p427
      %p429 = pneg %p428
      // Predicated region
      $region9: #{tpu_custom_call.1} parent=5 // pred_check
        _
      $region10: #{tpu_custom_call.1} parent=5 // pred_check_branch
        %431 = sbr.rel (%p428) target = $region12
      $region11: #{tpu_custom_call.1} parent=5 // pred_region
        %s432 = ssub.s32 %s36, 1
        // Predicated region
        $region13: #{tpu_custom_call.1} parent=11 // pred_check
          %p433 = pneg %p83
        $region14: #{tpu_custom_call.1} parent=11 // pred_check_branch
          %435 = sbr.rel (%p433) target = $region16
        $region15: #{tpu_custom_call.1} parent=11 // pred_region
          %s437 = ssub.s32 8192, 8192
          %438 = vsyncadd [#allocation8], %s437
          %s439 = sshll.u32 [#allocation7], 4
          %s440 = int_to_ptr.vmem [resolvable:$true] %s439
          %445 = dma.hbm_to_vmem [thread:$0]  %s2, 8192, %s440, [#allocation8], 256, 256, 16
        $region16: #{tpu_custom_call.1} parent=11 // pred_fallthru
          _
        // Predicated region
        $region17: #{tpu_custom_call.1} parent=11 // pred_check
          %p446 = pneg %p104
        $region18: #{tpu_custom_call.1} parent=11 // pred_check_branch
          %448 = sbr.rel (%p446) target = $region20
        $region19: #{tpu_custom_call.1} parent=11 // pred_region
          _
        $region20: #{tpu_custom_call.1} parent=11 // pred_fallthru
          _
        // Predicated region
        $region21: #{tpu_custom_call.1} parent=11 // pred_check
          %p449 = pneg %p125
        $region22: #{tpu_custom_call.1} parent=11 // pred_check_branch
          %451 = sbr.rel (%p449) target = $region24
        $region23: #{tpu_custom_call.1} parent=11 // pred_region
          %s453 = ssub.s32 4096, 4096
          %454 = vsyncadd [#allocation8], %s453
          %s455 = sshll.u32 [#allocation9], 4
          %s456 = int_to_ptr.vmem [resolvable:$true] %s455
          %461 = dma.hbm_to_vmem [thread:$0]  %s4, 4096, %s456, [#allocation8], 128, 128, 8
        $region24: #{tpu_custom_call.1} parent=11 // pred_fallthru
          _
        // Predicated region
        $region25: #{tpu_custom_call.1} parent=11 // pred_check
          %p462 = pneg %p146
        $region26: #{tpu_custom_call.1} parent=11 // pred_check_branch
          %464 = sbr.rel (%p462) target = $region28
        $region27: #{tpu_custom_call.1} parent=11 // pred_region
          _
        $region28: #{tpu_custom_call.1} parent=11 // pred_fallthru
          _
        // Predicated region
        $region29: #{tpu_custom_call.1} parent=11 // pred_check
          %p465 = pneg %p167
        $region30: #{tpu_custom_call.1} parent=11 // pred_check_branch
          %467 = sbr.rel (%p465) target = $region32
        $region31: #{tpu_custom_call.1} parent=11 // pred_region
          _
        $region32: #{tpu_custom_call.1} parent=11 // pred_fallthru
          _
        // Predicated region
        $region33: #{tpu_custom_call.1} parent=11 // pred_check
          %p468 = pneg %p188
        $region34: #{tpu_custom_call.1} parent=11 // pred_check_branch
          %470 = sbr.rel (%p468) target = $region36
        $region35: #{tpu_custom_call.1} parent=11 // pred_region
          _
        $region36: #{tpu_custom_call.1} parent=11 // pred_fallthru
          _
        // Predicated region
        $region37: #{tpu_custom_call.1} parent=11 // pred_check
          %p471 = pneg %p209
        $region38: #{tpu_custom_call.1} parent=11 // pred_check_branch
          %473 = sbr.rel (%p471) target = $region40
        $region39: #{tpu_custom_call.1} parent=11 // pred_region
          _
        $region40: #{tpu_custom_call.1} parent=11 // pred_fallthru
          _
        // Predicated region
        $region41: #{tpu_custom_call.1} parent=11 // pred_check
          %p474 = pneg %p230
        $region42: #{tpu_custom_call.1} parent=11 // pred_check_branch
          %476 = sbr.rel (%p474) target = $region44
        $region43: #{tpu_custom_call.1} parent=11 // pred_region
          _
        $region44: #{tpu_custom_call.1} parent=11 // pred_fallthru
          _
        // Predicated region
        $region45: #{tpu_custom_call.1} parent=11 // pred_check
          %p477 = pneg %p251
        $region46: #{tpu_custom_call.1} parent=11 // pred_check_branch
          %479 = sbr.rel (%p477) target = $region48
        $region47: #{tpu_custom_call.1} parent=11 // pred_region
          %s481 = ssub.s32 4096, 4096
          %482 = vsyncadd [#allocation11], %s481
          %s483 = sshll.u32 [#allocation10], 4
          %s484 = int_to_ptr.vmem [resolvable:$true] %s483
          %489 = dma.hbm_to_vmem [thread:$0]  %s10, 4096, %s484, [#allocation11], 256, 256, 16
        $region48: #{tpu_custom_call.1} parent=11 // pred_fallthru
          _
        // Predicated region
        $region49: #{tpu_custom_call.1} parent=11 // pred_check
          %p490 = pneg %p272
        $region50: #{tpu_custom_call.1} parent=11 // pred_check_branch
          %492 = sbr.rel (%p490) target = $region52
        $region51: #{tpu_custom_call.1} parent=11 // pred_region
          _
        $region52: #{tpu_custom_call.1} parent=11 // pred_fallthru
          _
        // Predicated region
        $region53: #{tpu_custom_call.1} parent=11 // pred_check
          %p493 = pneg %p293
        $region54: #{tpu_custom_call.1} parent=11 // pred_check_branch
          %495 = sbr.rel (%p493) target = $region56
        $region55: #{tpu_custom_call.1} parent=11 // pred_region
          %s497 = ssub.s32 24576, 24576
          %498 = vsyncadd [#allocation11], %s497
          %s499 = sshll.u32 [#allocation12], 4
          %s500 = int_to_ptr.vmem [resolvable:$true] %s499
          %505 = dma.hbm_to_vmem [thread:$0]  %s12, 24576, %s500, [#allocation11], 768, 768, 48
        $region56: #{tpu_custom_call.1} parent=11 // pred_fallthru
          _
        // Predicated region
        $region57: #{tpu_custom_call.1} parent=11 // pred_check
          %p506 = pneg %p314
        $region58: #{tpu_custom_call.1} parent=11 // pred_check_branch
          %508 = sbr.rel (%p506) target = $region60
        $region59: #{tpu_custom_call.1} parent=11 // pred_region
          _
        $region60: #{tpu_custom_call.1} parent=11 // pred_fallthru
          _
      $region12: #{tpu_custom_call.1} parent=5 // pred_fallthru
        _
      %p509 = scmp.lt.s32.totalorder %s36, 2
      // Predicated region
      $region61: #{tpu_custom_call.1} parent=5 // pred_check
        %p510 = pneg %p509
      $region62: #{tpu_custom_call.1} parent=5 // pred_check_branch
        %512 = sbr.rel (%p510) target = $region64
      $region63: #{tpu_custom_call.1} parent=5 // pred_region
        // Predicated region
        $region65: #{tpu_custom_call.1} parent=63 // pred_check
          %p513 = pneg %p56
        $region66: #{tpu_custom_call.1} parent=63 // pred_check_branch
          %515 = sbr.rel (%p513) target = $region68
        $region67: #{tpu_custom_call.1} parent=63 // pred_region
          %s516 = sand.u32 %s46, 1
          %s517 = scalar_lea.sflag [#allocation5], %s516
          %s518 = sand.u32 %s46, 1
          %s519 = smul.addr %s518, 256
          %s520 = scalar_lea.vmem [#allocation4], %s519
          %s521 = smul.u32 16, %s36
          %s523 = ssub.s32 4096, 4096
          %524 = vsyncadd %s517, %s523
          %s525 = smul.addr %s521, 2
          %s526 = smul.addr %s525, 128
          %s527 = scalar_lea.hbm %s1, %s526
          %s528 = sshll.u32 %s520, 4
          %s529 = int_to_ptr.vmem [resolvable:$true] %s528
          %534 = dma.hbm_to_vmem [thread:$0]  %s527, 4096, %s529, %s517, 256, 256, 16
        $region68: #{tpu_custom_call.1} parent=63 // pred_fallthru
          _
      $region64: #{tpu_custom_call.1} parent=5 // pred_fallthru
        _
      %p535 = scmp.le.s32.totalorder 1, %s36
      %p536 = scmp.lt.s32.totalorder %s36, 3
      %p537 = pnand %p535, %p536
      %p538 = pneg %p537
      // Predicated region
      $region69: #{tpu_custom_call.1} parent=5 // pred_check
        _
      $region70: #{tpu_custom_call.1} parent=5 // pred_check_branch
        %540 = sbr.rel (%p537) target = $region72
      $region71: #{tpu_custom_call.1} parent=5 // pred_region
        %s541 = ssub.s32 %s36, 1
        %s542 = sand.u32 %s49, 1
        %s543 = scalar_lea.sflag [#allocation5], %s542
        %s544 = sand.u32 %s49, 1
        %s545 = smul.addr %s544, 256
        %s546 = scalar_lea.vmem [#allocation4], %s545
        // Predicated region
        $region73: #{tpu_custom_call.1} parent=71 // pred_check
          %p547 = pneg %p62
        $region74: #{tpu_custom_call.1} parent=71 // pred_check_branch
          %549 = sbr.rel (%p547) target = $region76
        $region75: #{tpu_custom_call.1} parent=71 // pred_region
          %550 = dma.done %s543, 4096
        $region76: #{tpu_custom_call.1} parent=71 // pred_fallthru
          _
        // Predicated region
        $region77: #{tpu_custom_call.1} parent=71 // pred_check
          %p551 = pneg %p83
        $region78: #{tpu_custom_call.1} parent=71 // pred_check_branch
          %553 = sbr.rel (%p551) target = $region80
        $region79: #{tpu_custom_call.1} parent=71 // pred_region
          %554 = dma.done [#allocation8], 8192
        $region80: #{tpu_custom_call.1} parent=71 // pred_fallthru
          _
        // Predicated region
        $region81: #{tpu_custom_call.1} parent=71 // pred_check
          %p555 = pneg %p125
        $region82: #{tpu_custom_call.1} parent=71 // pred_check_branch
          %557 = sbr.rel (%p555) target = $region84
        $region83: #{tpu_custom_call.1} parent=71 // pred_region
          %558 = dma.done [#allocation8], 4096
        $region84: #{tpu_custom_call.1} parent=71 // pred_fallthru
          _
        // Predicated region
        $region85: #{tpu_custom_call.1} parent=71 // pred_check
          %p559 = pneg %p251
        $region86: #{tpu_custom_call.1} parent=71 // pred_check_branch
          %561 = sbr.rel (%p559) target = $region88
        $region87: #{tpu_custom_call.1} parent=71 // pred_region
          %562 = dma.done [#allocation11], 4096
        $region88: #{tpu_custom_call.1} parent=71 // pred_fallthru
          _
        // Predicated region
        $region89: #{tpu_custom_call.1} parent=71 // pred_check
          %p563 = pneg %p293
        $region90: #{tpu_custom_call.1} parent=71 // pred_check_branch
          %565 = sbr.rel (%p563) target = $region92
        $region91: #{tpu_custom_call.1} parent=71 // pred_region
          %566 = dma.done [#allocation11], 24576
        $region92: #{tpu_custom_call.1} parent=71 // pred_fallthru
          _
        %s567 = sand.u32 %s49, 1
        %s568 = scalar_lea.sflag [#allocation5], %s567
        %s569 = sand.u32 %s49, 1
        %s570 = smul.addr %s569, 256
        %s571 = scalar_lea.vmem [#allocation4], %s570
        %p572 = pneg %p62
        %p573 = pneg %p59
        %p574 = pneg %p83
        %p575 = pneg %p80
        %p576 = pneg %p104
        %p577 = pneg %p101
        %p578 = pneg %p125
        %p579 = pneg %p122
        %p580 = pneg %p146
        %p581 = pneg %p143
        %p582 = pneg %p167
        %p583 = pneg %p164
        %p584 = pneg %p188
        %p585 = pneg %p185
        %p586 = pneg %p209
        %p587 = pneg %p206
        %p588 = pneg %p230
        %p589 = pneg %p227
        %p590 = pneg %p251
        %p591 = pneg %p248
        %p592 = pneg %p272
        %p593 = pneg %p269
        %p594 = pneg %p293
        %p595 = pneg %p290
        %p596 = pneg %p314
        %p597 = pneg %p311
        %p598 = pneg %p340
        %p599 = pneg %p337
        %s600 = smul.u32 16, %s41
        %p601 = scmp.lt.s32.totalorder %s600, 31
        %s602 = scalar_select %p601, %s600, 31
        %s603 = smul.addr %s602, 8
        %s604 = scalar_lea.vmem %s14, %s603
        %p605 = pneg %p366
        %p606 = pneg %p363
        %s607 = sand.u32 %s353, 1
        %s608 = scalar_lea.sflag [#allocation6], %s607
        %s609 = sand.u32 %s353, 1
        %s610 = smul.addr %s609, 256
        %s611 = scalar_lea.vmem [#allocation13], %s610
        %p612 = pneg %p392
        %p613 = pneg %p389
        %s614 = sand.u32 %s41, 1
        %s615 = scalar_lea.sflag [#allocation15], %s614
        %s616 = sand.u32 %s379, 1
        %s617 = smul.addr %s616, 256
        %s618 = scalar_lea.vmem [#allocation14], %s617
        %p619 = pneg %p418
        %p620 = pneg %p415
        %s621 = sand.u32 %s41, 1
        %s622 = scalar_lea.sflag [#allocation15], %s621
        %s623 = sand.u32 %s405, 1
        %s624 = smul.addr %s623, 256
        %s625 = scalar_lea.vmem [#allocation16], %s624
        %s626 = smul.u32 16, %s41
        %s627 = smul.u32 16, %s41
        %p628 = scmp.lt.s32.totalorder %s627, 31
        %s629 = scalar_select %p628, %s627, 31
        %s630 = smul.addr %s629, 8
        %s631 = scalar_lea.vmem %s14, %s630
        %s632 = smul.u32 16, %s41
        %s633 = smul.u32 16, %s41
        %s634 = smul.u32 16, %s41
        %s635 = smul.u32 16, %s41
        %v636 = vld [vmem:[%s546] sm:$0xff]
        %v637 = vld [vmem:[%s546 + $0x8] sm:$0xff]
        %v638 = vld [vmem:[%s546 + $0x10] sm:$0xff]
        %v639 = vld [vmem:[%s546 + $0x18] sm:$0xff]
        %v640 = vld [vmem:[%s546 + $0x20] sm:$0xff]
        %v641 = vld [vmem:[%s546 + $0x28] sm:$0xff]
        %v642 = vld [vmem:[%s546 + $0x30] sm:$0xff]
        %v643 = vld [vmem:[%s546 + $0x38] sm:$0xff]
        %v644 = vld [vmem:[%s546 + $0x40] sm:$0xff]
        %v645 = vld [vmem:[%s546 + $0x48] sm:$0xff]
        %v646 = vld [vmem:[%s546 + $0x50] sm:$0xff]
        %v647 = vld [vmem:[%s546 + $0x58] sm:$0xff]
        %v648 = vld [vmem:[%s546 + $0x60] sm:$0xff]
        %v649 = vld [vmem:[%s546 + $0x68] sm:$0xff]
        %v650 = vld [vmem:[%s546 + $0x70] sm:$0xff]
        %v651 = vld [vmem:[%s546 + $0x78] sm:$0xff]
        %v652 = vld [vmem:[%s546 + $0x80] sm:$0xff]
        %v653 = vld [vmem:[%s546 + $0x88] sm:$0xff]
        %v654 = vld [vmem:[%s546 + $0x90] sm:$0xff]
        %v655 = vld [vmem:[%s546 + $0x98] sm:$0xff]
        %v656 = vld [vmem:[%s546 + $0xa0] sm:$0xff]
        %v657 = vld [vmem:[%s546 + $0xa8] sm:$0xff]
        %v658 = vld [vmem:[%s546 + $0xb0] sm:$0xff]
        %v659 = vld [vmem:[%s546 + $0xb8] sm:$0xff]
        %v660 = vld [vmem:[%s546 + $0xc0] sm:$0xff]
        %v661 = vld [vmem:[%s546 + $0xc8] sm:$0xff]
        %v662 = vld [vmem:[%s546 + $0xd0] sm:$0xff]
        %v663 = vld [vmem:[%s546 + $0xd8] sm:$0xff]
        %v664 = vld [vmem:[%s546 + $0xe0] sm:$0xff]
        %v665 = vld [vmem:[%s546 + $0xe8] sm:$0xff]
        %v666 = vld [vmem:[%s546 + $0xf0] sm:$0xff]
        %v667 = vld [vmem:[%s546 + $0xf8] sm:$0xff]
        %v668 = vld [vmem:[#allocation7] sm:$0xff]
        %v669 = vld [vmem:[#allocation7 + $0x8] sm:$0xff]
        %v670 = vld [vmem:[#allocation7 + $0x10] sm:$0xff]
        %v671 = vld [vmem:[#allocation7 + $0x18] sm:$0xff]
        %v672 = vld [vmem:[#allocation7 + $0x20] sm:$0xff]
        %v673 = vld [vmem:[#allocation7 + $0x28] sm:$0xff]
        %v674 = vld [vmem:[#allocation7 + $0x30] sm:$0xff]
        %v675 = vld [vmem:[#allocation7 + $0x38] sm:$0xff]
        %v676 = vld [vmem:[#allocation7 + $0x40] sm:$0xff]
        %v677 = vld [vmem:[#allocation7 + $0x48] sm:$0xff]
        %v678 = vld [vmem:[#allocation7 + $0x50] sm:$0xff]
        %v679 = vld [vmem:[#allocation7 + $0x58] sm:$0xff]
        %v680 = vld [vmem:[#allocation7 + $0x60] sm:$0xff]
        %v681 = vld [vmem:[#allocation7 + $0x68] sm:$0xff]
        %v682 = vld [vmem:[#allocation7 + $0x70] sm:$0xff]
        %v683 = vld [vmem:[#allocation7 + $0x78] sm:$0xff]
        %v684 = vld [vmem:[#allocation7 + $0x80] sm:$0xff]
        %v685 = vld [vmem:[#allocation7 + $0x88] sm:$0xff]
        %v686 = vld [vmem:[#allocation7 + $0x90] sm:$0xff]
        %v687 = vld [vmem:[#allocation7 + $0x98] sm:$0xff]
        %v688 = vld [vmem:[#allocation7 + $0xa0] sm:$0xff]
        %v689 = vld [vmem:[#allocation7 + $0xa8] sm:$0xff]
        %v690 = vld [vmem:[#allocation7 + $0xb0] sm:$0xff]
        %v691 = vld [vmem:[#allocation7 + $0xb8] sm:$0xff]
        %v692 = vld [vmem:[#allocation7 + $0xc0] sm:$0xff]
        %v693 = vld [vmem:[#allocation7 + $0xc8] sm:$0xff]
        %v694 = vld [vmem:[#allocation7 + $0xd0] sm:$0xff]
        %v695 = vld [vmem:[#allocation7 + $0xd8] sm:$0xff]
        %v696 = vld [vmem:[#allocation7 + $0xe0] sm:$0xff]
        %v697 = vld [vmem:[#allocation7 + $0xe8] sm:$0xff]
        %v698 = vld [vmem:[#allocation7 + $0xf0] sm:$0xff]
        %v699 = vld [vmem:[#allocation7 + $0xf8] sm:$0xff]
        %v700 = vld [vmem:[#allocation7 + $0x100] sm:$0xff]
        %v701 = vld [vmem:[#allocation7 + $0x108] sm:$0xff]
        %v702 = vld [vmem:[#allocation7 + $0x110] sm:$0xff]
        %v703 = vld [vmem:[#allocation7 + $0x118] sm:$0xff]
        %v704 = vld [vmem:[#allocation7 + $0x120] sm:$0xff]
        %v705 = vld [vmem:[#allocation7 + $0x128] sm:$0xff]
        %v706 = vld [vmem:[#allocation7 + $0x130] sm:$0xff]
        %v707 = vld [vmem:[#allocation7 + $0x138] sm:$0xff]
        %v708 = vld [vmem:[#allocation7 + $0x140] sm:$0xff]
        %v709 = vld [vmem:[#allocation7 + $0x148] sm:$0xff]
        %v710 = vld [vmem:[#allocation7 + $0x150] sm:$0xff]
        %v711 = vld [vmem:[#allocation7 + $0x158] sm:$0xff]
        %v712 = vld [vmem:[#allocation7 + $0x160] sm:$0xff]
        %v713 = vld [vmem:[#allocation7 + $0x168] sm:$0xff]
        %v714 = vld [vmem:[#allocation7 + $0x170] sm:$0xff]
        %v715 = vld [vmem:[#allocation7 + $0x178] sm:$0xff]
        %v716 = vld [vmem:[#allocation7 + $0x180] sm:$0xff]
        %v717 = vld [vmem:[#allocation7 + $0x188] sm:$0xff]
        %v718 = vld [vmem:[#allocation7 + $0x190] sm:$0xff]
        %v719 = vld [vmem:[#allocation7 + $0x198] sm:$0xff]
        %v720 = vld [vmem:[#allocation7 + $0x1a0] sm:$0xff]
        %v721 = vld [vmem:[#allocation7 + $0x1a8] sm:$0xff]
        %v722 = vld [vmem:[#allocation7 + $0x1b0] sm:$0xff]
        %v723 = vld [vmem:[#allocation7 + $0x1b8] sm:$0xff]
        %v724 = vld [vmem:[#allocation7 + $0x1c0] sm:$0xff]
        %v725 = vld [vmem:[#allocation7 + $0x1c8] sm:$0xff]
        %v726 = vld [vmem:[#allocation7 + $0x1d0] sm:$0xff]
        %v727 = vld [vmem:[#allocation7 + $0x1d8] sm:$0xff]
        %v728 = vld [vmem:[#allocation7 + $0x1e0] sm:$0xff]
        %v729 = vld [vmem:[#allocation7 + $0x1e8] sm:$0xff]
        %v730 = vld [vmem:[#allocation7 + $0x1f0] sm:$0xff]
        %v731 = vld [vmem:[#allocation7 + $0x1f8] sm:$0xff]
        %v732 = vld [vmem:[%s3] sm:$0x3]
        %v734 = vlaneseq
        %v735 = vshrl.u32 %v734, 7
        %v736 = vsub.s32 0, %v735
        %v737 = vrot.slane %v732, %v736
        %v738 = vlaneseq
        %v739 = vshrl.u32 %v738, 7
        %v740 = vsub.s32 1, %v739
        %v741 = vrot.slane %v732, %v740
        %744 = vmatprep.subr.mxu0 %v699
        %745 = vmatpush1.msra.mxu0 %v698
        %746 = vmatprep.subr.mxu0 %v697
        %747 = vmatpush1.msra.mxu0 %v696
        %748 = vmatprep.subr.mxu0 %v695
        %749 = vmatpush1.msra.mxu0 %v694
        %750 = vmatprep.subr.mxu0 %v693
        %751 = vmatpush1.msra.mxu0 %v692
        %752 = vmatprep.subr.mxu0 %v691
        %753 = vmatpush1.msra.mxu0 %v690
        %754 = vmatprep.subr.mxu0 %v689
        %755 = vmatpush1.msra.mxu0 %v688
        %756 = vmatprep.subr.mxu0 %v687
        %757 = vmatpush1.msra.mxu0 %v686
        %758 = vmatprep.subr.mxu0 %v685
        %759 = vmatpush1.msra.mxu0 %v684
        %760 = vmatprep.subr.mxu0 %v683
        %761 = vmatpush1.msra.mxu0 %v682
        %762 = vmatprep.subr.mxu0 %v681
        %763 = vmatpush1.msra.mxu0 %v680
        %764 = vmatprep.subr.mxu0 %v679
        %765 = vmatpush1.msra.mxu0 %v678
        %766 = vmatprep.subr.mxu0 %v677
        %767 = vmatpush1.msra.mxu0 %v676
        %768 = vmatprep.subr.mxu0 %v675
        %769 = vmatpush1.msra.mxu0 %v674
        %770 = vmatprep.subr.mxu0 %v673
        %771 = vmatpush1.msra.mxu0 %v672
        %772 = vmatprep.subr.mxu0 %v671
        %773 = vmatpush1.msra.mxu0 %v670
        %774 = vmatprep.subr.mxu0 %v669
        %775 = vmatpush1.msra.mxu0 %v668
        %776 = vmatprep.subr.mxu0 %v731
        %777 = vmatpush2.msra.mxu0 %v730
        %778 = vmatprep.subr.mxu0 %v729
        %779 = vmatpush2.msra.mxu0 %v728
        %780 = vmatprep.subr.mxu0 %v727
        %781 = vmatpush2.msra.mxu0 %v726
        %782 = vmatprep.subr.mxu0 %v725
        %783 = vmatpush2.msra.mxu0 %v724
        %784 = vmatprep.subr.mxu0 %v723
        %785 = vmatpush2.msra.mxu0 %v722
        %786 = vmatprep.subr.mxu0 %v721
        %787 = vmatpush2.msra.mxu0 %v720
        %788 = vmatprep.subr.mxu0 %v719
        %789 = vmatpush2.msra.mxu0 %v718
        %790 = vmatprep.subr.mxu0 %v717
        %791 = vmatpush2.msra.mxu0 %v716
        %792 = vmatprep.subr.mxu0 %v715
        %793 = vmatpush2.msra.mxu0 %v714
        %794 = vmatprep.subr.mxu0 %v713
        %795 = vmatpush2.msra.mxu0 %v712
        %796 = vmatprep.subr.mxu0 %v711
        %797 = vmatpush2.msra.mxu0 %v710
        %798 = vmatprep.subr.mxu0 %v709
        %799 = vmatpush2.msra.mxu0 %v708
        %800 = vmatprep.subr.mxu0 %v707
        %801 = vmatpush2.msra.mxu0 %v706
        %802 = vmatprep.subr.mxu0 %v705
        %803 = vmatpush2.msra.mxu0 %v704
        %804 = vmatprep.subr.mxu0 %v703
        %805 = vmatpush2.msra.mxu0 %v702
        %806 = vmatprep.subr.mxu0 %v701
        %807 = vmatpush2.msra.mxu0 %v700
        %808 = vmatprep.mubr.f32.mxu0 %v637
        %809 = vmatmul.mubr.f32.gmra.mxu0 %v636
        %v810 = vpop.f32.mrf.mxu0
        %v811 = vadd.f32 %v737, %v810
        %v812 = vpop.f32.mrf.mxu0
        %v813 = vadd.f32 %v741, %v812
        %814 = vmatprep.mubr.f32.mxu0 %v639
        %815 = vmatmul.mubr.f32.gmra.mxu0 %v638
        %v816 = vpop.f32.mrf.mxu0
        %v817 = vadd.f32 %v737, %v816
        %v818 = vpop.f32.mrf.mxu0
        %v819 = vadd.f32 %v741, %v818
        %820 = vmatprep.mubr.f32.mxu0 %v641
        %821 = vmatmul.mubr.f32.gmra.mxu0 %v640
        %v822 = vpop.f32.mrf.mxu0
        %v823 = vadd.f32 %v737, %v822
        %v824 = vpop.f32.mrf.mxu0
        %v825 = vadd.f32 %v741, %v824
        %826 = vmatprep.mubr.f32.mxu0 %v643
        %827 = vmatmul.mubr.f32.gmra.mxu0 %v642
        %v828 = vpop.f32.mrf.mxu0
        %v829 = vadd.f32 %v737, %v828
        %v830 = vpop.f32.mrf.mxu0
        %v831 = vadd.f32 %v741, %v830
        %832 = vmatprep.mubr.f32.mxu0 %v645
        %833 = vmatmul.mubr.f32.gmra.mxu0 %v644
        %v834 = vpop.f32.mrf.mxu0
        %v835 = vadd.f32 %v737, %v834
        %v836 = vpop.f32.mrf.mxu0
        %v837 = vadd.f32 %v741, %v836
        %838 = vmatprep.mubr.f32.mxu0 %v647
        %839 = vmatmul.mubr.f32.gmra.mxu0 %v646
        %v840 = vpop.f32.mrf.mxu0
        %v841 = vadd.f32 %v737, %v840
        %v842 = vpop.f32.mrf.mxu0
        %v843 = vadd.f32 %v741, %v842
        %844 = vmatprep.mubr.f32.mxu0 %v649
        %845 = vmatmul.mubr.f32.gmra.mxu0 %v648
        %v846 = vpop.f32.mrf.mxu0
        %v847 = vadd.f32 %v737, %v846
        %v848 = vpop.f32.mrf.mxu0
        %v849 = vadd.f32 %v741, %v848
        %850 = vmatprep.mubr.f32.mxu0 %v651
        %851 = vmatmul.mubr.f32.gmra.mxu0 %v650
        %v852 = vpop.f32.mrf.mxu0
        %v853 = vadd.f32 %v737, %v852
        %v854 = vpop.f32.mrf.mxu0
        %v855 = vadd.f32 %v741, %v854
        %856 = vmatprep.mubr.f32.mxu0 %v653
        %857 = vmatmul.mubr.f32.gmra.mxu0 %v652
        %v858 = vpop.f32.mrf.mxu0
        %v859 = vadd.f32 %v737, %v858
        %v860 = vpop.f32.mrf.mxu0
        %v861 = vadd.f32 %v741, %v860
        %862 = vmatprep.mubr.f32.mxu0 %v655
        %863 = vmatmul.mubr.f32.gmra.mxu0 %v654
        %v864 = vpop.f32.mrf.mxu0
        %v865 = vadd.f32 %v737, %v864
        %v866 = vpop.f32.mrf.mxu0
        %v867 = vadd.f32 %v741, %v866
        %868 = vmatprep.mubr.f32.mxu0 %v657
        %869 = vmatmul.mubr.f32.gmra.mxu0 %v656
        %v870 = vpop.f32.mrf.mxu0
        %v871 = vadd.f32 %v737, %v870
        %v872 = vpop.f32.mrf.mxu0
        %v873 = vadd.f32 %v741, %v872
        %874 = vmatprep.mubr.f32.mxu0 %v659
        %875 = vmatmul.mubr.f32.gmra.mxu0 %v658
        %v876 = vpop.f32.mrf.mxu0
        %v877 = vadd.f32 %v737, %v876
        %v878 = vpop.f32.mrf.mxu0
        %v879 = vadd.f32 %v741, %v878
        %880 = vmatprep.mubr.f32.mxu0 %v661
        %881 = vmatmul.mubr.f32.gmra.mxu0 %v660
        %v882 = vpop.f32.mrf.mxu0
        %v883 = vadd.f32 %v737, %v882
        %v884 = vpop.f32.mrf.mxu0
        %v885 = vadd.f32 %v741, %v884
        %886 = vmatprep.mubr.f32.mxu0 %v663
        %887 = vmatmul.mubr.f32.gmra.mxu0 %v662
        %v888 = vpop.f32.mrf.mxu0
        %v889 = vadd.f32 %v737, %v888
        %v890 = vpop.f32.mrf.mxu0
        %v891 = vadd.f32 %v741, %v890
        %892 = vmatprep.mubr.f32.mxu0 %v665
        %893 = vmatmul.mubr.f32.gmra.mxu0 %v664
        %v894 = vpop.f32.mrf.mxu0
        %v895 = vadd.f32 %v737, %v894
        %v896 = vpop.f32.mrf.mxu0
        %v897 = vadd.f32 %v741, %v896
        %898 = vmatprep.mubr.f32.mxu0 %v667
        %899 = vmatmul.mubr.f32.gmra.mxu0 %v666
        %v900 = vpop.f32.mrf.mxu0
        %v901 = vadd.f32 %v737, %v900
        %v902 = vpop.f32.mrf.mxu0
        %v903 = vadd.f32 %v741, %v902
        %904 = vdwg.mxu0
        %v905 = vmax.f32 %v811, 0.0
        %v906 = vmax.f32 %v813, 0.0
        %v907 = vmax.f32 %v817, 0.0
        %v908 = vmax.f32 %v819, 0.0
        %v909 = vmax.f32 %v823, 0.0
        %v910 = vmax.f32 %v825, 0.0
        %v911 = vmax.f32 %v829, 0.0
        %v912 = vmax.f32 %v831, 0.0
        %v913 = vmax.f32 %v835, 0.0
        %v914 = vmax.f32 %v837, 0.0
        %v915 = vmax.f32 %v841, 0.0
        %v916 = vmax.f32 %v843, 0.0
        %v917 = vmax.f32 %v847, 0.0
        %v918 = vmax.f32 %v849, 0.0
        %v919 = vmax.f32 %v853, 0.0
        %v920 = vmax.f32 %v855, 0.0
        %v921 = vmax.f32 %v859, 0.0
        %v922 = vmax.f32 %v861, 0.0
        %v923 = vmax.f32 %v865, 0.0
        %v924 = vmax.f32 %v867, 0.0
        %v925 = vmax.f32 %v871, 0.0
        %v926 = vmax.f32 %v873, 0.0
        %v927 = vmax.f32 %v877, 0.0
        %v928 = vmax.f32 %v879, 0.0
        %v929 = vmax.f32 %v883, 0.0
        %v930 = vmax.f32 %v885, 0.0
        %v931 = vmax.f32 %v889, 0.0
        %v932 = vmax.f32 %v891, 0.0
        %v933 = vmax.f32 %v895, 0.0
        %v934 = vmax.f32 %v897, 0.0
        %v935 = vmax.f32 %v901, 0.0
        %v936 = vmax.f32 %v903, 0.0
        %v937 = vld [vmem:[#allocation9] sm:$0xff]
        %v938 = vld [vmem:[#allocation9 + $0x8] sm:$0xff]
        %v939 = vld [vmem:[#allocation9 + $0x10] sm:$0xff]
        %v940 = vld [vmem:[#allocation9 + $0x18] sm:$0xff]
        %v941 = vld [vmem:[#allocation9 + $0x20] sm:$0xff]
        %v942 = vld [vmem:[#allocation9 + $0x28] sm:$0xff]
        %v943 = vld [vmem:[#allocation9 + $0x30] sm:$0xff]
        %v944 = vld [vmem:[#allocation9 + $0x38] sm:$0xff]
        %v945 = vld [vmem:[#allocation9 + $0x40] sm:$0xff]
        %v946 = vld [vmem:[#allocation9 + $0x48] sm:$0xff]
        %v947 = vld [vmem:[#allocation9 + $0x50] sm:$0xff]
        %v948 = vld [vmem:[#allocation9 + $0x58] sm:$0xff]
        %v949 = vld [vmem:[#allocation9 + $0x60] sm:$0xff]
        %v950 = vld [vmem:[#allocation9 + $0x68] sm:$0xff]
        %v951 = vld [vmem:[#allocation9 + $0x70] sm:$0xff]
        %v952 = vld [vmem:[#allocation9 + $0x78] sm:$0xff]
        %v953 = vld [vmem:[#allocation9 + $0x80] sm:$0xff]
        %v954 = vld [vmem:[#allocation9 + $0x88] sm:$0xff]
        %v955 = vld [vmem:[#allocation9 + $0x90] sm:$0xff]
        %v956 = vld [vmem:[#allocation9 + $0x98] sm:$0xff]
        %v957 = vld [vmem:[#allocation9 + $0xa0] sm:$0xff]
        %v958 = vld [vmem:[#allocation9 + $0xa8] sm:$0xff]
        %v959 = vld [vmem:[#allocation9 + $0xb0] sm:$0xff]
        %v960 = vld [vmem:[#allocation9 + $0xb8] sm:$0xff]
        %v961 = vld [vmem:[#allocation9 + $0xc0] sm:$0xff]
        %v962 = vld [vmem:[#allocation9 + $0xc8] sm:$0xff]
        %v963 = vld [vmem:[#allocation9 + $0xd0] sm:$0xff]
        %v964 = vld [vmem:[#allocation9 + $0xd8] sm:$0xff]
        %v965 = vld [vmem:[#allocation9 + $0xe0] sm:$0xff]
        %v966 = vld [vmem:[#allocation9 + $0xe8] sm:$0xff]
        %v967 = vld [vmem:[#allocation9 + $0xf0] sm:$0xff]
        %v968 = vld [vmem:[#allocation9 + $0xf8] sm:$0xff]
        %v969 = vld [vmem:[%s5] sm:$0x1]
        %v971 = vlaneseq
        %v972 = vshrl.u32 %v971, 7
        %v973 = vsub.s32 0, %v972
        %v974 = vrot.slane %v969, %v973
        %976 = vmatprep.subr.mxu0 0.0
        %977 = vmatpush1.msra.mxu0 %v952
        %978 = vmatprep.subr.mxu0 0.0
        %979 = vmatpush1.msra.mxu0 %v951
        %980 = vmatprep.subr.mxu0 0.0
        %981 = vmatpush1.msra.mxu0 %v950
        %982 = vmatprep.subr.mxu0 0.0
        %983 = vmatpush1.msra.mxu0 %v949
        %984 = vmatprep.subr.mxu0 0.0
        %985 = vmatpush1.msra.mxu0 %v948
        %986 = vmatprep.subr.mxu0 0.0
        %987 = vmatpush1.msra.mxu0 %v947
        %988 = vmatprep.subr.mxu0 0.0
        %989 = vmatpush1.msra.mxu0 %v946
        %990 = vmatprep.subr.mxu0 0.0
        %991 = vmatpush1.msra.mxu0 %v945
        %992 = vmatprep.subr.mxu0 0.0
        %993 = vmatpush1.msra.mxu0 %v944
        %994 = vmatprep.subr.mxu0 0.0
        %995 = vmatpush1.msra.mxu0 %v943
        %996 = vmatprep.subr.mxu0 0.0
        %997 = vmatpush1.msra.mxu0 %v942
        %998 = vmatprep.subr.mxu0 0.0
        %999 = vmatpush1.msra.mxu0 %v941
        %1000 = vmatprep.subr.mxu0 0.0
        %1001 = vmatpush1.msra.mxu0 %v940
        %1002 = vmatprep.subr.mxu0 0.0
        %1003 = vmatpush1.msra.mxu0 %v939
        %1004 = vmatprep.subr.mxu0 0.0
        %1005 = vmatpush1.msra.mxu0 %v938
        %1006 = vmatprep.subr.mxu0 0.0
        %1007 = vmatpush1.msra.mxu0 %v937
        %1008 = vmatprep.subr.mxu0 0.0
        %1009 = vmatpush2.msra.mxu0 %v968
        %1010 = vmatprep.subr.mxu0 0.0
        %1011 = vmatpush2.msra.mxu0 %v967
        %1012 = vmatprep.subr.mxu0 0.0
        %1013 = vmatpush2.msra.mxu0 %v966
        %1014 = vmatprep.subr.mxu0 0.0
        %1015 = vmatpush2.msra.mxu0 %v965
        %1016 = vmatprep.subr.mxu0 0.0
        %1017 = vmatpush2.msra.mxu0 %v964
        %1018 = vmatprep.subr.mxu0 0.0
        %1019 = vmatpush2.msra.mxu0 %v963
        %1020 = vmatprep.subr.mxu0 0.0
        %1021 = vmatpush2.msra.mxu0 %v962
        %1022 = vmatprep.subr.mxu0 0.0
        %1023 = vmatpush2.msra.mxu0 %v961
        %1024 = vmatprep.subr.mxu0 0.0
        %1025 = vmatpush2.msra.mxu0 %v960
        %1026 = vmatprep.subr.mxu0 0.0
        %1027 = vmatpush2.msra.mxu0 %v959
        %1028 = vmatprep.subr.mxu0 0.0
        %1029 = vmatpush2.msra.mxu0 %v958
        %1030 = vmatprep.subr.mxu0 0.0
        %1031 = vmatpush2.msra.mxu0 %v957
        %1032 = vmatprep.subr.mxu0 0.0
        %1033 = vmatpush2.msra.mxu0 %v956
        %1034 = vmatprep.subr.mxu0 0.0
        %1035 = vmatpush2.msra.mxu0 %v955
        %1036 = vmatprep.subr.mxu0 0.0
        %1037 = vmatpush2.msra.mxu0 %v954
        %1038 = vmatprep.subr.mxu0 0.0
        %1039 = vmatpush2.msra.mxu0 %v953
        %1040 = vmatprep.mubr.f32.mxu0 %v906
        %1041 = vmatmul.mubr.f32.gmra.mxu0 %v905
        %v1042 = vpop.f32.mrf.mxu0
        %v1043 = vadd.f32 %v974, %v1042
        %v1044 = vpop.f32.mrf.mxu0
        %1045 = vmatprep.mubr.f32.mxu0 %v908
        %1046 = vmatmul.mubr.f32.gmra.mxu0 %v907
        %v1047 = vpop.f32.mrf.mxu0
        %v1048 = vadd.f32 %v974, %v1047
        %v1049 = vpop.f32.mrf.mxu0
        %1050 = vmatprep.mubr.f32.mxu0 %v910
        %1051 = vmatmul.mubr.f32.gmra.mxu0 %v909
        %v1052 = vpop.f32.mrf.mxu0
        %v1053 = vadd.f32 %v974, %v1052
        %v1054 = vpop.f32.mrf.mxu0
        %1055 = vmatprep.mubr.f32.mxu0 %v912
        %1056 = vmatmul.mubr.f32.gmra.mxu0 %v911
        %v1057 = vpop.f32.mrf.mxu0
        %v1058 = vadd.f32 %v974, %v1057
        %v1059 = vpop.f32.mrf.mxu0
        %1060 = vmatprep.mubr.f32.mxu0 %v914
        %1061 = vmatmul.mubr.f32.gmra.mxu0 %v913
        %v1062 = vpop.f32.mrf.mxu0
        %v1063 = vadd.f32 %v974, %v1062
        %v1064 = vpop.f32.mrf.mxu0
        %1065 = vmatprep.mubr.f32.mxu0 %v916
        %1066 = vmatmul.mubr.f32.gmra.mxu0 %v915
        %v1067 = vpop.f32.mrf.mxu0
        %v1068 = vadd.f32 %v974, %v1067
        %v1069 = vpop.f32.mrf.mxu0
        %1070 = vmatprep.mubr.f32.mxu0 %v918
        %1071 = vmatmul.mubr.f32.gmra.mxu0 %v917
        %v1072 = vpop.f32.mrf.mxu0
        %v1073 = vadd.f32 %v974, %v1072
        %v1074 = vpop.f32.mrf.mxu0
        %1075 = vmatprep.mubr.f32.mxu0 %v920
        %1076 = vmatmul.mubr.f32.gmra.mxu0 %v919
        %v1077 = vpop.f32.mrf.mxu0
        %v1078 = vadd.f32 %v974, %v1077
        %v1079 = vpop.f32.mrf.mxu0
        %1080 = vmatprep.mubr.f32.mxu0 %v922
        %1081 = vmatmul.mubr.f32.gmra.mxu0 %v921
        %v1082 = vpop.f32.mrf.mxu0
        %v1083 = vadd.f32 %v974, %v1082
        %v1084 = vpop.f32.mrf.mxu0
        %1085 = vmatprep.mubr.f32.mxu0 %v924
        %1086 = vmatmul.mubr.f32.gmra.mxu0 %v923
        %v1087 = vpop.f32.mrf.mxu0
        %v1088 = vadd.f32 %v974, %v1087
        %v1089 = vpop.f32.mrf.mxu0
        %1090 = vmatprep.mubr.f32.mxu0 %v926
        %1091 = vmatmul.mubr.f32.gmra.mxu0 %v925
        %v1092 = vpop.f32.mrf.mxu0
        %v1093 = vadd.f32 %v974, %v1092
        %v1094 = vpop.f32.mrf.mxu0
        %1095 = vmatprep.mubr.f32.mxu0 %v928
        %1096 = vmatmul.mubr.f32.gmra.mxu0 %v927
        %v1097 = vpop.f32.mrf.mxu0
        %v1098 = vadd.f32 %v974, %v1097
        %v1099 = vpop.f32.mrf.mxu0
        %1100 = vmatprep.mubr.f32.mxu0 %v930
        %1101 = vmatmul.mubr.f32.gmra.mxu0 %v929
        %v1102 = vpop.f32.mrf.mxu0
        %v1103 = vadd.f32 %v974, %v1102
        %v1104 = vpop.f32.mrf.mxu0
        %1105 = vmatprep.mubr.f32.mxu0 %v932
        %1106 = vmatmul.mubr.f32.gmra.mxu0 %v931
        %v1107 = vpop.f32.mrf.mxu0
        %v1108 = vadd.f32 %v974, %v1107
        %v1109 = vpop.f32.mrf.mxu0
        %1110 = vmatprep.mubr.f32.mxu0 %v934
        %1111 = vmatmul.mubr.f32.gmra.mxu0 %v933
        %v1112 = vpop.f32.mrf.mxu0
        %v1113 = vadd.f32 %v974, %v1112
        %v1114 = vpop.f32.mrf.mxu0
        %1115 = vmatprep.mubr.f32.mxu0 %v936
        %1116 = vmatmul.mubr.f32.gmra.mxu0 %v935
        %v1117 = vpop.f32.mrf.mxu0
        %v1118 = vadd.f32 %v974, %v1117
        %v1119 = vpop.f32.mrf.mxu0
        %1120 = vdwg.mxu0
        %v1121 = vmax.f32 %v1043, 0.0
        %v1122 = vmax.f32 %v1048, 0.0
        %v1123 = vmax.f32 %v1053, 0.0
        %v1124 = vmax.f32 %v1058, 0.0
        %v1125 = vmax.f32 %v1063, 0.0
        %v1126 = vmax.f32 %v1068, 0.0
        %v1127 = vmax.f32 %v1073, 0.0
        %v1128 = vmax.f32 %v1078, 0.0
        %v1129 = vmax.f32 %v1083, 0.0
        %v1130 = vmax.f32 %v1088, 0.0
        %v1131 = vmax.f32 %v1093, 0.0
        %v1132 = vmax.f32 %v1098, 0.0
        %v1133 = vmax.f32 %v1103, 0.0
        %v1134 = vmax.f32 %v1108, 0.0
        %v1135 = vmax.f32 %v1113, 0.0
        %v1136 = vmax.f32 %v1118, 0.0
        %v1137 = vld [vmem:[%s6] sm:$0xff]
        %v1138 = vld [vmem:[%s6 + $0x8] sm:$0xff]
        %v1139 = vld [vmem:[%s6 + $0x10] sm:$0xff]
        %v1140 = vld [vmem:[%s6 + $0x18] sm:$0xff]
        %v1141 = vld [vmem:[%s6 + $0x20] sm:$0xff]
        %v1142 = vld [vmem:[%s6 + $0x28] sm:$0xff]
        %v1143 = vld [vmem:[%s6 + $0x30] sm:$0xff]
        %v1144 = vld [vmem:[%s6 + $0x38] sm:$0xff]
        %v1145 = vld [vmem:[%s6 + $0x40] sm:$0xff]
        %v1146 = vld [vmem:[%s6 + $0x48] sm:$0xff]
        %v1147 = vld [vmem:[%s6 + $0x50] sm:$0xff]
        %v1148 = vld [vmem:[%s6 + $0x58] sm:$0xff]
        %v1149 = vld [vmem:[%s6 + $0x60] sm:$0xff]
        %v1150 = vld [vmem:[%s6 + $0x68] sm:$0xff]
        %v1151 = vld [vmem:[%s6 + $0x70] sm:$0xff]
        %v1152 = vld [vmem:[%s6 + $0x78] sm:$0xff]
        %v1153 = vld [vmem:[%s7] sm:$0x1]
        %v1155 = vlaneseq
        %v1156 = vshrl.u32 %v1155, 7
        %v1157 = vsub.s32 0, %v1156
        %v1158 = vrot.slane %v1153, %v1157
        %1160 = vmatprep.subr.mxu0 0.0
        %1161 = vmatpush1.msra.mxu0 %v1152
        %1162 = vmatprep.subr.mxu0 0.0
        %1163 = vmatpush1.msra.mxu0 %v1151
        %1164 = vmatprep.subr.mxu0 0.0
        %1165 = vmatpush1.msra.mxu0 %v1150
        %1166 = vmatprep.subr.mxu0 0.0
        %1167 = vmatpush1.msra.mxu0 %v1149
        %1168 = vmatprep.subr.mxu0 0.0
        %1169 = vmatpush1.msra.mxu0 %v1148
        %1170 = vmatprep.subr.mxu0 0.0
        %1171 = vmatpush1.msra.mxu0 %v1147
        %1172 = vmatprep.subr.mxu0 0.0
        %1173 = vmatpush1.msra.mxu0 %v1146
        %1174 = vmatprep.subr.mxu0 0.0
        %1175 = vmatpush1.msra.mxu0 %v1145
        %1176 = vmatprep.subr.mxu0 0.0
        %1177 = vmatpush1.msra.mxu0 %v1144
        %1178 = vmatprep.subr.mxu0 0.0
        %1179 = vmatpush1.msra.mxu0 %v1143
        %1180 = vmatprep.subr.mxu0 0.0
        %1181 = vmatpush1.msra.mxu0 %v1142
        %1182 = vmatprep.subr.mxu0 0.0
        %1183 = vmatpush1.msra.mxu0 %v1141
        %1184 = vmatprep.subr.mxu0 0.0
        %1185 = vmatpush1.msra.mxu0 %v1140
        %1186 = vmatprep.subr.mxu0 0.0
        %1187 = vmatpush1.msra.mxu0 %v1139
        %1188 = vmatprep.subr.mxu0 0.0
        %1189 = vmatpush1.msra.mxu0 %v1138
        %1190 = vmatprep.subr.mxu0 0.0
        %1191 = vmatpush1.msra.mxu0 %v1137
        %1192 = vmatprep.subr.mxu0 0.0
        %1193 = vmatpush2.msra.mxu0 0.0
        %1194 = vmatprep.subr.mxu0 0.0
        %1195 = vmatpush2.msra.mxu0 0.0
        %1196 = vmatprep.subr.mxu0 0.0
        %1197 = vmatpush2.msra.mxu0 0.0
        %1198 = vmatprep.subr.mxu0 0.0
        %1199 = vmatpush2.msra.mxu0 0.0
        %1200 = vmatprep.subr.mxu0 0.0
        %1201 = vmatpush2.msra.mxu0 0.0
        %1202 = vmatprep.subr.mxu0 0.0
        %1203 = vmatpush2.msra.mxu0 0.0
        %1204 = vmatprep.subr.mxu0 0.0
        %1205 = vmatpush2.msra.mxu0 0.0
        %1206 = vmatprep.subr.mxu0 0.0
        %1207 = vmatpush2.msra.mxu0 0.0
        %1208 = vmatprep.subr.mxu0 0.0
        %1209 = vmatpush2.msra.mxu0 0.0
        %1210 = vmatprep.subr.mxu0 0.0
        %1211 = vmatpush2.msra.mxu0 0.0
        %1212 = vmatprep.subr.mxu0 0.0
        %1213 = vmatpush2.msra.mxu0 0.0
        %1214 = vmatprep.subr.mxu0 0.0
        %1215 = vmatpush2.msra.mxu0 0.0
        %1216 = vmatprep.subr.mxu0 0.0
        %1217 = vmatpush2.msra.mxu0 0.0
        %1218 = vmatprep.subr.mxu0 0.0
        %1219 = vmatpush2.msra.mxu0 0.0
        %1220 = vmatprep.subr.mxu0 0.0
        %1221 = vmatpush2.msra.mxu0 0.0
        %1222 = vmatprep.subr.mxu0 0.0
        %1223 = vmatpush2.msra.mxu0 0.0
        %1224 = vmatprep.mubr.f32.mxu0 0.0
        %1225 = vmatmul.mubr.f32.gmra.mxu0 %v1121
        %v1226 = vpop.f32.mrf.mxu0
        %v1227 = vadd.f32 %v1158, %v1226
        %v1228 = vpop.f32.mrf.mxu0
        %1229 = vmatprep.mubr.f32.mxu0 0.0
        %1230 = vmatmul.mubr.f32.gmra.mxu0 %v1122
        %v1231 = vpop.f32.mrf.mxu0
        %v1232 = vadd.f32 %v1158, %v1231
        %v1233 = vpop.f32.mrf.mxu0
        %1234 = vmatprep.mubr.f32.mxu0 0.0
        %1235 = vmatmul.mubr.f32.gmra.mxu0 %v1123
        %v1236 = vpop.f32.mrf.mxu0
        %v1237 = vadd.f32 %v1158, %v1236
        %v1238 = vpop.f32.mrf.mxu0
        %1239 = vmatprep.mubr.f32.mxu0 0.0
        %1240 = vmatmul.mubr.f32.gmra.mxu0 %v1124
        %v1241 = vpop.f32.mrf.mxu0
        %v1242 = vadd.f32 %v1158, %v1241
        %v1243 = vpop.f32.mrf.mxu0
        %1244 = vmatprep.mubr.f32.mxu0 0.0
        %1245 = vmatmul.mubr.f32.gmra.mxu0 %v1125
        %v1246 = vpop.f32.mrf.mxu0
        %v1247 = vadd.f32 %v1158, %v1246
        %v1248 = vpop.f32.mrf.mxu0
        %1249 = vmatprep.mubr.f32.mxu0 0.0
        %1250 = vmatmul.mubr.f32.gmra.mxu0 %v1126
        %v1251 = vpop.f32.mrf.mxu0
        %v1252 = vadd.f32 %v1158, %v1251
        %v1253 = vpop.f32.mrf.mxu0
        %1254 = vmatprep.mubr.f32.mxu0 0.0
        %1255 = vmatmul.mubr.f32.gmra.mxu0 %v1127
        %v1256 = vpop.f32.mrf.mxu0
        %v1257 = vadd.f32 %v1158, %v1256
        %v1258 = vpop.f32.mrf.mxu0
        %1259 = vmatprep.mubr.f32.mxu0 0.0
        %1260 = vmatmul.mubr.f32.gmra.mxu0 %v1128
        %v1261 = vpop.f32.mrf.mxu0
        %v1262 = vadd.f32 %v1158, %v1261
        %v1263 = vpop.f32.mrf.mxu0
        %1264 = vmatprep.mubr.f32.mxu0 0.0
        %1265 = vmatmul.mubr.f32.gmra.mxu0 %v1129
        %v1266 = vpop.f32.mrf.mxu0
        %v1267 = vadd.f32 %v1158, %v1266
        %v1268 = vpop.f32.mrf.mxu0
        %1269 = vmatprep.mubr.f32.mxu0 0.0
        %1270 = vmatmul.mubr.f32.gmra.mxu0 %v1130
        %v1271 = vpop.f32.mrf.mxu0
        %v1272 = vadd.f32 %v1158, %v1271
        %v1273 = vpop.f32.mrf.mxu0
        %1274 = vmatprep.mubr.f32.mxu0 0.0
        %1275 = vmatmul.mubr.f32.gmra.mxu0 %v1131
        %v1276 = vpop.f32.mrf.mxu0
        %v1277 = vadd.f32 %v1158, %v1276
        %v1278 = vpop.f32.mrf.mxu0
        %1279 = vmatprep.mubr.f32.mxu0 0.0
        %1280 = vmatmul.mubr.f32.gmra.mxu0 %v1132
        %v1281 = vpop.f32.mrf.mxu0
        %v1282 = vadd.f32 %v1158, %v1281
        %v1283 = vpop.f32.mrf.mxu0
        %1284 = vmatprep.mubr.f32.mxu0 0.0
        %1285 = vmatmul.mubr.f32.gmra.mxu0 %v1133
        %v1286 = vpop.f32.mrf.mxu0
        %v1287 = vadd.f32 %v1158, %v1286
        %v1288 = vpop.f32.mrf.mxu0
        %1289 = vmatprep.mubr.f32.mxu0 0.0
        %1290 = vmatmul.mubr.f32.gmra.mxu0 %v1134
        %v1291 = vpop.f32.mrf.mxu0
        %v1292 = vadd.f32 %v1158, %v1291
        %v1293 = vpop.f32.mrf.mxu0
        %1294 = vmatprep.mubr.f32.mxu0 0.0
        %1295 = vmatmul.mubr.f32.gmra.mxu0 %v1135
        %v1296 = vpop.f32.mrf.mxu0
        %v1297 = vadd.f32 %v1158, %v1296
        %v1298 = vpop.f32.mrf.mxu0
        %1299 = vmatprep.mubr.f32.mxu0 0.0
        %1300 = vmatmul.mubr.f32.gmra.mxu0 %v1136
        %v1301 = vpop.f32.mrf.mxu0
        %v1302 = vadd.f32 %v1158, %v1301
        %v1303 = vpop.f32.mrf.mxu0
        %1304 = vdwg.mxu0
        %v1305 = vld [vmem:[%s8] sm:$0xff]
        %v1306 = vld [vmem:[%s8 + $0x8] sm:$0xff]
        %v1307 = vld [vmem:[%s8 + $0x10] sm:$0xff]
        %v1308 = vld [vmem:[%s8 + $0x18] sm:$0xff]
        %v1309 = vld [vmem:[%s9] sm:$0x1]
        %v1311 = vlaneseq
        %v1312 = vshrl.u32 %v1311, 7
        %v1313 = vsub.s32 0, %v1312
        %v1314 = vrot.slane %v1309, %v1313
        %vm1316 = vcmask 261120
        %v1318 = vsel %vm1316, %v1227, 0
        %v1321 = vsel %vm1316, %v1232, 0
        %v1324 = vsel %vm1316, %v1237, 0
        %v1327 = vsel %vm1316, %v1242, 0
        %v1330 = vsel %vm1316, %v1247, 0
        %v1333 = vsel %vm1316, %v1252, 0
        %v1336 = vsel %vm1316, %v1257, 0
        %v1339 = vsel %vm1316, %v1262, 0
        %v1342 = vsel %vm1316, %v1267, 0
        %v1345 = vsel %vm1316, %v1272, 0
        %v1348 = vsel %vm1316, %v1277, 0
        %v1351 = vsel %vm1316, %v1282, 0
        %v1354 = vsel %vm1316, %v1287, 0
        %v1357 = vsel %vm1316, %v1292, 0
        %v1360 = vsel %vm1316, %v1297, 0
        %v1363 = vsel %vm1316, %v1302, 0
        %1365 = vmatprep.subr.mxu0 0.0
        %1366 = vmatpush1.msra.mxu0 0.0
        %1367 = vmatprep.subr.mxu0 0.0
        %1368 = vmatpush1.msra.mxu0 0.0
        %1369 = vmatprep.subr.mxu0 0.0
        %1370 = vmatpush1.msra.mxu0 0.0
        %1371 = vmatprep.subr.mxu0 0.0
        %1372 = vmatpush1.msra.mxu0 0.0
        %1373 = vmatprep.subr.mxu0 0.0
        %1374 = vmatpush1.msra.mxu0 0.0
        %1375 = vmatprep.subr.mxu0 0.0
        %1376 = vmatpush1.msra.mxu0 0.0
        %1377 = vmatprep.subr.mxu0 0.0
        %1378 = vmatpush1.msra.mxu0 0.0
        %1379 = vmatprep.subr.mxu0 0.0
        %1380 = vmatpush1.msra.mxu0 0.0
        %1381 = vmatprep.subr.mxu0 0.0
        %1382 = vmatpush1.msra.mxu0 0.0
        %1383 = vmatprep.subr.mxu0 0.0
        %1384 = vmatpush1.msra.mxu0 0.0
        %1385 = vmatprep.subr.mxu0 0.0
        %1386 = vmatpush1.msra.mxu0 0.0
        %1387 = vmatprep.subr.mxu0 0.0
        %1388 = vmatpush1.msra.mxu0 0.0
        %1389 = vmatprep.subr.mxu0 0.0
        %1390 = vmatpush1.msra.mxu0 %v1308
        %1391 = vmatprep.subr.mxu0 0.0
        %1392 = vmatpush1.msra.mxu0 %v1307
        %1393 = vmatprep.subr.mxu0 0.0
        %1394 = vmatpush1.msra.mxu0 %v1306
        %1395 = vmatprep.subr.mxu0 0.0
        %1396 = vmatpush1.msra.mxu0 %v1305
        %1397 = vmatprep.subr.mxu0 0.0
        %1398 = vmatpush2.msra.mxu0 0.0
        %1399 = vmatprep.subr.mxu0 0.0
        %1400 = vmatpush2.msra.mxu0 0.0
        %1401 = vmatprep.subr.mxu0 0.0
        %1402 = vmatpush2.msra.mxu0 0.0
        %1403 = vmatprep.subr.mxu0 0.0
        %1404 = vmatpush2.msra.mxu0 0.0
        %1405 = vmatprep.subr.mxu0 0.0
        %1406 = vmatpush2.msra.mxu0 0.0
        %1407 = vmatprep.subr.mxu0 0.0
        %1408 = vmatpush2.msra.mxu0 0.0
        %1409 = vmatprep.subr.mxu0 0.0
        %1410 = vmatpush2.msra.mxu0 0.0
        %1411 = vmatprep.subr.mxu0 0.0
        %1412 = vmatpush2.msra.mxu0 0.0
        %1413 = vmatprep.subr.mxu0 0.0
        %1414 = vmatpush2.msra.mxu0 0.0
        %1415 = vmatprep.subr.mxu0 0.0
        %1416 = vmatpush2.msra.mxu0 0.0
        %1417 = vmatprep.subr.mxu0 0.0
        %1418 = vmatpush2.msra.mxu0 0.0
        %1419 = vmatprep.subr.mxu0 0.0
        %1420 = vmatpush2.msra.mxu0 0.0
        %1421 = vmatprep.subr.mxu0 0.0
        %1422 = vmatpush2.msra.mxu0 0.0
        %1423 = vmatprep.subr.mxu0 0.0
        %1424 = vmatpush2.msra.mxu0 0.0
        %1425 = vmatprep.subr.mxu0 0.0
        %1426 = vmatpush2.msra.mxu0 0.0
        %1427 = vmatprep.subr.mxu0 0.0
        %1428 = vmatpush2.msra.mxu0 0.0
        %1429 = vmatprep.mubr.f32.mxu0 0.0
        %1430 = vmatmul.mubr.f32.gmra.mxu0 %v1318
        %v1431 = vpop.f32.mrf.mxu0
        %v1432 = vadd.f32 %v1314, %v1431
        %v1433 = vpop.f32.mrf.mxu0
        %1434 = vmatprep.mubr.f32.mxu0 0.0
        %1435 = vmatmul.mubr.f32.gmra.mxu0 %v1321
        %v1436 = vpop.f32.mrf.mxu0
        %v1437 = vadd.f32 %v1314, %v1436
        %v1438 = vpop.f32.mrf.mxu0
        %1439 = vmatprep.mubr.f32.mxu0 0.0
        %1440 = vmatmul.mubr.f32.gmra.mxu0 %v1324
        %v1441 = vpop.f32.mrf.mxu0
        %v1442 = vadd.f32 %v1314, %v1441
        %v1443 = vpop.f32.mrf.mxu0
        %1444 = vmatprep.mubr.f32.mxu0 0.0
        %1445 = vmatmul.mubr.f32.gmra.mxu0 %v1327
        %v1446 = vpop.f32.mrf.mxu0
        %v1447 = vadd.f32 %v1314, %v1446
        %v1448 = vpop.f32.mrf.mxu0
        %1449 = vmatprep.mubr.f32.mxu0 0.0
        %1450 = vmatmul.mubr.f32.gmra.mxu0 %v1330
        %v1451 = vpop.f32.mrf.mxu0
        %v1452 = vadd.f32 %v1314, %v1451
        %v1453 = vpop.f32.mrf.mxu0
        %1454 = vmatprep.mubr.f32.mxu0 0.0
        %1455 = vmatmul.mubr.f32.gmra.mxu0 %v1333
        %v1456 = vpop.f32.mrf.mxu0
        %v1457 = vadd.f32 %v1314, %v1456
        %v1458 = vpop.f32.mrf.mxu0
        %1459 = vmatprep.mubr.f32.mxu0 0.0
        %1460 = vmatmul.mubr.f32.gmra.mxu0 %v1336
        %v1461 = vpop.f32.mrf.mxu0
        %v1462 = vadd.f32 %v1314, %v1461
        %v1463 = vpop.f32.mrf.mxu0
        %1464 = vmatprep.mubr.f32.mxu0 0.0
        %1465 = vmatmul.mubr.f32.gmra.mxu0 %v1339
        %v1466 = vpop.f32.mrf.mxu0
        %v1467 = vadd.f32 %v1314, %v1466
        %v1468 = vpop.f32.mrf.mxu0
        %1469 = vmatprep.mubr.f32.mxu0 0.0
        %1470 = vmatmul.mubr.f32.gmra.mxu0 %v1342
        %v1471 = vpop.f32.mrf.mxu0
        %v1472 = vadd.f32 %v1314, %v1471
        %v1473 = vpop.f32.mrf.mxu0
        %1474 = vmatprep.mubr.f32.mxu0 0.0
        %1475 = vmatmul.mubr.f32.gmra.mxu0 %v1345
        %v1476 = vpop.f32.mrf.mxu0
        %v1477 = vadd.f32 %v1314, %v1476
        %v1478 = vpop.f32.mrf.mxu0
        %1479 = vmatprep.mubr.f32.mxu0 0.0
        %1480 = vmatmul.mubr.f32.gmra.mxu0 %v1348
        %v1481 = vpop.f32.mrf.mxu0
        %v1482 = vadd.f32 %v1314, %v1481
        %v1483 = vpop.f32.mrf.mxu0
        %1484 = vmatprep.mubr.f32.mxu0 0.0
        %1485 = vmatmul.mubr.f32.gmra.mxu0 %v1351
        %v1486 = vpop.f32.mrf.mxu0
        %v1487 = vadd.f32 %v1314, %v1486
        %v1488 = vpop.f32.mrf.mxu0
        %1489 = vmatprep.mubr.f32.mxu0 0.0
        %1490 = vmatmul.mubr.f32.gmra.mxu0 %v1354
        %v1491 = vpop.f32.mrf.mxu0
        %v1492 = vadd.f32 %v1314, %v1491
        %v1493 = vpop.f32.mrf.mxu0
        %1494 = vmatprep.mubr.f32.mxu0 0.0
        %1495 = vmatmul.mubr.f32.gmra.mxu0 %v1357
        %v1496 = vpop.f32.mrf.mxu0
        %v1497 = vadd.f32 %v1314, %v1496
        %v1498 = vpop.f32.mrf.mxu0
        %1499 = vmatprep.mubr.f32.mxu0 0.0
        %1500 = vmatmul.mubr.f32.gmra.mxu0 %v1360
        %v1501 = vpop.f32.mrf.mxu0
        %v1502 = vadd.f32 %v1314, %v1501
        %v1503 = vpop.f32.mrf.mxu0
        %1504 = vmatprep.mubr.f32.mxu0 0.0
        %1505 = vmatmul.mubr.f32.gmra.mxu0 %v1363
        %v1506 = vpop.f32.mrf.mxu0
        %v1507 = vadd.f32 %v1314, %v1506
        %v1508 = vpop.f32.mrf.mxu0
        %1509 = vdwg.mxu0
        %v1510 = vmax.f32 %v1432, 0.0
        %v1511 = vmax.f32 %v1437, 0.0
        %v1512 = vmax.f32 %v1442, 0.0
        %v1513 = vmax.f32 %v1447, 0.0
        %v1514 = vmax.f32 %v1452, 0.0
        %v1515 = vmax.f32 %v1457, 0.0
        %v1516 = vmax.f32 %v1462, 0.0
        %v1517 = vmax.f32 %v1467, 0.0
        %v1518 = vmax.f32 %v1472, 0.0
        %v1519 = vmax.f32 %v1477, 0.0
        %v1520 = vmax.f32 %v1482, 0.0
        %v1521 = vmax.f32 %v1487, 0.0
        %v1522 = vmax.f32 %v1492, 0.0
        %v1523 = vmax.f32 %v1497, 0.0
        %v1524 = vmax.f32 %v1502, 0.0
        %v1525 = vmax.f32 %v1507, 0.0
        %v1526 = vld [vmem:[#allocation10] sm:$0xff]
        %v1527 = vld [vmem:[#allocation10 + $0x8] sm:$0xff]
        %v1528 = vld [vmem:[#allocation10 + $0x10] sm:$0xff]
        %v1529 = vld [vmem:[#allocation10 + $0x18] sm:$0xff]
        %v1530 = vld [vmem:[#allocation10 + $0x20] sm:$0xff]
        %v1531 = vld [vmem:[#allocation10 + $0x28] sm:$0xff]
        %v1532 = vld [vmem:[#allocation10 + $0x30] sm:$0xff]
        %v1533 = vld [vmem:[#allocation10 + $0x38] sm:$0xff]
        %v1534 = vld [vmem:[#allocation10 + $0x40] sm:$0xff]
        %v1535 = vld [vmem:[#allocation10 + $0x48] sm:$0xff]
        %v1536 = vld [vmem:[#allocation10 + $0x50] sm:$0xff]
        %v1537 = vld [vmem:[#allocation10 + $0x58] sm:$0xff]
        %v1538 = vld [vmem:[#allocation10 + $0x60] sm:$0xff]
        %v1539 = vld [vmem:[#allocation10 + $0x68] sm:$0xff]
        %v1540 = vld [vmem:[#allocation10 + $0x70] sm:$0xff]
        %v1541 = vld [vmem:[#allocation10 + $0x78] sm:$0xff]
        %v1542 = vld [vmem:[#allocation10 + $0x80] sm:$0xff]
        %v1543 = vld [vmem:[#allocation10 + $0x88] sm:$0xff]
        %v1544 = vld [vmem:[#allocation10 + $0x90] sm:$0xff]
        %v1545 = vld [vmem:[#allocation10 + $0x98] sm:$0xff]
        %v1546 = vld [vmem:[#allocation10 + $0xa0] sm:$0xff]
        %v1547 = vld [vmem:[#allocation10 + $0xa8] sm:$0xff]
        %v1548 = vld [vmem:[#allocation10 + $0xb0] sm:$0xff]
        %v1549 = vld [vmem:[#allocation10 + $0xb8] sm:$0xff]
        %v1550 = vld [vmem:[#allocation10 + $0xc0] sm:$0xff]
        %v1551 = vld [vmem:[#allocation10 + $0xc8] sm:$0xff]
        %v1552 = vld [vmem:[#allocation10 + $0xd0] sm:$0xff]
        %v1553 = vld [vmem:[#allocation10 + $0xd8] sm:$0xff]
        %v1554 = vld [vmem:[#allocation10 + $0xe0] sm:$0xff]
        %v1555 = vld [vmem:[#allocation10 + $0xe8] sm:$0xff]
        %v1556 = vld [vmem:[#allocation10 + $0xf0] sm:$0xff]
        %v1557 = vld [vmem:[#allocation10 + $0xf8] sm:$0xff]
        %v1558 = vld [vmem:[%s11] sm:$0x3]
        %v1560 = vlaneseq
        %v1561 = vshrl.u32 %v1560, 7
        %v1562 = vsub.s32 0, %v1561
        %v1563 = vrot.slane %v1558, %v1562
        %v1564 = vlaneseq
        %v1565 = vshrl.u32 %v1564, 7
        %v1566 = vsub.s32 1, %v1565
        %v1567 = vrot.slane %v1558, %v1566
        %1570 = vmatprep.subr.mxu0 %v1557
        %1571 = vmatpush1.msra.mxu0 %v1556
        %1572 = vmatprep.subr.mxu0 %v1555
        %1573 = vmatpush1.msra.mxu0 %v1554
        %1574 = vmatprep.subr.mxu0 %v1553
        %1575 = vmatpush1.msra.mxu0 %v1552
        %1576 = vmatprep.subr.mxu0 %v1551
        %1577 = vmatpush1.msra.mxu0 %v1550
        %1578 = vmatprep.subr.mxu0 %v1549
        %1579 = vmatpush1.msra.mxu0 %v1548
        %1580 = vmatprep.subr.mxu0 %v1547
        %1581 = vmatpush1.msra.mxu0 %v1546
        %1582 = vmatprep.subr.mxu0 %v1545
        %1583 = vmatpush1.msra.mxu0 %v1544
        %1584 = vmatprep.subr.mxu0 %v1543
        %1585 = vmatpush1.msra.mxu0 %v1542
        %1586 = vmatprep.subr.mxu0 %v1541
        %1587 = vmatpush1.msra.mxu0 %v1540
        %1588 = vmatprep.subr.mxu0 %v1539
        %1589 = vmatpush1.msra.mxu0 %v1538
        %1590 = vmatprep.subr.mxu0 %v1537
        %1591 = vmatpush1.msra.mxu0 %v1536
        %1592 = vmatprep.subr.mxu0 %v1535
        %1593 = vmatpush1.msra.mxu0 %v1534
        %1594 = vmatprep.subr.mxu0 %v1533
        %1595 = vmatpush1.msra.mxu0 %v1532
        %1596 = vmatprep.subr.mxu0 %v1531
        %1597 = vmatpush1.msra.mxu0 %v1530
        %1598 = vmatprep.subr.mxu0 %v1529
        %1599 = vmatpush1.msra.mxu0 %v1528
        %1600 = vmatprep.subr.mxu0 %v1527
        %1601 = vmatpush1.msra.mxu0 %v1526
        %1602 = vmatprep.subr.mxu0 0.0
        %1603 = vmatpush2.msra.mxu0 0.0
        %1604 = vmatprep.subr.mxu0 0.0
        %1605 = vmatpush2.msra.mxu0 0.0
        %1606 = vmatprep.subr.mxu0 0.0
        %1607 = vmatpush2.msra.mxu0 0.0
        %1608 = vmatprep.subr.mxu0 0.0
        %1609 = vmatpush2.msra.mxu0 0.0
        %1610 = vmatprep.subr.mxu0 0.0
        %1611 = vmatpush2.msra.mxu0 0.0
        %1612 = vmatprep.subr.mxu0 0.0
        %1613 = vmatpush2.msra.mxu0 0.0
        %1614 = vmatprep.subr.mxu0 0.0
        %1615 = vmatpush2.msra.mxu0 0.0
        %1616 = vmatprep.subr.mxu0 0.0
        %1617 = vmatpush2.msra.mxu0 0.0
        %1618 = vmatprep.subr.mxu0 0.0
        %1619 = vmatpush2.msra.mxu0 0.0
        %1620 = vmatprep.subr.mxu0 0.0
        %1621 = vmatpush2.msra.mxu0 0.0
        %1622 = vmatprep.subr.mxu0 0.0
        %1623 = vmatpush2.msra.mxu0 0.0
        %1624 = vmatprep.subr.mxu0 0.0
        %1625 = vmatpush2.msra.mxu0 0.0
        %1626 = vmatprep.subr.mxu0 0.0
        %1627 = vmatpush2.msra.mxu0 0.0
        %1628 = vmatprep.subr.mxu0 0.0
        %1629 = vmatpush2.msra.mxu0 0.0
        %1630 = vmatprep.subr.mxu0 0.0
        %1631 = vmatpush2.msra.mxu0 0.0
        %1632 = vmatprep.subr.mxu0 0.0
        %1633 = vmatpush2.msra.mxu0 0.0
        %1634 = vmatprep.mubr.f32.mxu0 0.0
        %1635 = vmatmul.mubr.f32.gmra.mxu0 %v1510
        %v1636 = vpop.f32.mrf.mxu0
        %v1637 = vadd.f32 %v1563, %v1636
        %v1638 = vpop.f32.mrf.mxu0
        %v1639 = vadd.f32 %v1567, %v1638
        %1640 = vmatprep.mubr.f32.mxu0 0.0
        %1641 = vmatmul.mubr.f32.gmra.mxu0 %v1511
        %v1642 = vpop.f32.mrf.mxu0
        %v1643 = vadd.f32 %v1563, %v1642
        %v1644 = vpop.f32.mrf.mxu0
        %v1645 = vadd.f32 %v1567, %v1644
        %1646 = vmatprep.mubr.f32.mxu0 0.0
        %1647 = vmatmul.mubr.f32.gmra.mxu0 %v1512
        %v1648 = vpop.f32.mrf.mxu0
        %v1649 = vadd.f32 %v1563, %v1648
        %v1650 = vpop.f32.mrf.mxu0
        %v1651 = vadd.f32 %v1567, %v1650
        %1652 = vmatprep.mubr.f32.mxu0 0.0
        %1653 = vmatmul.mubr.f32.gmra.mxu0 %v1513
        %v1654 = vpop.f32.mrf.mxu0
        %v1655 = vadd.f32 %v1563, %v1654
        %v1656 = vpop.f32.mrf.mxu0
        %v1657 = vadd.f32 %v1567, %v1656
        %1658 = vmatprep.mubr.f32.mxu0 0.0
        %1659 = vmatmul.mubr.f32.gmra.mxu0 %v1514
        %v1660 = vpop.f32.mrf.mxu0
        %v1661 = vadd.f32 %v1563, %v1660
        %v1662 = vpop.f32.mrf.mxu0
        %v1663 = vadd.f32 %v1567, %v1662
        %1664 = vmatprep.mubr.f32.mxu0 0.0
        %1665 = vmatmul.mubr.f32.gmra.mxu0 %v1515
        %v1666 = vpop.f32.mrf.mxu0
        %v1667 = vadd.f32 %v1563, %v1666
        %v1668 = vpop.f32.mrf.mxu0
        %v1669 = vadd.f32 %v1567, %v1668
        %1670 = vmatprep.mubr.f32.mxu0 0.0
        %1671 = vmatmul.mubr.f32.gmra.mxu0 %v1516
        %v1672 = vpop.f32.mrf.mxu0
        %v1673 = vadd.f32 %v1563, %v1672
        %v1674 = vpop.f32.mrf.mxu0
        %v1675 = vadd.f32 %v1567, %v1674
        %1676 = vmatprep.mubr.f32.mxu0 0.0
        %1677 = vmatmul.mubr.f32.gmra.mxu0 %v1517
        %v1678 = vpop.f32.mrf.mxu0
        %v1679 = vadd.f32 %v1563, %v1678
        %v1680 = vpop.f32.mrf.mxu0
        %v1681 = vadd.f32 %v1567, %v1680
        %1682 = vmatprep.mubr.f32.mxu0 0.0
        %1683 = vmatmul.mubr.f32.gmra.mxu0 %v1518
        %v1684 = vpop.f32.mrf.mxu0
        %v1685 = vadd.f32 %v1563, %v1684
        %v1686 = vpop.f32.mrf.mxu0
        %v1687 = vadd.f32 %v1567, %v1686
        %1688 = vmatprep.mubr.f32.mxu0 0.0
        %1689 = vmatmul.mubr.f32.gmra.mxu0 %v1519
        %v1690 = vpop.f32.mrf.mxu0
        %v1691 = vadd.f32 %v1563, %v1690
        %v1692 = vpop.f32.mrf.mxu0
        %v1693 = vadd.f32 %v1567, %v1692
        %1694 = vmatprep.mubr.f32.mxu0 0.0
        %1695 = vmatmul.mubr.f32.gmra.mxu0 %v1520
        %v1696 = vpop.f32.mrf.mxu0
        %v1697 = vadd.f32 %v1563, %v1696
        %v1698 = vpop.f32.mrf.mxu0
        %v1699 = vadd.f32 %v1567, %v1698
        %1700 = vmatprep.mubr.f32.mxu0 0.0
        %1701 = vmatmul.mubr.f32.gmra.mxu0 %v1521
        %v1702 = vpop.f32.mrf.mxu0
        %v1703 = vadd.f32 %v1563, %v1702
        %v1704 = vpop.f32.mrf.mxu0
        %v1705 = vadd.f32 %v1567, %v1704
        %1706 = vmatprep.mubr.f32.mxu0 0.0
        %1707 = vmatmul.mubr.f32.gmra.mxu0 %v1522
        %v1708 = vpop.f32.mrf.mxu0
        %v1709 = vadd.f32 %v1563, %v1708
        %v1710 = vpop.f32.mrf.mxu0
        %v1711 = vadd.f32 %v1567, %v1710
        %1712 = vmatprep.mubr.f32.mxu0 0.0
        %1713 = vmatmul.mubr.f32.gmra.mxu0 %v1523
        %v1714 = vpop.f32.mrf.mxu0
        %v1715 = vadd.f32 %v1563, %v1714
        %v1716 = vpop.f32.mrf.mxu0
        %v1717 = vadd.f32 %v1567, %v1716
        %1718 = vmatprep.mubr.f32.mxu0 0.0
        %1719 = vmatmul.mubr.f32.gmra.mxu0 %v1524
        %v1720 = vpop.f32.mrf.mxu0
        %v1721 = vadd.f32 %v1563, %v1720
        %v1722 = vpop.f32.mrf.mxu0
        %v1723 = vadd.f32 %v1567, %v1722
        %1724 = vmatprep.mubr.f32.mxu0 0.0
        %1725 = vmatmul.mubr.f32.gmra.mxu0 %v1525
        %v1726 = vpop.f32.mrf.mxu0
        %v1727 = vadd.f32 %v1563, %v1726
        %v1728 = vpop.f32.mrf.mxu0
        %v1729 = vadd.f32 %v1567, %v1728
        %1730 = vdwg.mxu0
        %v1731 = vmax.f32 %v1637, 0.0
        %v1732 = vmax.f32 %v1639, 0.0
        %v1733 = vmax.f32 %v1643, 0.0
        %v1734 = vmax.f32 %v1645, 0.0
        %v1735 = vmax.f32 %v1649, 0.0
        %v1736 = vmax.f32 %v1651, 0.0
        %v1737 = vmax.f32 %v1655, 0.0
        %v1738 = vmax.f32 %v1657, 0.0
        %v1739 = vmax.f32 %v1661, 0.0
        %v1740 = vmax.f32 %v1663, 0.0
        %v1741 = vmax.f32 %v1667, 0.0
        %v1742 = vmax.f32 %v1669, 0.0
        %v1743 = vmax.f32 %v1673, 0.0
        %v1744 = vmax.f32 %v1675, 0.0
        %v1745 = vmax.f32 %v1679, 0.0
        %v1746 = vmax.f32 %v1681, 0.0
        %v1747 = vmax.f32 %v1685, 0.0
        %v1748 = vmax.f32 %v1687, 0.0
        %v1749 = vmax.f32 %v1691, 0.0
        %v1750 = vmax.f32 %v1693, 0.0
        %v1751 = vmax.f32 %v1697, 0.0
        %v1752 = vmax.f32 %v1699, 0.0
        %v1753 = vmax.f32 %v1703, 0.0
        %v1754 = vmax.f32 %v1705, 0.0
        %v1755 = vmax.f32 %v1709, 0.0
        %v1756 = vmax.f32 %v1711, 0.0
        %v1757 = vmax.f32 %v1715, 0.0
        %v1758 = vmax.f32 %v1717, 0.0
        %v1759 = vmax.f32 %v1721, 0.0
        %v1760 = vmax.f32 %v1723, 0.0
        %v1761 = vmax.f32 %v1727, 0.0
        %v1762 = vmax.f32 %v1729, 0.0
        %v1763 = vld [vmem:[#allocation12] sm:$0xff]
        %v1764 = vld [vmem:[#allocation12 + $0x8] sm:$0xff]
        %v1765 = vld [vmem:[#allocation12 + $0x10] sm:$0xff]
        %v1766 = vld [vmem:[#allocation12 + $0x18] sm:$0xff]
        %v1767 = vld [vmem:[#allocation12 + $0x20] sm:$0xff]
        %v1768 = vld [vmem:[#allocation12 + $0x28] sm:$0xff]
        %v1769 = vld [vmem:[#allocation12 + $0x30] sm:$0xff]
        %v1770 = vld [vmem:[#allocation12 + $0x38] sm:$0xff]
        %v1771 = vld [vmem:[#allocation12 + $0x40] sm:$0xff]
        %v1772 = vld [vmem:[#allocation12 + $0x48] sm:$0xff]
        %v1773 = vld [vmem:[#allocation12 + $0x50] sm:$0xff]
        %v1774 = vld [vmem:[#allocation12 + $0x58] sm:$0xff]
        %v1775 = vld [vmem:[#allocation12 + $0x60] sm:$0xff]
        %v1776 = vld [vmem:[#allocation12 + $0x68] sm:$0xff]
        %v1777 = vld [vmem:[#allocation12 + $0x70] sm:$0xff]
        %v1778 = vld [vmem:[#allocation12 + $0x78] sm:$0xff]
        %v1779 = vld [vmem:[#allocation12 + $0x80] sm:$0xff]
        %v1780 = vld [vmem:[#allocation12 + $0x88] sm:$0xff]
        %v1781 = vld [vmem:[#allocation12 + $0x90] sm:$0xff]
        %v1782 = vld [vmem:[#allocation12 + $0x98] sm:$0xff]
        %v1783 = vld [vmem:[#allocation12 + $0xa0] sm:$0xff]
        %v1784 = vld [vmem:[#allocation12 + $0xa8] sm:$0xff]
        %v1785 = vld [vmem:[#allocation12 + $0xb0] sm:$0xff]
        %v1786 = vld [vmem:[#allocation12 + $0xb8] sm:$0xff]
        %v1787 = vld [vmem:[#allocation12 + $0xc0] sm:$0xff]
        %v1788 = vld [vmem:[#allocation12 + $0xc8] sm:$0xff]
        %v1789 = vld [vmem:[#allocation12 + $0xd0] sm:$0xff]
        %v1790 = vld [vmem:[#allocation12 + $0xd8] sm:$0xff]
        %v1791 = vld [vmem:[#allocation12 + $0xe0] sm:$0xff]
        %v1792 = vld [vmem:[#allocation12 + $0xe8] sm:$0xff]
        %v1793 = vld [vmem:[#allocation12 + $0xf0] sm:$0xff]
        %v1794 = vld [vmem:[#allocation12 + $0xf8] sm:$0xff]
        %v1795 = vld [vmem:[#allocation12 + $0x100] sm:$0xff]
        %v1796 = vld [vmem:[#allocation12 + $0x108] sm:$0xff]
        %v1797 = vld [vmem:[#allocation12 + $0x110] sm:$0xff]
        %v1798 = vld [vmem:[#allocation12 + $0x118] sm:$0xff]
        %v1799 = vld [vmem:[#allocation12 + $0x120] sm:$0xff]
        %v1800 = vld [vmem:[#allocation12 + $0x128] sm:$0xff]
        %v1801 = vld [vmem:[#allocation12 + $0x130] sm:$0xff]
        %v1802 = vld [vmem:[#allocation12 + $0x138] sm:$0xff]
        %v1803 = vld [vmem:[#allocation12 + $0x140] sm:$0xff]
        %v1804 = vld [vmem:[#allocation12 + $0x148] sm:$0xff]
        %v1805 = vld [vmem:[#allocation12 + $0x150] sm:$0xff]
        %v1806 = vld [vmem:[#allocation12 + $0x158] sm:$0xff]
        %v1807 = vld [vmem:[#allocation12 + $0x160] sm:$0xff]
        %v1808 = vld [vmem:[#allocation12 + $0x168] sm:$0xff]
        %v1809 = vld [vmem:[#allocation12 + $0x170] sm:$0xff]
        %v1810 = vld [vmem:[#allocation12 + $0x178] sm:$0xff]
        %v1811 = vld [vmem:[#allocation12 + $0x180] sm:$0xff]
        %v1812 = vld [vmem:[#allocation12 + $0x188] sm:$0xff]
        %v1813 = vld [vmem:[#allocation12 + $0x190] sm:$0xff]
        %v1814 = vld [vmem:[#allocation12 + $0x198] sm:$0xff]
        %v1815 = vld [vmem:[#allocation12 + $0x1a0] sm:$0xff]
        %v1816 = vld [vmem:[#allocation12 + $0x1a8] sm:$0xff]
        %v1817 = vld [vmem:[#allocation12 + $0x1b0] sm:$0xff]
        %v1818 = vld [vmem:[#allocation12 + $0x1b8] sm:$0xff]
        %v1819 = vld [vmem:[#allocation12 + $0x1c0] sm:$0xff]
        %v1820 = vld [vmem:[#allocation12 + $0x1c8] sm:$0xff]
        %v1821 = vld [vmem:[#allocation12 + $0x1d0] sm:$0xff]
        %v1822 = vld [vmem:[#allocation12 + $0x1d8] sm:$0xff]
        %v1823 = vld [vmem:[#allocation12 + $0x1e0] sm:$0xff]
        %v1824 = vld [vmem:[#allocation12 + $0x1e8] sm:$0xff]
        %v1825 = vld [vmem:[#allocation12 + $0x1f0] sm:$0xff]
        %v1826 = vld [vmem:[#allocation12 + $0x1f8] sm:$0xff]
        %v1827 = vld [vmem:[#allocation12 + $0x200] sm:$0xff]
        %v1828 = vld [vmem:[#allocation12 + $0x208] sm:$0xff]
        %v1829 = vld [vmem:[#allocation12 + $0x210] sm:$0xff]
        %v1830 = vld [vmem:[#allocation12 + $0x218] sm:$0xff]
        %v1831 = vld [vmem:[#allocation12 + $0x220] sm:$0xff]
        %v1832 = vld [vmem:[#allocation12 + $0x228] sm:$0xff]
        %v1833 = vld [vmem:[#allocation12 + $0x230] sm:$0xff]
        %v1834 = vld [vmem:[#allocation12 + $0x238] sm:$0xff]
        %v1835 = vld [vmem:[#allocation12 + $0x240] sm:$0xff]
        %v1836 = vld [vmem:[#allocation12 + $0x248] sm:$0xff]
        %v1837 = vld [vmem:[#allocation12 + $0x250] sm:$0xff]
        %v1838 = vld [vmem:[#allocation12 + $0x258] sm:$0xff]
        %v1839 = vld [vmem:[#allocation12 + $0x260] sm:$0xff]
        %v1840 = vld [vmem:[#allocation12 + $0x268] sm:$0xff]
        %v1841 = vld [vmem:[#allocation12 + $0x270] sm:$0xff]
        %v1842 = vld [vmem:[#allocation12 + $0x278] sm:$0xff]
        %v1843 = vld [vmem:[#allocation12 + $0x280] sm:$0xff]
        %v1844 = vld [vmem:[#allocation12 + $0x288] sm:$0xff]
        %v1845 = vld [vmem:[#allocation12 + $0x290] sm:$0xff]
        %v1846 = vld [vmem:[#allocation12 + $0x298] sm:$0xff]
        %v1847 = vld [vmem:[#allocation12 + $0x2a0] sm:$0xff]
        %v1848 = vld [vmem:[#allocation12 + $0x2a8] sm:$0xff]
        %v1849 = vld [vmem:[#allocation12 + $0x2b0] sm:$0xff]
        %v1850 = vld [vmem:[#allocation12 + $0x2b8] sm:$0xff]
        %v1851 = vld [vmem:[#allocation12 + $0x2c0] sm:$0xff]
        %v1852 = vld [vmem:[#allocation12 + $0x2c8] sm:$0xff]
        %v1853 = vld [vmem:[#allocation12 + $0x2d0] sm:$0xff]
        %v1854 = vld [vmem:[#allocation12 + $0x2d8] sm:$0xff]
        %v1855 = vld [vmem:[#allocation12 + $0x2e0] sm:$0xff]
        %v1856 = vld [vmem:[#allocation12 + $0x2e8] sm:$0xff]
        %v1857 = vld [vmem:[#allocation12 + $0x2f0] sm:$0xff]
        %v1858 = vld [vmem:[#allocation12 + $0x2f8] sm:$0xff]
        %v1859 = vld [vmem:[#allocation12 + $0x300] sm:$0xff]
        %v1860 = vld [vmem:[#allocation12 + $0x308] sm:$0xff]
        %v1861 = vld [vmem:[#allocation12 + $0x310] sm:$0xff]
        %v1862 = vld [vmem:[#allocation12 + $0x318] sm:$0xff]
        %v1863 = vld [vmem:[#allocation12 + $0x320] sm:$0xff]
        %v1864 = vld [vmem:[#allocation12 + $0x328] sm:$0xff]
        %v1865 = vld [vmem:[#allocation12 + $0x330] sm:$0xff]
        %v1866 = vld [vmem:[#allocation12 + $0x338] sm:$0xff]
        %v1867 = vld [vmem:[#allocation12 + $0x340] sm:$0xff]
        %v1868 = vld [vmem:[#allocation12 + $0x348] sm:$0xff]
        %v1869 = vld [vmem:[#allocation12 + $0x350] sm:$0xff]
        %v1870 = vld [vmem:[#allocation12 + $0x358] sm:$0xff]
        %v1871 = vld [vmem:[#allocation12 + $0x360] sm:$0xff]
        %v1872 = vld [vmem:[#allocation12 + $0x368] sm:$0xff]
        %v1873 = vld [vmem:[#allocation12 + $0x370] sm:$0xff]
        %v1874 = vld [vmem:[#allocation12 + $0x378] sm:$0xff]
        %v1875 = vld [vmem:[#allocation12 + $0x380] sm:$0xff]
        %v1876 = vld [vmem:[#allocation12 + $0x388] sm:$0xff]
        %v1877 = vld [vmem:[#allocation12 + $0x390] sm:$0xff]
        %v1878 = vld [vmem:[#allocation12 + $0x398] sm:$0xff]
        %v1879 = vld [vmem:[#allocation12 + $0x3a0] sm:$0xff]
        %v1880 = vld [vmem:[#allocation12 + $0x3a8] sm:$0xff]
        %v1881 = vld [vmem:[#allocation12 + $0x3b0] sm:$0xff]
        %v1882 = vld [vmem:[#allocation12 + $0x3b8] sm:$0xff]
        %v1883 = vld [vmem:[#allocation12 + $0x3c0] sm:$0xff]
        %v1884 = vld [vmem:[#allocation12 + $0x3c8] sm:$0xff]
        %v1885 = vld [vmem:[#allocation12 + $0x3d0] sm:$0xff]
        %v1886 = vld [vmem:[#allocation12 + $0x3d8] sm:$0xff]
        %v1887 = vld [vmem:[#allocation12 + $0x3e0] sm:$0xff]
        %v1888 = vld [vmem:[#allocation12 + $0x3e8] sm:$0xff]
        %v1889 = vld [vmem:[#allocation12 + $0x3f0] sm:$0xff]
        %v1890 = vld [vmem:[#allocation12 + $0x3f8] sm:$0xff]
        %v1891 = vld [vmem:[#allocation12 + $0x400] sm:$0xff]
        %v1892 = vld [vmem:[#allocation12 + $0x408] sm:$0xff]
        %v1893 = vld [vmem:[#allocation12 + $0x410] sm:$0xff]
        %v1894 = vld [vmem:[#allocation12 + $0x418] sm:$0xff]
        %v1895 = vld [vmem:[#allocation12 + $0x420] sm:$0xff]
        %v1896 = vld [vmem:[#allocation12 + $0x428] sm:$0xff]
        %v1897 = vld [vmem:[#allocation12 + $0x430] sm:$0xff]
        %v1898 = vld [vmem:[#allocation12 + $0x438] sm:$0xff]
        %v1899 = vld [vmem:[#allocation12 + $0x440] sm:$0xff]
        %v1900 = vld [vmem:[#allocation12 + $0x448] sm:$0xff]
        %v1901 = vld [vmem:[#allocation12 + $0x450] sm:$0xff]
        %v1902 = vld [vmem:[#allocation12 + $0x458] sm:$0xff]
        %v1903 = vld [vmem:[#allocation12 + $0x460] sm:$0xff]
        %v1904 = vld [vmem:[#allocation12 + $0x468] sm:$0xff]
        %v1905 = vld [vmem:[#allocation12 + $0x470] sm:$0xff]
        %v1906 = vld [vmem:[#allocation12 + $0x478] sm:$0xff]
        %v1907 = vld [vmem:[#allocation12 + $0x480] sm:$0xff]
        %v1908 = vld [vmem:[#allocation12 + $0x488] sm:$0xff]
        %v1909 = vld [vmem:[#allocation12 + $0x490] sm:$0xff]
        %v1910 = vld [vmem:[#allocation12 + $0x498] sm:$0xff]
        %v1911 = vld [vmem:[#allocation12 + $0x4a0] sm:$0xff]
        %v1912 = vld [vmem:[#allocation12 + $0x4a8] sm:$0xff]
        %v1913 = vld [vmem:[#allocation12 + $0x4b0] sm:$0xff]
        %v1914 = vld [vmem:[#allocation12 + $0x4b8] sm:$0xff]
        %v1915 = vld [vmem:[#allocation12 + $0x4c0] sm:$0xff]
        %v1916 = vld [vmem:[#allocation12 + $0x4c8] sm:$0xff]
        %v1917 = vld [vmem:[#allocation12 + $0x4d0] sm:$0xff]
        %v1918 = vld [vmem:[#allocation12 + $0x4d8] sm:$0xff]
        %v1919 = vld [vmem:[#allocation12 + $0x4e0] sm:$0xff]
        %v1920 = vld [vmem:[#allocation12 + $0x4e8] sm:$0xff]
        %v1921 = vld [vmem:[#allocation12 + $0x4f0] sm:$0xff]
        %v1922 = vld [vmem:[#allocation12 + $0x4f8] sm:$0xff]
        %v1923 = vld [vmem:[#allocation12 + $0x500] sm:$0xff]
        %v1924 = vld [vmem:[#allocation12 + $0x508] sm:$0xff]
        %v1925 = vld [vmem:[#allocation12 + $0x510] sm:$0xff]
        %v1926 = vld [vmem:[#allocation12 + $0x518] sm:$0xff]
        %v1927 = vld [vmem:[#allocation12 + $0x520] sm:$0xff]
        %v1928 = vld [vmem:[#allocation12 + $0x528] sm:$0xff]
        %v1929 = vld [vmem:[#allocation12 + $0x530] sm:$0xff]
        %v1930 = vld [vmem:[#allocation12 + $0x538] sm:$0xff]
        %v1931 = vld [vmem:[#allocation12 + $0x540] sm:$0xff]
        %v1932 = vld [vmem:[#allocation12 + $0x548] sm:$0xff]
        %v1933 = vld [vmem:[#allocation12 + $0x550] sm:$0xff]
        %v1934 = vld [vmem:[#allocation12 + $0x558] sm:$0xff]
        %v1935 = vld [vmem:[#allocation12 + $0x560] sm:$0xff]
        %v1936 = vld [vmem:[#allocation12 + $0x568] sm:$0xff]
        %v1937 = vld [vmem:[#allocation12 + $0x570] sm:$0xff]
        %v1938 = vld [vmem:[#allocation12 + $0x578] sm:$0xff]
        %v1939 = vld [vmem:[#allocation12 + $0x580] sm:$0xff]
        %v1940 = vld [vmem:[#allocation12 + $0x588] sm:$0xff]
        %v1941 = vld [vmem:[#allocation12 + $0x590] sm:$0xff]
        %v1942 = vld [vmem:[#allocation12 + $0x598] sm:$0xff]
        %v1943 = vld [vmem:[#allocation12 + $0x5a0] sm:$0xff]
        %v1944 = vld [vmem:[#allocation12 + $0x5a8] sm:$0xff]
        %v1945 = vld [vmem:[#allocation12 + $0x5b0] sm:$0xff]
        %v1946 = vld [vmem:[#allocation12 + $0x5b8] sm:$0xff]
        %v1947 = vld [vmem:[#allocation12 + $0x5c0] sm:$0xff]
        %v1948 = vld [vmem:[#allocation12 + $0x5c8] sm:$0xff]
        %v1949 = vld [vmem:[#allocation12 + $0x5d0] sm:$0xff]
        %v1950 = vld [vmem:[#allocation12 + $0x5d8] sm:$0xff]
        %v1951 = vld [vmem:[#allocation12 + $0x5e0] sm:$0xff]
        %v1952 = vld [vmem:[#allocation12 + $0x5e8] sm:$0xff]
        %v1953 = vld [vmem:[#allocation12 + $0x5f0] sm:$0xff]
        %v1954 = vld [vmem:[#allocation12 + $0x5f8] sm:$0xff]
        %v1955 = vld [vmem:[%s13] sm:$0x3f]
        %v1957 = vlaneseq
        %v1958 = vshrl.u32 %v1957, 7
        %v1959 = vsub.s32 0, %v1958
        %v1960 = vrot.slane %v1955, %v1959
        %v1961 = vlaneseq
        %v1962 = vshrl.u32 %v1961, 7
        %v1963 = vsub.s32 1, %v1962
        %v1964 = vrot.slane %v1955, %v1963
        %v1965 = vlaneseq
        %v1966 = vshrl.u32 %v1965, 7
        %v1967 = vsub.s32 2, %v1966
        %v1968 = vrot.slane %v1955, %v1967
        %v1969 = vlaneseq
        %v1970 = vshrl.u32 %v1969, 7
        %v1971 = vsub.s32 3, %v1970
        %v1972 = vrot.slane %v1955, %v1971
        %v1973 = vlaneseq
        %v1974 = vshrl.u32 %v1973, 7
        %v1975 = vsub.s32 4, %v1974
        %v1976 = vrot.slane %v1955, %v1975
        %v1977 = vlaneseq
        %v1978 = vshrl.u32 %v1977, 7
        %v1979 = vsub.s32 5, %v1978
        %v1980 = vrot.slane %v1955, %v1979
        %1987 = vmatprep.subr.mxu0 %v1854
        %1988 = vmatpush1.msra.mxu0 %v1853
        %1989 = vmatprep.subr.mxu0 %v1848
        %1990 = vmatpush1.msra.mxu0 %v1847
        %1991 = vmatprep.subr.mxu0 %v1842
        %1992 = vmatpush1.msra.mxu0 %v1841
        %1993 = vmatprep.subr.mxu0 %v1836
        %1994 = vmatpush1.msra.mxu0 %v1835
        %1995 = vmatprep.subr.mxu0 %v1830
        %1996 = vmatpush1.msra.mxu0 %v1829
        %1997 = vmatprep.subr.mxu0 %v1824
        %1998 = vmatpush1.msra.mxu0 %v1823
        %1999 = vmatprep.subr.mxu0 %v1818
        %2000 = vmatpush1.msra.mxu0 %v1817
        %2001 = vmatprep.subr.mxu0 %v1812
        %2002 = vmatpush1.msra.mxu0 %v1811
        %2003 = vmatprep.subr.mxu0 %v1806
        %2004 = vmatpush1.msra.mxu0 %v1805
        %2005 = vmatprep.subr.mxu0 %v1800
        %2006 = vmatpush1.msra.mxu0 %v1799
        %2007 = vmatprep.subr.mxu0 %v1794
        %2008 = vmatpush1.msra.mxu0 %v1793
        %2009 = vmatprep.subr.mxu0 %v1788
        %2010 = vmatpush1.msra.mxu0 %v1787
        %2011 = vmatprep.subr.mxu0 %v1782
        %2012 = vmatpush1.msra.mxu0 %v1781
        %2013 = vmatprep.subr.mxu0 %v1776
        %2014 = vmatpush1.msra.mxu0 %v1775
        %2015 = vmatprep.subr.mxu0 %v1770
        %2016 = vmatpush1.msra.mxu0 %v1769
        %2017 = vmatprep.subr.mxu0 %v1764
        %2018 = vmatpush1.msra.mxu0 %v1763
        %2019 = vmatprep.subr.mxu0 %v1950
        %2020 = vmatpush2.msra.mxu0 %v1949
        %2021 = vmatprep.subr.mxu0 %v1944
        %2022 = vmatpush2.msra.mxu0 %v1943
        %2023 = vmatprep.subr.mxu0 %v1938
        %2024 = vmatpush2.msra.mxu0 %v1937
        %2025 = vmatprep.subr.mxu0 %v1932
        %2026 = vmatpush2.msra.mxu0 %v1931
        %2027 = vmatprep.subr.mxu0 %v1926
        %2028 = vmatpush2.msra.mxu0 %v1925
        %2029 = vmatprep.subr.mxu0 %v1920
        %2030 = vmatpush2.msra.mxu0 %v1919
        %2031 = vmatprep.subr.mxu0 %v1914
        %2032 = vmatpush2.msra.mxu0 %v1913
        %2033 = vmatprep.subr.mxu0 %v1908
        %2034 = vmatpush2.msra.mxu0 %v1907
        %2035 = vmatprep.subr.mxu0 %v1902
        %2036 = vmatpush2.msra.mxu0 %v1901
        %2037 = vmatprep.subr.mxu0 %v1896
        %2038 = vmatpush2.msra.mxu0 %v1895
        %2039 = vmatprep.subr.mxu0 %v1890
        %2040 = vmatpush2.msra.mxu0 %v1889
        %2041 = vmatprep.subr.mxu0 %v1884
        %2042 = vmatpush2.msra.mxu0 %v1883
        %2043 = vmatprep.subr.mxu0 %v1878
        %2044 = vmatpush2.msra.mxu0 %v1877
        %2045 = vmatprep.subr.mxu0 %v1872
        %2046 = vmatpush2.msra.mxu0 %v1871
        %2047 = vmatprep.subr.mxu0 %v1866
        %2048 = vmatpush2.msra.mxu0 %v1865
        %2049 = vmatprep.subr.mxu0 %v1860
        %2050 = vmatpush2.msra.mxu0 %v1859
        %2051 = vmatprep.mubr.f32.mxu0 %v1732
        %2052 = vmatmul.mubr.f32.gmra.mxu0 %v1731
        %v2053 = vpop.f32.mrf.mxu0
        %v2054 = vadd.f32 %v1960, %v2053
        %v2055 = vpop.f32.mrf.mxu0
        %v2056 = vadd.f32 %v1964, %v2055
        %2057 = vmatprep.mubr.f32.mxu0 %v1734
        %2058 = vmatmul.mubr.f32.gmra.mxu0 %v1733
        %v2059 = vpop.f32.mrf.mxu0
        %v2060 = vadd.f32 %v1960, %v2059
        %v2061 = vpop.f32.mrf.mxu0
        %v2062 = vadd.f32 %v1964, %v2061
        %2063 = vmatprep.mubr.f32.mxu0 %v1736
        %2064 = vmatmul.mubr.f32.gmra.mxu0 %v1735
        %v2065 = vpop.f32.mrf.mxu0
        %v2066 = vadd.f32 %v1960, %v2065
        %v2067 = vpop.f32.mrf.mxu0
        %v2068 = vadd.f32 %v1964, %v2067
        %2069 = vmatprep.mubr.f32.mxu0 %v1738
        %2070 = vmatmul.mubr.f32.gmra.mxu0 %v1737
        %v2071 = vpop.f32.mrf.mxu0
        %v2072 = vadd.f32 %v1960, %v2071
        %v2073 = vpop.f32.mrf.mxu0
        %v2074 = vadd.f32 %v1964, %v2073
        %2075 = vmatprep.mubr.f32.mxu0 %v1740
        %2076 = vmatmul.mubr.f32.gmra.mxu0 %v1739
        %v2077 = vpop.f32.mrf.mxu0
        %v2078 = vadd.f32 %v1960, %v2077
        %v2079 = vpop.f32.mrf.mxu0
        %v2080 = vadd.f32 %v1964, %v2079
        %2081 = vmatprep.mubr.f32.mxu0 %v1742
        %2082 = vmatmul.mubr.f32.gmra.mxu0 %v1741
        %v2083 = vpop.f32.mrf.mxu0
        %v2084 = vadd.f32 %v1960, %v2083
        %v2085 = vpop.f32.mrf.mxu0
        %v2086 = vadd.f32 %v1964, %v2085
        %2087 = vmatprep.mubr.f32.mxu0 %v1744
        %2088 = vmatmul.mubr.f32.gmra.mxu0 %v1743
        %v2089 = vpop.f32.mrf.mxu0
        %v2090 = vadd.f32 %v1960, %v2089
        %v2091 = vpop.f32.mrf.mxu0
        %v2092 = vadd.f32 %v1964, %v2091
        %2093 = vmatprep.mubr.f32.mxu0 %v1746
        %2094 = vmatmul.mubr.f32.gmra.mxu0 %v1745
        %v2095 = vpop.f32.mrf.mxu0
        %v2096 = vadd.f32 %v1960, %v2095
        %v2097 = vpop.f32.mrf.mxu0
        %v2098 = vadd.f32 %v1964, %v2097
        %2099 = vmatprep.mubr.f32.mxu0 %v1748
        %2100 = vmatmul.mubr.f32.gmra.mxu0 %v1747
        %v2101 = vpop.f32.mrf.mxu0
        %v2102 = vadd.f32 %v1960, %v2101
        %v2103 = vpop.f32.mrf.mxu0
        %v2104 = vadd.f32 %v1964, %v2103
        %2105 = vmatprep.mubr.f32.mxu0 %v1750
        %2106 = vmatmul.mubr.f32.gmra.mxu0 %v1749
        %v2107 = vpop.f32.mrf.mxu0
        %v2108 = vadd.f32 %v1960, %v2107
        %v2109 = vpop.f32.mrf.mxu0
        %v2110 = vadd.f32 %v1964, %v2109
        %2111 = vmatprep.mubr.f32.mxu0 %v1752
        %2112 = vmatmul.mubr.f32.gmra.mxu0 %v1751
        %v2113 = vpop.f32.mrf.mxu0
        %v2114 = vadd.f32 %v1960, %v2113
        %v2115 = vpop.f32.mrf.mxu0
        %v2116 = vadd.f32 %v1964, %v2115
        %2117 = vmatprep.mubr.f32.mxu0 %v1754
        %2118 = vmatmul.mubr.f32.gmra.mxu0 %v1753
        %v2119 = vpop.f32.mrf.mxu0
        %v2120 = vadd.f32 %v1960, %v2119
        %v2121 = vpop.f32.mrf.mxu0
        %v2122 = vadd.f32 %v1964, %v2121
        %2123 = vmatprep.mubr.f32.mxu0 %v1756
        %2124 = vmatmul.mubr.f32.gmra.mxu0 %v1755
        %v2125 = vpop.f32.mrf.mxu0
        %v2126 = vadd.f32 %v1960, %v2125
        %v2127 = vpop.f32.mrf.mxu0
        %v2128 = vadd.f32 %v1964, %v2127
        %2129 = vmatprep.mubr.f32.mxu0 %v1758
        %2130 = vmatmul.mubr.f32.gmra.mxu0 %v1757
        %v2131 = vpop.f32.mrf.mxu0
        %v2132 = vadd.f32 %v1960, %v2131
        %v2133 = vpop.f32.mrf.mxu0
        %v2134 = vadd.f32 %v1964, %v2133
        %2135 = vmatprep.mubr.f32.mxu0 %v1760
        %2136 = vmatmul.mubr.f32.gmra.mxu0 %v1759
        %v2137 = vpop.f32.mrf.mxu0
        %v2138 = vadd.f32 %v1960, %v2137
        %v2139 = vpop.f32.mrf.mxu0
        %v2140 = vadd.f32 %v1964, %v2139
        %2141 = vmatprep.mubr.f32.mxu0 %v1762
        %2142 = vmatmul.mubr.f32.gmra.mxu0 %v1761
        %v2143 = vpop.f32.mrf.mxu0
        %v2144 = vadd.f32 %v1960, %v2143
        %v2145 = vpop.f32.mrf.mxu0
        %v2146 = vadd.f32 %v1964, %v2145
        %2147 = vdwg.mxu0
        %2148 = vmatprep.subr.mxu0 %v1856
        %2149 = vmatpush1.msra.mxu0 %v1855
        %2150 = vmatprep.subr.mxu0 %v1850
        %2151 = vmatpush1.msra.mxu0 %v1849
        %2152 = vmatprep.subr.mxu0 %v1844
        %2153 = vmatpush1.msra.mxu0 %v1843
        %2154 = vmatprep.subr.mxu0 %v1838
        %2155 = vmatpush1.msra.mxu0 %v1837
        %2156 = vmatprep.subr.mxu0 %v1832
        %2157 = vmatpush1.msra.mxu0 %v1831
        %2158 = vmatprep.subr.mxu0 %v1826
        %2159 = vmatpush1.msra.mxu0 %v1825
        %2160 = vmatprep.subr.mxu0 %v1820
        %2161 = vmatpush1.msra.mxu0 %v1819
        %2162 = vmatprep.subr.mxu0 %v1814
        %2163 = vmatpush1.msra.mxu0 %v1813
        %2164 = vmatprep.subr.mxu0 %v1808
        %2165 = vmatpush1.msra.mxu0 %v1807
        %2166 = vmatprep.subr.mxu0 %v1802
        %2167 = vmatpush1.msra.mxu0 %v1801
        %2168 = vmatprep.subr.mxu0 %v1796
        %2169 = vmatpush1.msra.mxu0 %v1795
        %2170 = vmatprep.subr.mxu0 %v1790
        %2171 = vmatpush1.msra.mxu0 %v1789
        %2172 = vmatprep.subr.mxu0 %v1784
        %2173 = vmatpush1.msra.mxu0 %v1783
        %2174 = vmatprep.subr.mxu0 %v1778
        %2175 = vmatpush1.msra.mxu0 %v1777
        %2176 = vmatprep.subr.mxu0 %v1772
        %2177 = vmatpush1.msra.mxu0 %v1771
        %2178 = vmatprep.subr.mxu0 %v1766
        %2179 = vmatpush1.msra.mxu0 %v1765
        %2180 = vmatprep.subr.mxu0 %v1952
        %2181 = vmatpush2.msra.mxu0 %v1951
        %2182 = vmatprep.subr.mxu0 %v1946
        %2183 = vmatpush2.msra.mxu0 %v1945
        %2184 = vmatprep.subr.mxu0 %v1940
        %2185 = vmatpush2.msra.mxu0 %v1939
        %2186 = vmatprep.subr.mxu0 %v1934
        %2187 = vmatpush2.msra.mxu0 %v1933
        %2188 = vmatprep.subr.mxu0 %v1928
        %2189 = vmatpush2.msra.mxu0 %v1927
        %2190 = vmatprep.subr.mxu0 %v1922
        %2191 = vmatpush2.msra.mxu0 %v1921
        %2192 = vmatprep.subr.mxu0 %v1916
        %2193 = vmatpush2.msra.mxu0 %v1915
        %2194 = vmatprep.subr.mxu0 %v1910
        %2195 = vmatpush2.msra.mxu0 %v1909
        %2196 = vmatprep.subr.mxu0 %v1904
        %2197 = vmatpush2.msra.mxu0 %v1903
        %2198 = vmatprep.subr.mxu0 %v1898
        %2199 = vmatpush2.msra.mxu0 %v1897
        %2200 = vmatprep.subr.mxu0 %v1892
        %2201 = vmatpush2.msra.mxu0 %v1891
        %2202 = vmatprep.subr.mxu0 %v1886
        %2203 = vmatpush2.msra.mxu0 %v1885
        %2204 = vmatprep.subr.mxu0 %v1880
        %2205 = vmatpush2.msra.mxu0 %v1879
        %2206 = vmatprep.subr.mxu0 %v1874
        %2207 = vmatpush2.msra.mxu0 %v1873
        %2208 = vmatprep.subr.mxu0 %v1868
        %2209 = vmatpush2.msra.mxu0 %v1867
        %2210 = vmatprep.subr.mxu0 %v1862
        %2211 = vmatpush2.msra.mxu0 %v1861
        %2212 = vmatprep.mubr.f32.mxu0 %v1732
        %2213 = vmatmul.mubr.f32.gmra.mxu0 %v1731
        %v2214 = vpop.f32.mrf.mxu0
        %v2215 = vadd.f32 %v1968, %v2214
        %v2216 = vpop.f32.mrf.mxu0
        %v2217 = vadd.f32 %v1972, %v2216
        %2218 = vmatprep.mubr.f32.mxu0 %v1734
        %2219 = vmatmul.mubr.f32.gmra.mxu0 %v1733
        %v2220 = vpop.f32.mrf.mxu0
        %v2221 = vadd.f32 %v1968, %v2220
        %v2222 = vpop.f32.mrf.mxu0
        %v2223 = vadd.f32 %v1972, %v2222
        %2224 = vmatprep.mubr.f32.mxu0 %v1736
        %2225 = vmatmul.mubr.f32.gmra.mxu0 %v1735
        %v2226 = vpop.f32.mrf.mxu0
        %v2227 = vadd.f32 %v1968, %v2226
        %v2228 = vpop.f32.mrf.mxu0
        %v2229 = vadd.f32 %v1972, %v2228
        %2230 = vmatprep.mubr.f32.mxu0 %v1738
        %2231 = vmatmul.mubr.f32.gmra.mxu0 %v1737
        %v2232 = vpop.f32.mrf.mxu0
        %v2233 = vadd.f32 %v1968, %v2232
        %v2234 = vpop.f32.mrf.mxu0
        %v2235 = vadd.f32 %v1972, %v2234
        %2236 = vmatprep.mubr.f32.mxu0 %v1740
        %2237 = vmatmul.mubr.f32.gmra.mxu0 %v1739
        %v2238 = vpop.f32.mrf.mxu0
        %v2239 = vadd.f32 %v1968, %v2238
        %v2240 = vpop.f32.mrf.mxu0
        %v2241 = vadd.f32 %v1972, %v2240
        %2242 = vmatprep.mubr.f32.mxu0 %v1742
        %2243 = vmatmul.mubr.f32.gmra.mxu0 %v1741
        %v2244 = vpop.f32.mrf.mxu0
        %v2245 = vadd.f32 %v1968, %v2244
        %v2246 = vpop.f32.mrf.mxu0
        %v2247 = vadd.f32 %v1972, %v2246
        %2248 = vmatprep.mubr.f32.mxu0 %v1744
        %2249 = vmatmul.mubr.f32.gmra.mxu0 %v1743
        %v2250 = vpop.f32.mrf.mxu0
        %v2251 = vadd.f32 %v1968, %v2250
        %v2252 = vpop.f32.mrf.mxu0
        %v2253 = vadd.f32 %v1972, %v2252
        %2254 = vmatprep.mubr.f32.mxu0 %v1746
        %2255 = vmatmul.mubr.f32.gmra.mxu0 %v1745
        %v2256 = vpop.f32.mrf.mxu0
        %v2257 = vadd.f32 %v1968, %v2256
        %v2258 = vpop.f32.mrf.mxu0
        %v2259 = vadd.f32 %v1972, %v2258
        %2260 = vmatprep.mubr.f32.mxu0 %v1748
        %2261 = vmatmul.mubr.f32.gmra.mxu0 %v1747
        %v2262 = vpop.f32.mrf.mxu0
        %v2263 = vadd.f32 %v1968, %v2262
        %v2264 = vpop.f32.mrf.mxu0
        %v2265 = vadd.f32 %v1972, %v2264
        %2266 = vmatprep.mubr.f32.mxu0 %v1750
        %2267 = vmatmul.mubr.f32.gmra.mxu0 %v1749
        %v2268 = vpop.f32.mrf.mxu0
        %v2269 = vadd.f32 %v1968, %v2268
        %v2270 = vpop.f32.mrf.mxu0
        %v2271 = vadd.f32 %v1972, %v2270
        %2272 = vmatprep.mubr.f32.mxu0 %v1752
        %2273 = vmatmul.mubr.f32.gmra.mxu0 %v1751
        %v2274 = vpop.f32.mrf.mxu0
        %v2275 = vadd.f32 %v1968, %v2274
        %v2276 = vpop.f32.mrf.mxu0
        %v2277 = vadd.f32 %v1972, %v2276
        %2278 = vmatprep.mubr.f32.mxu0 %v1754
        %2279 = vmatmul.mubr.f32.gmra.mxu0 %v1753
        %v2280 = vpop.f32.mrf.mxu0
        %v2281 = vadd.f32 %v1968, %v2280
        %v2282 = vpop.f32.mrf.mxu0
        %v2283 = vadd.f32 %v1972, %v2282
        %2284 = vmatprep.mubr.f32.mxu0 %v1756
        %2285 = vmatmul.mubr.f32.gmra.mxu0 %v1755
        %v2286 = vpop.f32.mrf.mxu0
        %v2287 = vadd.f32 %v1968, %v2286
        %v2288 = vpop.f32.mrf.mxu0
        %v2289 = vadd.f32 %v1972, %v2288
        %2290 = vmatprep.mubr.f32.mxu0 %v1758
        %2291 = vmatmul.mubr.f32.gmra.mxu0 %v1757
        %v2292 = vpop.f32.mrf.mxu0
        %v2293 = vadd.f32 %v1968, %v2292
        %v2294 = vpop.f32.mrf.mxu0
        %v2295 = vadd.f32 %v1972, %v2294
        %2296 = vmatprep.mubr.f32.mxu0 %v1760
        %2297 = vmatmul.mubr.f32.gmra.mxu0 %v1759
        %v2298 = vpop.f32.mrf.mxu0
        %v2299 = vadd.f32 %v1968, %v2298
        %v2300 = vpop.f32.mrf.mxu0
        %v2301 = vadd.f32 %v1972, %v2300
        %2302 = vmatprep.mubr.f32.mxu0 %v1762
        %2303 = vmatmul.mubr.f32.gmra.mxu0 %v1761
        %v2304 = vpop.f32.mrf.mxu0
        %v2305 = vadd.f32 %v1968, %v2304
        %v2306 = vpop.f32.mrf.mxu0
        %v2307 = vadd.f32 %v1972, %v2306
        %2308 = vdwg.mxu0
        %2309 = vmatprep.subr.mxu0 %v1858
        %2310 = vmatpush1.msra.mxu0 %v1857
        %2311 = vmatprep.subr.mxu0 %v1852
        %2312 = vmatpush1.msra.mxu0 %v1851
        %2313 = vmatprep.subr.mxu0 %v1846
        %2314 = vmatpush1.msra.mxu0 %v1845
        %2315 = vmatprep.subr.mxu0 %v1840
        %2316 = vmatpush1.msra.mxu0 %v1839
        %2317 = vmatprep.subr.mxu0 %v1834
        %2318 = vmatpush1.msra.mxu0 %v1833
        %2319 = vmatprep.subr.mxu0 %v1828
        %2320 = vmatpush1.msra.mxu0 %v1827
        %2321 = vmatprep.subr.mxu0 %v1822
        %2322 = vmatpush1.msra.mxu0 %v1821
        %2323 = vmatprep.subr.mxu0 %v1816
        %2324 = vmatpush1.msra.mxu0 %v1815
        %2325 = vmatprep.subr.mxu0 %v1810
        %2326 = vmatpush1.msra.mxu0 %v1809
        %2327 = vmatprep.subr.mxu0 %v1804
        %2328 = vmatpush1.msra.mxu0 %v1803
        %2329 = vmatprep.subr.mxu0 %v1798
        %2330 = vmatpush1.msra.mxu0 %v1797
        %2331 = vmatprep.subr.mxu0 %v1792
        %2332 = vmatpush1.msra.mxu0 %v1791
        %2333 = vmatprep.subr.mxu0 %v1786
        %2334 = vmatpush1.msra.mxu0 %v1785
        %2335 = vmatprep.subr.mxu0 %v1780
        %2336 = vmatpush1.msra.mxu0 %v1779
        %2337 = vmatprep.subr.mxu0 %v1774
        %2338 = vmatpush1.msra.mxu0 %v1773
        %2339 = vmatprep.subr.mxu0 %v1768
        %2340 = vmatpush1.msra.mxu0 %v1767
        %2341 = vmatprep.subr.mxu0 %v1954
        %2342 = vmatpush2.msra.mxu0 %v1953
        %2343 = vmatprep.subr.mxu0 %v1948
        %2344 = vmatpush2.msra.mxu0 %v1947
        %2345 = vmatprep.subr.mxu0 %v1942
        %2346 = vmatpush2.msra.mxu0 %v1941
        %2347 = vmatprep.subr.mxu0 %v1936
        %2348 = vmatpush2.msra.mxu0 %v1935
        %2349 = vmatprep.subr.mxu0 %v1930
        %2350 = vmatpush2.msra.mxu0 %v1929
        %2351 = vmatprep.subr.mxu0 %v1924
        %2352 = vmatpush2.msra.mxu0 %v1923
        %2353 = vmatprep.subr.mxu0 %v1918
        %2354 = vmatpush2.msra.mxu0 %v1917
        %2355 = vmatprep.subr.mxu0 %v1912
        %2356 = vmatpush2.msra.mxu0 %v1911
        %2357 = vmatprep.subr.mxu0 %v1906
        %2358 = vmatpush2.msra.mxu0 %v1905
        %2359 = vmatprep.subr.mxu0 %v1900
        %2360 = vmatpush2.msra.mxu0 %v1899
        %2361 = vmatprep.subr.mxu0 %v1894
        %2362 = vmatpush2.msra.mxu0 %v1893
        %2363 = vmatprep.subr.mxu0 %v1888
        %2364 = vmatpush2.msra.mxu0 %v1887
        %2365 = vmatprep.subr.mxu0 %v1882
        %2366 = vmatpush2.msra.mxu0 %v1881
        %2367 = vmatprep.subr.mxu0 %v1876
        %2368 = vmatpush2.msra.mxu0 %v1875
        %2369 = vmatprep.subr.mxu0 %v1870
        %2370 = vmatpush2.msra.mxu0 %v1869
        %2371 = vmatprep.subr.mxu0 %v1864
        %2372 = vmatpush2.msra.mxu0 %v1863
        %2373 = vmatprep.mubr.f32.mxu0 %v1732
        %2374 = vmatmul.mubr.f32.gmra.mxu0 %v1731
        %v2375 = vpop.f32.mrf.mxu0
        %v2376 = vadd.f32 %v1976, %v2375
        %v2377 = vpop.f32.mrf.mxu0
        %v2378 = vadd.f32 %v1980, %v2377
        %2379 = vmatprep.mubr.f32.mxu0 %v1734
        %2380 = vmatmul.mubr.f32.gmra.mxu0 %v1733
        %v2381 = vpop.f32.mrf.mxu0
        %v2382 = vadd.f32 %v1976, %v2381
        %v2383 = vpop.f32.mrf.mxu0
        %v2384 = vadd.f32 %v1980, %v2383
        %2385 = vmatprep.mubr.f32.mxu0 %v1736
        %2386 = vmatmul.mubr.f32.gmra.mxu0 %v1735
        %v2387 = vpop.f32.mrf.mxu0
        %v2388 = vadd.f32 %v1976, %v2387
        %v2389 = vpop.f32.mrf.mxu0
        %v2390 = vadd.f32 %v1980, %v2389
        %2391 = vmatprep.mubr.f32.mxu0 %v1738
        %2392 = vmatmul.mubr.f32.gmra.mxu0 %v1737
        %v2393 = vpop.f32.mrf.mxu0
        %v2394 = vadd.f32 %v1976, %v2393
        %v2395 = vpop.f32.mrf.mxu0
        %v2396 = vadd.f32 %v1980, %v2395
        %2397 = vmatprep.mubr.f32.mxu0 %v1740
        %2398 = vmatmul.mubr.f32.gmra.mxu0 %v1739
        %v2399 = vpop.f32.mrf.mxu0
        %v2400 = vadd.f32 %v1976, %v2399
        %v2401 = vpop.f32.mrf.mxu0
        %v2402 = vadd.f32 %v1980, %v2401
        %2403 = vmatprep.mubr.f32.mxu0 %v1742
        %2404 = vmatmul.mubr.f32.gmra.mxu0 %v1741
        %v2405 = vpop.f32.mrf.mxu0
        %v2406 = vadd.f32 %v1976, %v2405
        %v2407 = vpop.f32.mrf.mxu0
        %v2408 = vadd.f32 %v1980, %v2407
        %2409 = vmatprep.mubr.f32.mxu0 %v1744
        %2410 = vmatmul.mubr.f32.gmra.mxu0 %v1743
        %v2411 = vpop.f32.mrf.mxu0
        %v2412 = vadd.f32 %v1976, %v2411
        %v2413 = vpop.f32.mrf.mxu0
        %v2414 = vadd.f32 %v1980, %v2413
        %2415 = vmatprep.mubr.f32.mxu0 %v1746
        %2416 = vmatmul.mubr.f32.gmra.mxu0 %v1745
        %v2417 = vpop.f32.mrf.mxu0
        %v2418 = vadd.f32 %v1976, %v2417
        %v2419 = vpop.f32.mrf.mxu0
        %v2420 = vadd.f32 %v1980, %v2419
        %2421 = vmatprep.mubr.f32.mxu0 %v1748
        %2422 = vmatmul.mubr.f32.gmra.mxu0 %v1747
        %v2423 = vpop.f32.mrf.mxu0
        %v2424 = vadd.f32 %v1976, %v2423
        %v2425 = vpop.f32.mrf.mxu0
        %v2426 = vadd.f32 %v1980, %v2425
        %2427 = vmatprep.mubr.f32.mxu0 %v1750
        %2428 = vmatmul.mubr.f32.gmra.mxu0 %v1749
        %v2429 = vpop.f32.mrf.mxu0
        %v2430 = vadd.f32 %v1976, %v2429
        %v2431 = vpop.f32.mrf.mxu0
        %v2432 = vadd.f32 %v1980, %v2431
        %2433 = vmatprep.mubr.f32.mxu0 %v1752
        %2434 = vmatmul.mubr.f32.gmra.mxu0 %v1751
        %v2435 = vpop.f32.mrf.mxu0
        %v2436 = vadd.f32 %v1976, %v2435
        %v2437 = vpop.f32.mrf.mxu0
        %v2438 = vadd.f32 %v1980, %v2437
        %2439 = vmatprep.mubr.f32.mxu0 %v1754
        %2440 = vmatmul.mubr.f32.gmra.mxu0 %v1753
        %v2441 = vpop.f32.mrf.mxu0
        %v2442 = vadd.f32 %v1976, %v2441
        %v2443 = vpop.f32.mrf.mxu0
        %v2444 = vadd.f32 %v1980, %v2443
        %2445 = vmatprep.mubr.f32.mxu0 %v1756
        %2446 = vmatmul.mubr.f32.gmra.mxu0 %v1755
        %v2447 = vpop.f32.mrf.mxu0
        %v2448 = vadd.f32 %v1976, %v2447
        %v2449 = vpop.f32.mrf.mxu0
        %v2450 = vadd.f32 %v1980, %v2449
        %2451 = vmatprep.mubr.f32.mxu0 %v1758
        %2452 = vmatmul.mubr.f32.gmra.mxu0 %v1757
        %v2453 = vpop.f32.mrf.mxu0
        %v2454 = vadd.f32 %v1976, %v2453
        %v2455 = vpop.f32.mrf.mxu0
        %v2456 = vadd.f32 %v1980, %v2455
        %2457 = vmatprep.mubr.f32.mxu0 %v1760
        %2458 = vmatmul.mubr.f32.gmra.mxu0 %v1759
        %v2459 = vpop.f32.mrf.mxu0
        %v2460 = vadd.f32 %v1976, %v2459
        %v2461 = vpop.f32.mrf.mxu0
        %v2462 = vadd.f32 %v1980, %v2461
        %2463 = vmatprep.mubr.f32.mxu0 %v1762
        %2464 = vmatmul.mubr.f32.gmra.mxu0 %v1761
        %v2465 = vpop.f32.mrf.mxu0
        %v2466 = vadd.f32 %v1976, %v2465
        %v2467 = vpop.f32.mrf.mxu0
        %v2468 = vadd.f32 %v1980, %v2467
        %2469 = vdwg.mxu0
        %v2470 = vmul.f32 %v2054, 1.442695
        %v2471 = vpow.pop %v2470
        %v2472 = vmul.f32 %v2056, 1.442695
        %v2473 = vpow.pop %v2472
        %v2474 = vmul.f32 %v2060, 1.442695
        %v2475 = vpow.pop %v2474
        %v2476 = vmul.f32 %v2062, 1.442695
        %v2477 = vpow.pop %v2476
        %v2478 = vmul.f32 %v2066, 1.442695
        %v2479 = vpow.pop %v2478
        %v2480 = vmul.f32 %v2068, 1.442695
        %v2481 = vpow.pop %v2480
        %v2482 = vmul.f32 %v2072, 1.442695
        %v2483 = vpow.pop %v2482
        %v2484 = vmul.f32 %v2074, 1.442695
        %v2485 = vpow.pop %v2484
        %v2486 = vmul.f32 %v2078, 1.442695
        %v2487 = vpow.pop %v2486
        %v2488 = vmul.f32 %v2080, 1.442695
        %v2489 = vpow.pop %v2488
        %v2490 = vmul.f32 %v2084, 1.442695
        %v2491 = vpow.pop %v2490
        %v2492 = vmul.f32 %v2086, 1.442695
        %v2493 = vpow.pop %v2492
        %v2494 = vmul.f32 %v2090, 1.442695
        %v2495 = vpow.pop %v2494
        %v2496 = vmul.f32 %v2092, 1.442695
        %v2497 = vpow.pop %v2496
        %v2498 = vmul.f32 %v2096, 1.442695
        %v2499 = vpow.pop %v2498
        %v2500 = vmul.f32 %v2098, 1.442695
        %v2501 = vpow.pop %v2500
        %v2502 = vmul.f32 %v2102, 1.442695
        %v2503 = vpow.pop %v2502
        %v2504 = vmul.f32 %v2104, 1.442695
        %v2505 = vpow.pop %v2504
        %v2506 = vmul.f32 %v2108, 1.442695
        %v2507 = vpow.pop %v2506
        %v2508 = vmul.f32 %v2110, 1.442695
        %v2509 = vpow.pop %v2508
        %v2510 = vmul.f32 %v2114, 1.442695
        %v2511 = vpow.pop %v2510
        %v2512 = vmul.f32 %v2116, 1.442695
        %v2513 = vpow.pop %v2512
        %v2514 = vmul.f32 %v2120, 1.442695
        %v2515 = vpow.pop %v2514
        %v2516 = vmul.f32 %v2122, 1.442695
        %v2517 = vpow.pop %v2516
        %v2518 = vmul.f32 %v2126, 1.442695
        %v2519 = vpow.pop %v2518
        %v2520 = vmul.f32 %v2128, 1.442695
        %v2521 = vpow.pop %v2520
        %v2522 = vmul.f32 %v2132, 1.442695
        %v2523 = vpow.pop %v2522
        %v2524 = vmul.f32 %v2134, 1.442695
        %v2525 = vpow.pop %v2524
        %v2526 = vmul.f32 %v2138, 1.442695
        %v2527 = vpow.pop %v2526
        %v2528 = vmul.f32 %v2140, 1.442695
        %v2529 = vpow.pop %v2528
        %v2530 = vmul.f32 %v2144, 1.442695
        %v2531 = vpow.pop %v2530
        %v2532 = vmul.f32 %v2146, 1.442695
        %v2533 = vpow.pop %v2532
        %v2534 = vmax.f32 %v2471, 1e-05
        %v2535 = vmax.f32 %v2473, 1e-05
        %v2536 = vmax.f32 %v2475, 1e-05
        %v2537 = vmax.f32 %v2477, 1e-05
        %v2538 = vmax.f32 %v2479, 1e-05
        %v2539 = vmax.f32 %v2481, 1e-05
        %v2540 = vmax.f32 %v2483, 1e-05
        %v2541 = vmax.f32 %v2485, 1e-05
        %v2542 = vmax.f32 %v2487, 1e-05
        %v2543 = vmax.f32 %v2489, 1e-05
        %v2544 = vmax.f32 %v2491, 1e-05
        %v2545 = vmax.f32 %v2493, 1e-05
        %v2546 = vmax.f32 %v2495, 1e-05
        %v2547 = vmax.f32 %v2497, 1e-05
        %v2548 = vmax.f32 %v2499, 1e-05
        %v2549 = vmax.f32 %v2501, 1e-05
        %v2550 = vmax.f32 %v2503, 1e-05
        %v2551 = vmax.f32 %v2505, 1e-05
        %v2552 = vmax.f32 %v2507, 1e-05
        %v2553 = vmax.f32 %v2509, 1e-05
        %v2554 = vmax.f32 %v2511, 1e-05
        %v2555 = vmax.f32 %v2513, 1e-05
        %v2556 = vmax.f32 %v2515, 1e-05
        %v2557 = vmax.f32 %v2517, 1e-05
        %v2558 = vmax.f32 %v2519, 1e-05
        %v2559 = vmax.f32 %v2521, 1e-05
        %v2560 = vmax.f32 %v2523, 1e-05
        %v2561 = vmax.f32 %v2525, 1e-05
        %v2562 = vmax.f32 %v2527, 1e-05
        %v2563 = vmax.f32 %v2529, 1e-05
        %v2564 = vmax.f32 %v2531, 1e-05
        %v2565 = vmax.f32 %v2533, 1e-05
        %v2566 = vmin.f32 %v2534, 1000000.0
        %v2567 = vmin.f32 %v2535, 1000000.0
        %v2568 = vmin.f32 %v2536, 1000000.0
        %v2569 = vmin.f32 %v2537, 1000000.0
        %v2570 = vmin.f32 %v2538, 1000000.0
        %v2571 = vmin.f32 %v2539, 1000000.0
        %v2572 = vmin.f32 %v2540, 1000000.0
        %v2573 = vmin.f32 %v2541, 1000000.0
        %v2574 = vmin.f32 %v2542, 1000000.0
        %v2575 = vmin.f32 %v2543, 1000000.0
        %v2576 = vmin.f32 %v2544, 1000000.0
        %v2577 = vmin.f32 %v2545, 1000000.0
        %v2578 = vmin.f32 %v2546, 1000000.0
        %v2579 = vmin.f32 %v2547, 1000000.0
        %v2580 = vmin.f32 %v2548, 1000000.0
        %v2581 = vmin.f32 %v2549, 1000000.0
        %v2582 = vmin.f32 %v2550, 1000000.0
        %v2583 = vmin.f32 %v2551, 1000000.0
        %v2584 = vmin.f32 %v2552, 1000000.0
        %v2585 = vmin.f32 %v2553, 1000000.0
        %v2586 = vmin.f32 %v2554, 1000000.0
        %v2587 = vmin.f32 %v2555, 1000000.0
        %v2588 = vmin.f32 %v2556, 1000000.0
        %v2589 = vmin.f32 %v2557, 1000000.0
        %v2590 = vmin.f32 %v2558, 1000000.0
        %v2591 = vmin.f32 %v2559, 1000000.0
        %v2592 = vmin.f32 %v2560, 1000000.0
        %v2593 = vmin.f32 %v2561, 1000000.0
        %v2594 = vmin.f32 %v2562, 1000000.0
        %v2595 = vmin.f32 %v2563, 1000000.0
        %v2596 = vmin.f32 %v2564, 1000000.0
        %v2597 = vmin.f32 %v2565, 1000000.0
        %v2598 = vmax.f32 %v2215, 0.0
        %v2599 = vmax.f32 %v2217, 0.0
        %v2600 = vmax.f32 %v2221, 0.0
        %v2601 = vmax.f32 %v2223, 0.0
        %v2602 = vmax.f32 %v2227, 0.0
        %v2603 = vmax.f32 %v2229, 0.0
        %v2604 = vmax.f32 %v2233, 0.0
        %v2605 = vmax.f32 %v2235, 0.0
        %v2606 = vmax.f32 %v2239, 0.0
        %v2607 = vmax.f32 %v2241, 0.0
        %v2608 = vmax.f32 %v2245, 0.0
        %v2609 = vmax.f32 %v2247, 0.0
        %v2610 = vmax.f32 %v2251, 0.0
        %v2611 = vmax.f32 %v2253, 0.0
        %v2612 = vmax.f32 %v2257, 0.0
        %v2613 = vmax.f32 %v2259, 0.0
        %v2614 = vmax.f32 %v2263, 0.0
        %v2615 = vmax.f32 %v2265, 0.0
        %v2616 = vmax.f32 %v2269, 0.0
        %v2617 = vmax.f32 %v2271, 0.0
        %v2618 = vmax.f32 %v2275, 0.0
        %v2619 = vmax.f32 %v2277, 0.0
        %v2620 = vmax.f32 %v2281, 0.0
        %v2621 = vmax.f32 %v2283, 0.0
        %v2622 = vmax.f32 %v2287, 0.0
        %v2623 = vmax.f32 %v2289, 0.0
        %v2624 = vmax.f32 %v2293, 0.0
        %v2625 = vmax.f32 %v2295, 0.0
        %v2626 = vmax.f32 %v2299, 0.0
        %v2627 = vmax.f32 %v2301, 0.0
        %v2628 = vmax.f32 %v2305, 0.0
        %v2629 = vmax.f32 %v2307, 0.0
        %v2630 = vand.u32 2147483647, %v2215
        %v2631 = vand.u32 2147483647, %v2217
        %v2632 = vand.u32 2147483647, %v2221
        %v2633 = vand.u32 2147483647, %v2223
        %v2634 = vand.u32 2147483647, %v2227
        %v2635 = vand.u32 2147483647, %v2229
        %v2636 = vand.u32 2147483647, %v2233
        %v2637 = vand.u32 2147483647, %v2235
        %v2638 = vand.u32 2147483647, %v2239
        %v2639 = vand.u32 2147483647, %v2241
        %v2640 = vand.u32 2147483647, %v2245
        %v2641 = vand.u32 2147483647, %v2247
        %v2642 = vand.u32 2147483647, %v2251
        %v2643 = vand.u32 2147483647, %v2253
        %v2644 = vand.u32 2147483647, %v2257
        %v2645 = vand.u32 2147483647, %v2259
        %v2646 = vand.u32 2147483647, %v2263
        %v2647 = vand.u32 2147483647, %v2265
        %v2648 = vand.u32 2147483647, %v2269
        %v2649 = vand.u32 2147483647, %v2271
        %v2650 = vand.u32 2147483647, %v2275
        %v2651 = vand.u32 2147483647, %v2277
        %v2652 = vand.u32 2147483647, %v2281
        %v2653 = vand.u32 2147483647, %v2283
        %v2654 = vand.u32 2147483647, %v2287
        %v2655 = vand.u32 2147483647, %v2289
        %v2656 = vand.u32 2147483647, %v2293
        %v2657 = vand.u32 2147483647, %v2295
        %v2658 = vand.u32 2147483647, %v2299
        %v2659 = vand.u32 2147483647, %v2301
        %v2660 = vand.u32 2147483647, %v2305
        %v2661 = vand.u32 2147483647, %v2307
        %v2662 = vsub.f32 0.0, %v2630
        %v2663 = vsub.f32 0.0, %v2631
        %v2664 = vsub.f32 0.0, %v2632
        %v2665 = vsub.f32 0.0, %v2633
        %v2666 = vsub.f32 0.0, %v2634
        %v2667 = vsub.f32 0.0, %v2635
        %v2668 = vsub.f32 0.0, %v2636
        %v2669 = vsub.f32 0.0, %v2637
        %v2670 = vsub.f32 0.0, %v2638
        %v2671 = vsub.f32 0.0, %v2639
        %v2672 = vsub.f32 0.0, %v2640
        %v2673 = vsub.f32 0.0, %v2641
        %v2674 = vsub.f32 0.0, %v2642
        %v2675 = vsub.f32 0.0, %v2643
        %v2676 = vsub.f32 0.0, %v2644
        %v2677 = vsub.f32 0.0, %v2645
        %v2678 = vsub.f32 0.0, %v2646
        %v2679 = vsub.f32 0.0, %v2647
        %v2680 = vsub.f32 0.0, %v2648
        %v2681 = vsub.f32 0.0, %v2649
        %v2682 = vsub.f32 0.0, %v2650
        %v2683 = vsub.f32 0.0, %v2651
        %v2684 = vsub.f32 0.0, %v2652
        %v2685 = vsub.f32 0.0, %v2653
        %v2686 = vsub.f32 0.0, %v2654
        %v2687 = vsub.f32 0.0, %v2655
        %v2688 = vsub.f32 0.0, %v2656
        %v2689 = vsub.f32 0.0, %v2657
        %v2690 = vsub.f32 0.0, %v2658
        %v2691 = vsub.f32 0.0, %v2659
        %v2692 = vsub.f32 0.0, %v2660
        %v2693 = vsub.f32 0.0, %v2661
        %v2694 = vmul.f32 %v2662, 1.442695
        %v2695 = vpow.pop %v2694
        %v2696 = vmul.f32 %v2663, 1.442695
        %v2697 = vpow.pop %v2696
        %v2698 = vmul.f32 %v2664, 1.442695
        %v2699 = vpow.pop %v2698
        %v2700 = vmul.f32 %v2665, 1.442695
        %v2701 = vpow.pop %v2700
        %v2702 = vmul.f32 %v2666, 1.442695
        %v2703 = vpow.pop %v2702
        %v2704 = vmul.f32 %v2667, 1.442695
        %v2705 = vpow.pop %v2704
        %v2706 = vmul.f32 %v2668, 1.442695
        %v2707 = vpow.pop %v2706
        %v2708 = vmul.f32 %v2669, 1.442695
        %v2709 = vpow.pop %v2708
        %v2710 = vmul.f32 %v2670, 1.442695
        %v2711 = vpow.pop %v2710
        %v2712 = vmul.f32 %v2671, 1.442695
        %v2713 = vpow.pop %v2712
        %v2714 = vmul.f32 %v2672, 1.442695
        %v2715 = vpow.pop %v2714
        %v2716 = vmul.f32 %v2673, 1.442695
        %v2717 = vpow.pop %v2716
        %v2718 = vmul.f32 %v2674, 1.442695
        %v2719 = vpow.pop %v2718
        %v2720 = vmul.f32 %v2675, 1.442695
        %v2721 = vpow.pop %v2720
        %v2722 = vmul.f32 %v2676, 1.442695
        %v2723 = vpow.pop %v2722
        %v2724 = vmul.f32 %v2677, 1.442695
        %v2725 = vpow.pop %v2724
        %v2726 = vmul.f32 %v2678, 1.442695
        %v2727 = vpow.pop %v2726
        %v2728 = vmul.f32 %v2679, 1.442695
        %v2729 = vpow.pop %v2728
        %v2730 = vmul.f32 %v2680, 1.442695
        %v2731 = vpow.pop %v2730
        %v2732 = vmul.f32 %v2681, 1.442695
        %v2733 = vpow.pop %v2732
        %v2734 = vmul.f32 %v2682, 1.442695
        %v2735 = vpow.pop %v2734
        %v2736 = vmul.f32 %v2683, 1.442695
        %v2737 = vpow.pop %v2736
        %v2738 = vmul.f32 %v2684, 1.442695
        %v2739 = vpow.pop %v2738
        %v2740 = vmul.f32 %v2685, 1.442695
        %v2741 = vpow.pop %v2740
        %v2742 = vmul.f32 %v2686, 1.442695
        %v2743 = vpow.pop %v2742
        %v2744 = vmul.f32 %v2687, 1.442695
        %v2745 = vpow.pop %v2744
        %v2746 = vmul.f32 %v2688, 1.442695
        %v2747 = vpow.pop %v2746
        %v2748 = vmul.f32 %v2689, 1.442695
        %v2749 = vpow.pop %v2748
        %v2750 = vmul.f32 %v2690, 1.442695
        %v2751 = vpow.pop %v2750
        %v2752 = vmul.f32 %v2691, 1.442695
        %v2753 = vpow.pop %v2752
        %v2754 = vmul.f32 %v2692, 1.442695
        %v2755 = vpow.pop %v2754
        %v2756 = vmul.f32 %v2693, 1.442695
        %v2757 = vpow.pop %v2756
        %v2758 = vadd.f32 %v2695, 1.0
        %v2759 = vlog2.pop %v2758
        %v2760 = vmul.f32 %v2759, 0.6931472
        %v2761 = vmul.f32 -0.5, %v2695
        %v2762 = vadd.f32 %v2761, 1.0
        %v2763 = vmul.f32 %v2762, %v2695
        %v2764 = vand.u32 2147483647, %v2695
        %vm2765 = vcmp.lt.f32.partialorder %v2764, 0.0004427343
        %v2766 = vsel %vm2765, %v2763, %v2760
        %v2767 = vadd.f32 %v2697, 1.0
        %v2768 = vlog2.pop %v2767
        %v2769 = vmul.f32 %v2768, 0.6931472
        %v2770 = vmul.f32 -0.5, %v2697
        %v2771 = vadd.f32 %v2770, 1.0
        %v2772 = vmul.f32 %v2771, %v2697
        %v2773 = vand.u32 2147483647, %v2697
        %vm2774 = vcmp.lt.f32.partialorder %v2773, 0.0004427343
        %v2775 = vsel %vm2774, %v2772, %v2769
        %v2776 = vadd.f32 %v2699, 1.0
        %v2777 = vlog2.pop %v2776
        %v2778 = vmul.f32 %v2777, 0.6931472
        %v2779 = vmul.f32 -0.5, %v2699
        %v2780 = vadd.f32 %v2779, 1.0
        %v2781 = vmul.f32 %v2780, %v2699
        %v2782 = vand.u32 2147483647, %v2699
        %vm2783 = vcmp.lt.f32.partialorder %v2782, 0.0004427343
        %v2784 = vsel %vm2783, %v2781, %v2778
        %v2785 = vadd.f32 %v2701, 1.0
        %v2786 = vlog2.pop %v2785
        %v2787 = vmul.f32 %v2786, 0.6931472
        %v2788 = vmul.f32 -0.5, %v2701
        %v2789 = vadd.f32 %v2788, 1.0
        %v2790 = vmul.f32 %v2789, %v2701
        %v2791 = vand.u32 2147483647, %v2701
        %vm2792 = vcmp.lt.f32.partialorder %v2791, 0.0004427343
        %v2793 = vsel %vm2792, %v2790, %v2787
        %v2794 = vadd.f32 %v2703, 1.0
        %v2795 = vlog2.pop %v2794
        %v2796 = vmul.f32 %v2795, 0.6931472
        %v2797 = vmul.f32 -0.5, %v2703
        %v2798 = vadd.f32 %v2797, 1.0
        %v2799 = vmul.f32 %v2798, %v2703
        %v2800 = vand.u32 2147483647, %v2703
        %vm2801 = vcmp.lt.f32.partialorder %v2800, 0.0004427343
        %v2802 = vsel %vm2801, %v2799, %v2796
        %v2803 = vadd.f32 %v2705, 1.0
        %v2804 = vlog2.pop %v2803
        %v2805 = vmul.f32 %v2804, 0.6931472
        %v2806 = vmul.f32 -0.5, %v2705
        %v2807 = vadd.f32 %v2806, 1.0
        %v2808 = vmul.f32 %v2807, %v2705
        %v2809 = vand.u32 2147483647, %v2705
        %vm2810 = vcmp.lt.f32.partialorder %v2809, 0.0004427343
        %v2811 = vsel %vm2810, %v2808, %v2805
        %v2812 = vadd.f32 %v2707, 1.0
        %v2813 = vlog2.pop %v2812
        %v2814 = vmul.f32 %v2813, 0.6931472
        %v2815 = vmul.f32 -0.5, %v2707
        %v2816 = vadd.f32 %v2815, 1.0
        %v2817 = vmul.f32 %v2816, %v2707
        %v2818 = vand.u32 2147483647, %v2707
        %vm2819 = vcmp.lt.f32.partialorder %v2818, 0.0004427343
        %v2820 = vsel %vm2819, %v2817, %v2814
        %v2821 = vadd.f32 %v2709, 1.0
        %v2822 = vlog2.pop %v2821
        %v2823 = vmul.f32 %v2822, 0.6931472
        %v2824 = vmul.f32 -0.5, %v2709
        %v2825 = vadd.f32 %v2824, 1.0
        %v2826 = vmul.f32 %v2825, %v2709
        %v2827 = vand.u32 2147483647, %v2709
        %vm2828 = vcmp.lt.f32.partialorder %v2827, 0.0004427343
        %v2829 = vsel %vm2828, %v2826, %v2823
        %v2830 = vadd.f32 %v2711, 1.0
        %v2831 = vlog2.pop %v2830
        %v2832 = vmul.f32 %v2831, 0.6931472
        %v2833 = vmul.f32 -0.5, %v2711
        %v2834 = vadd.f32 %v2833, 1.0
        %v2835 = vmul.f32 %v2834, %v2711
        %v2836 = vand.u32 2147483647, %v2711
        %vm2837 = vcmp.lt.f32.partialorder %v2836, 0.0004427343
        %v2838 = vsel %vm2837, %v2835, %v2832
        %v2839 = vadd.f32 %v2713, 1.0
        %v2840 = vlog2.pop %v2839
        %v2841 = vmul.f32 %v2840, 0.6931472
        %v2842 = vmul.f32 -0.5, %v2713
        %v2843 = vadd.f32 %v2842, 1.0
        %v2844 = vmul.f32 %v2843, %v2713
        %v2845 = vand.u32 2147483647, %v2713
        %vm2846 = vcmp.lt.f32.partialorder %v2845, 0.0004427343
        %v2847 = vsel %vm2846, %v2844, %v2841
        %v2848 = vadd.f32 %v2715, 1.0
        %v2849 = vlog2.pop %v2848
        %v2850 = vmul.f32 %v2849, 0.6931472
        %v2851 = vmul.f32 -0.5, %v2715
        %v2852 = vadd.f32 %v2851, 1.0
        %v2853 = vmul.f32 %v2852, %v2715
        %v2854 = vand.u32 2147483647, %v2715
        %vm2855 = vcmp.lt.f32.partialorder %v2854, 0.0004427343
        %v2856 = vsel %vm2855, %v2853, %v2850
        %v2857 = vadd.f32 %v2717, 1.0
        %v2858 = vlog2.pop %v2857
        %v2859 = vmul.f32 %v2858, 0.6931472
        %v2860 = vmul.f32 -0.5, %v2717
        %v2861 = vadd.f32 %v2860, 1.0
        %v2862 = vmul.f32 %v2861, %v2717
        %v2863 = vand.u32 2147483647, %v2717
        %vm2864 = vcmp.lt.f32.partialorder %v2863, 0.0004427343
        %v2865 = vsel %vm2864, %v2862, %v2859
        %v2866 = vadd.f32 %v2719, 1.0
        %v2867 = vlog2.pop %v2866
        %v2868 = vmul.f32 %v2867, 0.6931472
        %v2869 = vmul.f32 -0.5, %v2719
        %v2870 = vadd.f32 %v2869, 1.0
        %v2871 = vmul.f32 %v2870, %v2719
        %v2872 = vand.u32 2147483647, %v2719
        %vm2873 = vcmp.lt.f32.partialorder %v2872, 0.0004427343
        %v2874 = vsel %vm2873, %v2871, %v2868
        %v2875 = vadd.f32 %v2721, 1.0
        %v2876 = vlog2.pop %v2875
        %v2877 = vmul.f32 %v2876, 0.6931472
        %v2878 = vmul.f32 -0.5, %v2721
        %v2879 = vadd.f32 %v2878, 1.0
        %v2880 = vmul.f32 %v2879, %v2721
        %v2881 = vand.u32 2147483647, %v2721
        %vm2882 = vcmp.lt.f32.partialorder %v2881, 0.0004427343
        %v2883 = vsel %vm2882, %v2880, %v2877
        %v2884 = vadd.f32 %v2723, 1.0
        %v2885 = vlog2.pop %v2884
        %v2886 = vmul.f32 %v2885, 0.6931472
        %v2887 = vmul.f32 -0.5, %v2723
        %v2888 = vadd.f32 %v2887, 1.0
        %v2889 = vmul.f32 %v2888, %v2723
        %v2890 = vand.u32 2147483647, %v2723
        %vm2891 = vcmp.lt.f32.partialorder %v2890, 0.0004427343
        %v2892 = vsel %vm2891, %v2889, %v2886
        %v2893 = vadd.f32 %v2725, 1.0
        %v2894 = vlog2.pop %v2893
        %v2895 = vmul.f32 %v2894, 0.6931472
        %v2896 = vmul.f32 -0.5, %v2725
        %v2897 = vadd.f32 %v2896, 1.0
        %v2898 = vmul.f32 %v2897, %v2725
        %v2899 = vand.u32 2147483647, %v2725
        %vm2900 = vcmp.lt.f32.partialorder %v2899, 0.0004427343
        %v2901 = vsel %vm2900, %v2898, %v2895
        %v2902 = vadd.f32 %v2727, 1.0
        %v2903 = vlog2.pop %v2902
        %v2904 = vmul.f32 %v2903, 0.6931472
        %v2905 = vmul.f32 -0.5, %v2727
        %v2906 = vadd.f32 %v2905, 1.0
        %v2907 = vmul.f32 %v2906, %v2727
        %v2908 = vand.u32 2147483647, %v2727
        %vm2909 = vcmp.lt.f32.partialorder %v2908, 0.0004427343
        %v2910 = vsel %vm2909, %v2907, %v2904
        %v2911 = vadd.f32 %v2729, 1.0
        %v2912 = vlog2.pop %v2911
        %v2913 = vmul.f32 %v2912, 0.6931472
        %v2914 = vmul.f32 -0.5, %v2729
        %v2915 = vadd.f32 %v2914, 1.0
        %v2916 = vmul.f32 %v2915, %v2729
        %v2917 = vand.u32 2147483647, %v2729
        %vm2918 = vcmp.lt.f32.partialorder %v2917, 0.0004427343
        %v2919 = vsel %vm2918, %v2916, %v2913
        %v2920 = vadd.f32 %v2731, 1.0
        %v2921 = vlog2.pop %v2920
        %v2922 = vmul.f32 %v2921, 0.6931472
        %v2923 = vmul.f32 -0.5, %v2731
        %v2924 = vadd.f32 %v2923, 1.0
        %v2925 = vmul.f32 %v2924, %v2731
        %v2926 = vand.u32 2147483647, %v2731
        %vm2927 = vcmp.lt.f32.partialorder %v2926, 0.0004427343
        %v2928 = vsel %vm2927, %v2925, %v2922
        %v2929 = vadd.f32 %v2733, 1.0
        %v2930 = vlog2.pop %v2929
        %v2931 = vmul.f32 %v2930, 0.6931472
        %v2932 = vmul.f32 -0.5, %v2733
        %v2933 = vadd.f32 %v2932, 1.0
        %v2934 = vmul.f32 %v2933, %v2733
        %v2935 = vand.u32 2147483647, %v2733
        %vm2936 = vcmp.lt.f32.partialorder %v2935, 0.0004427343
        %v2937 = vsel %vm2936, %v2934, %v2931
        %v2938 = vadd.f32 %v2735, 1.0
        %v2939 = vlog2.pop %v2938
        %v2940 = vmul.f32 %v2939, 0.6931472
        %v2941 = vmul.f32 -0.5, %v2735
        %v2942 = vadd.f32 %v2941, 1.0
        %v2943 = vmul.f32 %v2942, %v2735
        %v2944 = vand.u32 2147483647, %v2735
        %vm2945 = vcmp.lt.f32.partialorder %v2944, 0.0004427343
        %v2946 = vsel %vm2945, %v2943, %v2940
        %v2947 = vadd.f32 %v2737, 1.0
        %v2948 = vlog2.pop %v2947
        %v2949 = vmul.f32 %v2948, 0.6931472
        %v2950 = vmul.f32 -0.5, %v2737
        %v2951 = vadd.f32 %v2950, 1.0
        %v2952 = vmul.f32 %v2951, %v2737
        %v2953 = vand.u32 2147483647, %v2737
        %vm2954 = vcmp.lt.f32.partialorder %v2953, 0.0004427343
        %v2955 = vsel %vm2954, %v2952, %v2949
        %v2956 = vadd.f32 %v2739, 1.0
        %v2957 = vlog2.pop %v2956
        %v2958 = vmul.f32 %v2957, 0.6931472
        %v2959 = vmul.f32 -0.5, %v2739
        %v2960 = vadd.f32 %v2959, 1.0
        %v2961 = vmul.f32 %v2960, %v2739
        %v2962 = vand.u32 2147483647, %v2739
        %vm2963 = vcmp.lt.f32.partialorder %v2962, 0.0004427343
        %v2964 = vsel %vm2963, %v2961, %v2958
        %v2965 = vadd.f32 %v2741, 1.0
        %v2966 = vlog2.pop %v2965
        %v2967 = vmul.f32 %v2966, 0.6931472
        %v2968 = vmul.f32 -0.5, %v2741
        %v2969 = vadd.f32 %v2968, 1.0
        %v2970 = vmul.f32 %v2969, %v2741
        %v2971 = vand.u32 2147483647, %v2741
        %vm2972 = vcmp.lt.f32.partialorder %v2971, 0.0004427343
        %v2973 = vsel %vm2972, %v2970, %v2967
        %v2974 = vadd.f32 %v2743, 1.0
        %v2975 = vlog2.pop %v2974
        %v2976 = vmul.f32 %v2975, 0.6931472
        %v2977 = vmul.f32 -0.5, %v2743
        %v2978 = vadd.f32 %v2977, 1.0
        %v2979 = vmul.f32 %v2978, %v2743
        %v2980 = vand.u32 2147483647, %v2743
        %vm2981 = vcmp.lt.f32.partialorder %v2980, 0.0004427343
        %v2982 = vsel %vm2981, %v2979, %v2976
        %v2983 = vadd.f32 %v2745, 1.0
        %v2984 = vlog2.pop %v2983
        %v2985 = vmul.f32 %v2984, 0.6931472
        %v2986 = vmul.f32 -0.5, %v2745
        %v2987 = vadd.f32 %v2986, 1.0
        %v2988 = vmul.f32 %v2987, %v2745
        %v2989 = vand.u32 2147483647, %v2745
        %vm2990 = vcmp.lt.f32.partialorder %v2989, 0.0004427343
        %v2991 = vsel %vm2990, %v2988, %v2985
        %v2992 = vadd.f32 %v2747, 1.0
        %v2993 = vlog2.pop %v2992
        %v2994 = vmul.f32 %v2993, 0.6931472
        %v2995 = vmul.f32 -0.5, %v2747
        %v2996 = vadd.f32 %v2995, 1.0
        %v2997 = vmul.f32 %v2996, %v2747
        %v2998 = vand.u32 2147483647, %v2747
        %vm2999 = vcmp.lt.f32.partialorder %v2998, 0.0004427343
        %v3000 = vsel %vm2999, %v2997, %v2994
        %v3001 = vadd.f32 %v2749, 1.0
        %v3002 = vlog2.pop %v3001
        %v3003 = vmul.f32 %v3002, 0.6931472
        %v3004 = vmul.f32 -0.5, %v2749
        %v3005 = vadd.f32 %v3004, 1.0
        %v3006 = vmul.f32 %v3005, %v2749
        %v3007 = vand.u32 2147483647, %v2749
        %vm3008 = vcmp.lt.f32.partialorder %v3007, 0.0004427343
        %v3009 = vsel %vm3008, %v3006, %v3003
        %v3010 = vadd.f32 %v2751, 1.0
        %v3011 = vlog2.pop %v3010
        %v3012 = vmul.f32 %v3011, 0.6931472
        %v3013 = vmul.f32 -0.5, %v2751
        %v3014 = vadd.f32 %v3013, 1.0
        %v3015 = vmul.f32 %v3014, %v2751
        %v3016 = vand.u32 2147483647, %v2751
        %vm3017 = vcmp.lt.f32.partialorder %v3016, 0.0004427343
        %v3018 = vsel %vm3017, %v3015, %v3012
        %v3019 = vadd.f32 %v2753, 1.0
        %v3020 = vlog2.pop %v3019
        %v3021 = vmul.f32 %v3020, 0.6931472
        %v3022 = vmul.f32 -0.5, %v2753
        %v3023 = vadd.f32 %v3022, 1.0
        %v3024 = vmul.f32 %v3023, %v2753
        %v3025 = vand.u32 2147483647, %v2753
        %vm3026 = vcmp.lt.f32.partialorder %v3025, 0.0004427343
        %v3027 = vsel %vm3026, %v3024, %v3021
        %v3028 = vadd.f32 %v2755, 1.0
        %v3029 = vlog2.pop %v3028
        %v3030 = vmul.f32 %v3029, 0.6931472
        %v3031 = vmul.f32 -0.5, %v2755
        %v3032 = vadd.f32 %v3031, 1.0
        %v3033 = vmul.f32 %v3032, %v2755
        %v3034 = vand.u32 2147483647, %v2755
        %vm3035 = vcmp.lt.f32.partialorder %v3034, 0.0004427343
        %v3036 = vsel %vm3035, %v3033, %v3030
        %v3037 = vadd.f32 %v2757, 1.0
        %v3038 = vlog2.pop %v3037
        %v3039 = vmul.f32 %v3038, 0.6931472
        %v3040 = vmul.f32 -0.5, %v2757
        %v3041 = vadd.f32 %v3040, 1.0
        %v3042 = vmul.f32 %v3041, %v2757
        %v3043 = vand.u32 2147483647, %v2757
        %vm3044 = vcmp.lt.f32.partialorder %v3043, 0.0004427343
        %v3045 = vsel %vm3044, %v3042, %v3039
        %v3046 = vadd.f32 %v2598, %v2766
        %v3047 = vadd.f32 %v2599, %v2775
        %v3048 = vadd.f32 %v2600, %v2784
        %v3049 = vadd.f32 %v2601, %v2793
        %v3050 = vadd.f32 %v2602, %v2802
        %v3051 = vadd.f32 %v2603, %v2811
        %v3052 = vadd.f32 %v2604, %v2820
        %v3053 = vadd.f32 %v2605, %v2829
        %v3054 = vadd.f32 %v2606, %v2838
        %v3055 = vadd.f32 %v2607, %v2847
        %v3056 = vadd.f32 %v2608, %v2856
        %v3057 = vadd.f32 %v2609, %v2865
        %v3058 = vadd.f32 %v2610, %v2874
        %v3059 = vadd.f32 %v2611, %v2883
        %v3060 = vadd.f32 %v2612, %v2892
        %v3061 = vadd.f32 %v2613, %v2901
        %v3062 = vadd.f32 %v2614, %v2910
        %v3063 = vadd.f32 %v2615, %v2919
        %v3064 = vadd.f32 %v2616, %v2928
        %v3065 = vadd.f32 %v2617, %v2937
        %v3066 = vadd.f32 %v2618, %v2946
        %v3067 = vadd.f32 %v2619, %v2955
        %v3068 = vadd.f32 %v2620, %v2964
        %v3069 = vadd.f32 %v2621, %v2973
        %v3070 = vadd.f32 %v2622, %v2982
        %v3071 = vadd.f32 %v2623, %v2991
        %v3072 = vadd.f32 %v2624, %v3000
        %v3073 = vadd.f32 %v2625, %v3009
        %v3074 = vadd.f32 %v2626, %v3018
        %v3075 = vadd.f32 %v2627, %v3027
        %v3076 = vadd.f32 %v2628, %v3036
        %v3077 = vadd.f32 %v2629, %v3045
        %v3078 = vmax.f32 %v3046, 0.0001
        %v3079 = vmax.f32 %v3047, 0.0001
        %v3080 = vmax.f32 %v3048, 0.0001
        %v3081 = vmax.f32 %v3049, 0.0001
        %v3082 = vmax.f32 %v3050, 0.0001
        %v3083 = vmax.f32 %v3051, 0.0001
        %v3084 = vmax.f32 %v3052, 0.0001
        %v3085 = vmax.f32 %v3053, 0.0001
        %v3086 = vmax.f32 %v3054, 0.0001
        %v3087 = vmax.f32 %v3055, 0.0001
        %v3088 = vmax.f32 %v3056, 0.0001
        %v3089 = vmax.f32 %v3057, 0.0001
        %v3090 = vmax.f32 %v3058, 0.0001
        %v3091 = vmax.f32 %v3059, 0.0001
        %v3092 = vmax.f32 %v3060, 0.0001
        %v3093 = vmax.f32 %v3061, 0.0001
        %v3094 = vmax.f32 %v3062, 0.0001
        %v3095 = vmax.f32 %v3063, 0.0001
        %v3096 = vmax.f32 %v3064, 0.0001
        %v3097 = vmax.f32 %v3065, 0.0001
        %v3098 = vmax.f32 %v3066, 0.0001
        %v3099 = vmax.f32 %v3067, 0.0001
        %v3100 = vmax.f32 %v3068, 0.0001
        %v3101 = vmax.f32 %v3069, 0.0001
        %v3102 = vmax.f32 %v3070, 0.0001
        %v3103 = vmax.f32 %v3071, 0.0001
        %v3104 = vmax.f32 %v3072, 0.0001
        %v3105 = vmax.f32 %v3073, 0.0001
        %v3106 = vmax.f32 %v3074, 0.0001
        %v3107 = vmax.f32 %v3075, 0.0001
        %v3108 = vmax.f32 %v3076, 0.0001
        %v3109 = vmax.f32 %v3077, 0.0001
        %v3110 = vmin.f32 %v3078, 10000.0
        %v3111 = vmin.f32 %v3079, 10000.0
        %v3112 = vmin.f32 %v3080, 10000.0
        %v3113 = vmin.f32 %v3081, 10000.0
        %v3114 = vmin.f32 %v3082, 10000.0
        %v3115 = vmin.f32 %v3083, 10000.0
        %v3116 = vmin.f32 %v3084, 10000.0
        %v3117 = vmin.f32 %v3085, 10000.0
        %v3118 = vmin.f32 %v3086, 10000.0
        %v3119 = vmin.f32 %v3087, 10000.0
        %v3120 = vmin.f32 %v3088, 10000.0
        %v3121 = vmin.f32 %v3089, 10000.0
        %v3122 = vmin.f32 %v3090, 10000.0
        %v3123 = vmin.f32 %v3091, 10000.0
        %v3124 = vmin.f32 %v3092, 10000.0
        %v3125 = vmin.f32 %v3093, 10000.0
        %v3126 = vmin.f32 %v3094, 10000.0
        %v3127 = vmin.f32 %v3095, 10000.0
        %v3128 = vmin.f32 %v3096, 10000.0
        %v3129 = vmin.f32 %v3097, 10000.0
        %v3130 = vmin.f32 %v3098, 10000.0
        %v3131 = vmin.f32 %v3099, 10000.0
        %v3132 = vmin.f32 %v3100, 10000.0
        %v3133 = vmin.f32 %v3101, 10000.0
        %v3134 = vmin.f32 %v3102, 10000.0
        %v3135 = vmin.f32 %v3103, 10000.0
        %v3136 = vmin.f32 %v3104, 10000.0
        %v3137 = vmin.f32 %v3105, 10000.0
        %v3138 = vmin.f32 %v3106, 10000.0
        %v3139 = vmin.f32 %v3107, 10000.0
        %v3140 = vmin.f32 %v3108, 10000.0
        %v3141 = vmin.f32 %v3109, 10000.0
        %v3142 = vsub.f32 0.0, %v2376
        %v3143 = vsub.f32 0.0, %v2378
        %v3144 = vsub.f32 0.0, %v2382
        %v3145 = vsub.f32 0.0, %v2384
        %v3146 = vsub.f32 0.0, %v2388
        %v3147 = vsub.f32 0.0, %v2390
        %v3148 = vsub.f32 0.0, %v2394
        %v3149 = vsub.f32 0.0, %v2396
        %v3150 = vsub.f32 0.0, %v2400
        %v3151 = vsub.f32 0.0, %v2402
        %v3152 = vsub.f32 0.0, %v2406
        %v3153 = vsub.f32 0.0, %v2408
        %v3154 = vsub.f32 0.0, %v2412
        %v3155 = vsub.f32 0.0, %v2414
        %v3156 = vsub.f32 0.0, %v2418
        %v3157 = vsub.f32 0.0, %v2420
        %v3158 = vsub.f32 0.0, %v2424
        %v3159 = vsub.f32 0.0, %v2426
        %v3160 = vsub.f32 0.0, %v2430
        %v3161 = vsub.f32 0.0, %v2432
        %v3162 = vsub.f32 0.0, %v2436
        %v3163 = vsub.f32 0.0, %v2438
        %v3164 = vsub.f32 0.0, %v2442
        %v3165 = vsub.f32 0.0, %v2444
        %v3166 = vsub.f32 0.0, %v2448
        %v3167 = vsub.f32 0.0, %v2450
        %v3168 = vsub.f32 0.0, %v2454
        %v3169 = vsub.f32 0.0, %v2456
        %v3170 = vsub.f32 0.0, %v2460
        %v3171 = vsub.f32 0.0, %v2462
        %v3172 = vsub.f32 0.0, %v2466
        %v3173 = vsub.f32 0.0, %v2468
        %v3174 = vmul.f32 %v3142, 1.442695
        %v3175 = vpow.pop %v3174
        %v3176 = vmul.f32 %v3143, 1.442695
        %v3177 = vpow.pop %v3176
        %v3178 = vmul.f32 %v3144, 1.442695
        %v3179 = vpow.pop %v3178
        %v3180 = vmul.f32 %v3145, 1.442695
        %v3181 = vpow.pop %v3180
        %v3182 = vmul.f32 %v3146, 1.442695
        %v3183 = vpow.pop %v3182
        %v3184 = vmul.f32 %v3147, 1.442695
        %v3185 = vpow.pop %v3184
        %v3186 = vmul.f32 %v3148, 1.442695
        %v3187 = vpow.pop %v3186
        %v3188 = vmul.f32 %v3149, 1.442695
        %v3189 = vpow.pop %v3188
        %v3190 = vmul.f32 %v3150, 1.442695
        %v3191 = vpow.pop %v3190
        %v3192 = vmul.f32 %v3151, 1.442695
        %v3193 = vpow.pop %v3192
        %v3194 = vmul.f32 %v3152, 1.442695
        %v3195 = vpow.pop %v3194
        %v3196 = vmul.f32 %v3153, 1.442695
        %v3197 = vpow.pop %v3196
        %v3198 = vmul.f32 %v3154, 1.442695
        %v3199 = vpow.pop %v3198
        %v3200 = vmul.f32 %v3155, 1.442695
        %v3201 = vpow.pop %v3200
        %v3202 = vmul.f32 %v3156, 1.442695
        %v3203 = vpow.pop %v3202
        %v3204 = vmul.f32 %v3157, 1.442695
        %v3205 = vpow.pop %v3204
        %v3206 = vmul.f32 %v3158, 1.442695
        %v3207 = vpow.pop %v3206
        %v3208 = vmul.f32 %v3159, 1.442695
        %v3209 = vpow.pop %v3208
        %v3210 = vmul.f32 %v3160, 1.442695
        %v3211 = vpow.pop %v3210
        %v3212 = vmul.f32 %v3161, 1.442695
        %v3213 = vpow.pop %v3212
        %v3214 = vmul.f32 %v3162, 1.442695
        %v3215 = vpow.pop %v3214
        %v3216 = vmul.f32 %v3163, 1.442695
        %v3217 = vpow.pop %v3216
        %v3218 = vmul.f32 %v3164, 1.442695
        %v3219 = vpow.pop %v3218
        %v3220 = vmul.f32 %v3165, 1.442695
        %v3221 = vpow.pop %v3220
        %v3222 = vmul.f32 %v3166, 1.442695
        %v3223 = vpow.pop %v3222
        %v3224 = vmul.f32 %v3167, 1.442695
        %v3225 = vpow.pop %v3224
        %v3226 = vmul.f32 %v3168, 1.442695
        %v3227 = vpow.pop %v3226
        %v3228 = vmul.f32 %v3169, 1.442695
        %v3229 = vpow.pop %v3228
        %v3230 = vmul.f32 %v3170, 1.442695
        %v3231 = vpow.pop %v3230
        %v3232 = vmul.f32 %v3171, 1.442695
        %v3233 = vpow.pop %v3232
        %v3234 = vmul.f32 %v3172, 1.442695
        %v3235 = vpow.pop %v3234
        %v3236 = vmul.f32 %v3173, 1.442695
        %v3237 = vpow.pop %v3236
        %v3238 = vadd.f32 %v3175, 1.0
        %v3239 = vadd.f32 %v3177, 1.0
        %v3240 = vadd.f32 %v3179, 1.0
        %v3241 = vadd.f32 %v3181, 1.0
        %v3242 = vadd.f32 %v3183, 1.0
        %v3243 = vadd.f32 %v3185, 1.0
        %v3244 = vadd.f32 %v3187, 1.0
        %v3245 = vadd.f32 %v3189, 1.0
        %v3246 = vadd.f32 %v3191, 1.0
        %v3247 = vadd.f32 %v3193, 1.0
        %v3248 = vadd.f32 %v3195, 1.0
        %v3249 = vadd.f32 %v3197, 1.0
        %v3250 = vadd.f32 %v3199, 1.0
        %v3251 = vadd.f32 %v3201, 1.0
        %v3252 = vadd.f32 %v3203, 1.0
        %v3253 = vadd.f32 %v3205, 1.0
        %v3254 = vadd.f32 %v3207, 1.0
        %v3255 = vadd.f32 %v3209, 1.0
        %v3256 = vadd.f32 %v3211, 1.0
        %v3257 = vadd.f32 %v3213, 1.0
        %v3258 = vadd.f32 %v3215, 1.0
        %v3259 = vadd.f32 %v3217, 1.0
        %v3260 = vadd.f32 %v3219, 1.0
        %v3261 = vadd.f32 %v3221, 1.0
        %v3262 = vadd.f32 %v3223, 1.0
        %v3263 = vadd.f32 %v3225, 1.0
        %v3264 = vadd.f32 %v3227, 1.0
        %v3265 = vadd.f32 %v3229, 1.0
        %v3266 = vadd.f32 %v3231, 1.0
        %v3267 = vadd.f32 %v3233, 1.0
        %v3268 = vadd.f32 %v3235, 1.0
        %v3269 = vadd.f32 %v3237, 1.0
        %v3270 = vrcp.pop %v3238
        %v3271 = vrcp.pop %v3239
        %v3272 = vrcp.pop %v3240
        %v3273 = vrcp.pop %v3241
        %v3274 = vrcp.pop %v3242
        %v3275 = vrcp.pop %v3243
        %v3276 = vrcp.pop %v3244
        %v3277 = vrcp.pop %v3245
        %v3278 = vrcp.pop %v3246
        %v3279 = vrcp.pop %v3247
        %v3280 = vrcp.pop %v3248
        %v3281 = vrcp.pop %v3249
        %v3282 = vrcp.pop %v3250
        %v3283 = vrcp.pop %v3251
        %v3284 = vrcp.pop %v3252
        %v3285 = vrcp.pop %v3253
        %v3286 = vrcp.pop %v3254
        %v3287 = vrcp.pop %v3255
        %v3288 = vrcp.pop %v3256
        %v3289 = vrcp.pop %v3257
        %v3290 = vrcp.pop %v3258
        %v3291 = vrcp.pop %v3259
        %v3292 = vrcp.pop %v3260
        %v3293 = vrcp.pop %v3261
        %v3294 = vrcp.pop %v3262
        %v3295 = vrcp.pop %v3263
        %v3296 = vrcp.pop %v3264
        %v3297 = vrcp.pop %v3265
        %v3298 = vrcp.pop %v3266
        %v3299 = vrcp.pop %v3267
        %v3300 = vrcp.pop %v3268
        %v3301 = vrcp.pop %v3269
        %v3302 = vmax.f32 %v3270, 0.0
        %v3303 = vmax.f32 %v3271, 0.0
        %v3304 = vmax.f32 %v3272, 0.0
        %v3305 = vmax.f32 %v3273, 0.0
        %v3306 = vmax.f32 %v3274, 0.0
        %v3307 = vmax.f32 %v3275, 0.0
        %v3308 = vmax.f32 %v3276, 0.0
        %v3309 = vmax.f32 %v3277, 0.0
        %v3310 = vmax.f32 %v3278, 0.0
        %v3311 = vmax.f32 %v3279, 0.0
        %v3312 = vmax.f32 %v3280, 0.0
        %v3313 = vmax.f32 %v3281, 0.0
        %v3314 = vmax.f32 %v3282, 0.0
        %v3315 = vmax.f32 %v3283, 0.0
        %v3316 = vmax.f32 %v3284, 0.0
        %v3317 = vmax.f32 %v3285, 0.0
        %v3318 = vmax.f32 %v3286, 0.0
        %v3319 = vmax.f32 %v3287, 0.0
        %v3320 = vmax.f32 %v3288, 0.0
        %v3321 = vmax.f32 %v3289, 0.0
        %v3322 = vmax.f32 %v3290, 0.0
        %v3323 = vmax.f32 %v3291, 0.0
        %v3324 = vmax.f32 %v3292, 0.0
        %v3325 = vmax.f32 %v3293, 0.0
        %v3326 = vmax.f32 %v3294, 0.0
        %v3327 = vmax.f32 %v3295, 0.0
        %v3328 = vmax.f32 %v3296, 0.0
        %v3329 = vmax.f32 %v3297, 0.0
        %v3330 = vmax.f32 %v3298, 0.0
        %v3331 = vmax.f32 %v3299, 0.0
        %v3332 = vmax.f32 %v3300, 0.0
        %v3333 = vmax.f32 %v3301, 0.0
        %v3334 = vmin.f32 %v3302, 1.0
        %v3335 = vmin.f32 %v3303, 1.0
        %v3336 = vmin.f32 %v3304, 1.0
        %v3337 = vmin.f32 %v3305, 1.0
        %v3338 = vmin.f32 %v3306, 1.0
        %v3339 = vmin.f32 %v3307, 1.0
        %v3340 = vmin.f32 %v3308, 1.0
        %v3341 = vmin.f32 %v3309, 1.0
        %v3342 = vmin.f32 %v3310, 1.0
        %v3343 = vmin.f32 %v3311, 1.0
        %v3344 = vmin.f32 %v3312, 1.0
        %v3345 = vmin.f32 %v3313, 1.0
        %v3346 = vmin.f32 %v3314, 1.0
        %v3347 = vmin.f32 %v3315, 1.0
        %v3348 = vmin.f32 %v3316, 1.0
        %v3349 = vmin.f32 %v3317, 1.0
        %v3350 = vmin.f32 %v3318, 1.0
        %v3351 = vmin.f32 %v3319, 1.0
        %v3352 = vmin.f32 %v3320, 1.0
        %v3353 = vmin.f32 %v3321, 1.0
        %v3354 = vmin.f32 %v3322, 1.0
        %v3355 = vmin.f32 %v3323, 1.0
        %v3356 = vmin.f32 %v3324, 1.0
        %v3357 = vmin.f32 %v3325, 1.0
        %v3358 = vmin.f32 %v3326, 1.0
        %v3359 = vmin.f32 %v3327, 1.0
        %v3360 = vmin.f32 %v3328, 1.0
        %v3361 = vmin.f32 %v3329, 1.0
        %v3362 = vmin.f32 %v3330, 1.0
        %v3363 = vmin.f32 %v3331, 1.0
        %v3364 = vmin.f32 %v3332, 1.0
        %v3365 = vmin.f32 %v3333, 1.0
        %3366 = vst.msk [vmem:[%s631] sm:$0xff] %vm1316, %v1227
        %3367 = vst.msk [vmem:[%s631 + $0x8] sm:$0xff] %vm1316, %v1232
        %3368 = vst.msk [vmem:[%s631 + $0x10] sm:$0xff] %vm1316, %v1237
        %3369 = vst.msk [vmem:[%s631 + $0x18] sm:$0xff] %vm1316, %v1242
        %3370 = vst.msk [vmem:[%s631 + $0x20] sm:$0xff] %vm1316, %v1247
        %3371 = vst.msk [vmem:[%s631 + $0x28] sm:$0xff] %vm1316, %v1252
        %3372 = vst.msk [vmem:[%s631 + $0x30] sm:$0xff] %vm1316, %v1257
        %3373 = vst.msk [vmem:[%s631 + $0x38] sm:$0xff] %vm1316, %v1262
        %3374 = vst.msk [vmem:[%s631 + $0x40] sm:$0xff] %vm1316, %v1267
        %3375 = vst.msk [vmem:[%s631 + $0x48] sm:$0xff] %vm1316, %v1272
        %3376 = vst.msk [vmem:[%s631 + $0x50] sm:$0xff] %vm1316, %v1277
        %3377 = vst.msk [vmem:[%s631 + $0x58] sm:$0xff] %vm1316, %v1282
        %3378 = vst.msk [vmem:[%s631 + $0x60] sm:$0xff] %vm1316, %v1287
        %3379 = vst.msk [vmem:[%s631 + $0x68] sm:$0xff] %vm1316, %v1292
        %3380 = vst.msk [vmem:[%s631 + $0x70] sm:$0xff] %vm1316, %v1297
        %3381 = vst.msk [vmem:[%s631 + $0x78] sm:$0xff] %vm1316, %v1302
        %3382 = vst [vmem:[%s611] sm:$0xff] %v2566
        %3383 = vst [vmem:[%s611 + $0x8] sm:$0xff] %v2567
        %3384 = vst [vmem:[%s611 + $0x10] sm:$0xff] %v2568
        %3385 = vst [vmem:[%s611 + $0x18] sm:$0xff] %v2569
        %3386 = vst [vmem:[%s611 + $0x20] sm:$0xff] %v2570
        %3387 = vst [vmem:[%s611 + $0x28] sm:$0xff] %v2571
        %3388 = vst [vmem:[%s611 + $0x30] sm:$0xff] %v2572
        %3389 = vst [vmem:[%s611 + $0x38] sm:$0xff] %v2573
        %3390 = vst [vmem:[%s611 + $0x40] sm:$0xff] %v2574
        %3391 = vst [vmem:[%s611 + $0x48] sm:$0xff] %v2575
        %3392 = vst [vmem:[%s611 + $0x50] sm:$0xff] %v2576
        %3393 = vst [vmem:[%s611 + $0x58] sm:$0xff] %v2577
        %3394 = vst [vmem:[%s611 + $0x60] sm:$0xff] %v2578
        %3395 = vst [vmem:[%s611 + $0x68] sm:$0xff] %v2579
        %3396 = vst [vmem:[%s611 + $0x70] sm:$0xff] %v2580
        %3397 = vst [vmem:[%s611 + $0x78] sm:$0xff] %v2581
        %3398 = vst [vmem:[%s611 + $0x80] sm:$0xff] %v2582
        %3399 = vst [vmem:[%s611 + $0x88] sm:$0xff] %v2583
        %3400 = vst [vmem:[%s611 + $0x90] sm:$0xff] %v2584
        %3401 = vst [vmem:[%s611 + $0x98] sm:$0xff] %v2585
        %3402 = vst [vmem:[%s611 + $0xa0] sm:$0xff] %v2586
        %3403 = vst [vmem:[%s611 + $0xa8] sm:$0xff] %v2587
        %3404 = vst [vmem:[%s611 + $0xb0] sm:$0xff] %v2588
        %3405 = vst [vmem:[%s611 + $0xb8] sm:$0xff] %v2589
        %3406 = vst [vmem:[%s611 + $0xc0] sm:$0xff] %v2590
        %3407 = vst [vmem:[%s611 + $0xc8] sm:$0xff] %v2591
        %3408 = vst [vmem:[%s611 + $0xd0] sm:$0xff] %v2592
        %3409 = vst [vmem:[%s611 + $0xd8] sm:$0xff] %v2593
        %3410 = vst [vmem:[%s611 + $0xe0] sm:$0xff] %v2594
        %3411 = vst [vmem:[%s611 + $0xe8] sm:$0xff] %v2595
        %3412 = vst [vmem:[%s611 + $0xf0] sm:$0xff] %v2596
        %3413 = vst [vmem:[%s611 + $0xf8] sm:$0xff] %v2597
        %3414 = vst [vmem:[%s618] sm:$0xff] %v3110
        %3415 = vst [vmem:[%s618 + $0x8] sm:$0xff] %v3111
        %3416 = vst [vmem:[%s618 + $0x10] sm:$0xff] %v3112
        %3417 = vst [vmem:[%s618 + $0x18] sm:$0xff] %v3113
        %3418 = vst [vmem:[%s618 + $0x20] sm:$0xff] %v3114
        %3419 = vst [vmem:[%s618 + $0x28] sm:$0xff] %v3115
        %3420 = vst [vmem:[%s618 + $0x30] sm:$0xff] %v3116
        %3421 = vst [vmem:[%s618 + $0x38] sm:$0xff] %v3117
        %3422 = vst [vmem:[%s618 + $0x40] sm:$0xff] %v3118
        %3423 = vst [vmem:[%s618 + $0x48] sm:$0xff] %v3119
        %3424 = vst [vmem:[%s618 + $0x50] sm:$0xff] %v3120
        %3425 = vst [vmem:[%s618 + $0x58] sm:$0xff] %v3121
        %3426 = vst [vmem:[%s618 + $0x60] sm:$0xff] %v3122
        %3427 = vst [vmem:[%s618 + $0x68] sm:$0xff] %v3123
        %3428 = vst [vmem:[%s618 + $0x70] sm:$0xff] %v3124
        %3429 = vst [vmem:[%s618 + $0x78] sm:$0xff] %v3125
        %3430 = vst [vmem:[%s618 + $0x80] sm:$0xff] %v3126
        %3431 = vst [vmem:[%s618 + $0x88] sm:$0xff] %v3127
        %3432 = vst [vmem:[%s618 + $0x90] sm:$0xff] %v3128
        %3433 = vst [vmem:[%s618 + $0x98] sm:$0xff] %v3129
        %3434 = vst [vmem:[%s618 + $0xa0] sm:$0xff] %v3130
        %3435 = vst [vmem:[%s618 + $0xa8] sm:$0xff] %v3131
        %3436 = vst [vmem:[%s618 + $0xb0] sm:$0xff] %v3132
        %3437 = vst [vmem:[%s618 + $0xb8] sm:$0xff] %v3133
        %3438 = vst [vmem:[%s618 + $0xc0] sm:$0xff] %v3134
        %3439 = vst [vmem:[%s618 + $0xc8] sm:$0xff] %v3135
        %3440 = vst [vmem:[%s618 + $0xd0] sm:$0xff] %v3136
        %3441 = vst [vmem:[%s618 + $0xd8] sm:$0xff] %v3137
        %3442 = vst [vmem:[%s618 + $0xe0] sm:$0xff] %v3138
        %3443 = vst [vmem:[%s618 + $0xe8] sm:$0xff] %v3139
        %3444 = vst [vmem:[%s618 + $0xf0] sm:$0xff] %v3140
        %3445 = vst [vmem:[%s618 + $0xf8] sm:$0xff] %v3141
        %3446 = vst [vmem:[%s625] sm:$0xff] %v3334
        %3447 = vst [vmem:[%s625 + $0x8] sm:$0xff] %v3335
        %3448 = vst [vmem:[%s625 + $0x10] sm:$0xff] %v3336
        %3449 = vst [vmem:[%s625 + $0x18] sm:$0xff] %v3337
        %3450 = vst [vmem:[%s625 + $0x20] sm:$0xff] %v3338
        %3451 = vst [vmem:[%s625 + $0x28] sm:$0xff] %v3339
        %3452 = vst [vmem:[%s625 + $0x30] sm:$0xff] %v3340
        %3453 = vst [vmem:[%s625 + $0x38] sm:$0xff] %v3341
        %3454 = vst [vmem:[%s625 + $0x40] sm:$0xff] %v3342
        %3455 = vst [vmem:[%s625 + $0x48] sm:$0xff] %v3343
        %3456 = vst [vmem:[%s625 + $0x50] sm:$0xff] %v3344
        %3457 = vst [vmem:[%s625 + $0x58] sm:$0xff] %v3345
        %3458 = vst [vmem:[%s625 + $0x60] sm:$0xff] %v3346
        %3459 = vst [vmem:[%s625 + $0x68] sm:$0xff] %v3347
        %3460 = vst [vmem:[%s625 + $0x70] sm:$0xff] %v3348
        %3461 = vst [vmem:[%s625 + $0x78] sm:$0xff] %v3349
        %3462 = vst [vmem:[%s625 + $0x80] sm:$0xff] %v3350
        %3463 = vst [vmem:[%s625 + $0x88] sm:$0xff] %v3351
        %3464 = vst [vmem:[%s625 + $0x90] sm:$0xff] %v3352
        %3465 = vst [vmem:[%s625 + $0x98] sm:$0xff] %v3353
        %3466 = vst [vmem:[%s625 + $0xa0] sm:$0xff] %v3354
        %3467 = vst [vmem:[%s625 + $0xa8] sm:$0xff] %v3355
        %3468 = vst [vmem:[%s625 + $0xb0] sm:$0xff] %v3356
        %3469 = vst [vmem:[%s625 + $0xb8] sm:$0xff] %v3357
        %3470 = vst [vmem:[%s625 + $0xc0] sm:$0xff] %v3358
        %3471 = vst [vmem:[%s625 + $0xc8] sm:$0xff] %v3359
        %3472 = vst [vmem:[%s625 + $0xd0] sm:$0xff] %v3360
        %3473 = vst [vmem:[%s625 + $0xd8] sm:$0xff] %v3361
        %3474 = vst [vmem:[%s625 + $0xe0] sm:$0xff] %v3362
        %3475 = vst [vmem:[%s625 + $0xe8] sm:$0xff] %v3363
        %3476 = vst [vmem:[%s625 + $0xf0] sm:$0xff] %v3364
        %3477 = vst [vmem:[%s625 + $0xf8] sm:$0xff] %v3365
        %s3478 = smul.u32 16, %s41
        %p3479 = scmp.lt.s32.totalorder %s3478, 31
        %s3480 = scalar_select %p3479, %s3478, 31
        %s3481 = smul.addr %s3480, 8
        %s3482 = scalar_lea.vmem %s14, %s3481
        %s3483 = sand.u32 %s353, 1
        %s3484 = scalar_lea.sflag [#allocation6], %s3483
        %s3485 = sand.u32 %s353, 1
        %s3486 = smul.addr %s3485, 256
        %s3487 = scalar_lea.vmem [#allocation13], %s3486
        %s3488 = sand.u32 %s41, 1
        %s3489 = scalar_lea.sflag [#allocation15], %s3488
        %s3490 = sand.u32 %s379, 1
        %s3491 = smul.addr %s3490, 256
        %s3492 = scalar_lea.vmem [#allocation14], %s3491
        %s3493 = sand.u32 %s41, 1
        %s3494 = scalar_lea.sflag [#allocation15], %s3493
        %s3495 = sand.u32 %s405, 1
        %s3496 = smul.addr %s3495, 256
        %s3497 = scalar_lea.vmem [#allocation16], %s3496
        // Predicated region
        $region93: #{tpu_custom_call.1} parent=71 // pred_check
          %p3498 = pneg %p337
        $region94: #{tpu_custom_call.1} parent=71 // pred_check_branch
          %3500 = sbr.rel (%p3498) target = $region96
        $region95: #{tpu_custom_call.1} parent=71 // pred_region
          %s3501 = smul.u32 16, %s41
        $region96: #{tpu_custom_call.1} parent=71 // pred_fallthru
          _
        // Predicated region
        $region97: #{tpu_custom_call.1} parent=71 // pred_check
          %p3502 = pneg %p363
        $region98: #{tpu_custom_call.1} parent=71 // pred_check_branch
          %3504 = sbr.rel (%p3502) target = $region100
        $region99: #{tpu_custom_call.1} parent=71 // pred_region
          %s3505 = smul.u32 16, %s41
          %s3507 = ssub.s32 4096, 4096
          %3508 = vsyncadd %s3484, %s3507
          %s3509 = smul.addr %s3505, 2
          %s3510 = smul.addr %s3509, 128
          %s3511 = scalar_lea.hbm %s15, %s3510
          %s3512 = sshll.u32 %s3487, 4
          %s3513 = int_to_ptr.vmem [resolvable:$true] %s3512
          %3518 = dma.vmem_to_hbm [thread:$0]  %s3513, 4096, %s3511, %s3484, 256, 256, 16
        $region100: #{tpu_custom_call.1} parent=71 // pred_fallthru
          _
        // Predicated region
        $region101: #{tpu_custom_call.1} parent=71 // pred_check
          %p3519 = pneg %p389
        $region102: #{tpu_custom_call.1} parent=71 // pred_check_branch
          %3521 = sbr.rel (%p3519) target = $region104
        $region103: #{tpu_custom_call.1} parent=71 // pred_region
          %s3522 = smul.u32 16, %s41
          %s3524 = ssub.s32 4096, 4096
          %3525 = vsyncadd %s3489, %s3524
          %s3526 = smul.addr %s3522, 2
          %s3527 = smul.addr %s3526, 128
          %s3528 = scalar_lea.hbm %s16, %s3527
          %s3529 = sshll.u32 %s3492, 4
          %s3530 = int_to_ptr.vmem [resolvable:$true] %s3529
          %3535 = dma.vmem_to_hbm [thread:$0]  %s3530, 4096, %s3528, %s3489, 256, 256, 16
        $region104: #{tpu_custom_call.1} parent=71 // pred_fallthru
          _
        // Predicated region
        $region105: #{tpu_custom_call.1} parent=71 // pred_check
          %p3536 = pneg %p415
        $region106: #{tpu_custom_call.1} parent=71 // pred_check_branch
          %3538 = sbr.rel (%p3536) target = $region108
        $region107: #{tpu_custom_call.1} parent=71 // pred_region
          %s3539 = smul.u32 16, %s41
          %s3541 = ssub.s32 4096, 4096
          %3542 = vsyncadd %s3494, %s3541
          %s3543 = smul.addr %s3539, 2
          %s3544 = smul.addr %s3543, 128
          %s3545 = scalar_lea.hbm %s17, %s3544
          %s3546 = sshll.u32 %s3497, 4
          %s3547 = int_to_ptr.vmem [resolvable:$true] %s3546
          %3552 = dma.vmem_to_hbm [thread:$0]  %s3547, 4096, %s3545, %s3494, 256, 256, 16
        $region108: #{tpu_custom_call.1} parent=71 // pred_fallthru
          _
      $region72: #{tpu_custom_call.1} parent=5 // pred_fallthru
        _
      %p3553 = scmp.le.s32.totalorder 2, %s36
      // Predicated region
      $region109: #{tpu_custom_call.1} parent=5 // pred_check
        %p3554 = pneg %p3553
      $region110: #{tpu_custom_call.1} parent=5 // pred_check_branch
        %3556 = sbr.rel (%p3554) target = $region112
      $region111: #{tpu_custom_call.1} parent=5 // pred_region
        %s3557 = ssub.s32 %s36, 2
        // Predicated region
        $region113: #{tpu_custom_call.1} parent=111 // pred_check
          %p3558 = pneg %p343
        $region114: #{tpu_custom_call.1} parent=111 // pred_check_branch
          %3560 = sbr.rel (%p3558) target = $region116
        $region115: #{tpu_custom_call.1} parent=111 // pred_region
          %s3561 = smul.u32 16, %s42
          %p3562 = scmp.lt.s32.totalorder %s3561, 31
          %s3563 = scalar_select %p3562, %s3561, 31
          %s3564 = smul.addr %s3563, 8
          %s3565 = scalar_lea.vmem %s14, %s3564
        $region116: #{tpu_custom_call.1} parent=111 // pred_fallthru
          _
        // Predicated region
        $region117: #{tpu_custom_call.1} parent=111 // pred_check
          %p3566 = pneg %p369
        $region118: #{tpu_custom_call.1} parent=111 // pred_check_branch
          %3568 = sbr.rel (%p3566) target = $region120
        $region119: #{tpu_custom_call.1} parent=111 // pred_region
          %s3569 = sand.u32 %s354, 1
          %s3570 = scalar_lea.sflag [#allocation6], %s3569
          %s3571 = sand.u32 %s354, 1
          %s3572 = smul.addr %s3571, 256
          %s3573 = scalar_lea.vmem [#allocation13], %s3572
          %3574 = dma.done %s3570, 4096
        $region120: #{tpu_custom_call.1} parent=111 // pred_fallthru
          _
        // Predicated region
        $region121: #{tpu_custom_call.1} parent=111 // pred_check
          %p3575 = pneg %p395
        $region122: #{tpu_custom_call.1} parent=111 // pred_check_branch
          %3577 = sbr.rel (%p3575) target = $region124
        $region123: #{tpu_custom_call.1} parent=111 // pred_region
          %s3578 = sand.u32 %s42, 1
          %s3579 = scalar_lea.sflag [#allocation15], %s3578
          %s3580 = sand.u32 %s380, 1
          %s3581 = smul.addr %s3580, 256
          %s3582 = scalar_lea.vmem [#allocation14], %s3581
          %3583 = dma.done %s3579, 4096
        $region124: #{tpu_custom_call.1} parent=111 // pred_fallthru
          _
        // Predicated region
        $region125: #{tpu_custom_call.1} parent=111 // pred_check
          %p3584 = pneg %p421
        $region126: #{tpu_custom_call.1} parent=111 // pred_check_branch
          %3586 = sbr.rel (%p3584) target = $region128
        $region127: #{tpu_custom_call.1} parent=111 // pred_region
          %s3587 = sand.u32 %s42, 1
          %s3588 = scalar_lea.sflag [#allocation15], %s3587
          %s3589 = sand.u32 %s406, 1
          %s3590 = smul.addr %s3589, 256
          %s3591 = scalar_lea.vmem [#allocation16], %s3590
          %3592 = dma.done %s3588, 4096
        $region128: #{tpu_custom_call.1} parent=111 // pred_fallthru
          _
      $region112: #{tpu_custom_call.1} parent=5 // pred_fallthru
        _
    $region6: #{tpu_custom_call.1} parent=1 // loop_footer
      %s40 = sadd.s32 1, %s36
    $region7: #{tpu_custom_call.1} parent=1 // loop_footer_branch
      %35 = sbr.rel target = $region3
    $region8: #{tpu_custom_call.1} parent=1 // loop_exit
      _
    %3593 = vsyncpa [#allocation5], 1
    %s3594 = scalar_lea.sflag [#allocation5], 1
    %3595 = vsyncpa %s3594, 1
    %3596 = vsyncpa [#allocation8], 1
    %3597 = vsyncpa [#allocation11], 1
    %3598 = vsyncpa [#allocation6], 1
    %s3599 = scalar_lea.sflag [#allocation6], 1
    %3600 = vsyncpa %s3599, 1
    %3601 = vsyncpa [#allocation15], 1
    %s3602 = scalar_lea.sflag [#allocation15], 1
    %3603 = vsyncpa %s3602, 1

</llo_original>
